<compile_context>
chip_gen: v5e
topology: v5e:2x2
jax: 0.10.0
libtpu: 0.0.40
codegen_flags: <defaults>
</compile_context>

<pallas_src>
import functools

import jax
import jax.numpy as jnp
from jax.experimental import pallas as pl
from jax.experimental.pallas import tpu as pltpu


_VMEM_LIMIT_BYTES = 32 * 1024 * 1024   # >= default scoped limit on v5e/v6e/v7x
_TILE_ELEM_BUDGET = 1 << 16            # cap on tc * tH * W (per sub-band plane)


def _largest_divisor(n, cap, multiple_of=1):
    """Largest divisor of n that is <= cap and a multiple of `multiple_of`."""
    for t in range(min(n, cap), 0, -1):
        if n % t == 0 and t % multiple_of == 0:
            return t
    return None


def _pick_tiles(C, H, W):
    """Choose (tc, tH): tH divides H with (tH % 8 == 0 or tH == H) so the block's
    second-to-last dim obeys the (8, 128) tiling rule; tc divides C. The budget
    tc*tH*W <= _TILE_ELEM_BUDGET keeps per-step VMEM (double-buffered input +
    output blocks + temporaries) around ~8 MiB."""
    budget = max(1, _TILE_ELEM_BUDGET // max(W, 1))
    if H <= budget:
        tH = H
    else:
        tH = _largest_divisor(H, budget, multiple_of=8) or H
    tc = _largest_divisor(C, max(1, budget // tH)) or 1
    return tc, tH


# ----------------------------------------------------------------------------
# Fused single-pass kernel (preferred).
# ----------------------------------------------------------------------------
def _iwt_fused_kernel(x_ref, h_ref):
    # x_ref: (1, 4, tc, tH, W)   h_ref: (1, tc, tH, 4*W)
    half = jnp.float32(0.5)
    x1 = x_ref[0, 0] * half          # per-band ref slices: no full-block load
    x2 = x_ref[0, 1] * half
    x3 = x_ref[0, 2] * half
    x4 = x_ref[0, 3] * half
    d12 = x1 - x2                    # Haar butterfly: 8 adds instead of 12
    s12 = x1 + x2
    d34 = x3 - x4
    s34 = x3 + x4
    a = d12 - d34                    # -> h[2i,   2j]
    b = d12 + d34                    # -> h[2i+1, 2j]
    c = s12 - s34                    # -> h[2i,   2j+1]
    d = s12 + s34                    # -> h[2i+1, 2j+1]
    tc_, th_, w_ = a.shape
    # Column interleave done in VMEM / vregs (XLU work, no extra HBM pass):
    even = jnp.stack([a, c], axis=-1).reshape(tc_, th_, 2 * w_)   # output row 2i
    odd = jnp.stack([b, d], axis=-1).reshape(tc_, th_, 2 * w_)    # output row 2i+1
    # Block's last dim holds [even output row | odd output row] = 4W lanes.
    h_ref[0] = jnp.concatenate([even, odd], axis=-1)


@functools.partial(jax.jit, static_argnums=(1, 2))
def _iwt_fused(x, tc, tH):
    B, C4, H, W = x.shape
    C = C4 // 4
    # Free reshape (splits the contiguous channel dim) so each band has its own index.
    xb = x.astype(jnp.float32).reshape(B, 4, C, H, W)
    out = pl.pallas_call(
        _iwt_fused_kernel,
        out_shape=jax.ShapeDtypeStruct((B, C, H, 4 * W), jnp.float32),
        grid_spec=pltpu.PrefetchScalarGridSpec(
            num_scalar_prefetch=0,
            grid=(B, C // tc, H // tH),
            in_specs=[pl.BlockSpec((1, 4, tc, tH, W),
                                   lambda b, cc, hh: (b, 0, cc, hh, 0))],
            out_specs=pl.BlockSpec((1, tc, tH, 4 * W),
                                   lambda b, cc, hh: (b, cc, hh, 0)),
        ),
        compiler_params=pltpu.CompilerParams(
            dimension_semantics=("parallel", "parallel", "parallel"),
            vmem_limit_bytes=_VMEM_LIMIT_BYTES),
    )(xb)
    # Row-major layouts of (B,C,H,4W) and (B,C,2H,2W) are identical
    # ((2i+p)*2W + 2j+q == i*4W + p*2W + 2j+q), so this reshape is free.
    return out.reshape(B, C, 2 * H, 2 * W)


# ----------------------------------------------------------------------------
# Two-pass fallback (kernel computes the 4 sub-band planes, XLA interleaves).
# ----------------------------------------------------------------------------
def _iwt_planes_kernel(x_ref, a_ref, b_ref, c_ref, d_ref):
    # x_ref: (1, 4, tc, tH, W)   each out ref: (1, tc, tH, W)
    half = jnp.float32(0.5)
    x1 = x_ref[0, 0] * half
    x2 = x_ref[0, 1] * half
    x3 = x_ref[0, 2] * half
    x4 = x_ref[0, 3] * half
    d12 = x1 - x2
    s12 = x1 + x2
    d34 = x3 - x4
    s34 = x3 + x4
    a_ref[0] = d12 - d34      # -> h[0::2, 0::2]
    b_ref[0] = d12 + d34      # -> h[1::2, 0::2]
    c_ref[0] = s12 - s34      # -> h[0::2, 1::2]
    d_ref[0] = s12 + s34      # -> h[1::2, 1::2]


@functools.partial(jax.jit, static_argnums=(1, 2))
def _iwt_planes(x, tc, tH):
    B, C4, H, W = x.shape
    C = C4 // 4
    xb = x.astype(jnp.float32).reshape(B, 4, C, H, W)
    plane = jax.ShapeDtypeStruct((B, C, H, W), jnp.float32)
    out_spec = pl.BlockSpec((1, tc, tH, W), lambda b, cc, hh: (b, cc, hh, 0))
    pa, pb, pc, pd = pl.pallas_call(
        _iwt_planes_kernel,
        out_shape=(plane, plane, plane, plane),
        grid_spec=pltpu.PrefetchScalarGridSpec(
            num_scalar_prefetch=0,
            grid=(B, C // tc, H // tH),
            in_specs=[pl.BlockSpec((1, 4, tc, tH, W),
                                   lambda b, cc, hh: (b, 0, cc, hh, 0))],
            out_specs=(out_spec, out_spec, out_spec, out_spec),
        ),
        compiler_params=pltpu.CompilerParams(
            dimension_semantics=("parallel", "parallel", "parallel"),
            vmem_limit_bytes=_VMEM_LIMIT_BYTES),
    )(xb)
    h6 = jnp.stack([jnp.stack([pa, pc], axis=-1),
                    jnp.stack([pb, pd], axis=-1)], axis=3)   # (B, C, H, 2, W, 2)
    return h6.reshape(B, C, 2 * H, 2 * W)


# ----------------------------------------------------------------------------
# Public entry point (matches IWT.forward / iwt_init semantics).
# ----------------------------------------------------------------------------
_IMPL_CACHE = {}


def iwt(x):
    """Inverse Haar wavelet transform: (B, 4C, H, W) -> (B, C, 2H, 2W), float32."""
    B, C4, H, W = x.shape
    assert C4 % 4 == 0, "input channels must be divisible by 4"
    C = C4 // 4
    tc, tH = _pick_tiles(C, H, W)
    key = (B, C, H, W)
    if key not in _IMPL_CACHE:
        try:
            out = jax.block_until_ready(_iwt_fused(x, tc, tH))
            _IMPL_CACHE[key] = "fused"
            return out
        except Exception:
            # In-kernel lane interleave did not lower on this backend; use the
            # previously validated two-pass variant instead.
            _IMPL_CACHE[key] = "planes"
    if _IMPL_CACHE[key] == "fused":
        return _iwt_fused(x, tc, tH)
    return _iwt_planes(x, tc, tH)


def iwt_reference(x):
    """Pure-JAX reference mirroring the PyTorch iwt_init semantics."""
    B, C4, H, W = x.shape
    C = C4 // 4
    x = x.astype(jnp.float32)
    x1 = x[:, 0 * C:1 * C] / 2
    x2 = x[:, 1 * C:2 * C] / 2
    x3 = x[:, 2 * C:3 * C] / 2
    x4 = x[:, 3 * C:4 * C] / 2
    h = jnp.zeros((B, C, 2 * H, 2 * W), jnp.float32)
    h = h.at[:, :, 0::2, 0::2].set(x1 - x2 - x3 + x4)
    h = h.at[:, :, 1::2, 0::2].set(x1 - x2 + x3 - x4)
    h = h.at[:, :, 0::2, 1::2].set(x1 + x2 - x3 - x4)
    h = h.at[:, :, 1::2, 1::2].set(x1 + x2 + x3 + x4)
    return h


if __name__ == "__main__":
    # IWT has no learnable parameters; only the input needs to be built.
    key = jax.random.PRNGKey(0)
    B, C_out, H, W = 2, 4, 16, 16          # module input channels = 4 * C_out = 16
    x = jax.random.normal(key, (B, 4 * C_out, H, W), dtype=jnp.float32)

    out = iwt(x)
    out = jax.block_until_ready(out)

    ref = iwt_reference(x)
    assert out.shape == (B, C_out, 2 * H, 2 * W), out.shape
    assert out.dtype == jnp.float32
    assert jnp.allclose(out, ref, atol=1e-6, rtol=1e-6), "mismatch vs reference"

    print("KERNEL_OK")
</pallas_src>

<mosaic_0001>
module attributes {stable_mosaic.version = 11 : i64} {
  func.func @_iwt_fused_kernel(%arg0: i32, %arg1: i32, %arg2: i32, %arg3: memref<1x4x4x16x16xf32, #tpu.memory_space<vmem>>, %arg4: memref<1x4x16x64xf32, #tpu.memory_space<vmem>>) attributes {dimension_semantics = [#tpu.dimension_semantics<parallel>, #tpu.dimension_semantics<parallel>, #tpu.dimension_semantics<parallel>], iteration_bounds = array<i64: 2, 1, 1>, scalar_prefetch = 0 : i64, scratch_operands = 0 : i64, tpu.core_type = #tpu.core_type<tc>, window_params = [{transform_indices = @transform_0, window_bounds = array<i64: 1, 4, 4, 16, 16>}, {transform_indices = @transform_1, window_bounds = array<i64: 1, 4, 16, 64>}]} {
    %c0 = arith.constant 0 : index
    %c0_0 = arith.constant 0 : index
    %c0_1 = arith.constant 0 : index
    %c0_2 = arith.constant 0 : index
    %c0_3 = arith.constant 0 : index
    %0 = vector.load %arg3[%c0, %c0_0, %c0_1, %c0_2, %c0_3] : memref<1x4x4x16x16xf32, #tpu.memory_space<vmem>>, vector<1x1x4x16x16xf32>
    %1 = vector.shape_cast %0 : vector<1x1x4x16x16xf32> to vector<4x16x16xf32>
    %cst = arith.constant 5.000000e-01 : f32
    %2 = vector.broadcast %cst : f32 to vector<4x16x16xf32>
    %3 = arith.mulf %1, %2 : vector<4x16x16xf32>
    %c0_4 = arith.constant 0 : index
    %c1 = arith.constant 1 : index
    %c0_5 = arith.constant 0 : index
    %c0_6 = arith.constant 0 : index
    %c0_7 = arith.constant 0 : index
    %4 = vector.load %arg3[%c0_4, %c1, %c0_5, %c0_6, %c0_7] : memref<1x4x4x16x16xf32, #tpu.memory_space<vmem>>, vector<1x1x4x16x16xf32>
    %5 = vector.shape_cast %4 : vector<1x1x4x16x16xf32> to vector<4x16x16xf32>
    %cst_8 = arith.constant 5.000000e-01 : f32
    %6 = vector.broadcast %cst_8 : f32 to vector<4x16x16xf32>
    %7 = arith.mulf %5, %6 : vector<4x16x16xf32>
    %c0_9 = arith.constant 0 : index
    %c2 = arith.constant 2 : index
    %c0_10 = arith.constant 0 : index
    %c0_11 = arith.constant 0 : index
    %c0_12 = arith.constant 0 : index
    %8 = vector.load %arg3[%c0_9, %c2, %c0_10, %c0_11, %c0_12] : memref<1x4x4x16x16xf32, #tpu.memory_space<vmem>>, vector<1x1x4x16x16xf32>
    %9 = vector.shape_cast %8 : vector<1x1x4x16x16xf32> to vector<4x16x16xf32>
    %cst_13 = arith.constant 5.000000e-01 : f32
    %10 = vector.broadcast %cst_13 : f32 to vector<4x16x16xf32>
    %11 = arith.mulf %9, %10 : vector<4x16x16xf32>
    %c0_14 = arith.constant 0 : index
    %c3 = arith.constant 3 : index
    %c0_15 = arith.constant 0 : index
    %c0_16 = arith.constant 0 : index
    %c0_17 = arith.constant 0 : index
    %12 = vector.load %arg3[%c0_14, %c3, %c0_15, %c0_16, %c0_17] : memref<1x4x4x16x16xf32, #tpu.memory_space<vmem>>, vector<1x1x4x16x16xf32>
    %13 = vector.shape_cast %12 : vector<1x1x4x16x16xf32> to vector<4x16x16xf32>
    %cst_18 = arith.constant 5.000000e-01 : f32
    %14 = vector.broadcast %cst_18 : f32 to vector<4x16x16xf32>
    %15 = arith.mulf %13, %14 : vector<4x16x16xf32>
    %16 = arith.subf %3, %7 : vector<4x16x16xf32>
    %17 = arith.addf %3, %7 : vector<4x16x16xf32>
    %18 = arith.subf %11, %15 : vector<4x16x16xf32>
    %19 = arith.addf %11, %15 : vector<4x16x16xf32>
    %20 = arith.subf %16, %18 : vector<4x16x16xf32>
    %21 = arith.addf %16, %18 : vector<4x16x16xf32>
    %22 = arith.subf %17, %19 : vector<4x16x16xf32>
    %23 = arith.addf %17, %19 : vector<4x16x16xf32>
    %24 = vector.shape_cast %20 : vector<4x16x16xf32> to vector<4x16x16x1xf32>
    %25 = vector.shape_cast %22 : vector<4x16x16xf32> to vector<4x16x16x1xf32>
    %26 = tpu.concatenate %24, %25 in 3 : vector<4x16x16x1xf32>, vector<4x16x16x1xf32> -> vector<4x16x16x2xf32>
    %27 = vector.shape_cast %26 : vector<4x16x16x2xf32> to vector<4x16x32xf32>
    %28 = vector.shape_cast %21 : vector<4x16x16xf32> to vector<4x16x16x1xf32>
    %29 = vector.shape_cast %23 : vector<4x16x16xf32> to vector<4x16x16x1xf32>
    %30 = tpu.concatenate %28, %29 in 3 : vector<4x16x16x1xf32>, vector<4x16x16x1xf32> -> vector<4x16x16x2xf32>
    %31 = vector.shape_cast %30 : vector<4x16x16x2xf32> to vector<4x16x32xf32>
    %32 = tpu.concatenate %27, %31 in 2 : vector<4x16x32xf32>, vector<4x16x32xf32> -> vector<4x16x64xf32>
    %c0_19 = arith.constant 0 : index
    %c0_20 = arith.constant 0 : index
    %c0_21 = arith.constant 0 : index
    %c0_22 = arith.constant 0 : index
    %33 = vector.load %arg4[%c0_19, %c0_20, %c0_21, %c0_22] : memref<1x4x16x64xf32, #tpu.memory_space<vmem>>, vector<1x4x16x64xf32>
    %34 = vector.shape_cast %33 : vector<1x4x16x64xf32> to vector<4x16x64xf32>
    %35 = vector.shape_cast %32 : vector<4x16x64xf32> to vector<1x4x16x64xf32>
    tpu.vector_store %arg4[%c0_19, %c0_20, %c0_21, %c0_22], %35 {strides = array<i32>} : memref<1x4x16x64xf32, #tpu.memory_space<vmem>>, vector<1x4x16x64xf32>,
    return
  }
  func.func @transform_0(%arg0: i32, %arg1: i32, %arg2: i32) -> (i32, i32, i32, i32, i32) {
    %c0_i32 = arith.constant 0 : i32
    %c0_i32_0 = arith.constant 0 : i32
    %c0_i32_1 = arith.constant 0 : i32
    return %arg0, %c0_i32, %arg1, %arg2, %c0_i32_0 : i32, i32, i32, i32, i32
  }
  func.func @transform_1(%arg0: i32, %arg1: i32, %arg2: i32) -> (i32, i32, i32, i32) {
    %c0_i32 = arith.constant 0 : i32
    %c0_i32_0 = arith.constant 0 : i32
    return %arg0, %arg1, %arg2, %c0_i32 : i32, i32, i32, i32
  }
}

module attributes {stable_mosaic.version = 11 : i64} {
  func.func @_iwt_planes_kernel(%arg0: i32, %arg1: i32, %arg2: i32, %arg3: memref<1x4x4x16x16xf32, #tpu.memory_space<vmem>>, %arg4: memref<1x4x16x16xf32, #tpu.memory_space<vmem>>, %arg5: memref<1x4x16x16xf32, #tpu.memory_space<vmem>>, %arg6: memref<1x4x16x16xf32, #tpu.memory_space<vmem>>, %arg7: memref<1x4x16x16xf32, #tpu.memory_space<vmem>>) attributes {dimension_semantics = [#tpu.dimension_semantics<parallel>, #tpu.dimension_semantics<parallel>, #tpu.dimension_semantics<parallel>], iteration_bounds = array<i64: 2, 1, 1>, scalar_prefetch = 0 : i64, scratch_operands = 0 : i64, tpu.core_type = #tpu.core_type<tc>, window_params = [{transform_indices = @transform_0, window_bounds = array<i64: 1, 4, 4, 16, 16>}, {transform_indices = @transform_1, window_bounds = array<i64: 1, 4, 16, 16>}, {transform_indices = @transform_2, window_bounds = array<i64: 1, 4, 16, 16>}, {transform_indices = @transform_3, window_bounds = array<i64: 1, 4, 16, 16>}, {transform_indices = @transform_4, window_bounds = array<i64: 1, 4, 16, 16>}]} {
    %c0 = arith.constant 0 : index
    %c0_0 = arith.constant 0 : index
    %c0_1 = arith.constant 0 : index
    %c0_2 = arith.constant 0 : index
    %c0_3 = arith.constant 0 : index
    %0 = vector.load %arg3[%c0, %c0_0, %c0_1, %c0_2, %c0_3] : memref<1x4x4x16x16xf32, #tpu.memory_space<vmem>>, vector<1x1x4x16x16xf32>
    %1 = vector.shape_cast %0 : vector<1x1x4x16x16xf32> to vector<4x16x16xf32>
    %cst = arith.constant 5.000000e-01 : f32
    %2 = vector.broadcast %cst : f32 to vector<4x16x16xf32>
    %3 = arith.mulf %1, %2 : vector<4x16x16xf32>
    %c0_4 = arith.constant 0 : index
    %c1 = arith.constant 1 : index
    %c0_5 = arith.constant 0 : index
    %c0_6 = arith.constant 0 : index
    %c0_7 = arith.constant 0 : index
    %4 = vector.load %arg3[%c0_4, %c1, %c0_5, %c0_6, %c0_7] : memref<1x4x4x16x16xf32, #tpu.memory_space<vmem>>, vector<1x1x4x16x16xf32>
    %5 = vector.shape_cast %4 : vector<1x1x4x16x16xf32> to vector<4x16x16xf32>
    %cst_8 = arith.constant 5.000000e-01 : f32
    %6 = vector.broadcast %cst_8 : f32 to vector<4x16x16xf32>
    %7 = arith.mulf %5, %6 : vector<4x16x16xf32>
    %c0_9 = arith.constant 0 : index
    %c2 = arith.constant 2 : index
    %c0_10 = arith.constant 0 : index
    %c0_11 = arith.constant 0 : index
    %c0_12 = arith.constant 0 : index
    %8 = vector.load %arg3[%c0_9, %c2, %c0_10, %c0_11, %c0_12] : memref<1x4x4x16x16xf32, #tpu.memory_space<vmem>>, vector<1x1x4x16x16xf32>
    %9 = vector.shape_cast %8 : vector<1x1x4x16x16xf32> to vector<4x16x16xf32>
    %cst_13 = arith.constant 5.000000e-01 : f32
    %10 = vector.broadcast %cst_13 : f32 to vector<4x16x16xf32>
    %11 = arith.mulf %9, %10 : vector<4x16x16xf32>
    %c0_14 = arith.constant 0 : index
    %c3 = arith.constant 3 : index
    %c0_15 = arith.constant 0 : index
    %c0_16 = arith.constant 0 : index
    %c0_17 = arith.constant 0 : index
    %12 = vector.load %arg3[%c0_14, %c3, %c0_15, %c0_16, %c0_17] : memref<1x4x4x16x16xf32, #tpu.memory_space<vmem>>, vector<1x1x4x16x16xf32>
    %13 = vector.shape_cast %12 : vector<1x1x4x16x16xf32> to vector<4x16x16xf32>
    %cst_18 = arith.constant 5.000000e-01 : f32
    %14 = vector.broadcast %cst_18 : f32 to vector<4x16x16xf32>
    %15 = arith.mulf %13, %14 : vector<4x16x16xf32>
    %16 = arith.subf %3, %7 : vector<4x16x16xf32>
    %17 = arith.addf %3, %7 : vector<4x16x16xf32>
    %18 = arith.subf %11, %15 : vector<4x16x16xf32>
    %19 = arith.addf %11, %15 : vector<4x16x16xf32>
    %20 = arith.subf %16, %18 : vector<4x16x16xf32>
    %c0_19 = arith.constant 0 : index
    %c0_20 = arith.constant 0 : index
    %c0_21 = arith.constant 0 : index
    %c0_22 = arith.constant 0 : index
    %21 = vector.load %arg4[%c0_19, %c0_20, %c0_21, %c0_22] : memref<1x4x16x16xf32, #tpu.memory_space<vmem>>, vector<1x4x16x16xf32>
    %22 = vector.shape_cast %21 : vector<1x4x16x16xf32> to vector<4x16x16xf32>
    %23 = vector.shape_cast %20 : vector<4x16x16xf32> to vector<1x4x16x16xf32>
    tpu.vector_store %arg4[%c0_19, %c0_20, %c0_21, %c0_22], %23 {strides = array<i32>} : memref<1x4x16x16xf32, #tpu.memory_space<vmem>>, vector<1x4x16x16xf32>,
    %24 = arith.addf %16, %18 : vector<4x16x16xf32>
    %c0_23 = arith.constant 0 : index
    %c0_24 = arith.constant 0 : index
    %c0_25 = arith.constant 0 : index
    %c0_26 = arith.constant 0 : index
    %25 = vector.load %arg5[%c0_23, %c0_24, %c0_25, %c0_26] : memref<1x4x16x16xf32, #tpu.memory_space<vmem>>, vector<1x4x16x16xf32>
    %26 = vector.shape_cast %25 : vector<1x4x16x16xf32> to vector<4x16x16xf32>
    %27 = vector.shape_cast %24 : vector<4x16x16xf32> to vector<1x4x16x16xf32>
    tpu.vector_store %arg5[%c0_23, %c0_24, %c0_25, %c0_26], %27 {strides = array<i32>} : memref<1x4x16x16xf32, #tpu.memory_space<vmem>>, vector<1x4x16x16xf32>,
    %28 = arith.subf %17, %19 : vector<4x16x16xf32>
    %c0_27 = arith.constant 0 : index
    %c0_28 = arith.constant 0 : index
    %c0_29 = arith.constant 0 : index
    %c0_30 = arith.constant 0 : index
    %29 = vector.load %arg6[%c0_27, %c0_28, %c0_29, %c0_30] : memref<1x4x16x16xf32, #tpu.memory_space<vmem>>, vector<1x4x16x16xf32>
    %30 = vector.shape_cast %29 : vector<1x4x16x16xf32> to vector<4x16x16xf32>
    %31 = vector.shape_cast %28 : vector<4x16x16xf32> to vector<1x4x16x16xf32>
    tpu.vector_store %arg6[%c0_27, %c0_28, %c0_29, %c0_30], %31 {strides = array<i32>} : memref<1x4x16x16xf32, #tpu.memory_space<vmem>>, vector<1x4x16x16xf32>,
    %32 = arith.addf %17, %19 : vector<4x16x16xf32>
    %c0_31 = arith.constant 0 : index
    %c0_32 = arith.constant 0 : index
    %c0_33 = arith.constant 0 : index
    %c0_34 = arith.constant 0 : index
    %33 = vector.load %arg7[%c0_31, %c0_32, %c0_33, %c0_34] : memref<1x4x16x16xf32, #tpu.memory_space<vmem>>, vector<1x4x16x16xf32>
    %34 = vector.shape_cast %33 : vector<1x4x16x16xf32> to vector<4x16x16xf32>
    %35 = vector.shape_cast %32 : vector<4x16x16xf32> to vector<1x4x16x16xf32>
    tpu.vector_store %arg7[%c0_31, %c0_32, %c0_33, %c0_34], %35 {strides = array<i32>} : memref<1x4x16x16xf32, #tpu.memory_space<vmem>>, vector<1x4x16x16xf32>,
    return
  }
  func.func @transform_0(%arg0: i32, %arg1: i32, %arg2: i32) -> (i32, i32, i32, i32, i32) {
    %c0_i32 = arith.constant 0 : i32
    %c0_i32_0 = arith.constant 0 : i32
    %c0_i32_1 = arith.constant 0 : i32
    return %arg0, %c0_i32, %arg1, %arg2, %c0_i32_0 : i32, i32, i32, i32, i32
  }
  func.func @transform_1(%arg0: i32, %arg1: i32, %arg2: i32) -> (i32, i32, i32, i32) {
    %c0_i32 = arith.constant 0 : i32
    %c0_i32_0 = arith.constant 0 : i32
    return %arg0, %arg1, %arg2, %c0_i32 : i32, i32, i32, i32
  }
  func.func @transform_2(%arg0: i32, %arg1: i32, %arg2: i32) -> (i32, i32, i32, i32) {
    %c0_i32 = arith.constant 0 : i32
    %c0_i32_0 = arith.constant 0 : i32
    return %arg0, %arg1, %arg2, %c0_i32 : i32, i32, i32, i32
  }
  func.func @transform_3(%arg0: i32, %arg1: i32, %arg2: i32) -> (i32, i32, i32, i32) {
    %c0_i32 = arith.constant 0 : i32
    %c0_i32_0 = arith.constant 0 : i32
    return %arg0, %arg1, %arg2, %c0_i32 : i32, i32, i32, i32
  }
  func.func @transform_4(%arg0: i32, %arg1: i32, %arg2: i32) -> (i32, i32, i32, i32) {
    %c0_i32 = arith.constant 0 : i32
    %c0_i32_0 = arith.constant 0 : i32
    return %arg0, %arg1, %arg2, %c0_i32 : i32, i32, i32, i32
  }
}

</mosaic_0001>

<llo_original>
// kernel: _iwt_fused.1
$region0: #{_iwt_fused.1}
  #allocation0 [shape = 'u32[]', space=smem, size = 0x4, offset = 0x4, fixed_abs, tag = 'smem constant byte address 0x4 - core index']
  #allocation1 [shape = 'u32[72,128]{1,0:T(1,128)}', space=vmem, size = 0x9000, scoped, tag = 'internal scratch']
  %s0 = inlined_call_operand.hbm [shape: f32[2,4,4,16,16], index: 0, kind: input, shape index: {}]
  %s1 = inlined_call_operand.vmem [shape: f32[2,4,16,64], index: 1, kind: output, shape index: {}]
  %s2 = sld [smem:[#allocation0]]
  $region41: #{_iwt_fused.1} parent=0
    _
  %s4 = ssub.s32 1, %s2
  %s5 = scalar_select 0, %s4, %s2
  $region1: #{_iwt_fused.1} parent=0
    #allocation2 [shape = 'u8[262144]{0}', space=vmem, size = 0x40000, scoped, tag = 'input window, operand 0']
    #allocation3 [shape = 's32[2]{0}', space=sflag, size = 0x8, scoped, tag = 'scoped memory for _iwt_fused.1']
    %6 = vsyncpa [#allocation3], 0
    %s7 = scalar_lea.sflag [#allocation3], 1
    %8 = vsyncpa %s7, 0
    loop: start=0, step=1, limit=4
    $region2: #{_iwt_fused.1} parent=1 // loop_pre_header
      _
    $region3: #{_iwt_fused.1} parent=1 // loop_header
      %s10 = sphi 0, %s14
      %p11 = scmp.ge.s32.totalorder %s10, 4
      %s17 = sphi 0, %s36
      %s18 = sphi 0, %s32
      %s19 = sphi 0, %s28
      %s20 = sphi 0, %s17
      %s21 = sphi 0, %s18
      %s22 = sphi 0, %s19
      %s23 = sphi 0, %s20
      %s24 = sphi 0, %s21
      %s25 = sphi 0, %s22
      %s43 = sphi 0, %s45
      %s46 = sphi 0, %s43
      %s47 = sphi 0, %s46
      %s63 = sphi 0, %s47
      %s73 = sphi 0, %s75
      %s76 = sphi 0, %s73
      %s77 = sphi 0, %s76
      %s93 = sphi 0, %s77
    $region4: #{_iwt_fused.1} parent=1 // loop_header_branch
      %13 = sbr.rel (%p11) target = $region8
    $region5: #{_iwt_fused.1} parent=1 // loop_body
      %s15 = ssub.s32 %s10, 1
      %s16 = ssub.s32 %s10, 2
      %s26 = sadd.s32 1, %s19
      %p27 = scmp.ge.s32.totalorder %s26, 1
      %s28 = scalar_select %p27, 0, %s26
      %s29 = sadd.s32 1, %s18
      %s30 = scalar_select %p27, %s29, %s18
      %p31 = scmp.ge.s32.totalorder %s30, 1
      %s32 = scalar_select %p31, 0, %s30
      %s33 = sadd.s32 1, %s17
      %s34 = scalar_select %p31, %s33, %s17
      %p35 = scmp.ge.s32.totalorder %s34, 2
      %s36 = scalar_select %p35, 0, %s34
      %s37 = ssub.s32 %s17, %s36
      %s38 = ssub.s32 %s18, %s32
      %s39 = sor.u32 %s37, %s38
      %s40 = ssub.s32 %s19, %s28
      %s41 = sor.u32 %s39, %s40
      %p42 = scmp.eq.s32.totalorder %s41, 0
      %s44 = sadd.s32 %s43, 1
      %s45 = scalar_select %p42, %s43, %s44
      %p48 = pneg %p42
      %p49 = scmp.eq.s32.totalorder %s10, 1
      %p50 = por %p48, %p49
      %p51 = scmp.ne.s32.totalorder %s43, %s46
      %p52 = scmp.eq.s32.totalorder %s10, 0
      %p53 = por %p51, %p52
      %p54 = scmp.ne.s32.totalorder %s43, %s46
      %p55 = scmp.eq.s32.totalorder %s15, 1
      %p56 = por %p54, %p55
      %p57 = scmp.ne.s32.totalorder %s46, %s47
      %p58 = scmp.eq.s32.totalorder %s15, 0
      %p59 = por %p57, %p58
      %p60 = scmp.ne.s32.totalorder %s46, %s47
      %p61 = scmp.eq.s32.totalorder %s16, 1
      %p62 = por %p60, %p61
      %p64 = scmp.ne.s32.totalorder %s47, %s63
      %p65 = scmp.eq.s32.totalorder %s16, 0
      %p66 = por %p64, %p65
      %s67 = ssub.s32 %s17, %s36
      %s68 = ssub.s32 %s18, %s32
      %s69 = sor.u32 %s67, %s68
      %s70 = ssub.s32 %s19, %s28
      %s71 = sor.u32 %s69, %s70
      %p72 = scmp.eq.s32.totalorder %s71, 0
      %s74 = sadd.s32 %s73, 1
      %s75 = scalar_select %p72, %s73, %s74
      %p78 = pneg %p72
      %p79 = scmp.eq.s32.totalorder %s10, 1
      %p80 = por %p78, %p79
      %p81 = scmp.ne.s32.totalorder %s73, %s76
      %p82 = scmp.eq.s32.totalorder %s10, 0
      %p83 = por %p81, %p82
      %p84 = scmp.ne.s32.totalorder %s73, %s76
      %p85 = scmp.eq.s32.totalorder %s15, 1
      %p86 = por %p84, %p85
      %p87 = scmp.ne.s32.totalorder %s76, %s77
      %p88 = scmp.eq.s32.totalorder %s15, 0
      %p89 = por %p87, %p88
      %p90 = scmp.ne.s32.totalorder %s76, %s77
      %p91 = scmp.eq.s32.totalorder %s16, 1
      %p92 = por %p90, %p91
      %p94 = scmp.ne.s32.totalorder %s77, %s93
      %p95 = scmp.eq.s32.totalorder %s16, 0
      %p96 = por %p94, %p95
      %p97 = scmp.le.s32.totalorder 1, %s10
      %p98 = scmp.lt.s32.totalorder %s10, 3
      %p99 = pnand %p97, %p98
      %p100 = pneg %p99
      // Predicated region
      $region9: #{_iwt_fused.1} parent=5 // pred_check
        _
      $region10: #{_iwt_fused.1} parent=5 // pred_check_branch
        %102 = sbr.rel (%p99) target = $region12
      $region11: #{_iwt_fused.1} parent=5 // pred_region
        %s103 = ssub.s32 %s10, 1
      $region12: #{_iwt_fused.1} parent=5 // pred_fallthru
        _
      %p104 = scmp.lt.s32.totalorder %s10, 2
      // Predicated region
      $region13: #{_iwt_fused.1} parent=5 // pred_check
        %p105 = pneg %p104
      $region14: #{_iwt_fused.1} parent=5 // pred_check_branch
        %107 = sbr.rel (%p105) target = $region16
      $region15: #{_iwt_fused.1} parent=5 // pred_region
        // Predicated region
        $region17: #{_iwt_fused.1} parent=15 // pred_check
          %p108 = pneg %p53
        $region18: #{_iwt_fused.1} parent=15 // pred_check_branch
          %110 = sbr.rel (%p108) target = $region20
        $region19: #{_iwt_fused.1} parent=15 // pred_region
          %s111 = sand.u32 %s43, 1
          %s112 = scalar_lea.sflag [#allocation3], %s111
          %s113 = sand.u32 %s43, 1
          %s114 = smul.addr %s113, 256
          %s115 = scalar_lea.vmem [#allocation2], %s114
          %s116 = smul.u32 4, %s18
          %s117 = smul.u32 2, %s19
          %119 = vsyncadd %s112, 0
          %s120 = smul.addr %s116, 2
          %s121 = sadd.s32 %s117, %s120
          %s122 = smul.addr %s17, 32
          %s123 = sadd.s32 %s121, %s122
          %s124 = smul.addr %s123, 8
          %s125 = scalar_lea.hbm %s0, %s124
          %s126 = sshll.u32 %s125, 4
          %s127 = int_to_ptr.hbm [resolvable:$true] %s126
          %s128 = sshll.u32 %s115, 4
          %s129 = int_to_ptr.vmem [resolvable:$true] %s128
          %134 = dma.hbm_to_vmem [thread:$0]  %s127, 4096, %s129, %s112, 128, 128, 8
        $region20: #{_iwt_fused.1} parent=15 // pred_fallthru
          _
      $region16: #{_iwt_fused.1} parent=5 // pred_fallthru
        _
      %p135 = scmp.le.s32.totalorder 1, %s10
      %p136 = scmp.lt.s32.totalorder %s10, 3
      %p137 = pnand %p135, %p136
      %p138 = pneg %p137
      // Predicated region
      $region21: #{_iwt_fused.1} parent=5 // pred_check
        _
      $region22: #{_iwt_fused.1} parent=5 // pred_check_branch
        %140 = sbr.rel (%p137) target = $region24
      $region23: #{_iwt_fused.1} parent=5 // pred_region
        %s141 = ssub.s32 %s10, 1
        %s142 = sand.u32 %s46, 1
        %s143 = scalar_lea.sflag [#allocation3], %s142
        %s144 = sand.u32 %s46, 1
        %s145 = smul.addr %s144, 256
        %s146 = scalar_lea.vmem [#allocation2], %s145
        // Predicated region
        $region25: #{_iwt_fused.1} parent=23 // pred_check
          %p147 = pneg %p59
        $region26: #{_iwt_fused.1} parent=23 // pred_check_branch
          %149 = sbr.rel (%p147) target = $region28
        $region27: #{_iwt_fused.1} parent=23 // pred_region
          %151 = dma.done %s143, 4096
        $region28: #{_iwt_fused.1} parent=23 // pred_fallthru
          _
        %s152 = sand.u32 %s46, 1
        %s153 = scalar_lea.sflag [#allocation3], %s152
        %s154 = sand.u32 %s46, 1
        %s155 = smul.addr %s154, 256
        %s156 = scalar_lea.vmem [#allocation2], %s155
        %p157 = pneg %p59
        %p158 = pneg %p56
        %p159 = pneg %p89
        %p160 = pneg %p86
        %s161 = smul.u32 4, %s21
        %s162 = smul.u32 2, %s22
        %p163 = scmp.lt.s32.totalorder %s20, 1
        %s164 = scalar_select %p163, %s20, 1
        %p165 = scmp.lt.s32.totalorder %s161, 3
        %s166 = scalar_select %p165, %s161, 3
        %p167 = scmp.lt.s32.totalorder %s162, 1
        %s168 = scalar_select %p167, %s162, 1
        %s169 = smul.addr %s166, 2
        %s170 = sadd.s32 %s168, %s169
        %s171 = smul.addr %s164, 8
        %s172 = sadd.s32 %s170, %s171
        %s173 = smul.addr %s172, 8
        %s174 = scalar_lea.vmem %s1, %s173
        %s175 = smul.u32 4, %s21
        %s176 = smul.u32 2, %s22
        %s177 = smul.u32 4, %s21
        %s178 = smul.u32 2, %s22
        %p179 = scmp.lt.s32.totalorder %s20, 1
        %s180 = scalar_select %p179, %s20, 1
        %p181 = scmp.lt.s32.totalorder %s177, 3
        %s182 = scalar_select %p181, %s177, 3
        %p183 = scmp.lt.s32.totalorder %s178, 1
        %s184 = scalar_select %p183, %s178, 1
        %s185 = smul.addr %s182, 2
        %s186 = sadd.s32 %s184, %s185
        %s187 = smul.addr %s180, 8
        %s188 = sadd.s32 %s186, %s187
        %s189 = smul.addr %s188, 8
        %s190 = scalar_lea.vmem %s1, %s189
        %s191 = smul.u32 4, %s21
        %s192 = smul.u32 2, %s22
        %v193 = vld [vmem:[%s146] sm:$0xff]
        %v194 = vld [vmem:[%s146 + $0x8] sm:$0xff]
        %v195 = vld [vmem:[%s146 + $0x10] sm:$0xff]
        %v196 = vld [vmem:[%s146 + $0x18] sm:$0xff]
        %v197 = vld [vmem:[%s146 + $0x20] sm:$0xff]
        %v198 = vld [vmem:[%s146 + $0x28] sm:$0xff]
        %v199 = vld [vmem:[%s146 + $0x30] sm:$0xff]
        %v200 = vld [vmem:[%s146 + $0x38] sm:$0xff]
        %v201 = vmul.f32 %v193, 0.5
        %v202 = vmul.f32 %v194, 0.5
        %v203 = vmul.f32 %v195, 0.5
        %v204 = vmul.f32 %v196, 0.5
        %v205 = vmul.f32 %v197, 0.5
        %v206 = vmul.f32 %v198, 0.5
        %v207 = vmul.f32 %v199, 0.5
        %v208 = vmul.f32 %v200, 0.5
        %s209 = scalar_lea.vmem %s146, 64 [#allocation2]
        %v210 = vld [vmem:[%s209] sm:$0xff]
        %v211 = vld [vmem:[%s209 + $0x8] sm:$0xff]
        %v212 = vld [vmem:[%s209 + $0x10] sm:$0xff]
        %v213 = vld [vmem:[%s209 + $0x18] sm:$0xff]
        %v214 = vld [vmem:[%s209 + $0x20] sm:$0xff]
        %v215 = vld [vmem:[%s209 + $0x28] sm:$0xff]
        %v216 = vld [vmem:[%s209 + $0x30] sm:$0xff]
        %v217 = vld [vmem:[%s209 + $0x38] sm:$0xff]
        %v218 = vmul.f32 %v210, 0.5
        %v219 = vmul.f32 %v211, 0.5
        %v220 = vmul.f32 %v212, 0.5
        %v221 = vmul.f32 %v213, 0.5
        %v222 = vmul.f32 %v214, 0.5
        %v223 = vmul.f32 %v215, 0.5
        %v224 = vmul.f32 %v216, 0.5
        %v225 = vmul.f32 %v217, 0.5
        %s226 = scalar_lea.vmem %s146, 128 [#allocation2]
        %v227 = vld [vmem:[%s226] sm:$0xff]
        %v228 = vld [vmem:[%s226 + $0x8] sm:$0xff]
        %v229 = vld [vmem:[%s226 + $0x10] sm:$0xff]
        %v230 = vld [vmem:[%s226 + $0x18] sm:$0xff]
        %v231 = vld [vmem:[%s226 + $0x20] sm:$0xff]
        %v232 = vld [vmem:[%s226 + $0x28] sm:$0xff]
        %v233 = vld [vmem:[%s226 + $0x30] sm:$0xff]
        %v234 = vld [vmem:[%s226 + $0x38] sm:$0xff]
        %v235 = vmul.f32 %v227, 0.5
        %v236 = vmul.f32 %v228, 0.5
        %v237 = vmul.f32 %v229, 0.5
        %v238 = vmul.f32 %v230, 0.5
        %v239 = vmul.f32 %v231, 0.5
        %v240 = vmul.f32 %v232, 0.5
        %v241 = vmul.f32 %v233, 0.5
        %v242 = vmul.f32 %v234, 0.5
        %s243 = scalar_lea.vmem %s146, 192 [#allocation2]
        %v244 = vld [vmem:[%s243] sm:$0xff]
        %v245 = vld [vmem:[%s243 + $0x8] sm:$0xff]
        %v246 = vld [vmem:[%s243 + $0x10] sm:$0xff]
        %v247 = vld [vmem:[%s243 + $0x18] sm:$0xff]
        %v248 = vld [vmem:[%s243 + $0x20] sm:$0xff]
        %v249 = vld [vmem:[%s243 + $0x28] sm:$0xff]
        %v250 = vld [vmem:[%s243 + $0x30] sm:$0xff]
        %v251 = vld [vmem:[%s243 + $0x38] sm:$0xff]
        %v252 = vmul.f32 %v244, 0.5
        %v253 = vmul.f32 %v245, 0.5
        %v254 = vmul.f32 %v246, 0.5
        %v255 = vmul.f32 %v247, 0.5
        %v256 = vmul.f32 %v248, 0.5
        %v257 = vmul.f32 %v249, 0.5
        %v258 = vmul.f32 %v250, 0.5
        %v259 = vmul.f32 %v251, 0.5
        %v260 = vsub.f32 %v201, %v218
        %v261 = vsub.f32 %v202, %v219
        %v262 = vsub.f32 %v203, %v220
        %v263 = vsub.f32 %v204, %v221
        %v264 = vsub.f32 %v205, %v222
        %v265 = vsub.f32 %v206, %v223
        %v266 = vsub.f32 %v207, %v224
        %v267 = vsub.f32 %v208, %v225
        %v268 = vadd.f32 %v201, %v218
        %v269 = vadd.f32 %v202, %v219
        %v270 = vadd.f32 %v203, %v220
        %v271 = vadd.f32 %v204, %v221
        %v272 = vadd.f32 %v205, %v222
        %v273 = vadd.f32 %v206, %v223
        %v274 = vadd.f32 %v207, %v224
        %v275 = vadd.f32 %v208, %v225
        %v276 = vsub.f32 %v235, %v252
        %v277 = vsub.f32 %v236, %v253
        %v278 = vsub.f32 %v237, %v254
        %v279 = vsub.f32 %v238, %v255
        %v280 = vsub.f32 %v239, %v256
        %v281 = vsub.f32 %v240, %v257
        %v282 = vsub.f32 %v241, %v258
        %v283 = vsub.f32 %v242, %v259
        %v284 = vadd.f32 %v235, %v252
        %v285 = vadd.f32 %v236, %v253
        %v286 = vadd.f32 %v237, %v254
        %v287 = vadd.f32 %v238, %v255
        %v288 = vadd.f32 %v239, %v256
        %v289 = vadd.f32 %v240, %v257
        %v290 = vadd.f32 %v241, %v258
        %v291 = vadd.f32 %v242, %v259
        %v292 = vsub.f32 %v260, %v276
        %v293 = vsub.f32 %v261, %v277
        %v294 = vsub.f32 %v262, %v278
        %v295 = vsub.f32 %v263, %v279
        %v296 = vsub.f32 %v264, %v280
        %v297 = vsub.f32 %v265, %v281
        %v298 = vsub.f32 %v266, %v282
        %v299 = vsub.f32 %v267, %v283
        %v300 = vadd.f32 %v260, %v276
        %v301 = vadd.f32 %v261, %v277
        %v302 = vadd.f32 %v262, %v278
        %v303 = vadd.f32 %v263, %v279
        %v304 = vadd.f32 %v264, %v280
        %v305 = vadd.f32 %v265, %v281
        %v306 = vadd.f32 %v266, %v282
        %v307 = vadd.f32 %v267, %v283
        %v308 = vsub.f32 %v268, %v284
        %v309 = vsub.f32 %v269, %v285
        %v310 = vsub.f32 %v270, %v286
        %v311 = vsub.f32 %v271, %v287
        %v312 = vsub.f32 %v272, %v288
        %v313 = vsub.f32 %v273, %v289
        %v314 = vsub.f32 %v274, %v290
        %v315 = vsub.f32 %v275, %v291
        %v316 = vadd.f32 %v268, %v284
        %v317 = vadd.f32 %v269, %v285
        %v318 = vadd.f32 %v270, %v286
        %v319 = vadd.f32 %v271, %v287
        %v320 = vadd.f32 %v272, %v288
        %v321 = vadd.f32 %v273, %v289
        %v322 = vadd.f32 %v274, %v290
        %v323 = vadd.f32 %v275, %v291
        %v324 = vperm.slane %v292, 0
        %v325 = vlaneseq
        %v326 = vshrl.u32 %v325, 7
        %328 = vset.pattern.permute.xlu0 %v326
        %329 = vperm.xlu0 %328, %v324
        %v330 = vpop.permute.xlu0 %329
        %v331 = vlaneseq
        %v332 = vshrl.u32 %v331, 7
        %v333 = vadd.s32 %v332, 8
        %334 = vset.pattern.permute.xlu0 %v333
        %335 = vperm.xlu0 %334, %v324
        %v336 = vpop.permute.xlu0 %335
        %v337 = vperm.slane %v292, 1
        %v338 = vlaneseq
        %v339 = vshrl.u32 %v338, 7
        %341 = vset.pattern.permute.xlu0 %v339
        %342 = vperm.xlu0 %341, %v337
        %v343 = vpop.permute.xlu0 %342
        %v344 = vlaneseq
        %v345 = vshrl.u32 %v344, 7
        %v346 = vadd.s32 %v345, 8
        %347 = vset.pattern.permute.xlu0 %v346
        %348 = vperm.xlu0 %347, %v337
        %v349 = vpop.permute.xlu0 %348
        %v350 = vperm.slane %v292, 2
        %v351 = vlaneseq
        %v352 = vshrl.u32 %v351, 7
        %354 = vset.pattern.permute.xlu0 %v352
        %355 = vperm.xlu0 %354, %v350
        %v356 = vpop.permute.xlu0 %355
        %v357 = vlaneseq
        %v358 = vshrl.u32 %v357, 7
        %v359 = vadd.s32 %v358, 8
        %360 = vset.pattern.permute.xlu0 %v359
        %361 = vperm.xlu0 %360, %v350
        %v362 = vpop.permute.xlu0 %361
        %v363 = vperm.slane %v292, 3
        %v364 = vlaneseq
        %v365 = vshrl.u32 %v364, 7
        %367 = vset.pattern.permute.xlu0 %v365
        %368 = vperm.xlu0 %367, %v363
        %v369 = vpop.permute.xlu0 %368
        %v370 = vlaneseq
        %v371 = vshrl.u32 %v370, 7
        %v372 = vadd.s32 %v371, 8
        %373 = vset.pattern.permute.xlu0 %v372
        %374 = vperm.xlu0 %373, %v363
        %v375 = vpop.permute.xlu0 %374
        %v376 = vperm.slane %v292, 4
        %v377 = vlaneseq
        %v378 = vshrl.u32 %v377, 7
        %380 = vset.pattern.permute.xlu0 %v378
        %381 = vperm.xlu0 %380, %v376
        %v382 = vpop.permute.xlu0 %381
        %v383 = vlaneseq
        %v384 = vshrl.u32 %v383, 7
        %v385 = vadd.s32 %v384, 8
        %386 = vset.pattern.permute.xlu0 %v385
        %387 = vperm.xlu0 %386, %v376
        %v388 = vpop.permute.xlu0 %387
        %v389 = vperm.slane %v292, 5
        %v390 = vlaneseq
        %v391 = vshrl.u32 %v390, 7
        %393 = vset.pattern.permute.xlu0 %v391
        %394 = vperm.xlu0 %393, %v389
        %v395 = vpop.permute.xlu0 %394
        %v396 = vlaneseq
        %v397 = vshrl.u32 %v396, 7
        %v398 = vadd.s32 %v397, 8
        %399 = vset.pattern.permute.xlu0 %v398
        %400 = vperm.xlu0 %399, %v389
        %v401 = vpop.permute.xlu0 %400
        %v402 = vperm.slane %v292, 6
        %v403 = vlaneseq
        %v404 = vshrl.u32 %v403, 7
        %406 = vset.pattern.permute.xlu0 %v404
        %407 = vperm.xlu0 %406, %v402
        %v408 = vpop.permute.xlu0 %407
        %v409 = vlaneseq
        %v410 = vshrl.u32 %v409, 7
        %v411 = vadd.s32 %v410, 8
        %412 = vset.pattern.permute.xlu0 %v411
        %413 = vperm.xlu0 %412, %v402
        %v414 = vpop.permute.xlu0 %413
        %v415 = vperm.slane %v292, 7
        %v416 = vlaneseq
        %v417 = vshrl.u32 %v416, 7
        %419 = vset.pattern.permute.xlu0 %v417
        %420 = vperm.xlu0 %419, %v415
        %v421 = vpop.permute.xlu0 %420
        %v422 = vlaneseq
        %v423 = vshrl.u32 %v422, 7
        %v424 = vadd.s32 %v423, 8
        %425 = vset.pattern.permute.xlu0 %v424
        %426 = vperm.xlu0 %425, %v415
        %v427 = vpop.permute.xlu0 %426
        %v428 = vperm.slane %v293, 0
        %v429 = vlaneseq
        %v430 = vshrl.u32 %v429, 7
        %432 = vset.pattern.permute.xlu0 %v430
        %433 = vperm.xlu0 %432, %v428
        %v434 = vpop.permute.xlu0 %433
        %v435 = vlaneseq
        %v436 = vshrl.u32 %v435, 7
        %v437 = vadd.s32 %v436, 8
        %438 = vset.pattern.permute.xlu0 %v437
        %439 = vperm.xlu0 %438, %v428
        %v440 = vpop.permute.xlu0 %439
        %v441 = vperm.slane %v293, 1
        %v442 = vlaneseq
        %v443 = vshrl.u32 %v442, 7
        %445 = vset.pattern.permute.xlu0 %v443
        %446 = vperm.xlu0 %445, %v441
        %v447 = vpop.permute.xlu0 %446
        %v448 = vlaneseq
        %v449 = vshrl.u32 %v448, 7
        %v450 = vadd.s32 %v449, 8
        %451 = vset.pattern.permute.xlu0 %v450
        %452 = vperm.xlu0 %451, %v441
        %v453 = vpop.permute.xlu0 %452
        %v454 = vperm.slane %v293, 2
        %v455 = vlaneseq
        %v456 = vshrl.u32 %v455, 7
        %458 = vset.pattern.permute.xlu0 %v456
        %459 = vperm.xlu0 %458, %v454
        %v460 = vpop.permute.xlu0 %459
        %v461 = vlaneseq
        %v462 = vshrl.u32 %v461, 7
        %v463 = vadd.s32 %v462, 8
        %464 = vset.pattern.permute.xlu0 %v463
        %465 = vperm.xlu0 %464, %v454
        %v466 = vpop.permute.xlu0 %465
        %v467 = vperm.slane %v293, 3
        %v468 = vlaneseq
        %v469 = vshrl.u32 %v468, 7
        %471 = vset.pattern.permute.xlu0 %v469
        %472 = vperm.xlu0 %471, %v467
        %v473 = vpop.permute.xlu0 %472
        %v474 = vlaneseq
        %v475 = vshrl.u32 %v474, 7
        %v476 = vadd.s32 %v475, 8
        %477 = vset.pattern.permute.xlu0 %v476
        %478 = vperm.xlu0 %477, %v467
        %v479 = vpop.permute.xlu0 %478
        %v480 = vperm.slane %v293, 4
        %v481 = vlaneseq
        %v482 = vshrl.u32 %v481, 7
        %484 = vset.pattern.permute.xlu0 %v482
        %485 = vperm.xlu0 %484, %v480
        %v486 = vpop.permute.xlu0 %485
        %v487 = vlaneseq
        %v488 = vshrl.u32 %v487, 7
        %v489 = vadd.s32 %v488, 8
        %490 = vset.pattern.permute.xlu0 %v489
        %491 = vperm.xlu0 %490, %v480
        %v492 = vpop.permute.xlu0 %491
        %v493 = vperm.slane %v293, 5
        %v494 = vlaneseq
        %v495 = vshrl.u32 %v494, 7
        %497 = vset.pattern.permute.xlu0 %v495
        %498 = vperm.xlu0 %497, %v493
        %v499 = vpop.permute.xlu0 %498
        %v500 = vlaneseq
        %v501 = vshrl.u32 %v500, 7
        %v502 = vadd.s32 %v501, 8
        %503 = vset.pattern.permute.xlu0 %v502
        %504 = vperm.xlu0 %503, %v493
        %v505 = vpop.permute.xlu0 %504
        %v506 = vperm.slane %v293, 6
        %v507 = vlaneseq
        %v508 = vshrl.u32 %v507, 7
        %510 = vset.pattern.permute.xlu0 %v508
        %511 = vperm.xlu0 %510, %v506
        %v512 = vpop.permute.xlu0 %511
        %v513 = vlaneseq
        %v514 = vshrl.u32 %v513, 7
        %v515 = vadd.s32 %v514, 8
        %516 = vset.pattern.permute.xlu0 %v515
        %517 = vperm.xlu0 %516, %v506
        %v518 = vpop.permute.xlu0 %517
        %v519 = vperm.slane %v293, 7
        %v520 = vlaneseq
        %v521 = vshrl.u32 %v520, 7
        %523 = vset.pattern.permute.xlu0 %v521
        %524 = vperm.xlu0 %523, %v519
        %v525 = vpop.permute.xlu0 %524
        %v526 = vlaneseq
        %v527 = vshrl.u32 %v526, 7
        %v528 = vadd.s32 %v527, 8
        %529 = vset.pattern.permute.xlu0 %v528
        %530 = vperm.xlu0 %529, %v519
        %v531 = vpop.permute.xlu0 %530
        %v532 = vperm.slane %v294, 0
        %v533 = vlaneseq
        %v534 = vshrl.u32 %v533, 7
        %536 = vset.pattern.permute.xlu0 %v534
        %537 = vperm.xlu0 %536, %v532
        %v538 = vpop.permute.xlu0 %537
        %v539 = vlaneseq
        %v540 = vshrl.u32 %v539, 7
        %v541 = vadd.s32 %v540, 8
        %542 = vset.pattern.permute.xlu0 %v541
        %543 = vperm.xlu0 %542, %v532
        %v544 = vpop.permute.xlu0 %543
        %v545 = vperm.slane %v294, 1
        %v546 = vlaneseq
        %v547 = vshrl.u32 %v546, 7
        %549 = vset.pattern.permute.xlu0 %v547
        %550 = vperm.xlu0 %549, %v545
        %v551 = vpop.permute.xlu0 %550
        %v552 = vlaneseq
        %v553 = vshrl.u32 %v552, 7
        %v554 = vadd.s32 %v553, 8
        %555 = vset.pattern.permute.xlu0 %v554
        %556 = vperm.xlu0 %555, %v545
        %v557 = vpop.permute.xlu0 %556
        %v558 = vperm.slane %v294, 2
        %v559 = vlaneseq
        %v560 = vshrl.u32 %v559, 7
        %562 = vset.pattern.permute.xlu0 %v560
        %563 = vperm.xlu0 %562, %v558
        %v564 = vpop.permute.xlu0 %563
        %v565 = vlaneseq
        %v566 = vshrl.u32 %v565, 7
        %v567 = vadd.s32 %v566, 8
        %568 = vset.pattern.permute.xlu0 %v567
        %569 = vperm.xlu0 %568, %v558
        %v570 = vpop.permute.xlu0 %569
        %v571 = vperm.slane %v294, 3
        %v572 = vlaneseq
        %v573 = vshrl.u32 %v572, 7
        %575 = vset.pattern.permute.xlu0 %v573
        %576 = vperm.xlu0 %575, %v571
        %v577 = vpop.permute.xlu0 %576
        %v578 = vlaneseq
        %v579 = vshrl.u32 %v578, 7
        %v580 = vadd.s32 %v579, 8
        %581 = vset.pattern.permute.xlu0 %v580
        %582 = vperm.xlu0 %581, %v571
        %v583 = vpop.permute.xlu0 %582
        %v584 = vperm.slane %v294, 4
        %v585 = vlaneseq
        %v586 = vshrl.u32 %v585, 7
        %588 = vset.pattern.permute.xlu0 %v586
        %589 = vperm.xlu0 %588, %v584
        %v590 = vpop.permute.xlu0 %589
        %v591 = vlaneseq
        %v592 = vshrl.u32 %v591, 7
        %v593 = vadd.s32 %v592, 8
        %594 = vset.pattern.permute.xlu0 %v593
        %595 = vperm.xlu0 %594, %v584
        %v596 = vpop.permute.xlu0 %595
        %v597 = vperm.slane %v294, 5
        %v598 = vlaneseq
        %v599 = vshrl.u32 %v598, 7
        %601 = vset.pattern.permute.xlu0 %v599
        %602 = vperm.xlu0 %601, %v597
        %v603 = vpop.permute.xlu0 %602
        %v604 = vlaneseq
        %v605 = vshrl.u32 %v604, 7
        %v606 = vadd.s32 %v605, 8
        %607 = vset.pattern.permute.xlu0 %v606
        %608 = vperm.xlu0 %607, %v597
        %v609 = vpop.permute.xlu0 %608
        %v610 = vperm.slane %v294, 6
        %v611 = vlaneseq
        %v612 = vshrl.u32 %v611, 7
        %614 = vset.pattern.permute.xlu0 %v612
        %615 = vperm.xlu0 %614, %v610
        %v616 = vpop.permute.xlu0 %615
        %v617 = vlaneseq
        %v618 = vshrl.u32 %v617, 7
        %v619 = vadd.s32 %v618, 8
        %620 = vset.pattern.permute.xlu0 %v619
        %621 = vperm.xlu0 %620, %v610
        %v622 = vpop.permute.xlu0 %621
        %v623 = vperm.slane %v294, 7
        %v624 = vlaneseq
        %v625 = vshrl.u32 %v624, 7
        %627 = vset.pattern.permute.xlu0 %v625
        %628 = vperm.xlu0 %627, %v623
        %v629 = vpop.permute.xlu0 %628
        %v630 = vlaneseq
        %v631 = vshrl.u32 %v630, 7
        %v632 = vadd.s32 %v631, 8
        %633 = vset.pattern.permute.xlu0 %v632
        %634 = vperm.xlu0 %633, %v623
        %v635 = vpop.permute.xlu0 %634
        %v636 = vperm.slane %v295, 0
        %v637 = vlaneseq
        %v638 = vshrl.u32 %v637, 7
        %640 = vset.pattern.permute.xlu0 %v638
        %641 = vperm.xlu0 %640, %v636
        %v642 = vpop.permute.xlu0 %641
        %v643 = vlaneseq
        %v644 = vshrl.u32 %v643, 7
        %v645 = vadd.s32 %v644, 8
        %646 = vset.pattern.permute.xlu0 %v645
        %647 = vperm.xlu0 %646, %v636
        %v648 = vpop.permute.xlu0 %647
        %v649 = vperm.slane %v295, 1
        %v650 = vlaneseq
        %v651 = vshrl.u32 %v650, 7
        %653 = vset.pattern.permute.xlu0 %v651
        %654 = vperm.xlu0 %653, %v649
        %v655 = vpop.permute.xlu0 %654
        %v656 = vlaneseq
        %v657 = vshrl.u32 %v656, 7
        %v658 = vadd.s32 %v657, 8
        %659 = vset.pattern.permute.xlu0 %v658
        %660 = vperm.xlu0 %659, %v649
        %v661 = vpop.permute.xlu0 %660
        %v662 = vperm.slane %v295, 2
        %v663 = vlaneseq
        %v664 = vshrl.u32 %v663, 7
        %666 = vset.pattern.permute.xlu0 %v664
        %667 = vperm.xlu0 %666, %v662
        %v668 = vpop.permute.xlu0 %667
        %v669 = vlaneseq
        %v670 = vshrl.u32 %v669, 7
        %v671 = vadd.s32 %v670, 8
        %672 = vset.pattern.permute.xlu0 %v671
        %673 = vperm.xlu0 %672, %v662
        %v674 = vpop.permute.xlu0 %673
        %v675 = vperm.slane %v295, 3
        %v676 = vlaneseq
        %v677 = vshrl.u32 %v676, 7
        %679 = vset.pattern.permute.xlu0 %v677
        %680 = vperm.xlu0 %679, %v675
        %v681 = vpop.permute.xlu0 %680
        %v682 = vlaneseq
        %v683 = vshrl.u32 %v682, 7
        %v684 = vadd.s32 %v683, 8
        %685 = vset.pattern.permute.xlu0 %v684
        %686 = vperm.xlu0 %685, %v675
        %v687 = vpop.permute.xlu0 %686
        %v688 = vperm.slane %v295, 4
        %v689 = vlaneseq
        %v690 = vshrl.u32 %v689, 7
        %692 = vset.pattern.permute.xlu0 %v690
        %693 = vperm.xlu0 %692, %v688
        %v694 = vpop.permute.xlu0 %693
        %v695 = vlaneseq
        %v696 = vshrl.u32 %v695, 7
        %v697 = vadd.s32 %v696, 8
        %698 = vset.pattern.permute.xlu0 %v697
        %699 = vperm.xlu0 %698, %v688
        %v700 = vpop.permute.xlu0 %699
        %v701 = vperm.slane %v295, 5
        %v702 = vlaneseq
        %v703 = vshrl.u32 %v702, 7
        %705 = vset.pattern.permute.xlu0 %v703
        %706 = vperm.xlu0 %705, %v701
        %v707 = vpop.permute.xlu0 %706
        %v708 = vlaneseq
        %v709 = vshrl.u32 %v708, 7
        %v710 = vadd.s32 %v709, 8
        %711 = vset.pattern.permute.xlu0 %v710
        %712 = vperm.xlu0 %711, %v701
        %v713 = vpop.permute.xlu0 %712
        %v714 = vperm.slane %v295, 6
        %v715 = vlaneseq
        %v716 = vshrl.u32 %v715, 7
        %718 = vset.pattern.permute.xlu0 %v716
        %719 = vperm.xlu0 %718, %v714
        %v720 = vpop.permute.xlu0 %719
        %v721 = vlaneseq
        %v722 = vshrl.u32 %v721, 7
        %v723 = vadd.s32 %v722, 8
        %724 = vset.pattern.permute.xlu0 %v723
        %725 = vperm.xlu0 %724, %v714
        %v726 = vpop.permute.xlu0 %725
        %v727 = vperm.slane %v295, 7
        %v728 = vlaneseq
        %v729 = vshrl.u32 %v728, 7
        %731 = vset.pattern.permute.xlu0 %v729
        %732 = vperm.xlu0 %731, %v727
        %v733 = vpop.permute.xlu0 %732
        %v734 = vlaneseq
        %v735 = vshrl.u32 %v734, 7
        %v736 = vadd.s32 %v735, 8
        %737 = vset.pattern.permute.xlu0 %v736
        %738 = vperm.xlu0 %737, %v727
        %v739 = vpop.permute.xlu0 %738
        %v740 = vperm.slane %v296, 0
        %v741 = vlaneseq
        %v742 = vshrl.u32 %v741, 7
        %744 = vset.pattern.permute.xlu0 %v742
        %745 = vperm.xlu0 %744, %v740
        %v746 = vpop.permute.xlu0 %745
        %v747 = vlaneseq
        %v748 = vshrl.u32 %v747, 7
        %v749 = vadd.s32 %v748, 8
        %750 = vset.pattern.permute.xlu0 %v749
        %751 = vperm.xlu0 %750, %v740
        %v752 = vpop.permute.xlu0 %751
        %v753 = vperm.slane %v296, 1
        %v754 = vlaneseq
        %v755 = vshrl.u32 %v754, 7
        %757 = vset.pattern.permute.xlu0 %v755
        %758 = vperm.xlu0 %757, %v753
        %v759 = vpop.permute.xlu0 %758
        %v760 = vlaneseq
        %v761 = vshrl.u32 %v760, 7
        %v762 = vadd.s32 %v761, 8
        %763 = vset.pattern.permute.xlu0 %v762
        %764 = vperm.xlu0 %763, %v753
        %v765 = vpop.permute.xlu0 %764
        %v766 = vperm.slane %v296, 2
        %v767 = vlaneseq
        %v768 = vshrl.u32 %v767, 7
        %770 = vset.pattern.permute.xlu0 %v768
        %771 = vperm.xlu0 %770, %v766
        %v772 = vpop.permute.xlu0 %771
        %v773 = vlaneseq
        %v774 = vshrl.u32 %v773, 7
        %v775 = vadd.s32 %v774, 8
        %776 = vset.pattern.permute.xlu0 %v775
        %777 = vperm.xlu0 %776, %v766
        %v778 = vpop.permute.xlu0 %777
        %v779 = vperm.slane %v296, 3
        %v780 = vlaneseq
        %v781 = vshrl.u32 %v780, 7
        %783 = vset.pattern.permute.xlu0 %v781
        %784 = vperm.xlu0 %783, %v779
        %v785 = vpop.permute.xlu0 %784
        %v786 = vlaneseq
        %v787 = vshrl.u32 %v786, 7
        %v788 = vadd.s32 %v787, 8
        %789 = vset.pattern.permute.xlu0 %v788
        %790 = vperm.xlu0 %789, %v779
        %v791 = vpop.permute.xlu0 %790
        %v792 = vperm.slane %v296, 4
        %v793 = vlaneseq
        %v794 = vshrl.u32 %v793, 7
        %796 = vset.pattern.permute.xlu0 %v794
        %797 = vperm.xlu0 %796, %v792
        %v798 = vpop.permute.xlu0 %797
        %v799 = vlaneseq
        %v800 = vshrl.u32 %v799, 7
        %v801 = vadd.s32 %v800, 8
        %802 = vset.pattern.permute.xlu0 %v801
        %803 = vperm.xlu0 %802, %v792
        %v804 = vpop.permute.xlu0 %803
        %v805 = vperm.slane %v296, 5
        %v806 = vlaneseq
        %v807 = vshrl.u32 %v806, 7
        %809 = vset.pattern.permute.xlu0 %v807
        %810 = vperm.xlu0 %809, %v805
        %v811 = vpop.permute.xlu0 %810
        %v812 = vlaneseq
        %v813 = vshrl.u32 %v812, 7
        %v814 = vadd.s32 %v813, 8
        %815 = vset.pattern.permute.xlu0 %v814
        %816 = vperm.xlu0 %815, %v805
        %v817 = vpop.permute.xlu0 %816
        %v818 = vperm.slane %v296, 6
        %v819 = vlaneseq
        %v820 = vshrl.u32 %v819, 7
        %822 = vset.pattern.permute.xlu0 %v820
        %823 = vperm.xlu0 %822, %v818
        %v824 = vpop.permute.xlu0 %823
        %v825 = vlaneseq
        %v826 = vshrl.u32 %v825, 7
        %v827 = vadd.s32 %v826, 8
        %828 = vset.pattern.permute.xlu0 %v827
        %829 = vperm.xlu0 %828, %v818
        %v830 = vpop.permute.xlu0 %829
        %v831 = vperm.slane %v296, 7
        %v832 = vlaneseq
        %v833 = vshrl.u32 %v832, 7
        %835 = vset.pattern.permute.xlu0 %v833
        %836 = vperm.xlu0 %835, %v831
        %v837 = vpop.permute.xlu0 %836
        %v838 = vlaneseq
        %v839 = vshrl.u32 %v838, 7
        %v840 = vadd.s32 %v839, 8
        %841 = vset.pattern.permute.xlu0 %v840
        %842 = vperm.xlu0 %841, %v831
        %v843 = vpop.permute.xlu0 %842
        %v844 = vperm.slane %v297, 0
        %v845 = vlaneseq
        %v846 = vshrl.u32 %v845, 7
        %848 = vset.pattern.permute.xlu0 %v846
        %849 = vperm.xlu0 %848, %v844
        %v850 = vpop.permute.xlu0 %849
        %v851 = vlaneseq
        %v852 = vshrl.u32 %v851, 7
        %v853 = vadd.s32 %v852, 8
        %854 = vset.pattern.permute.xlu0 %v853
        %855 = vperm.xlu0 %854, %v844
        %v856 = vpop.permute.xlu0 %855
        %v857 = vperm.slane %v297, 1
        %v858 = vlaneseq
        %v859 = vshrl.u32 %v858, 7
        %861 = vset.pattern.permute.xlu0 %v859
        %862 = vperm.xlu0 %861, %v857
        %v863 = vpop.permute.xlu0 %862
        %v864 = vlaneseq
        %v865 = vshrl.u32 %v864, 7
        %v866 = vadd.s32 %v865, 8
        %867 = vset.pattern.permute.xlu0 %v866
        %868 = vperm.xlu0 %867, %v857
        %v869 = vpop.permute.xlu0 %868
        %v870 = vperm.slane %v297, 2
        %v871 = vlaneseq
        %v872 = vshrl.u32 %v871, 7
        %874 = vset.pattern.permute.xlu0 %v872
        %875 = vperm.xlu0 %874, %v870
        %v876 = vpop.permute.xlu0 %875
        %v877 = vlaneseq
        %v878 = vshrl.u32 %v877, 7
        %v879 = vadd.s32 %v878, 8
        %880 = vset.pattern.permute.xlu0 %v879
        %881 = vperm.xlu0 %880, %v870
        %v882 = vpop.permute.xlu0 %881
        %v883 = vperm.slane %v297, 3
        %v884 = vlaneseq
        %v885 = vshrl.u32 %v884, 7
        %887 = vset.pattern.permute.xlu0 %v885
        %888 = vperm.xlu0 %887, %v883
        %v889 = vpop.permute.xlu0 %888
        %v890 = vlaneseq
        %v891 = vshrl.u32 %v890, 7
        %v892 = vadd.s32 %v891, 8
        %893 = vset.pattern.permute.xlu0 %v892
        %894 = vperm.xlu0 %893, %v883
        %v895 = vpop.permute.xlu0 %894
        %v896 = vperm.slane %v297, 4
        %v897 = vlaneseq
        %v898 = vshrl.u32 %v897, 7
        %900 = vset.pattern.permute.xlu0 %v898
        %901 = vperm.xlu0 %900, %v896
        %v902 = vpop.permute.xlu0 %901
        %v903 = vlaneseq
        %v904 = vshrl.u32 %v903, 7
        %v905 = vadd.s32 %v904, 8
        %906 = vset.pattern.permute.xlu0 %v905
        %907 = vperm.xlu0 %906, %v896
        %v908 = vpop.permute.xlu0 %907
        %v909 = vperm.slane %v297, 5
        %v910 = vlaneseq
        %v911 = vshrl.u32 %v910, 7
        %913 = vset.pattern.permute.xlu0 %v911
        %914 = vperm.xlu0 %913, %v909
        %v915 = vpop.permute.xlu0 %914
        %v916 = vlaneseq
        %v917 = vshrl.u32 %v916, 7
        %v918 = vadd.s32 %v917, 8
        %919 = vset.pattern.permute.xlu0 %v918
        %920 = vperm.xlu0 %919, %v909
        %v921 = vpop.permute.xlu0 %920
        %v922 = vperm.slane %v297, 6
        %v923 = vlaneseq
        %v924 = vshrl.u32 %v923, 7
        %926 = vset.pattern.permute.xlu0 %v924
        %927 = vperm.xlu0 %926, %v922
        %v928 = vpop.permute.xlu0 %927
        %v929 = vlaneseq
        %v930 = vshrl.u32 %v929, 7
        %v931 = vadd.s32 %v930, 8
        %932 = vset.pattern.permute.xlu0 %v931
        %933 = vperm.xlu0 %932, %v922
        %v934 = vpop.permute.xlu0 %933
        %v935 = vperm.slane %v297, 7
        %v936 = vlaneseq
        %v937 = vshrl.u32 %v936, 7
        %939 = vset.pattern.permute.xlu0 %v937
        %940 = vperm.xlu0 %939, %v935
        %v941 = vpop.permute.xlu0 %940
        %v942 = vlaneseq
        %v943 = vshrl.u32 %v942, 7
        %v944 = vadd.s32 %v943, 8
        %945 = vset.pattern.permute.xlu0 %v944
        %946 = vperm.xlu0 %945, %v935
        %v947 = vpop.permute.xlu0 %946
        %v948 = vperm.slane %v298, 0
        %v949 = vlaneseq
        %v950 = vshrl.u32 %v949, 7
        %952 = vset.pattern.permute.xlu0 %v950
        %953 = vperm.xlu0 %952, %v948
        %v954 = vpop.permute.xlu0 %953
        %v955 = vlaneseq
        %v956 = vshrl.u32 %v955, 7
        %v957 = vadd.s32 %v956, 8
        %958 = vset.pattern.permute.xlu0 %v957
        %959 = vperm.xlu0 %958, %v948
        %v960 = vpop.permute.xlu0 %959
        %v961 = vperm.slane %v298, 1
        %v962 = vlaneseq
        %v963 = vshrl.u32 %v962, 7
        %965 = vset.pattern.permute.xlu0 %v963
        %966 = vperm.xlu0 %965, %v961
        %v967 = vpop.permute.xlu0 %966
        %v968 = vlaneseq
        %v969 = vshrl.u32 %v968, 7
        %v970 = vadd.s32 %v969, 8
        %971 = vset.pattern.permute.xlu0 %v970
        %972 = vperm.xlu0 %971, %v961
        %v973 = vpop.permute.xlu0 %972
        %v974 = vperm.slane %v298, 2
        %v975 = vlaneseq
        %v976 = vshrl.u32 %v975, 7
        %978 = vset.pattern.permute.xlu0 %v976
        %979 = vperm.xlu0 %978, %v974
        %v980 = vpop.permute.xlu0 %979
        %v981 = vlaneseq
        %v982 = vshrl.u32 %v981, 7
        %v983 = vadd.s32 %v982, 8
        %984 = vset.pattern.permute.xlu0 %v983
        %985 = vperm.xlu0 %984, %v974
        %v986 = vpop.permute.xlu0 %985
        %v987 = vperm.slane %v298, 3
        %v988 = vlaneseq
        %v989 = vshrl.u32 %v988, 7
        %991 = vset.pattern.permute.xlu0 %v989
        %992 = vperm.xlu0 %991, %v987
        %v993 = vpop.permute.xlu0 %992
        %v994 = vlaneseq
        %v995 = vshrl.u32 %v994, 7
        %v996 = vadd.s32 %v995, 8
        %997 = vset.pattern.permute.xlu0 %v996
        %998 = vperm.xlu0 %997, %v987
        %v999 = vpop.permute.xlu0 %998
        %v1000 = vperm.slane %v298, 4
        %v1001 = vlaneseq
        %v1002 = vshrl.u32 %v1001, 7
        %1004 = vset.pattern.permute.xlu0 %v1002
        %1005 = vperm.xlu0 %1004, %v1000
        %v1006 = vpop.permute.xlu0 %1005
        %v1007 = vlaneseq
        %v1008 = vshrl.u32 %v1007, 7
        %v1009 = vadd.s32 %v1008, 8
        %1010 = vset.pattern.permute.xlu0 %v1009
        %1011 = vperm.xlu0 %1010, %v1000
        %v1012 = vpop.permute.xlu0 %1011
        %v1013 = vperm.slane %v298, 5
        %v1014 = vlaneseq
        %v1015 = vshrl.u32 %v1014, 7
        %1017 = vset.pattern.permute.xlu0 %v1015
        %1018 = vperm.xlu0 %1017, %v1013
        %v1019 = vpop.permute.xlu0 %1018
        %v1020 = vlaneseq
        %v1021 = vshrl.u32 %v1020, 7
        %v1022 = vadd.s32 %v1021, 8
        %1023 = vset.pattern.permute.xlu0 %v1022
        %1024 = vperm.xlu0 %1023, %v1013
        %v1025 = vpop.permute.xlu0 %1024
        %v1026 = vperm.slane %v298, 6
        %v1027 = vlaneseq
        %v1028 = vshrl.u32 %v1027, 7
        %1030 = vset.pattern.permute.xlu0 %v1028
        %1031 = vperm.xlu0 %1030, %v1026
        %v1032 = vpop.permute.xlu0 %1031
        %v1033 = vlaneseq
        %v1034 = vshrl.u32 %v1033, 7
        %v1035 = vadd.s32 %v1034, 8
        %1036 = vset.pattern.permute.xlu0 %v1035
        %1037 = vperm.xlu0 %1036, %v1026
        %v1038 = vpop.permute.xlu0 %1037
        %v1039 = vperm.slane %v298, 7
        %v1040 = vlaneseq
        %v1041 = vshrl.u32 %v1040, 7
        %1043 = vset.pattern.permute.xlu0 %v1041
        %1044 = vperm.xlu0 %1043, %v1039
        %v1045 = vpop.permute.xlu0 %1044
        %v1046 = vlaneseq
        %v1047 = vshrl.u32 %v1046, 7
        %v1048 = vadd.s32 %v1047, 8
        %1049 = vset.pattern.permute.xlu0 %v1048
        %1050 = vperm.xlu0 %1049, %v1039
        %v1051 = vpop.permute.xlu0 %1050
        %v1052 = vperm.slane %v299, 0
        %v1053 = vlaneseq
        %v1054 = vshrl.u32 %v1053, 7
        %1056 = vset.pattern.permute.xlu0 %v1054
        %1057 = vperm.xlu0 %1056, %v1052
        %v1058 = vpop.permute.xlu0 %1057
        %v1059 = vlaneseq
        %v1060 = vshrl.u32 %v1059, 7
        %v1061 = vadd.s32 %v1060, 8
        %1062 = vset.pattern.permute.xlu0 %v1061
        %1063 = vperm.xlu0 %1062, %v1052
        %v1064 = vpop.permute.xlu0 %1063
        %v1065 = vperm.slane %v299, 1
        %v1066 = vlaneseq
        %v1067 = vshrl.u32 %v1066, 7
        %1069 = vset.pattern.permute.xlu0 %v1067
        %1070 = vperm.xlu0 %1069, %v1065
        %v1071 = vpop.permute.xlu0 %1070
        %v1072 = vlaneseq
        %v1073 = vshrl.u32 %v1072, 7
        %v1074 = vadd.s32 %v1073, 8
        %1075 = vset.pattern.permute.xlu0 %v1074
        %1076 = vperm.xlu0 %1075, %v1065
        %v1077 = vpop.permute.xlu0 %1076
        %v1078 = vperm.slane %v299, 2
        %v1079 = vlaneseq
        %v1080 = vshrl.u32 %v1079, 7
        %1082 = vset.pattern.permute.xlu0 %v1080
        %1083 = vperm.xlu0 %1082, %v1078
        %v1084 = vpop.permute.xlu0 %1083
        %v1085 = vlaneseq
        %v1086 = vshrl.u32 %v1085, 7
        %v1087 = vadd.s32 %v1086, 8
        %1088 = vset.pattern.permute.xlu0 %v1087
        %1089 = vperm.xlu0 %1088, %v1078
        %v1090 = vpop.permute.xlu0 %1089
        %v1091 = vperm.slane %v299, 3
        %v1092 = vlaneseq
        %v1093 = vshrl.u32 %v1092, 7
        %1095 = vset.pattern.permute.xlu0 %v1093
        %1096 = vperm.xlu0 %1095, %v1091
        %v1097 = vpop.permute.xlu0 %1096
        %v1098 = vlaneseq
        %v1099 = vshrl.u32 %v1098, 7
        %v1100 = vadd.s32 %v1099, 8
        %1101 = vset.pattern.permute.xlu0 %v1100
        %1102 = vperm.xlu0 %1101, %v1091
        %v1103 = vpop.permute.xlu0 %1102
        %v1104 = vperm.slane %v299, 4
        %v1105 = vlaneseq
        %v1106 = vshrl.u32 %v1105, 7
        %1108 = vset.pattern.permute.xlu0 %v1106
        %1109 = vperm.xlu0 %1108, %v1104
        %v1110 = vpop.permute.xlu0 %1109
        %v1111 = vlaneseq
        %v1112 = vshrl.u32 %v1111, 7
        %v1113 = vadd.s32 %v1112, 8
        %1114 = vset.pattern.permute.xlu0 %v1113
        %1115 = vperm.xlu0 %1114, %v1104
        %v1116 = vpop.permute.xlu0 %1115
        %v1117 = vperm.slane %v299, 5
        %v1118 = vlaneseq
        %v1119 = vshrl.u32 %v1118, 7
        %1121 = vset.pattern.permute.xlu0 %v1119
        %1122 = vperm.xlu0 %1121, %v1117
        %v1123 = vpop.permute.xlu0 %1122
        %v1124 = vlaneseq
        %v1125 = vshrl.u32 %v1124, 7
        %v1126 = vadd.s32 %v1125, 8
        %1127 = vset.pattern.permute.xlu0 %v1126
        %1128 = vperm.xlu0 %1127, %v1117
        %v1129 = vpop.permute.xlu0 %1128
        %v1130 = vperm.slane %v299, 6
        %v1131 = vlaneseq
        %v1132 = vshrl.u32 %v1131, 7
        %1134 = vset.pattern.permute.xlu0 %v1132
        %1135 = vperm.xlu0 %1134, %v1130
        %v1136 = vpop.permute.xlu0 %1135
        %v1137 = vlaneseq
        %v1138 = vshrl.u32 %v1137, 7
        %v1139 = vadd.s32 %v1138, 8
        %1140 = vset.pattern.permute.xlu0 %v1139
        %1141 = vperm.xlu0 %1140, %v1130
        %v1142 = vpop.permute.xlu0 %1141
        %v1143 = vperm.slane %v299, 7
        %v1144 = vlaneseq
        %v1145 = vshrl.u32 %v1144, 7
        %1147 = vset.pattern.permute.xlu0 %v1145
        %1148 = vperm.xlu0 %1147, %v1143
        %v1149 = vpop.permute.xlu0 %1148
        %v1150 = vlaneseq
        %v1151 = vshrl.u32 %v1150, 7
        %v1152 = vadd.s32 %v1151, 8
        %1153 = vset.pattern.permute.xlu0 %v1152
        %1154 = vperm.xlu0 %1153, %v1143
        %v1155 = vpop.permute.xlu0 %1154
        %v1156 = vperm.slane %v308, 0
        %v1157 = vlaneseq
        %v1158 = vshrl.u32 %v1157, 7
        %1160 = vset.pattern.permute.xlu0 %v1158
        %1161 = vperm.xlu0 %1160, %v1156
        %v1162 = vpop.permute.xlu0 %1161
        %v1163 = vlaneseq
        %v1164 = vshrl.u32 %v1163, 7
        %v1165 = vadd.s32 %v1164, 8
        %1166 = vset.pattern.permute.xlu0 %v1165
        %1167 = vperm.xlu0 %1166, %v1156
        %v1168 = vpop.permute.xlu0 %1167
        %v1169 = vperm.slane %v308, 1
        %v1170 = vlaneseq
        %v1171 = vshrl.u32 %v1170, 7
        %1173 = vset.pattern.permute.xlu0 %v1171
        %1174 = vperm.xlu0 %1173, %v1169
        %v1175 = vpop.permute.xlu0 %1174
        %v1176 = vlaneseq
        %v1177 = vshrl.u32 %v1176, 7
        %v1178 = vadd.s32 %v1177, 8
        %1179 = vset.pattern.permute.xlu0 %v1178
        %1180 = vperm.xlu0 %1179, %v1169
        %v1181 = vpop.permute.xlu0 %1180
        %v1182 = vperm.slane %v308, 2
        %v1183 = vlaneseq
        %v1184 = vshrl.u32 %v1183, 7
        %1186 = vset.pattern.permute.xlu0 %v1184
        %1187 = vperm.xlu0 %1186, %v1182
        %v1188 = vpop.permute.xlu0 %1187
        %v1189 = vlaneseq
        %v1190 = vshrl.u32 %v1189, 7
        %v1191 = vadd.s32 %v1190, 8
        %1192 = vset.pattern.permute.xlu0 %v1191
        %1193 = vperm.xlu0 %1192, %v1182
        %v1194 = vpop.permute.xlu0 %1193
        %v1195 = vperm.slane %v308, 3
        %v1196 = vlaneseq
        %v1197 = vshrl.u32 %v1196, 7
        %1199 = vset.pattern.permute.xlu0 %v1197
        %1200 = vperm.xlu0 %1199, %v1195
        %v1201 = vpop.permute.xlu0 %1200
        %v1202 = vlaneseq
        %v1203 = vshrl.u32 %v1202, 7
        %v1204 = vadd.s32 %v1203, 8
        %1205 = vset.pattern.permute.xlu0 %v1204
        %1206 = vperm.xlu0 %1205, %v1195
        %v1207 = vpop.permute.xlu0 %1206
        %v1208 = vperm.slane %v308, 4
        %v1209 = vlaneseq
        %v1210 = vshrl.u32 %v1209, 7
        %1212 = vset.pattern.permute.xlu0 %v1210
        %1213 = vperm.xlu0 %1212, %v1208
        %v1214 = vpop.permute.xlu0 %1213
        %v1215 = vlaneseq
        %v1216 = vshrl.u32 %v1215, 7
        %v1217 = vadd.s32 %v1216, 8
        %1218 = vset.pattern.permute.xlu0 %v1217
        %1219 = vperm.xlu0 %1218, %v1208
        %v1220 = vpop.permute.xlu0 %1219
        %v1221 = vperm.slane %v308, 5
        %v1222 = vlaneseq
        %v1223 = vshrl.u32 %v1222, 7
        %1225 = vset.pattern.permute.xlu0 %v1223
        %1226 = vperm.xlu0 %1225, %v1221
        %v1227 = vpop.permute.xlu0 %1226
        %v1228 = vlaneseq
        %v1229 = vshrl.u32 %v1228, 7
        %v1230 = vadd.s32 %v1229, 8
        %1231 = vset.pattern.permute.xlu0 %v1230
        %1232 = vperm.xlu0 %1231, %v1221
        %v1233 = vpop.permute.xlu0 %1232
        %v1234 = vperm.slane %v308, 6
        %v1235 = vlaneseq
        %v1236 = vshrl.u32 %v1235, 7
        %1238 = vset.pattern.permute.xlu0 %v1236
        %1239 = vperm.xlu0 %1238, %v1234
        %v1240 = vpop.permute.xlu0 %1239
        %v1241 = vlaneseq
        %v1242 = vshrl.u32 %v1241, 7
        %v1243 = vadd.s32 %v1242, 8
        %1244 = vset.pattern.permute.xlu0 %v1243
        %1245 = vperm.xlu0 %1244, %v1234
        %v1246 = vpop.permute.xlu0 %1245
        %v1247 = vperm.slane %v308, 7
        %v1248 = vlaneseq
        %v1249 = vshrl.u32 %v1248, 7
        %1251 = vset.pattern.permute.xlu0 %v1249
        %1252 = vperm.xlu0 %1251, %v1247
        %v1253 = vpop.permute.xlu0 %1252
        %v1254 = vlaneseq
        %v1255 = vshrl.u32 %v1254, 7
        %v1256 = vadd.s32 %v1255, 8
        %1257 = vset.pattern.permute.xlu0 %v1256
        %1258 = vperm.xlu0 %1257, %v1247
        %v1259 = vpop.permute.xlu0 %1258
        %v1260 = vperm.slane %v309, 0
        %v1261 = vlaneseq
        %v1262 = vshrl.u32 %v1261, 7
        %1264 = vset.pattern.permute.xlu0 %v1262
        %1265 = vperm.xlu0 %1264, %v1260
        %v1266 = vpop.permute.xlu0 %1265
        %v1267 = vlaneseq
        %v1268 = vshrl.u32 %v1267, 7
        %v1269 = vadd.s32 %v1268, 8
        %1270 = vset.pattern.permute.xlu0 %v1269
        %1271 = vperm.xlu0 %1270, %v1260
        %v1272 = vpop.permute.xlu0 %1271
        %v1273 = vperm.slane %v309, 1
        %v1274 = vlaneseq
        %v1275 = vshrl.u32 %v1274, 7
        %1277 = vset.pattern.permute.xlu0 %v1275
        %1278 = vperm.xlu0 %1277, %v1273
        %v1279 = vpop.permute.xlu0 %1278
        %v1280 = vlaneseq
        %v1281 = vshrl.u32 %v1280, 7
        %v1282 = vadd.s32 %v1281, 8
        %1283 = vset.pattern.permute.xlu0 %v1282
        %1284 = vperm.xlu0 %1283, %v1273
        %v1285 = vpop.permute.xlu0 %1284
        %v1286 = vperm.slane %v309, 2
        %v1287 = vlaneseq
        %v1288 = vshrl.u32 %v1287, 7
        %1290 = vset.pattern.permute.xlu0 %v1288
        %1291 = vperm.xlu0 %1290, %v1286
        %v1292 = vpop.permute.xlu0 %1291
        %v1293 = vlaneseq
        %v1294 = vshrl.u32 %v1293, 7
        %v1295 = vadd.s32 %v1294, 8
        %1296 = vset.pattern.permute.xlu0 %v1295
        %1297 = vperm.xlu0 %1296, %v1286
        %v1298 = vpop.permute.xlu0 %1297
        %v1299 = vperm.slane %v309, 3
        %v1300 = vlaneseq
        %v1301 = vshrl.u32 %v1300, 7
        %1303 = vset.pattern.permute.xlu0 %v1301
        %1304 = vperm.xlu0 %1303, %v1299
        %v1305 = vpop.permute.xlu0 %1304
        %v1306 = vlaneseq
        %v1307 = vshrl.u32 %v1306, 7
        %v1308 = vadd.s32 %v1307, 8
        %1309 = vset.pattern.permute.xlu0 %v1308
        %1310 = vperm.xlu0 %1309, %v1299
        %v1311 = vpop.permute.xlu0 %1310
        %v1312 = vperm.slane %v309, 4
        %v1313 = vlaneseq
        %v1314 = vshrl.u32 %v1313, 7
        %1316 = vset.pattern.permute.xlu0 %v1314
        %1317 = vperm.xlu0 %1316, %v1312
        %v1318 = vpop.permute.xlu0 %1317
        %v1319 = vlaneseq
        %v1320 = vshrl.u32 %v1319, 7
        %v1321 = vadd.s32 %v1320, 8
        %1322 = vset.pattern.permute.xlu0 %v1321
        %1323 = vperm.xlu0 %1322, %v1312
        %v1324 = vpop.permute.xlu0 %1323
        %v1325 = vperm.slane %v309, 5
        %v1326 = vlaneseq
        %v1327 = vshrl.u32 %v1326, 7
        %1329 = vset.pattern.permute.xlu0 %v1327
        %1330 = vperm.xlu0 %1329, %v1325
        %v1331 = vpop.permute.xlu0 %1330
        %v1332 = vlaneseq
        %v1333 = vshrl.u32 %v1332, 7
        %v1334 = vadd.s32 %v1333, 8
        %1335 = vset.pattern.permute.xlu0 %v1334
        %1336 = vperm.xlu0 %1335, %v1325
        %v1337 = vpop.permute.xlu0 %1336
        %v1338 = vperm.slane %v309, 6
        %v1339 = vlaneseq
        %v1340 = vshrl.u32 %v1339, 7
        %1342 = vset.pattern.permute.xlu0 %v1340
        %1343 = vperm.xlu0 %1342, %v1338
        %v1344 = vpop.permute.xlu0 %1343
        %v1345 = vlaneseq
        %v1346 = vshrl.u32 %v1345, 7
        %v1347 = vadd.s32 %v1346, 8
        %1348 = vset.pattern.permute.xlu0 %v1347
        %1349 = vperm.xlu0 %1348, %v1338
        %v1350 = vpop.permute.xlu0 %1349
        %v1351 = vperm.slane %v309, 7
        %v1352 = vlaneseq
        %v1353 = vshrl.u32 %v1352, 7
        %1355 = vset.pattern.permute.xlu0 %v1353
        %1356 = vperm.xlu0 %1355, %v1351
        %v1357 = vpop.permute.xlu0 %1356
        %v1358 = vlaneseq
        %v1359 = vshrl.u32 %v1358, 7
        %v1360 = vadd.s32 %v1359, 8
        %1361 = vset.pattern.permute.xlu0 %v1360
        %1362 = vperm.xlu0 %1361, %v1351
        %v1363 = vpop.permute.xlu0 %1362
        %v1364 = vperm.slane %v310, 0
        %v1365 = vlaneseq
        %v1366 = vshrl.u32 %v1365, 7
        %1368 = vset.pattern.permute.xlu0 %v1366
        %1369 = vperm.xlu0 %1368, %v1364
        %v1370 = vpop.permute.xlu0 %1369
        %v1371 = vlaneseq
        %v1372 = vshrl.u32 %v1371, 7
        %v1373 = vadd.s32 %v1372, 8
        %1374 = vset.pattern.permute.xlu0 %v1373
        %1375 = vperm.xlu0 %1374, %v1364
        %v1376 = vpop.permute.xlu0 %1375
        %v1377 = vperm.slane %v310, 1
        %v1378 = vlaneseq
        %v1379 = vshrl.u32 %v1378, 7
        %1381 = vset.pattern.permute.xlu0 %v1379
        %1382 = vperm.xlu0 %1381, %v1377
        %v1383 = vpop.permute.xlu0 %1382
        %v1384 = vlaneseq
        %v1385 = vshrl.u32 %v1384, 7
        %v1386 = vadd.s32 %v1385, 8
        %1387 = vset.pattern.permute.xlu0 %v1386
        %1388 = vperm.xlu0 %1387, %v1377
        %v1389 = vpop.permute.xlu0 %1388
        %v1390 = vperm.slane %v310, 2
        %v1391 = vlaneseq
        %v1392 = vshrl.u32 %v1391, 7
        %1394 = vset.pattern.permute.xlu0 %v1392
        %1395 = vperm.xlu0 %1394, %v1390
        %v1396 = vpop.permute.xlu0 %1395
        %v1397 = vlaneseq
        %v1398 = vshrl.u32 %v1397, 7
        %v1399 = vadd.s32 %v1398, 8
        %1400 = vset.pattern.permute.xlu0 %v1399
        %1401 = vperm.xlu0 %1400, %v1390
        %v1402 = vpop.permute.xlu0 %1401
        %v1403 = vperm.slane %v310, 3
        %v1404 = vlaneseq
        %v1405 = vshrl.u32 %v1404, 7
        %1407 = vset.pattern.permute.xlu0 %v1405
        %1408 = vperm.xlu0 %1407, %v1403
        %v1409 = vpop.permute.xlu0 %1408
        %v1410 = vlaneseq
        %v1411 = vshrl.u32 %v1410, 7
        %v1412 = vadd.s32 %v1411, 8
        %1413 = vset.pattern.permute.xlu0 %v1412
        %1414 = vperm.xlu0 %1413, %v1403
        %v1415 = vpop.permute.xlu0 %1414
        %v1416 = vperm.slane %v310, 4
        %v1417 = vlaneseq
        %v1418 = vshrl.u32 %v1417, 7
        %1420 = vset.pattern.permute.xlu0 %v1418
        %1421 = vperm.xlu0 %1420, %v1416
        %v1422 = vpop.permute.xlu0 %1421
        %v1423 = vlaneseq
        %v1424 = vshrl.u32 %v1423, 7
        %v1425 = vadd.s32 %v1424, 8
        %1426 = vset.pattern.permute.xlu0 %v1425
        %1427 = vperm.xlu0 %1426, %v1416
        %v1428 = vpop.permute.xlu0 %1427
        %v1429 = vperm.slane %v310, 5
        %v1430 = vlaneseq
        %v1431 = vshrl.u32 %v1430, 7
        %1433 = vset.pattern.permute.xlu0 %v1431
        %1434 = vperm.xlu0 %1433, %v1429
        %v1435 = vpop.permute.xlu0 %1434
        %v1436 = vlaneseq
        %v1437 = vshrl.u32 %v1436, 7
        %v1438 = vadd.s32 %v1437, 8
        %1439 = vset.pattern.permute.xlu0 %v1438
        %1440 = vperm.xlu0 %1439, %v1429
        %v1441 = vpop.permute.xlu0 %1440
        %v1442 = vperm.slane %v310, 6
        %v1443 = vlaneseq
        %v1444 = vshrl.u32 %v1443, 7
        %1446 = vset.pattern.permute.xlu0 %v1444
        %1447 = vperm.xlu0 %1446, %v1442
        %v1448 = vpop.permute.xlu0 %1447
        %v1449 = vlaneseq
        %v1450 = vshrl.u32 %v1449, 7
        %v1451 = vadd.s32 %v1450, 8
        %1452 = vset.pattern.permute.xlu0 %v1451
        %1453 = vperm.xlu0 %1452, %v1442
        %v1454 = vpop.permute.xlu0 %1453
        %v1455 = vperm.slane %v310, 7
        %v1456 = vlaneseq
        %v1457 = vshrl.u32 %v1456, 7
        %1459 = vset.pattern.permute.xlu0 %v1457
        %1460 = vperm.xlu0 %1459, %v1455
        %v1461 = vpop.permute.xlu0 %1460
        %v1462 = vlaneseq
        %v1463 = vshrl.u32 %v1462, 7
        %v1464 = vadd.s32 %v1463, 8
        %1465 = vset.pattern.permute.xlu0 %v1464
        %1466 = vperm.xlu0 %1465, %v1455
        %v1467 = vpop.permute.xlu0 %1466
        %v1468 = vperm.slane %v311, 0
        %v1469 = vlaneseq
        %v1470 = vshrl.u32 %v1469, 7
        %1472 = vset.pattern.permute.xlu0 %v1470
        %1473 = vperm.xlu0 %1472, %v1468
        %v1474 = vpop.permute.xlu0 %1473
        %v1475 = vlaneseq
        %v1476 = vshrl.u32 %v1475, 7
        %v1477 = vadd.s32 %v1476, 8
        %1478 = vset.pattern.permute.xlu0 %v1477
        %1479 = vperm.xlu0 %1478, %v1468
        %v1480 = vpop.permute.xlu0 %1479
        %v1481 = vperm.slane %v311, 1
        %v1482 = vlaneseq
        %v1483 = vshrl.u32 %v1482, 7
        %1485 = vset.pattern.permute.xlu0 %v1483
        %1486 = vperm.xlu0 %1485, %v1481
        %v1487 = vpop.permute.xlu0 %1486
        %v1488 = vlaneseq
        %v1489 = vshrl.u32 %v1488, 7
        %v1490 = vadd.s32 %v1489, 8
        %1491 = vset.pattern.permute.xlu0 %v1490
        %1492 = vperm.xlu0 %1491, %v1481
        %v1493 = vpop.permute.xlu0 %1492
        %v1494 = vperm.slane %v311, 2
        %v1495 = vlaneseq
        %v1496 = vshrl.u32 %v1495, 7
        %1498 = vset.pattern.permute.xlu0 %v1496
        %1499 = vperm.xlu0 %1498, %v1494
        %v1500 = vpop.permute.xlu0 %1499
        %v1501 = vlaneseq
        %v1502 = vshrl.u32 %v1501, 7
        %v1503 = vadd.s32 %v1502, 8
        %1504 = vset.pattern.permute.xlu0 %v1503
        %1505 = vperm.xlu0 %1504, %v1494
        %v1506 = vpop.permute.xlu0 %1505
        %v1507 = vperm.slane %v311, 3
        %v1508 = vlaneseq
        %v1509 = vshrl.u32 %v1508, 7
        %1511 = vset.pattern.permute.xlu0 %v1509
        %1512 = vperm.xlu0 %1511, %v1507
        %v1513 = vpop.permute.xlu0 %1512
        %v1514 = vlaneseq
        %v1515 = vshrl.u32 %v1514, 7
        %v1516 = vadd.s32 %v1515, 8
        %1517 = vset.pattern.permute.xlu0 %v1516
        %1518 = vperm.xlu0 %1517, %v1507
        %v1519 = vpop.permute.xlu0 %1518
        %v1520 = vperm.slane %v311, 4
        %v1521 = vlaneseq
        %v1522 = vshrl.u32 %v1521, 7
        %1524 = vset.pattern.permute.xlu0 %v1522
        %1525 = vperm.xlu0 %1524, %v1520
        %v1526 = vpop.permute.xlu0 %1525
        %v1527 = vlaneseq
        %v1528 = vshrl.u32 %v1527, 7
        %v1529 = vadd.s32 %v1528, 8
        %1530 = vset.pattern.permute.xlu0 %v1529
        %1531 = vperm.xlu0 %1530, %v1520
        %v1532 = vpop.permute.xlu0 %1531
        %v1533 = vperm.slane %v311, 5
        %v1534 = vlaneseq
        %v1535 = vshrl.u32 %v1534, 7
        %1537 = vset.pattern.permute.xlu0 %v1535
        %1538 = vperm.xlu0 %1537, %v1533
        %v1539 = vpop.permute.xlu0 %1538
        %v1540 = vlaneseq
        %v1541 = vshrl.u32 %v1540, 7
        %v1542 = vadd.s32 %v1541, 8
        %1543 = vset.pattern.permute.xlu0 %v1542
        %1544 = vperm.xlu0 %1543, %v1533
        %v1545 = vpop.permute.xlu0 %1544
        %v1546 = vperm.slane %v311, 6
        %v1547 = vlaneseq
        %v1548 = vshrl.u32 %v1547, 7
        %1550 = vset.pattern.permute.xlu0 %v1548
        %1551 = vperm.xlu0 %1550, %v1546
        %v1552 = vpop.permute.xlu0 %1551
        %v1553 = vlaneseq
        %v1554 = vshrl.u32 %v1553, 7
        %v1555 = vadd.s32 %v1554, 8
        %1556 = vset.pattern.permute.xlu0 %v1555
        %1557 = vperm.xlu0 %1556, %v1546
        %v1558 = vpop.permute.xlu0 %1557
        %v1559 = vperm.slane %v311, 7
        %v1560 = vlaneseq
        %v1561 = vshrl.u32 %v1560, 7
        %1563 = vset.pattern.permute.xlu0 %v1561
        %1564 = vperm.xlu0 %1563, %v1559
        %v1565 = vpop.permute.xlu0 %1564
        %v1566 = vlaneseq
        %v1567 = vshrl.u32 %v1566, 7
        %v1568 = vadd.s32 %v1567, 8
        %1569 = vset.pattern.permute.xlu0 %v1568
        %1570 = vperm.xlu0 %1569, %v1559
        %v1571 = vpop.permute.xlu0 %1570
        %v1572 = vperm.slane %v312, 0
        %v1573 = vlaneseq
        %v1574 = vshrl.u32 %v1573, 7
        %1576 = vset.pattern.permute.xlu0 %v1574
        %1577 = vperm.xlu0 %1576, %v1572
        %v1578 = vpop.permute.xlu0 %1577
        %v1579 = vlaneseq
        %v1580 = vshrl.u32 %v1579, 7
        %v1581 = vadd.s32 %v1580, 8
        %1582 = vset.pattern.permute.xlu0 %v1581
        %1583 = vperm.xlu0 %1582, %v1572
        %v1584 = vpop.permute.xlu0 %1583
        %v1585 = vperm.slane %v312, 1
        %v1586 = vlaneseq
        %v1587 = vshrl.u32 %v1586, 7
        %1589 = vset.pattern.permute.xlu0 %v1587
        %1590 = vperm.xlu0 %1589, %v1585
        %v1591 = vpop.permute.xlu0 %1590
        %v1592 = vlaneseq
        %v1593 = vshrl.u32 %v1592, 7
        %v1594 = vadd.s32 %v1593, 8
        %1595 = vset.pattern.permute.xlu0 %v1594
        %1596 = vperm.xlu0 %1595, %v1585
        %v1597 = vpop.permute.xlu0 %1596
        %v1598 = vperm.slane %v312, 2
        %v1599 = vlaneseq
        %v1600 = vshrl.u32 %v1599, 7
        %1602 = vset.pattern.permute.xlu0 %v1600
        %1603 = vperm.xlu0 %1602, %v1598
        %v1604 = vpop.permute.xlu0 %1603
        %v1605 = vlaneseq
        %v1606 = vshrl.u32 %v1605, 7
        %v1607 = vadd.s32 %v1606, 8
        %1608 = vset.pattern.permute.xlu0 %v1607
        %1609 = vperm.xlu0 %1608, %v1598
        %v1610 = vpop.permute.xlu0 %1609
        %v1611 = vperm.slane %v312, 3
        %v1612 = vlaneseq
        %v1613 = vshrl.u32 %v1612, 7
        %1615 = vset.pattern.permute.xlu0 %v1613
        %1616 = vperm.xlu0 %1615, %v1611
        %v1617 = vpop.permute.xlu0 %1616
        %v1618 = vlaneseq
        %v1619 = vshrl.u32 %v1618, 7
        %v1620 = vadd.s32 %v1619, 8
        %1621 = vset.pattern.permute.xlu0 %v1620
        %1622 = vperm.xlu0 %1621, %v1611
        %v1623 = vpop.permute.xlu0 %1622
        %v1624 = vperm.slane %v312, 4
        %v1625 = vlaneseq
        %v1626 = vshrl.u32 %v1625, 7
        %1628 = vset.pattern.permute.xlu0 %v1626
        %1629 = vperm.xlu0 %1628, %v1624
        %v1630 = vpop.permute.xlu0 %1629
        %v1631 = vlaneseq
        %v1632 = vshrl.u32 %v1631, 7
        %v1633 = vadd.s32 %v1632, 8
        %1634 = vset.pattern.permute.xlu0 %v1633
        %1635 = vperm.xlu0 %1634, %v1624
        %v1636 = vpop.permute.xlu0 %1635
        %v1637 = vperm.slane %v312, 5
        %v1638 = vlaneseq
        %v1639 = vshrl.u32 %v1638, 7
        %1641 = vset.pattern.permute.xlu0 %v1639
        %1642 = vperm.xlu0 %1641, %v1637
        %v1643 = vpop.permute.xlu0 %1642
        %v1644 = vlaneseq
        %v1645 = vshrl.u32 %v1644, 7
        %v1646 = vadd.s32 %v1645, 8
        %1647 = vset.pattern.permute.xlu0 %v1646
        %1648 = vperm.xlu0 %1647, %v1637
        %v1649 = vpop.permute.xlu0 %1648
        %v1650 = vperm.slane %v312, 6
        %v1651 = vlaneseq
        %v1652 = vshrl.u32 %v1651, 7
        %1654 = vset.pattern.permute.xlu0 %v1652
        %1655 = vperm.xlu0 %1654, %v1650
        %v1656 = vpop.permute.xlu0 %1655
        %v1657 = vlaneseq
        %v1658 = vshrl.u32 %v1657, 7
        %v1659 = vadd.s32 %v1658, 8
        %1660 = vset.pattern.permute.xlu0 %v1659
        %1661 = vperm.xlu0 %1660, %v1650
        %v1662 = vpop.permute.xlu0 %1661
        %v1663 = vperm.slane %v312, 7
        %v1664 = vlaneseq
        %v1665 = vshrl.u32 %v1664, 7
        %1667 = vset.pattern.permute.xlu0 %v1665
        %1668 = vperm.xlu0 %1667, %v1663
        %v1669 = vpop.permute.xlu0 %1668
        %v1670 = vlaneseq
        %v1671 = vshrl.u32 %v1670, 7
        %v1672 = vadd.s32 %v1671, 8
        %1673 = vset.pattern.permute.xlu0 %v1672
        %1674 = vperm.xlu0 %1673, %v1663
        %v1675 = vpop.permute.xlu0 %1674
        %v1676 = vperm.slane %v313, 0
        %v1677 = vlaneseq
        %v1678 = vshrl.u32 %v1677, 7
        %1680 = vset.pattern.permute.xlu0 %v1678
        %1681 = vperm.xlu0 %1680, %v1676
        %v1682 = vpop.permute.xlu0 %1681
        %v1683 = vlaneseq
        %v1684 = vshrl.u32 %v1683, 7
        %v1685 = vadd.s32 %v1684, 8
        %1686 = vset.pattern.permute.xlu0 %v1685
        %1687 = vperm.xlu0 %1686, %v1676
        %v1688 = vpop.permute.xlu0 %1687
        %v1689 = vperm.slane %v313, 1
        %v1690 = vlaneseq
        %v1691 = vshrl.u32 %v1690, 7
        %1693 = vset.pattern.permute.xlu0 %v1691
        %1694 = vperm.xlu0 %1693, %v1689
        %v1695 = vpop.permute.xlu0 %1694
        %v1696 = vlaneseq
        %v1697 = vshrl.u32 %v1696, 7
        %v1698 = vadd.s32 %v1697, 8
        %1699 = vset.pattern.permute.xlu0 %v1698
        %1700 = vperm.xlu0 %1699, %v1689
        %v1701 = vpop.permute.xlu0 %1700
        %v1702 = vperm.slane %v313, 2
        %v1703 = vlaneseq
        %v1704 = vshrl.u32 %v1703, 7
        %1706 = vset.pattern.permute.xlu0 %v1704
        %1707 = vperm.xlu0 %1706, %v1702
        %v1708 = vpop.permute.xlu0 %1707
        %v1709 = vlaneseq
        %v1710 = vshrl.u32 %v1709, 7
        %v1711 = vadd.s32 %v1710, 8
        %1712 = vset.pattern.permute.xlu0 %v1711
        %1713 = vperm.xlu0 %1712, %v1702
        %v1714 = vpop.permute.xlu0 %1713
        %v1715 = vperm.slane %v313, 3
        %v1716 = vlaneseq
        %v1717 = vshrl.u32 %v1716, 7
        %1719 = vset.pattern.permute.xlu0 %v1717
        %1720 = vperm.xlu0 %1719, %v1715
        %v1721 = vpop.permute.xlu0 %1720
        %v1722 = vlaneseq
        %v1723 = vshrl.u32 %v1722, 7
        %v1724 = vadd.s32 %v1723, 8
        %1725 = vset.pattern.permute.xlu0 %v1724
        %1726 = vperm.xlu0 %1725, %v1715
        %v1727 = vpop.permute.xlu0 %1726
        %v1728 = vperm.slane %v313, 4
        %v1729 = vlaneseq
        %v1730 = vshrl.u32 %v1729, 7
        %1732 = vset.pattern.permute.xlu0 %v1730
        %1733 = vperm.xlu0 %1732, %v1728
        %v1734 = vpop.permute.xlu0 %1733
        %v1735 = vlaneseq
        %v1736 = vshrl.u32 %v1735, 7
        %v1737 = vadd.s32 %v1736, 8
        %1738 = vset.pattern.permute.xlu0 %v1737
        %1739 = vperm.xlu0 %1738, %v1728
        %v1740 = vpop.permute.xlu0 %1739
        %v1741 = vperm.slane %v313, 5
        %v1742 = vlaneseq
        %v1743 = vshrl.u32 %v1742, 7
        %1745 = vset.pattern.permute.xlu0 %v1743
        %1746 = vperm.xlu0 %1745, %v1741
        %v1747 = vpop.permute.xlu0 %1746
        %v1748 = vlaneseq
        %v1749 = vshrl.u32 %v1748, 7
        %v1750 = vadd.s32 %v1749, 8
        %1751 = vset.pattern.permute.xlu0 %v1750
        %1752 = vperm.xlu0 %1751, %v1741
        %v1753 = vpop.permute.xlu0 %1752
        %v1754 = vperm.slane %v313, 6
        %v1755 = vlaneseq
        %v1756 = vshrl.u32 %v1755, 7
        %1758 = vset.pattern.permute.xlu0 %v1756
        %1759 = vperm.xlu0 %1758, %v1754
        %v1760 = vpop.permute.xlu0 %1759
        %v1761 = vlaneseq
        %v1762 = vshrl.u32 %v1761, 7
        %v1763 = vadd.s32 %v1762, 8
        %1764 = vset.pattern.permute.xlu0 %v1763
        %1765 = vperm.xlu0 %1764, %v1754
        %v1766 = vpop.permute.xlu0 %1765
        %v1767 = vperm.slane %v313, 7
        %v1768 = vlaneseq
        %v1769 = vshrl.u32 %v1768, 7
        %1771 = vset.pattern.permute.xlu0 %v1769
        %1772 = vperm.xlu0 %1771, %v1767
        %v1773 = vpop.permute.xlu0 %1772
        %v1774 = vlaneseq
        %v1775 = vshrl.u32 %v1774, 7
        %v1776 = vadd.s32 %v1775, 8
        %1777 = vset.pattern.permute.xlu0 %v1776
        %1778 = vperm.xlu0 %1777, %v1767
        %v1779 = vpop.permute.xlu0 %1778
        %v1780 = vperm.slane %v314, 0
        %v1781 = vlaneseq
        %v1782 = vshrl.u32 %v1781, 7
        %1784 = vset.pattern.permute.xlu0 %v1782
        %1785 = vperm.xlu0 %1784, %v1780
        %v1786 = vpop.permute.xlu0 %1785
        %v1787 = vlaneseq
        %v1788 = vshrl.u32 %v1787, 7
        %v1789 = vadd.s32 %v1788, 8
        %1790 = vset.pattern.permute.xlu0 %v1789
        %1791 = vperm.xlu0 %1790, %v1780
        %v1792 = vpop.permute.xlu0 %1791
        %v1793 = vperm.slane %v314, 1
        %v1794 = vlaneseq
        %v1795 = vshrl.u32 %v1794, 7
        %1797 = vset.pattern.permute.xlu0 %v1795
        %1798 = vperm.xlu0 %1797, %v1793
        %v1799 = vpop.permute.xlu0 %1798
        %v1800 = vlaneseq
        %v1801 = vshrl.u32 %v1800, 7
        %v1802 = vadd.s32 %v1801, 8
        %1803 = vset.pattern.permute.xlu0 %v1802
        %1804 = vperm.xlu0 %1803, %v1793
        %v1805 = vpop.permute.xlu0 %1804
        %v1806 = vperm.slane %v314, 2
        %v1807 = vlaneseq
        %v1808 = vshrl.u32 %v1807, 7
        %1810 = vset.pattern.permute.xlu0 %v1808
        %1811 = vperm.xlu0 %1810, %v1806
        %v1812 = vpop.permute.xlu0 %1811
        %v1813 = vlaneseq
        %v1814 = vshrl.u32 %v1813, 7
        %v1815 = vadd.s32 %v1814, 8
        %1816 = vset.pattern.permute.xlu0 %v1815
        %1817 = vperm.xlu0 %1816, %v1806
        %v1818 = vpop.permute.xlu0 %1817
        %v1819 = vperm.slane %v314, 3
        %v1820 = vlaneseq
        %v1821 = vshrl.u32 %v1820, 7
        %1823 = vset.pattern.permute.xlu0 %v1821
        %1824 = vperm.xlu0 %1823, %v1819
        %v1825 = vpop.permute.xlu0 %1824
        %v1826 = vlaneseq
        %v1827 = vshrl.u32 %v1826, 7
        %v1828 = vadd.s32 %v1827, 8
        %1829 = vset.pattern.permute.xlu0 %v1828
        %1830 = vperm.xlu0 %1829, %v1819
        %v1831 = vpop.permute.xlu0 %1830
        %v1832 = vperm.slane %v314, 4
        %v1833 = vlaneseq
        %v1834 = vshrl.u32 %v1833, 7
        %1836 = vset.pattern.permute.xlu0 %v1834
        %1837 = vperm.xlu0 %1836, %v1832
        %v1838 = vpop.permute.xlu0 %1837
        %v1839 = vlaneseq
        %v1840 = vshrl.u32 %v1839, 7
        %v1841 = vadd.s32 %v1840, 8
        %1842 = vset.pattern.permute.xlu0 %v1841
        %1843 = vperm.xlu0 %1842, %v1832
        %v1844 = vpop.permute.xlu0 %1843
        %v1845 = vperm.slane %v314, 5
        %v1846 = vlaneseq
        %v1847 = vshrl.u32 %v1846, 7
        %1849 = vset.pattern.permute.xlu0 %v1847
        %1850 = vperm.xlu0 %1849, %v1845
        %v1851 = vpop.permute.xlu0 %1850
        %v1852 = vlaneseq
        %v1853 = vshrl.u32 %v1852, 7
        %v1854 = vadd.s32 %v1853, 8
        %1855 = vset.pattern.permute.xlu0 %v1854
        %1856 = vperm.xlu0 %1855, %v1845
        %v1857 = vpop.permute.xlu0 %1856
        %v1858 = vperm.slane %v314, 6
        %v1859 = vlaneseq
        %v1860 = vshrl.u32 %v1859, 7
        %1862 = vset.pattern.permute.xlu0 %v1860
        %1863 = vperm.xlu0 %1862, %v1858
        %v1864 = vpop.permute.xlu0 %1863
        %v1865 = vlaneseq
        %v1866 = vshrl.u32 %v1865, 7
        %v1867 = vadd.s32 %v1866, 8
        %1868 = vset.pattern.permute.xlu0 %v1867
        %1869 = vperm.xlu0 %1868, %v1858
        %v1870 = vpop.permute.xlu0 %1869
        %v1871 = vperm.slane %v314, 7
        %v1872 = vlaneseq
        %v1873 = vshrl.u32 %v1872, 7
        %1875 = vset.pattern.permute.xlu0 %v1873
        %1876 = vperm.xlu0 %1875, %v1871
        %v1877 = vpop.permute.xlu0 %1876
        %v1878 = vlaneseq
        %v1879 = vshrl.u32 %v1878, 7
        %v1880 = vadd.s32 %v1879, 8
        %1881 = vset.pattern.permute.xlu0 %v1880
        %1882 = vperm.xlu0 %1881, %v1871
        %v1883 = vpop.permute.xlu0 %1882
        %v1884 = vperm.slane %v315, 0
        %v1885 = vlaneseq
        %v1886 = vshrl.u32 %v1885, 7
        %1888 = vset.pattern.permute.xlu0 %v1886
        %1889 = vperm.xlu0 %1888, %v1884
        %v1890 = vpop.permute.xlu0 %1889
        %v1891 = vlaneseq
        %v1892 = vshrl.u32 %v1891, 7
        %v1893 = vadd.s32 %v1892, 8
        %1894 = vset.pattern.permute.xlu0 %v1893
        %1895 = vperm.xlu0 %1894, %v1884
        %v1896 = vpop.permute.xlu0 %1895
        %v1897 = vperm.slane %v315, 1
        %v1898 = vlaneseq
        %v1899 = vshrl.u32 %v1898, 7
        %1901 = vset.pattern.permute.xlu0 %v1899
        %1902 = vperm.xlu0 %1901, %v1897
        %v1903 = vpop.permute.xlu0 %1902
        %v1904 = vlaneseq
        %v1905 = vshrl.u32 %v1904, 7
        %v1906 = vadd.s32 %v1905, 8
        %1907 = vset.pattern.permute.xlu0 %v1906
        %1908 = vperm.xlu0 %1907, %v1897
        %v1909 = vpop.permute.xlu0 %1908
        %v1910 = vperm.slane %v315, 2
        %v1911 = vlaneseq
        %v1912 = vshrl.u32 %v1911, 7
        %1914 = vset.pattern.permute.xlu0 %v1912
        %1915 = vperm.xlu0 %1914, %v1910
        %v1916 = vpop.permute.xlu0 %1915
        %v1917 = vlaneseq
        %v1918 = vshrl.u32 %v1917, 7
        %v1919 = vadd.s32 %v1918, 8
        %1920 = vset.pattern.permute.xlu0 %v1919
        %1921 = vperm.xlu0 %1920, %v1910
        %v1922 = vpop.permute.xlu0 %1921
        %v1923 = vperm.slane %v315, 3
        %v1924 = vlaneseq
        %v1925 = vshrl.u32 %v1924, 7
        %1927 = vset.pattern.permute.xlu0 %v1925
        %1928 = vperm.xlu0 %1927, %v1923
        %v1929 = vpop.permute.xlu0 %1928
        %v1930 = vlaneseq
        %v1931 = vshrl.u32 %v1930, 7
        %v1932 = vadd.s32 %v1931, 8
        %1933 = vset.pattern.permute.xlu0 %v1932
        %1934 = vperm.xlu0 %1933, %v1923
        %v1935 = vpop.permute.xlu0 %1934
        %v1936 = vperm.slane %v315, 4
        %v1937 = vlaneseq
        %v1938 = vshrl.u32 %v1937, 7
        %1940 = vset.pattern.permute.xlu0 %v1938
        %1941 = vperm.xlu0 %1940, %v1936
        %v1942 = vpop.permute.xlu0 %1941
        %v1943 = vlaneseq
        %v1944 = vshrl.u32 %v1943, 7
        %v1945 = vadd.s32 %v1944, 8
        %1946 = vset.pattern.permute.xlu0 %v1945
        %1947 = vperm.xlu0 %1946, %v1936
        %v1948 = vpop.permute.xlu0 %1947
        %v1949 = vperm.slane %v315, 5
        %v1950 = vlaneseq
        %v1951 = vshrl.u32 %v1950, 7
        %1953 = vset.pattern.permute.xlu0 %v1951
        %1954 = vperm.xlu0 %1953, %v1949
        %v1955 = vpop.permute.xlu0 %1954
        %v1956 = vlaneseq
        %v1957 = vshrl.u32 %v1956, 7
        %v1958 = vadd.s32 %v1957, 8
        %1959 = vset.pattern.permute.xlu0 %v1958
        %1960 = vperm.xlu0 %1959, %v1949
        %v1961 = vpop.permute.xlu0 %1960
        %v1962 = vperm.slane %v315, 6
        %v1963 = vlaneseq
        %v1964 = vshrl.u32 %v1963, 7
        %1966 = vset.pattern.permute.xlu0 %v1964
        %1967 = vperm.xlu0 %1966, %v1962
        %v1968 = vpop.permute.xlu0 %1967
        %v1969 = vlaneseq
        %v1970 = vshrl.u32 %v1969, 7
        %v1971 = vadd.s32 %v1970, 8
        %1972 = vset.pattern.permute.xlu0 %v1971
        %1973 = vperm.xlu0 %1972, %v1962
        %v1974 = vpop.permute.xlu0 %1973
        %v1975 = vperm.slane %v315, 7
        %v1976 = vlaneseq
        %v1977 = vshrl.u32 %v1976, 7
        %1979 = vset.pattern.permute.xlu0 %v1977
        %1980 = vperm.xlu0 %1979, %v1975
        %v1981 = vpop.permute.xlu0 %1980
        %v1982 = vlaneseq
        %v1983 = vshrl.u32 %v1982, 7
        %v1984 = vadd.s32 %v1983, 8
        %1985 = vset.pattern.permute.xlu0 %v1984
        %1986 = vperm.xlu0 %1985, %v1975
        %v1987 = vpop.permute.xlu0 %1986
        %vm1988 = vcmask 7168
        %v1989 = vsel %vm1988, %v330, %v1162
        %v1990 = vsel %vm1988, %v336, %v1168
        %v1991 = vsel %vm1988, %v343, %v1175
        %v1992 = vsel %vm1988, %v349, %v1181
        %v1993 = vsel %vm1988, %v356, %v1188
        %v1994 = vsel %vm1988, %v362, %v1194
        %v1995 = vsel %vm1988, %v369, %v1201
        %v1996 = vsel %vm1988, %v375, %v1207
        %v1997 = vsel %vm1988, %v382, %v1214
        %v1998 = vsel %vm1988, %v388, %v1220
        %v1999 = vsel %vm1988, %v395, %v1227
        %v2000 = vsel %vm1988, %v401, %v1233
        %v2001 = vsel %vm1988, %v408, %v1240
        %v2002 = vsel %vm1988, %v414, %v1246
        %v2003 = vsel %vm1988, %v421, %v1253
        %v2004 = vsel %vm1988, %v427, %v1259
        %v2005 = vsel %vm1988, %v434, %v1266
        %v2006 = vsel %vm1988, %v440, %v1272
        %v2007 = vsel %vm1988, %v447, %v1279
        %v2008 = vsel %vm1988, %v453, %v1285
        %v2009 = vsel %vm1988, %v460, %v1292
        %v2010 = vsel %vm1988, %v466, %v1298
        %v2011 = vsel %vm1988, %v473, %v1305
        %v2012 = vsel %vm1988, %v479, %v1311
        %v2013 = vsel %vm1988, %v486, %v1318
        %v2014 = vsel %vm1988, %v492, %v1324
        %v2015 = vsel %vm1988, %v499, %v1331
        %v2016 = vsel %vm1988, %v505, %v1337
        %v2017 = vsel %vm1988, %v512, %v1344
        %v2018 = vsel %vm1988, %v518, %v1350
        %v2019 = vsel %vm1988, %v525, %v1357
        %v2020 = vsel %vm1988, %v531, %v1363
        %v2021 = vsel %vm1988, %v538, %v1370
        %v2022 = vsel %vm1988, %v544, %v1376
        %v2023 = vsel %vm1988, %v551, %v1383
        %v2024 = vsel %vm1988, %v557, %v1389
        %v2025 = vsel %vm1988, %v564, %v1396
        %v2026 = vsel %vm1988, %v570, %v1402
        %v2027 = vsel %vm1988, %v577, %v1409
        %v2028 = vsel %vm1988, %v583, %v1415
        %v2029 = vsel %vm1988, %v590, %v1422
        %v2030 = vsel %vm1988, %v596, %v1428
        %v2031 = vsel %vm1988, %v603, %v1435
        %v2032 = vsel %vm1988, %v609, %v1441
        %v2033 = vsel %vm1988, %v616, %v1448
        %v2034 = vsel %vm1988, %v622, %v1454
        %v2035 = vsel %vm1988, %v629, %v1461
        %v2036 = vsel %vm1988, %v635, %v1467
        %v2037 = vsel %vm1988, %v642, %v1474
        %v2038 = vsel %vm1988, %v648, %v1480
        %v2039 = vsel %vm1988, %v655, %v1487
        %v2040 = vsel %vm1988, %v661, %v1493
        %v2041 = vsel %vm1988, %v668, %v1500
        %v2042 = vsel %vm1988, %v674, %v1506
        %v2043 = vsel %vm1988, %v681, %v1513
        %v2044 = vsel %vm1988, %v687, %v1519
        %v2045 = vsel %vm1988, %v694, %v1526
        %v2046 = vsel %vm1988, %v700, %v1532
        %v2047 = vsel %vm1988, %v707, %v1539
        %v2048 = vsel %vm1988, %v713, %v1545
        %v2049 = vsel %vm1988, %v720, %v1552
        %v2050 = vsel %vm1988, %v726, %v1558
        %v2051 = vsel %vm1988, %v733, %v1565
        %v2052 = vsel %vm1988, %v739, %v1571
        %v2053 = vsel %vm1988, %v746, %v1578
        %v2054 = vsel %vm1988, %v752, %v1584
        %v2055 = vsel %vm1988, %v759, %v1591
        %v2056 = vsel %vm1988, %v765, %v1597
        %v2057 = vsel %vm1988, %v772, %v1604
        %v2058 = vsel %vm1988, %v778, %v1610
        %v2059 = vsel %vm1988, %v785, %v1617
        %v2060 = vsel %vm1988, %v791, %v1623
        %v2061 = vsel %vm1988, %v798, %v1630
        %v2062 = vsel %vm1988, %v804, %v1636
        %v2063 = vsel %vm1988, %v811, %v1643
        %v2064 = vsel %vm1988, %v817, %v1649
        %v2065 = vsel %vm1988, %v824, %v1656
        %v2066 = vsel %vm1988, %v830, %v1662
        %v2067 = vsel %vm1988, %v837, %v1669
        %v2068 = vsel %vm1988, %v843, %v1675
        %v2069 = vsel %vm1988, %v850, %v1682
        %v2070 = vsel %vm1988, %v856, %v1688
        %v2071 = vsel %vm1988, %v863, %v1695
        %v2072 = vsel %vm1988, %v869, %v1701
        %v2073 = vsel %vm1988, %v876, %v1708
        %v2074 = vsel %vm1988, %v882, %v1714
        %v2075 = vsel %vm1988, %v889, %v1721
        %v2076 = vsel %vm1988, %v895, %v1727
        %v2077 = vsel %vm1988, %v902, %v1734
        %v2078 = vsel %vm1988, %v908, %v1740
        %v2079 = vsel %vm1988, %v915, %v1747
        %v2080 = vsel %vm1988, %v921, %v1753
        %v2081 = vsel %vm1988, %v928, %v1760
        %v2082 = vsel %vm1988, %v934, %v1766
        %v2083 = vsel %vm1988, %v941, %v1773
        %v2084 = vsel %vm1988, %v947, %v1779
        %v2085 = vsel %vm1988, %v954, %v1786
        %v2086 = vsel %vm1988, %v960, %v1792
        %v2087 = vsel %vm1988, %v967, %v1799
        %v2088 = vsel %vm1988, %v973, %v1805
        %v2089 = vsel %vm1988, %v980, %v1812
        %v2090 = vsel %vm1988, %v986, %v1818
        %v2091 = vsel %vm1988, %v993, %v1825
        %v2092 = vsel %vm1988, %v999, %v1831
        %v2093 = vsel %vm1988, %v1006, %v1838
        %v2094 = vsel %vm1988, %v1012, %v1844
        %v2095 = vsel %vm1988, %v1019, %v1851
        %v2096 = vsel %vm1988, %v1025, %v1857
        %v2097 = vsel %vm1988, %v1032, %v1864
        %v2098 = vsel %vm1988, %v1038, %v1870
        %v2099 = vsel %vm1988, %v1045, %v1877
        %v2100 = vsel %vm1988, %v1051, %v1883
        %v2101 = vsel %vm1988, %v1058, %v1890
        %v2102 = vsel %vm1988, %v1064, %v1896
        %v2103 = vsel %vm1988, %v1071, %v1903
        %v2104 = vsel %vm1988, %v1077, %v1909
        %v2105 = vsel %vm1988, %v1084, %v1916
        %v2106 = vsel %vm1988, %v1090, %v1922
        %v2107 = vsel %vm1988, %v1097, %v1929
        %v2108 = vsel %vm1988, %v1103, %v1935
        %v2109 = vsel %vm1988, %v1110, %v1942
        %v2110 = vsel %vm1988, %v1116, %v1948
        %v2111 = vsel %vm1988, %v1123, %v1955
        %v2112 = vsel %vm1988, %v1129, %v1961
        %v2113 = vsel %vm1988, %v1136, %v1968
        %v2114 = vsel %vm1988, %v1142, %v1974
        %v2115 = vsel %vm1988, %v1149, %v1981
        %v2116 = vsel %vm1988, %v1155, %v1987
        %v2117 = vrot.slane %v1993, 4
        %vm2118 = vcmask 1047556
        %v2119 = vsel %vm2118, %v2117, %v1989
        %v2120 = vrot.slane %v1989, 4
        %v2121 = vsel %vm2118, %v1993, %v2120
        %v2123 = vunpack.c.l.s4 1983009808
        %v2124 = vunpack.c.0.s8 %v2123
        %v2125 = vperm.slane %v2119, %v2124
        %v2127 = vunpack.c.l.s4 1983009808
        %v2128 = vunpack.c.0.s8 %v2127
        %v2129 = vperm.slane %v2121, %v2128
        %v2130 = vrot.slane %v1995, 4
        %v2131 = vsel %vm2118, %v2130, %v1991
        %v2132 = vrot.slane %v1991, 4
        %v2133 = vsel %vm2118, %v1995, %v2132
        %v2135 = vunpack.c.l.s4 1983009808
        %v2136 = vunpack.c.0.s8 %v2135
        %v2137 = vperm.slane %v2131, %v2136
        %v2139 = vunpack.c.l.s4 1983009808
        %v2140 = vunpack.c.0.s8 %v2139
        %v2141 = vperm.slane %v2133, %v2140
        %v2142 = vrot.slane %v2001, 4
        %v2143 = vsel %vm2118, %v2142, %v1997
        %v2144 = vrot.slane %v1997, 4
        %v2145 = vsel %vm2118, %v2001, %v2144
        %v2147 = vunpack.c.l.s4 1983009808
        %v2148 = vunpack.c.0.s8 %v2147
        %v2149 = vperm.slane %v2143, %v2148
        %v2151 = vunpack.c.l.s4 1983009808
        %v2152 = vunpack.c.0.s8 %v2151
        %v2153 = vperm.slane %v2145, %v2152
        %v2154 = vrot.slane %v2003, 4
        %v2155 = vsel %vm2118, %v2154, %v1999
        %v2156 = vrot.slane %v1999, 4
        %v2157 = vsel %vm2118, %v2003, %v2156
        %v2159 = vunpack.c.l.s4 1983009808
        %v2160 = vunpack.c.0.s8 %v2159
        %v2161 = vperm.slane %v2155, %v2160
        %v2163 = vunpack.c.l.s4 1983009808
        %v2164 = vunpack.c.0.s8 %v2163
        %v2165 = vperm.slane %v2157, %v2164
        %v2166 = vrot.slane %v2137, 4
        %v2167 = vsel %vm2118, %v2166, %v2125
        %v2168 = vrot.slane %v2125, 4
        %v2169 = vsel %vm2118, %v2137, %v2168
        %v2171 = vunpack.c.l.s4 1934713408
        %v2172 = vunpack.c.0.s8 %v2171
        %v2173 = vperm.slane %v2167, %v2172
        %v2175 = vunpack.c.l.s4 1934713408
        %v2176 = vunpack.c.0.s8 %v2175
        %v2177 = vperm.slane %v2169, %v2176
        %v2178 = vrot.slane %v2141, 4
        %v2179 = vsel %vm2118, %v2178, %v2129
        %v2180 = vrot.slane %v2129, 4
        %v2181 = vsel %vm2118, %v2141, %v2180
        %v2183 = vunpack.c.l.s4 1934713408
        %v2184 = vunpack.c.0.s8 %v2183
        %v2185 = vperm.slane %v2179, %v2184
        %v2187 = vunpack.c.l.s4 1934713408
        %v2188 = vunpack.c.0.s8 %v2187
        %v2189 = vperm.slane %v2181, %v2188
        %v2190 = vrot.slane %v2161, 4
        %v2191 = vsel %vm2118, %v2190, %v2149
        %v2192 = vrot.slane %v2149, 4
        %v2193 = vsel %vm2118, %v2161, %v2192
        %v2195 = vunpack.c.l.s4 1934713408
        %v2196 = vunpack.c.0.s8 %v2195
        %v2197 = vperm.slane %v2191, %v2196
        %v2199 = vunpack.c.l.s4 1934713408
        %v2200 = vunpack.c.0.s8 %v2199
        %v2201 = vperm.slane %v2193, %v2200
        %v2202 = vrot.slane %v2165, 4
        %v2203 = vsel %vm2118, %v2202, %v2153
        %v2204 = vrot.slane %v2153, 4
        %v2205 = vsel %vm2118, %v2165, %v2204
        %v2207 = vunpack.c.l.s4 1934713408
        %v2208 = vunpack.c.0.s8 %v2207
        %v2209 = vperm.slane %v2203, %v2208
        %v2211 = vunpack.c.l.s4 1934713408
        %v2212 = vunpack.c.0.s8 %v2211
        %v2213 = vperm.slane %v2205, %v2212
        %v2214 = vrot.slane %v2197, 4
        %v2215 = vsel %vm2118, %v2214, %v2173
        %v2216 = vrot.slane %v2173, 4
        %v2217 = vsel %vm2118, %v2197, %v2216
        %v2218 = vrot.slane %v2201, 4
        %v2219 = vsel %vm2118, %v2218, %v2177
        %v2220 = vrot.slane %v2177, 4
        %v2221 = vsel %vm2118, %v2201, %v2220
        %v2222 = vrot.slane %v2209, 4
        %v2223 = vsel %vm2118, %v2222, %v2185
        %v2224 = vrot.slane %v2185, 4
        %v2225 = vsel %vm2118, %v2209, %v2224
        %v2226 = vrot.slane %v2213, 4
        %v2227 = vsel %vm2118, %v2226, %v2189
        %v2228 = vrot.slane %v2189, 4
        %v2229 = vsel %vm2118, %v2213, %v2228
        %v2230 = vrot.slane %v2009, 4
        %v2231 = vsel %vm2118, %v2230, %v2005
        %v2232 = vrot.slane %v2005, 4
        %v2233 = vsel %vm2118, %v2009, %v2232
        %v2235 = vunpack.c.l.s4 1983009808
        %v2236 = vunpack.c.0.s8 %v2235
        %v2237 = vperm.slane %v2231, %v2236
        %v2239 = vunpack.c.l.s4 1983009808
        %v2240 = vunpack.c.0.s8 %v2239
        %v2241 = vperm.slane %v2233, %v2240
        %v2242 = vrot.slane %v2011, 4
        %v2243 = vsel %vm2118, %v2242, %v2007
        %v2244 = vrot.slane %v2007, 4
        %v2245 = vsel %vm2118, %v2011, %v2244
        %v2247 = vunpack.c.l.s4 1983009808
        %v2248 = vunpack.c.0.s8 %v2247
        %v2249 = vperm.slane %v2243, %v2248
        %v2251 = vunpack.c.l.s4 1983009808
        %v2252 = vunpack.c.0.s8 %v2251
        %v2253 = vperm.slane %v2245, %v2252
        %v2254 = vrot.slane %v2017, 4
        %v2255 = vsel %vm2118, %v2254, %v2013
        %v2256 = vrot.slane %v2013, 4
        %v2257 = vsel %vm2118, %v2017, %v2256
        %v2259 = vunpack.c.l.s4 1983009808
        %v2260 = vunpack.c.0.s8 %v2259
        %v2261 = vperm.slane %v2255, %v2260
        %v2263 = vunpack.c.l.s4 1983009808
        %v2264 = vunpack.c.0.s8 %v2263
        %v2265 = vperm.slane %v2257, %v2264
        %v2266 = vrot.slane %v2019, 4
        %v2267 = vsel %vm2118, %v2266, %v2015
        %v2268 = vrot.slane %v2015, 4
        %v2269 = vsel %vm2118, %v2019, %v2268
        %v2271 = vunpack.c.l.s4 1983009808
        %v2272 = vunpack.c.0.s8 %v2271
        %v2273 = vperm.slane %v2267, %v2272
        %v2275 = vunpack.c.l.s4 1983009808
        %v2276 = vunpack.c.0.s8 %v2275
        %v2277 = vperm.slane %v2269, %v2276
        %v2278 = vrot.slane %v2249, 4
        %v2279 = vsel %vm2118, %v2278, %v2237
        %v2280 = vrot.slane %v2237, 4
        %v2281 = vsel %vm2118, %v2249, %v2280
        %v2283 = vunpack.c.l.s4 1934713408
        %v2284 = vunpack.c.0.s8 %v2283
        %v2285 = vperm.slane %v2279, %v2284
        %v2287 = vunpack.c.l.s4 1934713408
        %v2288 = vunpack.c.0.s8 %v2287
        %v2289 = vperm.slane %v2281, %v2288
        %v2290 = vrot.slane %v2253, 4
        %v2291 = vsel %vm2118, %v2290, %v2241
        %v2292 = vrot.slane %v2241, 4
        %v2293 = vsel %vm2118, %v2253, %v2292
        %v2295 = vunpack.c.l.s4 1934713408
        %v2296 = vunpack.c.0.s8 %v2295
        %v2297 = vperm.slane %v2291, %v2296
        %v2299 = vunpack.c.l.s4 1934713408
        %v2300 = vunpack.c.0.s8 %v2299
        %v2301 = vperm.slane %v2293, %v2300
        %v2302 = vrot.slane %v2273, 4
        %v2303 = vsel %vm2118, %v2302, %v2261
        %v2304 = vrot.slane %v2261, 4
        %v2305 = vsel %vm2118, %v2273, %v2304
        %v2307 = vunpack.c.l.s4 1934713408
        %v2308 = vunpack.c.0.s8 %v2307
        %v2309 = vperm.slane %v2303, %v2308
        %v2311 = vunpack.c.l.s4 1934713408
        %v2312 = vunpack.c.0.s8 %v2311
        %v2313 = vperm.slane %v2305, %v2312
        %v2314 = vrot.slane %v2277, 4
        %v2315 = vsel %vm2118, %v2314, %v2265
        %v2316 = vrot.slane %v2265, 4
        %v2317 = vsel %vm2118, %v2277, %v2316
        %v2319 = vunpack.c.l.s4 1934713408
        %v2320 = vunpack.c.0.s8 %v2319
        %v2321 = vperm.slane %v2315, %v2320
        %v2323 = vunpack.c.l.s4 1934713408
        %v2324 = vunpack.c.0.s8 %v2323
        %v2325 = vperm.slane %v2317, %v2324
        %v2326 = vrot.slane %v2309, 4
        %v2327 = vsel %vm2118, %v2326, %v2285
        %v2328 = vrot.slane %v2285, 4
        %v2329 = vsel %vm2118, %v2309, %v2328
        %v2330 = vrot.slane %v2313, 4
        %v2331 = vsel %vm2118, %v2330, %v2289
        %v2332 = vrot.slane %v2289, 4
        %v2333 = vsel %vm2118, %v2313, %v2332
        %v2334 = vrot.slane %v2321, 4
        %v2335 = vsel %vm2118, %v2334, %v2297
        %v2336 = vrot.slane %v2297, 4
        %v2337 = vsel %vm2118, %v2321, %v2336
        %v2338 = vrot.slane %v2325, 4
        %v2339 = vsel %vm2118, %v2338, %v2301
        %v2340 = vrot.slane %v2301, 4
        %v2341 = vsel %vm2118, %v2325, %v2340
        %v2342 = vrot.slane %v1994, 4
        %v2343 = vsel %vm2118, %v2342, %v1990
        %v2344 = vrot.slane %v1990, 4
        %v2345 = vsel %vm2118, %v1994, %v2344
        %v2347 = vunpack.c.l.s4 1983009808
        %v2348 = vunpack.c.0.s8 %v2347
        %v2349 = vperm.slane %v2343, %v2348
        %v2351 = vunpack.c.l.s4 1983009808
        %v2352 = vunpack.c.0.s8 %v2351
        %v2353 = vperm.slane %v2345, %v2352
        %v2354 = vrot.slane %v1996, 4
        %v2355 = vsel %vm2118, %v2354, %v1992
        %v2356 = vrot.slane %v1992, 4
        %v2357 = vsel %vm2118, %v1996, %v2356
        %v2359 = vunpack.c.l.s4 1983009808
        %v2360 = vunpack.c.0.s8 %v2359
        %v2361 = vperm.slane %v2355, %v2360
        %v2363 = vunpack.c.l.s4 1983009808
        %v2364 = vunpack.c.0.s8 %v2363
        %v2365 = vperm.slane %v2357, %v2364
        %v2366 = vrot.slane %v2002, 4
        %v2367 = vsel %vm2118, %v2366, %v1998
        %v2368 = vrot.slane %v1998, 4
        %v2369 = vsel %vm2118, %v2002, %v2368
        %v2371 = vunpack.c.l.s4 1983009808
        %v2372 = vunpack.c.0.s8 %v2371
        %v2373 = vperm.slane %v2367, %v2372
        %v2375 = vunpack.c.l.s4 1983009808
        %v2376 = vunpack.c.0.s8 %v2375
        %v2377 = vperm.slane %v2369, %v2376
        %v2378 = vrot.slane %v2004, 4
        %v2379 = vsel %vm2118, %v2378, %v2000
        %v2380 = vrot.slane %v2000, 4
        %v2381 = vsel %vm2118, %v2004, %v2380
        %v2383 = vunpack.c.l.s4 1983009808
        %v2384 = vunpack.c.0.s8 %v2383
        %v2385 = vperm.slane %v2379, %v2384
        %v2387 = vunpack.c.l.s4 1983009808
        %v2388 = vunpack.c.0.s8 %v2387
        %v2389 = vperm.slane %v2381, %v2388
        %v2390 = vrot.slane %v2361, 4
        %v2391 = vsel %vm2118, %v2390, %v2349
        %v2392 = vrot.slane %v2349, 4
        %v2393 = vsel %vm2118, %v2361, %v2392
        %v2395 = vunpack.c.l.s4 1934713408
        %v2396 = vunpack.c.0.s8 %v2395
        %v2397 = vperm.slane %v2391, %v2396
        %v2399 = vunpack.c.l.s4 1934713408
        %v2400 = vunpack.c.0.s8 %v2399
        %v2401 = vperm.slane %v2393, %v2400
        %v2402 = vrot.slane %v2365, 4
        %v2403 = vsel %vm2118, %v2402, %v2353
        %v2404 = vrot.slane %v2353, 4
        %v2405 = vsel %vm2118, %v2365, %v2404
        %v2407 = vunpack.c.l.s4 1934713408
        %v2408 = vunpack.c.0.s8 %v2407
        %v2409 = vperm.slane %v2403, %v2408
        %v2411 = vunpack.c.l.s4 1934713408
        %v2412 = vunpack.c.0.s8 %v2411
        %v2413 = vperm.slane %v2405, %v2412
        %v2414 = vrot.slane %v2385, 4
        %v2415 = vsel %vm2118, %v2414, %v2373
        %v2416 = vrot.slane %v2373, 4
        %v2417 = vsel %vm2118, %v2385, %v2416
        %v2419 = vunpack.c.l.s4 1934713408
        %v2420 = vunpack.c.0.s8 %v2419
        %v2421 = vperm.slane %v2415, %v2420
        %v2423 = vunpack.c.l.s4 1934713408
        %v2424 = vunpack.c.0.s8 %v2423
        %v2425 = vperm.slane %v2417, %v2424
        %v2426 = vrot.slane %v2389, 4
        %v2427 = vsel %vm2118, %v2426, %v2377
        %v2428 = vrot.slane %v2377, 4
        %v2429 = vsel %vm2118, %v2389, %v2428
        %v2431 = vunpack.c.l.s4 1934713408
        %v2432 = vunpack.c.0.s8 %v2431
        %v2433 = vperm.slane %v2427, %v2432
        %v2435 = vunpack.c.l.s4 1934713408
        %v2436 = vunpack.c.0.s8 %v2435
        %v2437 = vperm.slane %v2429, %v2436
        %v2438 = vrot.slane %v2421, 4
        %v2439 = vsel %vm2118, %v2438, %v2397
        %v2440 = vrot.slane %v2397, 4
        %v2441 = vsel %vm2118, %v2421, %v2440
        %v2442 = vrot.slane %v2425, 4
        %v2443 = vsel %vm2118, %v2442, %v2401
        %v2444 = vrot.slane %v2401, 4
        %v2445 = vsel %vm2118, %v2425, %v2444
        %v2446 = vrot.slane %v2433, 4
        %v2447 = vsel %vm2118, %v2446, %v2409
        %v2448 = vrot.slane %v2409, 4
        %v2449 = vsel %vm2118, %v2433, %v2448
        %v2450 = vrot.slane %v2437, 4
        %v2451 = vsel %vm2118, %v2450, %v2413
        %v2452 = vrot.slane %v2413, 4
        %v2453 = vsel %vm2118, %v2437, %v2452
        %v2454 = vrot.slane %v2010, 4
        %v2455 = vsel %vm2118, %v2454, %v2006
        %v2456 = vrot.slane %v2006, 4
        %v2457 = vsel %vm2118, %v2010, %v2456
        %v2459 = vunpack.c.l.s4 1983009808
        %v2460 = vunpack.c.0.s8 %v2459
        %v2461 = vperm.slane %v2455, %v2460
        %v2463 = vunpack.c.l.s4 1983009808
        %v2464 = vunpack.c.0.s8 %v2463
        %v2465 = vperm.slane %v2457, %v2464
        %v2466 = vrot.slane %v2012, 4
        %v2467 = vsel %vm2118, %v2466, %v2008
        %v2468 = vrot.slane %v2008, 4
        %v2469 = vsel %vm2118, %v2012, %v2468
        %v2471 = vunpack.c.l.s4 1983009808
        %v2472 = vunpack.c.0.s8 %v2471
        %v2473 = vperm.slane %v2467, %v2472
        %v2475 = vunpack.c.l.s4 1983009808
        %v2476 = vunpack.c.0.s8 %v2475
        %v2477 = vperm.slane %v2469, %v2476
        %v2478 = vrot.slane %v2018, 4
        %v2479 = vsel %vm2118, %v2478, %v2014
        %v2480 = vrot.slane %v2014, 4
        %v2481 = vsel %vm2118, %v2018, %v2480
        %v2483 = vunpack.c.l.s4 1983009808
        %v2484 = vunpack.c.0.s8 %v2483
        %v2485 = vperm.slane %v2479, %v2484
        %v2487 = vunpack.c.l.s4 1983009808
        %v2488 = vunpack.c.0.s8 %v2487
        %v2489 = vperm.slane %v2481, %v2488
        %v2490 = vrot.slane %v2020, 4
        %v2491 = vsel %vm2118, %v2490, %v2016
        %v2492 = vrot.slane %v2016, 4
        %v2493 = vsel %vm2118, %v2020, %v2492
        %v2495 = vunpack.c.l.s4 1983009808
        %v2496 = vunpack.c.0.s8 %v2495
        %v2497 = vperm.slane %v2491, %v2496
        %v2499 = vunpack.c.l.s4 1983009808
        %v2500 = vunpack.c.0.s8 %v2499
        %v2501 = vperm.slane %v2493, %v2500
        %v2502 = vrot.slane %v2473, 4
        %v2503 = vsel %vm2118, %v2502, %v2461
        %v2504 = vrot.slane %v2461, 4
        %v2505 = vsel %vm2118, %v2473, %v2504
        %v2507 = vunpack.c.l.s4 1934713408
        %v2508 = vunpack.c.0.s8 %v2507
        %v2509 = vperm.slane %v2503, %v2508
        %v2511 = vunpack.c.l.s4 1934713408
        %v2512 = vunpack.c.0.s8 %v2511
        %v2513 = vperm.slane %v2505, %v2512
        %v2514 = vrot.slane %v2477, 4
        %v2515 = vsel %vm2118, %v2514, %v2465
        %v2516 = vrot.slane %v2465, 4
        %v2517 = vsel %vm2118, %v2477, %v2516
        %v2519 = vunpack.c.l.s4 1934713408
        %v2520 = vunpack.c.0.s8 %v2519
        %v2521 = vperm.slane %v2515, %v2520
        %v2523 = vunpack.c.l.s4 1934713408
        %v2524 = vunpack.c.0.s8 %v2523
        %v2525 = vperm.slane %v2517, %v2524
        %v2526 = vrot.slane %v2497, 4
        %v2527 = vsel %vm2118, %v2526, %v2485
        %v2528 = vrot.slane %v2485, 4
        %v2529 = vsel %vm2118, %v2497, %v2528
        %v2531 = vunpack.c.l.s4 1934713408
        %v2532 = vunpack.c.0.s8 %v2531
        %v2533 = vperm.slane %v2527, %v2532
        %v2535 = vunpack.c.l.s4 1934713408
        %v2536 = vunpack.c.0.s8 %v2535
        %v2537 = vperm.slane %v2529, %v2536
        %v2538 = vrot.slane %v2501, 4
        %v2539 = vsel %vm2118, %v2538, %v2489
        %v2540 = vrot.slane %v2489, 4
        %v2541 = vsel %vm2118, %v2501, %v2540
        %v2543 = vunpack.c.l.s4 1934713408
        %v2544 = vunpack.c.0.s8 %v2543
        %v2545 = vperm.slane %v2539, %v2544
        %v2547 = vunpack.c.l.s4 1934713408
        %v2548 = vunpack.c.0.s8 %v2547
        %v2549 = vperm.slane %v2541, %v2548
        %v2550 = vrot.slane %v2533, 4
        %v2551 = vsel %vm2118, %v2550, %v2509
        %v2552 = vrot.slane %v2509, 4
        %v2553 = vsel %vm2118, %v2533, %v2552
        %v2554 = vrot.slane %v2537, 4
        %v2555 = vsel %vm2118, %v2554, %v2513
        %v2556 = vrot.slane %v2513, 4
        %v2557 = vsel %vm2118, %v2537, %v2556
        %v2558 = vrot.slane %v2545, 4
        %v2559 = vsel %vm2118, %v2558, %v2521
        %v2560 = vrot.slane %v2521, 4
        %v2561 = vsel %vm2118, %v2545, %v2560
        %v2562 = vrot.slane %v2549, 4
        %v2563 = vsel %vm2118, %v2562, %v2525
        %v2564 = vrot.slane %v2525, 4
        %v2565 = vsel %vm2118, %v2549, %v2564
        %v2566 = vrot.slane %v2025, 4
        %v2567 = vsel %vm2118, %v2566, %v2021
        %v2568 = vrot.slane %v2021, 4
        %v2569 = vsel %vm2118, %v2025, %v2568
        %v2571 = vunpack.c.l.s4 1983009808
        %v2572 = vunpack.c.0.s8 %v2571
        %v2573 = vperm.slane %v2567, %v2572
        %v2575 = vunpack.c.l.s4 1983009808
        %v2576 = vunpack.c.0.s8 %v2575
        %v2577 = vperm.slane %v2569, %v2576
        %v2578 = vrot.slane %v2027, 4
        %v2579 = vsel %vm2118, %v2578, %v2023
        %v2580 = vrot.slane %v2023, 4
        %v2581 = vsel %vm2118, %v2027, %v2580
        %v2583 = vunpack.c.l.s4 1983009808
        %v2584 = vunpack.c.0.s8 %v2583
        %v2585 = vperm.slane %v2579, %v2584
        %v2587 = vunpack.c.l.s4 1983009808
        %v2588 = vunpack.c.0.s8 %v2587
        %v2589 = vperm.slane %v2581, %v2588
        %v2590 = vrot.slane %v2033, 4
        %v2591 = vsel %vm2118, %v2590, %v2029
        %v2592 = vrot.slane %v2029, 4
        %v2593 = vsel %vm2118, %v2033, %v2592
        %v2595 = vunpack.c.l.s4 1983009808
        %v2596 = vunpack.c.0.s8 %v2595
        %v2597 = vperm.slane %v2591, %v2596
        %v2599 = vunpack.c.l.s4 1983009808
        %v2600 = vunpack.c.0.s8 %v2599
        %v2601 = vperm.slane %v2593, %v2600
        %v2602 = vrot.slane %v2035, 4
        %v2603 = vsel %vm2118, %v2602, %v2031
        %v2604 = vrot.slane %v2031, 4
        %v2605 = vsel %vm2118, %v2035, %v2604
        %v2607 = vunpack.c.l.s4 1983009808
        %v2608 = vunpack.c.0.s8 %v2607
        %v2609 = vperm.slane %v2603, %v2608
        %v2611 = vunpack.c.l.s4 1983009808
        %v2612 = vunpack.c.0.s8 %v2611
        %v2613 = vperm.slane %v2605, %v2612
        %v2614 = vrot.slane %v2585, 4
        %v2615 = vsel %vm2118, %v2614, %v2573
        %v2616 = vrot.slane %v2573, 4
        %v2617 = vsel %vm2118, %v2585, %v2616
        %v2619 = vunpack.c.l.s4 1934713408
        %v2620 = vunpack.c.0.s8 %v2619
        %v2621 = vperm.slane %v2615, %v2620
        %v2623 = vunpack.c.l.s4 1934713408
        %v2624 = vunpack.c.0.s8 %v2623
        %v2625 = vperm.slane %v2617, %v2624
        %v2626 = vrot.slane %v2589, 4
        %v2627 = vsel %vm2118, %v2626, %v2577
        %v2628 = vrot.slane %v2577, 4
        %v2629 = vsel %vm2118, %v2589, %v2628
        %v2631 = vunpack.c.l.s4 1934713408
        %v2632 = vunpack.c.0.s8 %v2631
        %v2633 = vperm.slane %v2627, %v2632
        %v2635 = vunpack.c.l.s4 1934713408
        %v2636 = vunpack.c.0.s8 %v2635
        %v2637 = vperm.slane %v2629, %v2636
        %v2638 = vrot.slane %v2609, 4
        %v2639 = vsel %vm2118, %v2638, %v2597
        %v2640 = vrot.slane %v2597, 4
        %v2641 = vsel %vm2118, %v2609, %v2640
        %v2643 = vunpack.c.l.s4 1934713408
        %v2644 = vunpack.c.0.s8 %v2643
        %v2645 = vperm.slane %v2639, %v2644
        %v2647 = vunpack.c.l.s4 1934713408
        %v2648 = vunpack.c.0.s8 %v2647
        %v2649 = vperm.slane %v2641, %v2648
        %v2650 = vrot.slane %v2613, 4
        %v2651 = vsel %vm2118, %v2650, %v2601
        %v2652 = vrot.slane %v2601, 4
        %v2653 = vsel %vm2118, %v2613, %v2652
        %v2655 = vunpack.c.l.s4 1934713408
        %v2656 = vunpack.c.0.s8 %v2655
        %v2657 = vperm.slane %v2651, %v2656
        %v2659 = vunpack.c.l.s4 1934713408
        %v2660 = vunpack.c.0.s8 %v2659
        %v2661 = vperm.slane %v2653, %v2660
        %v2662 = vrot.slane %v2645, 4
        %v2663 = vsel %vm2118, %v2662, %v2621
        %v2664 = vrot.slane %v2621, 4
        %v2665 = vsel %vm2118, %v2645, %v2664
        %v2666 = vrot.slane %v2649, 4
        %v2667 = vsel %vm2118, %v2666, %v2625
        %v2668 = vrot.slane %v2625, 4
        %v2669 = vsel %vm2118, %v2649, %v2668
        %v2670 = vrot.slane %v2657, 4
        %v2671 = vsel %vm2118, %v2670, %v2633
        %v2672 = vrot.slane %v2633, 4
        %v2673 = vsel %vm2118, %v2657, %v2672
        %v2674 = vrot.slane %v2661, 4
        %v2675 = vsel %vm2118, %v2674, %v2637
        %v2676 = vrot.slane %v2637, 4
        %v2677 = vsel %vm2118, %v2661, %v2676
        %v2678 = vrot.slane %v2041, 4
        %v2679 = vsel %vm2118, %v2678, %v2037
        %v2680 = vrot.slane %v2037, 4
        %v2681 = vsel %vm2118, %v2041, %v2680
        %v2683 = vunpack.c.l.s4 1983009808
        %v2684 = vunpack.c.0.s8 %v2683
        %v2685 = vperm.slane %v2679, %v2684
        %v2687 = vunpack.c.l.s4 1983009808
        %v2688 = vunpack.c.0.s8 %v2687
        %v2689 = vperm.slane %v2681, %v2688
        %v2690 = vrot.slane %v2043, 4
        %v2691 = vsel %vm2118, %v2690, %v2039
        %v2692 = vrot.slane %v2039, 4
        %v2693 = vsel %vm2118, %v2043, %v2692
        %v2695 = vunpack.c.l.s4 1983009808
        %v2696 = vunpack.c.0.s8 %v2695
        %v2697 = vperm.slane %v2691, %v2696
        %v2699 = vunpack.c.l.s4 1983009808
        %v2700 = vunpack.c.0.s8 %v2699
        %v2701 = vperm.slane %v2693, %v2700
        %v2702 = vrot.slane %v2049, 4
        %v2703 = vsel %vm2118, %v2702, %v2045
        %v2704 = vrot.slane %v2045, 4
        %v2705 = vsel %vm2118, %v2049, %v2704
        %v2707 = vunpack.c.l.s4 1983009808
        %v2708 = vunpack.c.0.s8 %v2707
        %v2709 = vperm.slane %v2703, %v2708
        %v2711 = vunpack.c.l.s4 1983009808
        %v2712 = vunpack.c.0.s8 %v2711
        %v2713 = vperm.slane %v2705, %v2712
        %v2714 = vrot.slane %v2051, 4
        %v2715 = vsel %vm2118, %v2714, %v2047
        %v2716 = vrot.slane %v2047, 4
        %v2717 = vsel %vm2118, %v2051, %v2716
        %v2719 = vunpack.c.l.s4 1983009808
        %v2720 = vunpack.c.0.s8 %v2719
        %v2721 = vperm.slane %v2715, %v2720
        %v2723 = vunpack.c.l.s4 1983009808
        %v2724 = vunpack.c.0.s8 %v2723
        %v2725 = vperm.slane %v2717, %v2724
        %v2726 = vrot.slane %v2697, 4
        %v2727 = vsel %vm2118, %v2726, %v2685
        %v2728 = vrot.slane %v2685, 4
        %v2729 = vsel %vm2118, %v2697, %v2728
        %v2731 = vunpack.c.l.s4 1934713408
        %v2732 = vunpack.c.0.s8 %v2731
        %v2733 = vperm.slane %v2727, %v2732
        %v2735 = vunpack.c.l.s4 1934713408
        %v2736 = vunpack.c.0.s8 %v2735
        %v2737 = vperm.slane %v2729, %v2736
        %v2738 = vrot.slane %v2701, 4
        %v2739 = vsel %vm2118, %v2738, %v2689
        %v2740 = vrot.slane %v2689, 4
        %v2741 = vsel %vm2118, %v2701, %v2740
        %v2743 = vunpack.c.l.s4 1934713408
        %v2744 = vunpack.c.0.s8 %v2743
        %v2745 = vperm.slane %v2739, %v2744
        %v2747 = vunpack.c.l.s4 1934713408
        %v2748 = vunpack.c.0.s8 %v2747
        %v2749 = vperm.slane %v2741, %v2748
        %v2750 = vrot.slane %v2721, 4
        %v2751 = vsel %vm2118, %v2750, %v2709
        %v2752 = vrot.slane %v2709, 4
        %v2753 = vsel %vm2118, %v2721, %v2752
        %v2755 = vunpack.c.l.s4 1934713408
        %v2756 = vunpack.c.0.s8 %v2755
        %v2757 = vperm.slane %v2751, %v2756
        %v2759 = vunpack.c.l.s4 1934713408
        %v2760 = vunpack.c.0.s8 %v2759
        %v2761 = vperm.slane %v2753, %v2760
        %v2762 = vrot.slane %v2725, 4
        %v2763 = vsel %vm2118, %v2762, %v2713
        %v2764 = vrot.slane %v2713, 4
        %v2765 = vsel %vm2118, %v2725, %v2764
        %v2767 = vunpack.c.l.s4 1934713408
        %v2768 = vunpack.c.0.s8 %v2767
        %v2769 = vperm.slane %v2763, %v2768
        %v2771 = vunpack.c.l.s4 1934713408
        %v2772 = vunpack.c.0.s8 %v2771
        %v2773 = vperm.slane %v2765, %v2772
        %v2774 = vrot.slane %v2757, 4
        %v2775 = vsel %vm2118, %v2774, %v2733
        %v2776 = vrot.slane %v2733, 4
        %v2777 = vsel %vm2118, %v2757, %v2776
        %v2778 = vrot.slane %v2761, 4
        %v2779 = vsel %vm2118, %v2778, %v2737
        %v2780 = vrot.slane %v2737, 4
        %v2781 = vsel %vm2118, %v2761, %v2780
        %v2782 = vrot.slane %v2769, 4
        %v2783 = vsel %vm2118, %v2782, %v2745
        %v2784 = vrot.slane %v2745, 4
        %v2785 = vsel %vm2118, %v2769, %v2784
        %v2786 = vrot.slane %v2773, 4
        %v2787 = vsel %vm2118, %v2786, %v2749
        %v2788 = vrot.slane %v2749, 4
        %v2789 = vsel %vm2118, %v2773, %v2788
        %v2790 = vrot.slane %v2026, 4
        %v2791 = vsel %vm2118, %v2790, %v2022
        %v2792 = vrot.slane %v2022, 4
        %v2793 = vsel %vm2118, %v2026, %v2792
        %v2795 = vunpack.c.l.s4 1983009808
        %v2796 = vunpack.c.0.s8 %v2795
        %v2797 = vperm.slane %v2791, %v2796
        %v2799 = vunpack.c.l.s4 1983009808
        %v2800 = vunpack.c.0.s8 %v2799
        %v2801 = vperm.slane %v2793, %v2800
        %v2802 = vrot.slane %v2028, 4
        %v2803 = vsel %vm2118, %v2802, %v2024
        %v2804 = vrot.slane %v2024, 4
        %v2805 = vsel %vm2118, %v2028, %v2804
        %v2807 = vunpack.c.l.s4 1983009808
        %v2808 = vunpack.c.0.s8 %v2807
        %v2809 = vperm.slane %v2803, %v2808
        %v2811 = vunpack.c.l.s4 1983009808
        %v2812 = vunpack.c.0.s8 %v2811
        %v2813 = vperm.slane %v2805, %v2812
        %v2814 = vrot.slane %v2034, 4
        %v2815 = vsel %vm2118, %v2814, %v2030
        %v2816 = vrot.slane %v2030, 4
        %v2817 = vsel %vm2118, %v2034, %v2816
        %v2819 = vunpack.c.l.s4 1983009808
        %v2820 = vunpack.c.0.s8 %v2819
        %v2821 = vperm.slane %v2815, %v2820
        %v2823 = vunpack.c.l.s4 1983009808
        %v2824 = vunpack.c.0.s8 %v2823
        %v2825 = vperm.slane %v2817, %v2824
        %v2826 = vrot.slane %v2036, 4
        %v2827 = vsel %vm2118, %v2826, %v2032
        %v2828 = vrot.slane %v2032, 4
        %v2829 = vsel %vm2118, %v2036, %v2828
        %v2831 = vunpack.c.l.s4 1983009808
        %v2832 = vunpack.c.0.s8 %v2831
        %v2833 = vperm.slane %v2827, %v2832
        %v2835 = vunpack.c.l.s4 1983009808
        %v2836 = vunpack.c.0.s8 %v2835
        %v2837 = vperm.slane %v2829, %v2836
        %v2838 = vrot.slane %v2809, 4
        %v2839 = vsel %vm2118, %v2838, %v2797
        %v2840 = vrot.slane %v2797, 4
        %v2841 = vsel %vm2118, %v2809, %v2840
        %v2843 = vunpack.c.l.s4 1934713408
        %v2844 = vunpack.c.0.s8 %v2843
        %v2845 = vperm.slane %v2839, %v2844
        %v2847 = vunpack.c.l.s4 1934713408
        %v2848 = vunpack.c.0.s8 %v2847
        %v2849 = vperm.slane %v2841, %v2848
        %v2850 = vrot.slane %v2813, 4
        %v2851 = vsel %vm2118, %v2850, %v2801
        %v2852 = vrot.slane %v2801, 4
        %v2853 = vsel %vm2118, %v2813, %v2852
        %v2855 = vunpack.c.l.s4 1934713408
        %v2856 = vunpack.c.0.s8 %v2855
        %v2857 = vperm.slane %v2851, %v2856
        %v2859 = vunpack.c.l.s4 1934713408
        %v2860 = vunpack.c.0.s8 %v2859
        %v2861 = vperm.slane %v2853, %v2860
        %v2862 = vrot.slane %v2833, 4
        %v2863 = vsel %vm2118, %v2862, %v2821
        %v2864 = vrot.slane %v2821, 4
        %v2865 = vsel %vm2118, %v2833, %v2864
        %v2867 = vunpack.c.l.s4 1934713408
        %v2868 = vunpack.c.0.s8 %v2867
        %v2869 = vperm.slane %v2863, %v2868
        %v2871 = vunpack.c.l.s4 1934713408
        %v2872 = vunpack.c.0.s8 %v2871
        %v2873 = vperm.slane %v2865, %v2872
        %v2874 = vrot.slane %v2837, 4
        %v2875 = vsel %vm2118, %v2874, %v2825
        %v2876 = vrot.slane %v2825, 4
        %v2877 = vsel %vm2118, %v2837, %v2876
        %v2879 = vunpack.c.l.s4 1934713408
        %v2880 = vunpack.c.0.s8 %v2879
        %v2881 = vperm.slane %v2875, %v2880
        %v2883 = vunpack.c.l.s4 1934713408
        %v2884 = vunpack.c.0.s8 %v2883
        %v2885 = vperm.slane %v2877, %v2884
        %v2886 = vrot.slane %v2869, 4
        %v2887 = vsel %vm2118, %v2886, %v2845
        %v2888 = vrot.slane %v2845, 4
        %v2889 = vsel %vm2118, %v2869, %v2888
        %v2890 = vrot.slane %v2873, 4
        %v2891 = vsel %vm2118, %v2890, %v2849
        %v2892 = vrot.slane %v2849, 4
        %v2893 = vsel %vm2118, %v2873, %v2892
        %v2894 = vrot.slane %v2881, 4
        %v2895 = vsel %vm2118, %v2894, %v2857
        %v2896 = vrot.slane %v2857, 4
        %v2897 = vsel %vm2118, %v2881, %v2896
        %v2898 = vrot.slane %v2885, 4
        %v2899 = vsel %vm2118, %v2898, %v2861
        %v2900 = vrot.slane %v2861, 4
        %v2901 = vsel %vm2118, %v2885, %v2900
        %v2902 = vrot.slane %v2042, 4
        %v2903 = vsel %vm2118, %v2902, %v2038
        %v2904 = vrot.slane %v2038, 4
        %v2905 = vsel %vm2118, %v2042, %v2904
        %v2907 = vunpack.c.l.s4 1983009808
        %v2908 = vunpack.c.0.s8 %v2907
        %v2909 = vperm.slane %v2903, %v2908
        %v2911 = vunpack.c.l.s4 1983009808
        %v2912 = vunpack.c.0.s8 %v2911
        %v2913 = vperm.slane %v2905, %v2912
        %v2914 = vrot.slane %v2044, 4
        %v2915 = vsel %vm2118, %v2914, %v2040
        %v2916 = vrot.slane %v2040, 4
        %v2917 = vsel %vm2118, %v2044, %v2916
        %v2919 = vunpack.c.l.s4 1983009808
        %v2920 = vunpack.c.0.s8 %v2919
        %v2921 = vperm.slane %v2915, %v2920
        %v2923 = vunpack.c.l.s4 1983009808
        %v2924 = vunpack.c.0.s8 %v2923
        %v2925 = vperm.slane %v2917, %v2924
        %v2926 = vrot.slane %v2050, 4
        %v2927 = vsel %vm2118, %v2926, %v2046
        %v2928 = vrot.slane %v2046, 4
        %v2929 = vsel %vm2118, %v2050, %v2928
        %v2931 = vunpack.c.l.s4 1983009808
        %v2932 = vunpack.c.0.s8 %v2931
        %v2933 = vperm.slane %v2927, %v2932
        %v2935 = vunpack.c.l.s4 1983009808
        %v2936 = vunpack.c.0.s8 %v2935
        %v2937 = vperm.slane %v2929, %v2936
        %v2938 = vrot.slane %v2052, 4
        %v2939 = vsel %vm2118, %v2938, %v2048
        %v2940 = vrot.slane %v2048, 4
        %v2941 = vsel %vm2118, %v2052, %v2940
        %v2943 = vunpack.c.l.s4 1983009808
        %v2944 = vunpack.c.0.s8 %v2943
        %v2945 = vperm.slane %v2939, %v2944
        %v2947 = vunpack.c.l.s4 1983009808
        %v2948 = vunpack.c.0.s8 %v2947
        %v2949 = vperm.slane %v2941, %v2948
        %v2950 = vrot.slane %v2921, 4
        %v2951 = vsel %vm2118, %v2950, %v2909
        %v2952 = vrot.slane %v2909, 4
        %v2953 = vsel %vm2118, %v2921, %v2952
        %v2955 = vunpack.c.l.s4 1934713408
        %v2956 = vunpack.c.0.s8 %v2955
        %v2957 = vperm.slane %v2951, %v2956
        %v2959 = vunpack.c.l.s4 1934713408
        %v2960 = vunpack.c.0.s8 %v2959
        %v2961 = vperm.slane %v2953, %v2960
        %v2962 = vrot.slane %v2925, 4
        %v2963 = vsel %vm2118, %v2962, %v2913
        %v2964 = vrot.slane %v2913, 4
        %v2965 = vsel %vm2118, %v2925, %v2964
        %v2967 = vunpack.c.l.s4 1934713408
        %v2968 = vunpack.c.0.s8 %v2967
        %v2969 = vperm.slane %v2963, %v2968
        %v2971 = vunpack.c.l.s4 1934713408
        %v2972 = vunpack.c.0.s8 %v2971
        %v2973 = vperm.slane %v2965, %v2972
        %v2974 = vrot.slane %v2945, 4
        %v2975 = vsel %vm2118, %v2974, %v2933
        %v2976 = vrot.slane %v2933, 4
        %v2977 = vsel %vm2118, %v2945, %v2976
        %v2979 = vunpack.c.l.s4 1934713408
        %v2980 = vunpack.c.0.s8 %v2979
        %v2981 = vperm.slane %v2975, %v2980
        %v2983 = vunpack.c.l.s4 1934713408
        %v2984 = vunpack.c.0.s8 %v2983
        %v2985 = vperm.slane %v2977, %v2984
        %v2986 = vrot.slane %v2949, 4
        %v2987 = vsel %vm2118, %v2986, %v2937
        %v2988 = vrot.slane %v2937, 4
        %v2989 = vsel %vm2118, %v2949, %v2988
        %v2991 = vunpack.c.l.s4 1934713408
        %v2992 = vunpack.c.0.s8 %v2991
        %v2993 = vperm.slane %v2987, %v2992
        %v2995 = vunpack.c.l.s4 1934713408
        %v2996 = vunpack.c.0.s8 %v2995
        %v2997 = vperm.slane %v2989, %v2996
        %v2998 = vrot.slane %v2981, 4
        %v2999 = vsel %vm2118, %v2998, %v2957
        %v3000 = vrot.slane %v2957, 4
        %v3001 = vsel %vm2118, %v2981, %v3000
        %v3002 = vrot.slane %v2985, 4
        %v3003 = vsel %vm2118, %v3002, %v2961
        %v3004 = vrot.slane %v2961, 4
        %v3005 = vsel %vm2118, %v2985, %v3004
        %v3006 = vrot.slane %v2993, 4
        %v3007 = vsel %vm2118, %v3006, %v2969
        %v3008 = vrot.slane %v2969, 4
        %v3009 = vsel %vm2118, %v2993, %v3008
        %v3010 = vrot.slane %v2997, 4
        %v3011 = vsel %vm2118, %v3010, %v2973
        %v3012 = vrot.slane %v2973, 4
        %v3013 = vsel %vm2118, %v2997, %v3012
        %v3014 = vrot.slane %v2057, 4
        %v3015 = vsel %vm2118, %v3014, %v2053
        %v3016 = vrot.slane %v2053, 4
        %v3017 = vsel %vm2118, %v2057, %v3016
        %v3019 = vunpack.c.l.s4 1983009808
        %v3020 = vunpack.c.0.s8 %v3019
        %v3021 = vperm.slane %v3015, %v3020
        %v3023 = vunpack.c.l.s4 1983009808
        %v3024 = vunpack.c.0.s8 %v3023
        %v3025 = vperm.slane %v3017, %v3024
        %v3026 = vrot.slane %v2059, 4
        %v3027 = vsel %vm2118, %v3026, %v2055
        %v3028 = vrot.slane %v2055, 4
        %v3029 = vsel %vm2118, %v2059, %v3028
        %v3031 = vunpack.c.l.s4 1983009808
        %v3032 = vunpack.c.0.s8 %v3031
        %v3033 = vperm.slane %v3027, %v3032
        %v3035 = vunpack.c.l.s4 1983009808
        %v3036 = vunpack.c.0.s8 %v3035
        %v3037 = vperm.slane %v3029, %v3036
        %v3038 = vrot.slane %v2065, 4
        %v3039 = vsel %vm2118, %v3038, %v2061
        %v3040 = vrot.slane %v2061, 4
        %v3041 = vsel %vm2118, %v2065, %v3040
        %v3043 = vunpack.c.l.s4 1983009808
        %v3044 = vunpack.c.0.s8 %v3043
        %v3045 = vperm.slane %v3039, %v3044
        %v3047 = vunpack.c.l.s4 1983009808
        %v3048 = vunpack.c.0.s8 %v3047
        %v3049 = vperm.slane %v3041, %v3048
        %v3050 = vrot.slane %v2067, 4
        %v3051 = vsel %vm2118, %v3050, %v2063
        %v3052 = vrot.slane %v2063, 4
        %v3053 = vsel %vm2118, %v2067, %v3052
        %v3055 = vunpack.c.l.s4 1983009808
        %v3056 = vunpack.c.0.s8 %v3055
        %v3057 = vperm.slane %v3051, %v3056
        %v3059 = vunpack.c.l.s4 1983009808
        %v3060 = vunpack.c.0.s8 %v3059
        %v3061 = vperm.slane %v3053, %v3060
        %v3062 = vrot.slane %v3033, 4
        %v3063 = vsel %vm2118, %v3062, %v3021
        %v3064 = vrot.slane %v3021, 4
        %v3065 = vsel %vm2118, %v3033, %v3064
        %v3067 = vunpack.c.l.s4 1934713408
        %v3068 = vunpack.c.0.s8 %v3067
        %v3069 = vperm.slane %v3063, %v3068
        %v3071 = vunpack.c.l.s4 1934713408
        %v3072 = vunpack.c.0.s8 %v3071
        %v3073 = vperm.slane %v3065, %v3072
        %v3074 = vrot.slane %v3037, 4
        %v3075 = vsel %vm2118, %v3074, %v3025
        %v3076 = vrot.slane %v3025, 4
        %v3077 = vsel %vm2118, %v3037, %v3076
        %v3079 = vunpack.c.l.s4 1934713408
        %v3080 = vunpack.c.0.s8 %v3079
        %v3081 = vperm.slane %v3075, %v3080
        %v3083 = vunpack.c.l.s4 1934713408
        %v3084 = vunpack.c.0.s8 %v3083
        %v3085 = vperm.slane %v3077, %v3084
        %v3086 = vrot.slane %v3057, 4
        %v3087 = vsel %vm2118, %v3086, %v3045
        %v3088 = vrot.slane %v3045, 4
        %v3089 = vsel %vm2118, %v3057, %v3088
        %v3091 = vunpack.c.l.s4 1934713408
        %v3092 = vunpack.c.0.s8 %v3091
        %v3093 = vperm.slane %v3087, %v3092
        %v3095 = vunpack.c.l.s4 1934713408
        %v3096 = vunpack.c.0.s8 %v3095
        %v3097 = vperm.slane %v3089, %v3096
        %v3098 = vrot.slane %v3061, 4
        %v3099 = vsel %vm2118, %v3098, %v3049
        %v3100 = vrot.slane %v3049, 4
        %v3101 = vsel %vm2118, %v3061, %v3100
        %v3103 = vunpack.c.l.s4 1934713408
        %v3104 = vunpack.c.0.s8 %v3103
        %v3105 = vperm.slane %v3099, %v3104
        %v3107 = vunpack.c.l.s4 1934713408
        %v3108 = vunpack.c.0.s8 %v3107
        %v3109 = vperm.slane %v3101, %v3108
        %v3110 = vrot.slane %v3093, 4
        %v3111 = vsel %vm2118, %v3110, %v3069
        %v3112 = vrot.slane %v3069, 4
        %v3113 = vsel %vm2118, %v3093, %v3112
        %v3114 = vrot.slane %v3097, 4
        %v3115 = vsel %vm2118, %v3114, %v3073
        %v3116 = vrot.slane %v3073, 4
        %v3117 = vsel %vm2118, %v3097, %v3116
        %v3118 = vrot.slane %v3105, 4
        %v3119 = vsel %vm2118, %v3118, %v3081
        %v3120 = vrot.slane %v3081, 4
        %v3121 = vsel %vm2118, %v3105, %v3120
        %v3122 = vrot.slane %v3109, 4
        %v3123 = vsel %vm2118, %v3122, %v3085
        %v3124 = vrot.slane %v3085, 4
        %v3125 = vsel %vm2118, %v3109, %v3124
        %v3126 = vrot.slane %v2073, 4
        %v3127 = vsel %vm2118, %v3126, %v2069
        %v3128 = vrot.slane %v2069, 4
        %v3129 = vsel %vm2118, %v2073, %v3128
        %v3131 = vunpack.c.l.s4 1983009808
        %v3132 = vunpack.c.0.s8 %v3131
        %v3133 = vperm.slane %v3127, %v3132
        %v3135 = vunpack.c.l.s4 1983009808
        %v3136 = vunpack.c.0.s8 %v3135
        %v3137 = vperm.slane %v3129, %v3136
        %v3138 = vrot.slane %v2075, 4
        %v3139 = vsel %vm2118, %v3138, %v2071
        %v3140 = vrot.slane %v2071, 4
        %v3141 = vsel %vm2118, %v2075, %v3140
        %v3143 = vunpack.c.l.s4 1983009808
        %v3144 = vunpack.c.0.s8 %v3143
        %v3145 = vperm.slane %v3139, %v3144
        %v3147 = vunpack.c.l.s4 1983009808
        %v3148 = vunpack.c.0.s8 %v3147
        %v3149 = vperm.slane %v3141, %v3148
        %v3150 = vrot.slane %v2081, 4
        %v3151 = vsel %vm2118, %v3150, %v2077
        %v3152 = vrot.slane %v2077, 4
        %v3153 = vsel %vm2118, %v2081, %v3152
        %v3155 = vunpack.c.l.s4 1983009808
        %v3156 = vunpack.c.0.s8 %v3155
        %v3157 = vperm.slane %v3151, %v3156
        %v3159 = vunpack.c.l.s4 1983009808
        %v3160 = vunpack.c.0.s8 %v3159
        %v3161 = vperm.slane %v3153, %v3160
        %v3162 = vrot.slane %v2083, 4
        %v3163 = vsel %vm2118, %v3162, %v2079
        %v3164 = vrot.slane %v2079, 4
        %v3165 = vsel %vm2118, %v2083, %v3164
        %v3167 = vunpack.c.l.s4 1983009808
        %v3168 = vunpack.c.0.s8 %v3167
        %v3169 = vperm.slane %v3163, %v3168
        %v3171 = vunpack.c.l.s4 1983009808
        %v3172 = vunpack.c.0.s8 %v3171
        %v3173 = vperm.slane %v3165, %v3172
        %v3174 = vrot.slane %v3145, 4
        %v3175 = vsel %vm2118, %v3174, %v3133
        %v3176 = vrot.slane %v3133, 4
        %v3177 = vsel %vm2118, %v3145, %v3176
        %v3179 = vunpack.c.l.s4 1934713408
        %v3180 = vunpack.c.0.s8 %v3179
        %v3181 = vperm.slane %v3175, %v3180
        %v3183 = vunpack.c.l.s4 1934713408
        %v3184 = vunpack.c.0.s8 %v3183
        %v3185 = vperm.slane %v3177, %v3184
        %v3186 = vrot.slane %v3149, 4
        %v3187 = vsel %vm2118, %v3186, %v3137
        %v3188 = vrot.slane %v3137, 4
        %v3189 = vsel %vm2118, %v3149, %v3188
        %v3191 = vunpack.c.l.s4 1934713408
        %v3192 = vunpack.c.0.s8 %v3191
        %v3193 = vperm.slane %v3187, %v3192
        %v3195 = vunpack.c.l.s4 1934713408
        %v3196 = vunpack.c.0.s8 %v3195
        %v3197 = vperm.slane %v3189, %v3196
        %v3198 = vrot.slane %v3169, 4
        %v3199 = vsel %vm2118, %v3198, %v3157
        %v3200 = vrot.slane %v3157, 4
        %v3201 = vsel %vm2118, %v3169, %v3200
        %v3203 = vunpack.c.l.s4 1934713408
        %v3204 = vunpack.c.0.s8 %v3203
        %v3205 = vperm.slane %v3199, %v3204
        %v3207 = vunpack.c.l.s4 1934713408
        %v3208 = vunpack.c.0.s8 %v3207
        %v3209 = vperm.slane %v3201, %v3208
        %v3210 = vrot.slane %v3173, 4
        %v3211 = vsel %vm2118, %v3210, %v3161
        %v3212 = vrot.slane %v3161, 4
        %v3213 = vsel %vm2118, %v3173, %v3212
        %v3215 = vunpack.c.l.s4 1934713408
        %v3216 = vunpack.c.0.s8 %v3215
        %v3217 = vperm.slane %v3211, %v3216
        %v3219 = vunpack.c.l.s4 1934713408
        %v3220 = vunpack.c.0.s8 %v3219
        %v3221 = vperm.slane %v3213, %v3220
        %v3222 = vrot.slane %v3205, 4
        %v3223 = vsel %vm2118, %v3222, %v3181
        %v3224 = vrot.slane %v3181, 4
        %v3225 = vsel %vm2118, %v3205, %v3224
        %v3226 = vrot.slane %v3209, 4
        %v3227 = vsel %vm2118, %v3226, %v3185
        %v3228 = vrot.slane %v3185, 4
        %v3229 = vsel %vm2118, %v3209, %v3228
        %v3230 = vrot.slane %v3217, 4
        %v3231 = vsel %vm2118, %v3230, %v3193
        %v3232 = vrot.slane %v3193, 4
        %v3233 = vsel %vm2118, %v3217, %v3232
        %v3234 = vrot.slane %v3221, 4
        %v3235 = vsel %vm2118, %v3234, %v3197
        %v3236 = vrot.slane %v3197, 4
        %v3237 = vsel %vm2118, %v3221, %v3236
        %v3238 = vrot.slane %v2058, 4
        %v3239 = vsel %vm2118, %v3238, %v2054
        %v3240 = vrot.slane %v2054, 4
        %v3241 = vsel %vm2118, %v2058, %v3240
        %v3243 = vunpack.c.l.s4 1983009808
        %v3244 = vunpack.c.0.s8 %v3243
        %v3245 = vperm.slane %v3239, %v3244
        %v3247 = vunpack.c.l.s4 1983009808
        %v3248 = vunpack.c.0.s8 %v3247
        %v3249 = vperm.slane %v3241, %v3248
        %v3250 = vrot.slane %v2060, 4
        %v3251 = vsel %vm2118, %v3250, %v2056
        %v3252 = vrot.slane %v2056, 4
        %v3253 = vsel %vm2118, %v2060, %v3252
        %v3255 = vunpack.c.l.s4 1983009808
        %v3256 = vunpack.c.0.s8 %v3255
        %v3257 = vperm.slane %v3251, %v3256
        %v3259 = vunpack.c.l.s4 1983009808
        %v3260 = vunpack.c.0.s8 %v3259
        %v3261 = vperm.slane %v3253, %v3260
        %v3262 = vrot.slane %v2066, 4
        %v3263 = vsel %vm2118, %v3262, %v2062
        %v3264 = vrot.slane %v2062, 4
        %v3265 = vsel %vm2118, %v2066, %v3264
        %v3267 = vunpack.c.l.s4 1983009808
        %v3268 = vunpack.c.0.s8 %v3267
        %v3269 = vperm.slane %v3263, %v3268
        %v3271 = vunpack.c.l.s4 1983009808
        %v3272 = vunpack.c.0.s8 %v3271
        %v3273 = vperm.slane %v3265, %v3272
        %v3274 = vrot.slane %v2068, 4
        %v3275 = vsel %vm2118, %v3274, %v2064
        %v3276 = vrot.slane %v2064, 4
        %v3277 = vsel %vm2118, %v2068, %v3276
        %v3279 = vunpack.c.l.s4 1983009808
        %v3280 = vunpack.c.0.s8 %v3279
        %v3281 = vperm.slane %v3275, %v3280
        %v3283 = vunpack.c.l.s4 1983009808
        %v3284 = vunpack.c.0.s8 %v3283
        %v3285 = vperm.slane %v3277, %v3284
        %v3286 = vrot.slane %v3257, 4
        %v3287 = vsel %vm2118, %v3286, %v3245
        %v3288 = vrot.slane %v3245, 4
        %v3289 = vsel %vm2118, %v3257, %v3288
        %v3291 = vunpack.c.l.s4 1934713408
        %v3292 = vunpack.c.0.s8 %v3291
        %v3293 = vperm.slane %v3287, %v3292
        %v3295 = vunpack.c.l.s4 1934713408
        %v3296 = vunpack.c.0.s8 %v3295
        %v3297 = vperm.slane %v3289, %v3296
        %v3298 = vrot.slane %v3261, 4
        %v3299 = vsel %vm2118, %v3298, %v3249
        %v3300 = vrot.slane %v3249, 4
        %v3301 = vsel %vm2118, %v3261, %v3300
        %v3303 = vunpack.c.l.s4 1934713408
        %v3304 = vunpack.c.0.s8 %v3303
        %v3305 = vperm.slane %v3299, %v3304
        %v3307 = vunpack.c.l.s4 1934713408
        %v3308 = vunpack.c.0.s8 %v3307
        %v3309 = vperm.slane %v3301, %v3308
        %v3310 = vrot.slane %v3281, 4
        %v3311 = vsel %vm2118, %v3310, %v3269
        %v3312 = vrot.slane %v3269, 4
        %v3313 = vsel %vm2118, %v3281, %v3312
        %v3315 = vunpack.c.l.s4 1934713408
        %v3316 = vunpack.c.0.s8 %v3315
        %v3317 = vperm.slane %v3311, %v3316
        %v3319 = vunpack.c.l.s4 1934713408
        %v3320 = vunpack.c.0.s8 %v3319
        %v3321 = vperm.slane %v3313, %v3320
        %v3322 = vrot.slane %v3285, 4
        %v3323 = vsel %vm2118, %v3322, %v3273
        %v3324 = vrot.slane %v3273, 4
        %v3325 = vsel %vm2118, %v3285, %v3324
        %v3327 = vunpack.c.l.s4 1934713408
        %v3328 = vunpack.c.0.s8 %v3327
        %v3329 = vperm.slane %v3323, %v3328
        %v3331 = vunpack.c.l.s4 1934713408
        %v3332 = vunpack.c.0.s8 %v3331
        %v3333 = vperm.slane %v3325, %v3332
        %v3334 = vrot.slane %v3317, 4
        %v3335 = vsel %vm2118, %v3334, %v3293
        %v3336 = vrot.slane %v3293, 4
        %v3337 = vsel %vm2118, %v3317, %v3336
        %v3338 = vrot.slane %v3321, 4
        %v3339 = vsel %vm2118, %v3338, %v3297
        %v3340 = vrot.slane %v3297, 4
        %v3341 = vsel %vm2118, %v3321, %v3340
        %v3342 = vrot.slane %v3329, 4
        %v3343 = vsel %vm2118, %v3342, %v3305
        %v3344 = vrot.slane %v3305, 4
        %v3345 = vsel %vm2118, %v3329, %v3344
        %v3346 = vrot.slane %v3333, 4
        %v3347 = vsel %vm2118, %v3346, %v3309
        %v3348 = vrot.slane %v3309, 4
        %v3349 = vsel %vm2118, %v3333, %v3348
        %v3350 = vrot.slane %v2074, 4
        %v3351 = vsel %vm2118, %v3350, %v2070
        %v3352 = vrot.slane %v2070, 4
        %v3353 = vsel %vm2118, %v2074, %v3352
        %v3355 = vunpack.c.l.s4 1983009808
        %v3356 = vunpack.c.0.s8 %v3355
        %v3357 = vperm.slane %v3351, %v3356
        %v3359 = vunpack.c.l.s4 1983009808
        %v3360 = vunpack.c.0.s8 %v3359
        %v3361 = vperm.slane %v3353, %v3360
        %v3362 = vrot.slane %v2076, 4
        %v3363 = vsel %vm2118, %v3362, %v2072
        %v3364 = vrot.slane %v2072, 4
        %v3365 = vsel %vm2118, %v2076, %v3364
        %v3367 = vunpack.c.l.s4 1983009808
        %v3368 = vunpack.c.0.s8 %v3367
        %v3369 = vperm.slane %v3363, %v3368
        %v3371 = vunpack.c.l.s4 1983009808
        %v3372 = vunpack.c.0.s8 %v3371
        %v3373 = vperm.slane %v3365, %v3372
        %v3374 = vrot.slane %v2082, 4
        %v3375 = vsel %vm2118, %v3374, %v2078
        %v3376 = vrot.slane %v2078, 4
        %v3377 = vsel %vm2118, %v2082, %v3376
        %v3379 = vunpack.c.l.s4 1983009808
        %v3380 = vunpack.c.0.s8 %v3379
        %v3381 = vperm.slane %v3375, %v3380
        %v3383 = vunpack.c.l.s4 1983009808
        %v3384 = vunpack.c.0.s8 %v3383
        %v3385 = vperm.slane %v3377, %v3384
        %v3386 = vrot.slane %v2084, 4
        %v3387 = vsel %vm2118, %v3386, %v2080
        %v3388 = vrot.slane %v2080, 4
        %v3389 = vsel %vm2118, %v2084, %v3388
        %v3391 = vunpack.c.l.s4 1983009808
        %v3392 = vunpack.c.0.s8 %v3391
        %v3393 = vperm.slane %v3387, %v3392
        %v3395 = vunpack.c.l.s4 1983009808
        %v3396 = vunpack.c.0.s8 %v3395
        %v3397 = vperm.slane %v3389, %v3396
        %v3398 = vrot.slane %v3369, 4
        %v3399 = vsel %vm2118, %v3398, %v3357
        %v3400 = vrot.slane %v3357, 4
        %v3401 = vsel %vm2118, %v3369, %v3400
        %v3403 = vunpack.c.l.s4 1934713408
        %v3404 = vunpack.c.0.s8 %v3403
        %v3405 = vperm.slane %v3399, %v3404
        %v3407 = vunpack.c.l.s4 1934713408
        %v3408 = vunpack.c.0.s8 %v3407
        %v3409 = vperm.slane %v3401, %v3408
        %v3410 = vrot.slane %v3373, 4
        %v3411 = vsel %vm2118, %v3410, %v3361
        %v3412 = vrot.slane %v3361, 4
        %v3413 = vsel %vm2118, %v3373, %v3412
        %v3415 = vunpack.c.l.s4 1934713408
        %v3416 = vunpack.c.0.s8 %v3415
        %v3417 = vperm.slane %v3411, %v3416
        %v3419 = vunpack.c.l.s4 1934713408
        %v3420 = vunpack.c.0.s8 %v3419
        %v3421 = vperm.slane %v3413, %v3420
        %v3422 = vrot.slane %v3393, 4
        %v3423 = vsel %vm2118, %v3422, %v3381
        %v3424 = vrot.slane %v3381, 4
        %v3425 = vsel %vm2118, %v3393, %v3424
        %v3427 = vunpack.c.l.s4 1934713408
        %v3428 = vunpack.c.0.s8 %v3427
        %v3429 = vperm.slane %v3423, %v3428
        %v3431 = vunpack.c.l.s4 1934713408
        %v3432 = vunpack.c.0.s8 %v3431
        %v3433 = vperm.slane %v3425, %v3432
        %v3434 = vrot.slane %v3397, 4
        %v3435 = vsel %vm2118, %v3434, %v3385
        %v3436 = vrot.slane %v3385, 4
        %v3437 = vsel %vm2118, %v3397, %v3436
        %v3439 = vunpack.c.l.s4 1934713408
        %v3440 = vunpack.c.0.s8 %v3439
        %v3441 = vperm.slane %v3435, %v3440
        %v3443 = vunpack.c.l.s4 1934713408
        %v3444 = vunpack.c.0.s8 %v3443
        %v3445 = vperm.slane %v3437, %v3444
        %v3446 = vrot.slane %v3429, 4
        %v3447 = vsel %vm2118, %v3446, %v3405
        %v3448 = vrot.slane %v3405, 4
        %v3449 = vsel %vm2118, %v3429, %v3448
        %v3450 = vrot.slane %v3433, 4
        %v3451 = vsel %vm2118, %v3450, %v3409
        %v3452 = vrot.slane %v3409, 4
        %v3453 = vsel %vm2118, %v3433, %v3452
        %v3454 = vrot.slane %v3441, 4
        %v3455 = vsel %vm2118, %v3454, %v3417
        %v3456 = vrot.slane %v3417, 4
        %v3457 = vsel %vm2118, %v3441, %v3456
        %v3458 = vrot.slane %v3445, 4
        %v3459 = vsel %vm2118, %v3458, %v3421
        %v3460 = vrot.slane %v3421, 4
        %v3461 = vsel %vm2118, %v3445, %v3460
        %v3462 = vrot.slane %v2089, 4
        %v3463 = vsel %vm2118, %v3462, %v2085
        %v3464 = vrot.slane %v2085, 4
        %v3465 = vsel %vm2118, %v2089, %v3464
        %v3467 = vunpack.c.l.s4 1983009808
        %v3468 = vunpack.c.0.s8 %v3467
        %v3469 = vperm.slane %v3463, %v3468
        %v3471 = vunpack.c.l.s4 1983009808
        %v3472 = vunpack.c.0.s8 %v3471
        %v3473 = vperm.slane %v3465, %v3472
        %v3474 = vrot.slane %v2091, 4
        %v3475 = vsel %vm2118, %v3474, %v2087
        %v3476 = vrot.slane %v2087, 4
        %v3477 = vsel %vm2118, %v2091, %v3476
        %v3479 = vunpack.c.l.s4 1983009808
        %v3480 = vunpack.c.0.s8 %v3479
        %v3481 = vperm.slane %v3475, %v3480
        %v3483 = vunpack.c.l.s4 1983009808
        %v3484 = vunpack.c.0.s8 %v3483
        %v3485 = vperm.slane %v3477, %v3484
        %v3486 = vrot.slane %v2097, 4
        %v3487 = vsel %vm2118, %v3486, %v2093
        %v3488 = vrot.slane %v2093, 4
        %v3489 = vsel %vm2118, %v2097, %v3488
        %v3491 = vunpack.c.l.s4 1983009808
        %v3492 = vunpack.c.0.s8 %v3491
        %v3493 = vperm.slane %v3487, %v3492
        %v3495 = vunpack.c.l.s4 1983009808
        %v3496 = vunpack.c.0.s8 %v3495
        %v3497 = vperm.slane %v3489, %v3496
        %v3498 = vrot.slane %v2099, 4
        %v3499 = vsel %vm2118, %v3498, %v2095
        %v3500 = vrot.slane %v2095, 4
        %v3501 = vsel %vm2118, %v2099, %v3500
        %v3503 = vunpack.c.l.s4 1983009808
        %v3504 = vunpack.c.0.s8 %v3503
        %v3505 = vperm.slane %v3499, %v3504
        %v3507 = vunpack.c.l.s4 1983009808
        %v3508 = vunpack.c.0.s8 %v3507
        %v3509 = vperm.slane %v3501, %v3508
        %v3510 = vrot.slane %v3481, 4
        %v3511 = vsel %vm2118, %v3510, %v3469
        %v3512 = vrot.slane %v3469, 4
        %v3513 = vsel %vm2118, %v3481, %v3512
        %v3515 = vunpack.c.l.s4 1934713408
        %v3516 = vunpack.c.0.s8 %v3515
        %v3517 = vperm.slane %v3511, %v3516
        %v3519 = vunpack.c.l.s4 1934713408
        %v3520 = vunpack.c.0.s8 %v3519
        %v3521 = vperm.slane %v3513, %v3520
        %v3522 = vrot.slane %v3485, 4
        %v3523 = vsel %vm2118, %v3522, %v3473
        %v3524 = vrot.slane %v3473, 4
        %v3525 = vsel %vm2118, %v3485, %v3524
        %v3527 = vunpack.c.l.s4 1934713408
        %v3528 = vunpack.c.0.s8 %v3527
        %v3529 = vperm.slane %v3523, %v3528
        %v3531 = vunpack.c.l.s4 1934713408
        %v3532 = vunpack.c.0.s8 %v3531
        %v3533 = vperm.slane %v3525, %v3532
        %v3534 = vrot.slane %v3505, 4
        %v3535 = vsel %vm2118, %v3534, %v3493
        %v3536 = vrot.slane %v3493, 4
        %v3537 = vsel %vm2118, %v3505, %v3536
        %v3539 = vunpack.c.l.s4 1934713408
        %v3540 = vunpack.c.0.s8 %v3539
        %v3541 = vperm.slane %v3535, %v3540
        %v3543 = vunpack.c.l.s4 1934713408
        %v3544 = vunpack.c.0.s8 %v3543
        %v3545 = vperm.slane %v3537, %v3544
        %v3546 = vrot.slane %v3509, 4
        %v3547 = vsel %vm2118, %v3546, %v3497
        %v3548 = vrot.slane %v3497, 4
        %v3549 = vsel %vm2118, %v3509, %v3548
        %v3551 = vunpack.c.l.s4 1934713408
        %v3552 = vunpack.c.0.s8 %v3551
        %v3553 = vperm.slane %v3547, %v3552
        %v3555 = vunpack.c.l.s4 1934713408
        %v3556 = vunpack.c.0.s8 %v3555
        %v3557 = vperm.slane %v3549, %v3556
        %v3558 = vrot.slane %v3541, 4
        %v3559 = vsel %vm2118, %v3558, %v3517
        %v3560 = vrot.slane %v3517, 4
        %v3561 = vsel %vm2118, %v3541, %v3560
        %v3562 = vrot.slane %v3545, 4
        %v3563 = vsel %vm2118, %v3562, %v3521
        %v3564 = vrot.slane %v3521, 4
        %v3565 = vsel %vm2118, %v3545, %v3564
        %v3566 = vrot.slane %v3553, 4
        %v3567 = vsel %vm2118, %v3566, %v3529
        %v3568 = vrot.slane %v3529, 4
        %v3569 = vsel %vm2118, %v3553, %v3568
        %v3570 = vrot.slane %v3557, 4
        %v3571 = vsel %vm2118, %v3570, %v3533
        %v3572 = vrot.slane %v3533, 4
        %v3573 = vsel %vm2118, %v3557, %v3572
        %v3574 = vrot.slane %v2105, 4
        %v3575 = vsel %vm2118, %v3574, %v2101
        %v3576 = vrot.slane %v2101, 4
        %v3577 = vsel %vm2118, %v2105, %v3576
        %v3579 = vunpack.c.l.s4 1983009808
        %v3580 = vunpack.c.0.s8 %v3579
        %v3581 = vperm.slane %v3575, %v3580
        %v3583 = vunpack.c.l.s4 1983009808
        %v3584 = vunpack.c.0.s8 %v3583
        %v3585 = vperm.slane %v3577, %v3584
        %v3586 = vrot.slane %v2107, 4
        %v3587 = vsel %vm2118, %v3586, %v2103
        %v3588 = vrot.slane %v2103, 4
        %v3589 = vsel %vm2118, %v2107, %v3588
        %v3591 = vunpack.c.l.s4 1983009808
        %v3592 = vunpack.c.0.s8 %v3591
        %v3593 = vperm.slane %v3587, %v3592
        %v3595 = vunpack.c.l.s4 1983009808
        %v3596 = vunpack.c.0.s8 %v3595
        %v3597 = vperm.slane %v3589, %v3596
        %v3598 = vrot.slane %v2113, 4
        %v3599 = vsel %vm2118, %v3598, %v2109
        %v3600 = vrot.slane %v2109, 4
        %v3601 = vsel %vm2118, %v2113, %v3600
        %v3603 = vunpack.c.l.s4 1983009808
        %v3604 = vunpack.c.0.s8 %v3603
        %v3605 = vperm.slane %v3599, %v3604
        %v3607 = vunpack.c.l.s4 1983009808
        %v3608 = vunpack.c.0.s8 %v3607
        %v3609 = vperm.slane %v3601, %v3608
        %v3610 = vrot.slane %v2115, 4
        %v3611 = vsel %vm2118, %v3610, %v2111
        %v3612 = vrot.slane %v2111, 4
        %v3613 = vsel %vm2118, %v2115, %v3612
        %v3615 = vunpack.c.l.s4 1983009808
        %v3616 = vunpack.c.0.s8 %v3615
        %v3617 = vperm.slane %v3611, %v3616
        %v3619 = vunpack.c.l.s4 1983009808
        %v3620 = vunpack.c.0.s8 %v3619
        %v3621 = vperm.slane %v3613, %v3620
        %v3622 = vrot.slane %v3593, 4
        %v3623 = vsel %vm2118, %v3622, %v3581
        %v3624 = vrot.slane %v3581, 4
        %v3625 = vsel %vm2118, %v3593, %v3624
        %v3627 = vunpack.c.l.s4 1934713408
        %v3628 = vunpack.c.0.s8 %v3627
        %v3629 = vperm.slane %v3623, %v3628
        %v3631 = vunpack.c.l.s4 1934713408
        %v3632 = vunpack.c.0.s8 %v3631
        %v3633 = vperm.slane %v3625, %v3632
        %v3634 = vrot.slane %v3597, 4
        %v3635 = vsel %vm2118, %v3634, %v3585
        %v3636 = vrot.slane %v3585, 4
        %v3637 = vsel %vm2118, %v3597, %v3636
        %v3639 = vunpack.c.l.s4 1934713408
        %v3640 = vunpack.c.0.s8 %v3639
        %v3641 = vperm.slane %v3635, %v3640
        %v3643 = vunpack.c.l.s4 1934713408
        %v3644 = vunpack.c.0.s8 %v3643
        %v3645 = vperm.slane %v3637, %v3644
        %v3646 = vrot.slane %v3617, 4
        %v3647 = vsel %vm2118, %v3646, %v3605
        %v3648 = vrot.slane %v3605, 4
        %v3649 = vsel %vm2118, %v3617, %v3648
        %v3651 = vunpack.c.l.s4 1934713408
        %v3652 = vunpack.c.0.s8 %v3651
        %v3653 = vperm.slane %v3647, %v3652
        %v3655 = vunpack.c.l.s4 1934713408
        %v3656 = vunpack.c.0.s8 %v3655
        %v3657 = vperm.slane %v3649, %v3656
        %v3658 = vrot.slane %v3621, 4
        %v3659 = vsel %vm2118, %v3658, %v3609
        %v3660 = vrot.slane %v3609, 4
        %v3661 = vsel %vm2118, %v3621, %v3660
        %v3663 = vunpack.c.l.s4 1934713408
        %v3664 = vunpack.c.0.s8 %v3663
        %v3665 = vperm.slane %v3659, %v3664
        %v3667 = vunpack.c.l.s4 1934713408
        %v3668 = vunpack.c.0.s8 %v3667
        %v3669 = vperm.slane %v3661, %v3668
        %v3670 = vrot.slane %v3653, 4
        %v3671 = vsel %vm2118, %v3670, %v3629
        %v3672 = vrot.slane %v3629, 4
        %v3673 = vsel %vm2118, %v3653, %v3672
        %v3674 = vrot.slane %v3657, 4
        %v3675 = vsel %vm2118, %v3674, %v3633
        %v3676 = vrot.slane %v3633, 4
        %v3677 = vsel %vm2118, %v3657, %v3676
        %v3678 = vrot.slane %v3665, 4
        %v3679 = vsel %vm2118, %v3678, %v3641
        %v3680 = vrot.slane %v3641, 4
        %v3681 = vsel %vm2118, %v3665, %v3680
        %v3682 = vrot.slane %v3669, 4
        %v3683 = vsel %vm2118, %v3682, %v3645
        %v3684 = vrot.slane %v3645, 4
        %v3685 = vsel %vm2118, %v3669, %v3684
        %v3686 = vrot.slane %v2090, 4
        %v3687 = vsel %vm2118, %v3686, %v2086
        %v3688 = vrot.slane %v2086, 4
        %v3689 = vsel %vm2118, %v2090, %v3688
        %v3691 = vunpack.c.l.s4 1983009808
        %v3692 = vunpack.c.0.s8 %v3691
        %v3693 = vperm.slane %v3687, %v3692
        %v3695 = vunpack.c.l.s4 1983009808
        %v3696 = vunpack.c.0.s8 %v3695
        %v3697 = vperm.slane %v3689, %v3696
        %v3698 = vrot.slane %v2092, 4
        %v3699 = vsel %vm2118, %v3698, %v2088
        %v3700 = vrot.slane %v2088, 4
        %v3701 = vsel %vm2118, %v2092, %v3700
        %v3703 = vunpack.c.l.s4 1983009808
        %v3704 = vunpack.c.0.s8 %v3703
        %v3705 = vperm.slane %v3699, %v3704
        %v3707 = vunpack.c.l.s4 1983009808
        %v3708 = vunpack.c.0.s8 %v3707
        %v3709 = vperm.slane %v3701, %v3708
        %v3710 = vrot.slane %v2098, 4
        %v3711 = vsel %vm2118, %v3710, %v2094
        %v3712 = vrot.slane %v2094, 4
        %v3713 = vsel %vm2118, %v2098, %v3712
        %v3715 = vunpack.c.l.s4 1983009808
        %v3716 = vunpack.c.0.s8 %v3715
        %v3717 = vperm.slane %v3711, %v3716
        %v3719 = vunpack.c.l.s4 1983009808
        %v3720 = vunpack.c.0.s8 %v3719
        %v3721 = vperm.slane %v3713, %v3720
        %v3722 = vrot.slane %v2100, 4
        %v3723 = vsel %vm2118, %v3722, %v2096
        %v3724 = vrot.slane %v2096, 4
        %v3725 = vsel %vm2118, %v2100, %v3724
        %v3727 = vunpack.c.l.s4 1983009808
        %v3728 = vunpack.c.0.s8 %v3727
        %v3729 = vperm.slane %v3723, %v3728
        %v3731 = vunpack.c.l.s4 1983009808
        %v3732 = vunpack.c.0.s8 %v3731
        %v3733 = vperm.slane %v3725, %v3732
        %v3734 = vrot.slane %v3705, 4
        %v3735 = vsel %vm2118, %v3734, %v3693
        %v3736 = vrot.slane %v3693, 4
        %v3737 = vsel %vm2118, %v3705, %v3736
        %v3739 = vunpack.c.l.s4 1934713408
        %v3740 = vunpack.c.0.s8 %v3739
        %v3741 = vperm.slane %v3735, %v3740
        %v3743 = vunpack.c.l.s4 1934713408
        %v3744 = vunpack.c.0.s8 %v3743
        %v3745 = vperm.slane %v3737, %v3744
        %v3746 = vrot.slane %v3709, 4
        %v3747 = vsel %vm2118, %v3746, %v3697
        %v3748 = vrot.slane %v3697, 4
        %v3749 = vsel %vm2118, %v3709, %v3748
        %v3751 = vunpack.c.l.s4 1934713408
        %v3752 = vunpack.c.0.s8 %v3751
        %v3753 = vperm.slane %v3747, %v3752
        %v3755 = vunpack.c.l.s4 1934713408
        %v3756 = vunpack.c.0.s8 %v3755
        %v3757 = vperm.slane %v3749, %v3756
        %v3758 = vrot.slane %v3729, 4
        %v3759 = vsel %vm2118, %v3758, %v3717
        %v3760 = vrot.slane %v3717, 4
        %v3761 = vsel %vm2118, %v3729, %v3760
        %v3763 = vunpack.c.l.s4 1934713408
        %v3764 = vunpack.c.0.s8 %v3763
        %v3765 = vperm.slane %v3759, %v3764
        %v3767 = vunpack.c.l.s4 1934713408
        %v3768 = vunpack.c.0.s8 %v3767
        %v3769 = vperm.slane %v3761, %v3768
        %v3770 = vrot.slane %v3733, 4
        %v3771 = vsel %vm2118, %v3770, %v3721
        %v3772 = vrot.slane %v3721, 4
        %v3773 = vsel %vm2118, %v3733, %v3772
        %v3775 = vunpack.c.l.s4 1934713408
        %v3776 = vunpack.c.0.s8 %v3775
        %v3777 = vperm.slane %v3771, %v3776
        %v3779 = vunpack.c.l.s4 1934713408
        %v3780 = vunpack.c.0.s8 %v3779
        %v3781 = vperm.slane %v3773, %v3780
        %v3782 = vrot.slane %v3765, 4
        %v3783 = vsel %vm2118, %v3782, %v3741
        %v3784 = vrot.slane %v3741, 4
        %v3785 = vsel %vm2118, %v3765, %v3784
        %v3786 = vrot.slane %v3769, 4
        %v3787 = vsel %vm2118, %v3786, %v3745
        %v3788 = vrot.slane %v3745, 4
        %v3789 = vsel %vm2118, %v3769, %v3788
        %v3790 = vrot.slane %v3777, 4
        %v3791 = vsel %vm2118, %v3790, %v3753
        %v3792 = vrot.slane %v3753, 4
        %v3793 = vsel %vm2118, %v3777, %v3792
        %v3794 = vrot.slane %v3781, 4
        %v3795 = vsel %vm2118, %v3794, %v3757
        %v3796 = vrot.slane %v3757, 4
        %v3797 = vsel %vm2118, %v3781, %v3796
        %v3798 = vrot.slane %v2106, 4
        %v3799 = vsel %vm2118, %v3798, %v2102
        %v3800 = vrot.slane %v2102, 4
        %v3801 = vsel %vm2118, %v2106, %v3800
        %v3803 = vunpack.c.l.s4 1983009808
        %v3804 = vunpack.c.0.s8 %v3803
        %v3805 = vperm.slane %v3799, %v3804
        %v3807 = vunpack.c.l.s4 1983009808
        %v3808 = vunpack.c.0.s8 %v3807
        %v3809 = vperm.slane %v3801, %v3808
        %v3810 = vrot.slane %v2108, 4
        %v3811 = vsel %vm2118, %v3810, %v2104
        %v3812 = vrot.slane %v2104, 4
        %v3813 = vsel %vm2118, %v2108, %v3812
        %v3815 = vunpack.c.l.s4 1983009808
        %v3816 = vunpack.c.0.s8 %v3815
        %v3817 = vperm.slane %v3811, %v3816
        %v3819 = vunpack.c.l.s4 1983009808
        %v3820 = vunpack.c.0.s8 %v3819
        %v3821 = vperm.slane %v3813, %v3820
        %v3822 = vrot.slane %v2114, 4
        %v3823 = vsel %vm2118, %v3822, %v2110
        %v3824 = vrot.slane %v2110, 4
        %v3825 = vsel %vm2118, %v2114, %v3824
        %v3827 = vunpack.c.l.s4 1983009808
        %v3828 = vunpack.c.0.s8 %v3827
        %v3829 = vperm.slane %v3823, %v3828
        %v3831 = vunpack.c.l.s4 1983009808
        %v3832 = vunpack.c.0.s8 %v3831
        %v3833 = vperm.slane %v3825, %v3832
        %v3834 = vrot.slane %v2116, 4
        %v3835 = vsel %vm2118, %v3834, %v2112
        %v3836 = vrot.slane %v2112, 4
        %v3837 = vsel %vm2118, %v2116, %v3836
        %v3839 = vunpack.c.l.s4 1983009808
        %v3840 = vunpack.c.0.s8 %v3839
        %v3841 = vperm.slane %v3835, %v3840
        %v3843 = vunpack.c.l.s4 1983009808
        %v3844 = vunpack.c.0.s8 %v3843
        %v3845 = vperm.slane %v3837, %v3844
        %v3846 = vrot.slane %v3817, 4
        %v3847 = vsel %vm2118, %v3846, %v3805
        %v3848 = vrot.slane %v3805, 4
        %v3849 = vsel %vm2118, %v3817, %v3848
        %v3851 = vunpack.c.l.s4 1934713408
        %v3852 = vunpack.c.0.s8 %v3851
        %v3853 = vperm.slane %v3847, %v3852
        %v3855 = vunpack.c.l.s4 1934713408
        %v3856 = vunpack.c.0.s8 %v3855
        %v3857 = vperm.slane %v3849, %v3856
        %v3858 = vrot.slane %v3821, 4
        %v3859 = vsel %vm2118, %v3858, %v3809
        %v3860 = vrot.slane %v3809, 4
        %v3861 = vsel %vm2118, %v3821, %v3860
        %v3863 = vunpack.c.l.s4 1934713408
        %v3864 = vunpack.c.0.s8 %v3863
        %v3865 = vperm.slane %v3859, %v3864
        %v3867 = vunpack.c.l.s4 1934713408
        %v3868 = vunpack.c.0.s8 %v3867
        %v3869 = vperm.slane %v3861, %v3868
        %v3870 = vrot.slane %v3841, 4
        %v3871 = vsel %vm2118, %v3870, %v3829
        %v3872 = vrot.slane %v3829, 4
        %v3873 = vsel %vm2118, %v3841, %v3872
        %v3875 = vunpack.c.l.s4 1934713408
        %v3876 = vunpack.c.0.s8 %v3875
        %v3877 = vperm.slane %v3871, %v3876
        %v3879 = vunpack.c.l.s4 1934713408
        %v3880 = vunpack.c.0.s8 %v3879
        %v3881 = vperm.slane %v3873, %v3880
        %v3882 = vrot.slane %v3845, 4
        %v3883 = vsel %vm2118, %v3882, %v3833
        %v3884 = vrot.slane %v3833, 4
        %v3885 = vsel %vm2118, %v3845, %v3884
        %v3887 = vunpack.c.l.s4 1934713408
        %v3888 = vunpack.c.0.s8 %v3887
        %v3889 = vperm.slane %v3883, %v3888
        %v3891 = vunpack.c.l.s4 1934713408
        %v3892 = vunpack.c.0.s8 %v3891
        %v3893 = vperm.slane %v3885, %v3892
        %v3894 = vrot.slane %v3877, 4
        %v3895 = vsel %vm2118, %v3894, %v3853
        %v3896 = vrot.slane %v3853, 4
        %v3897 = vsel %vm2118, %v3877, %v3896
        %v3898 = vrot.slane %v3881, 4
        %v3899 = vsel %vm2118, %v3898, %v3857
        %v3900 = vrot.slane %v3857, 4
        %v3901 = vsel %vm2118, %v3881, %v3900
        %v3902 = vrot.slane %v3889, 4
        %v3903 = vsel %vm2118, %v3902, %v3865
        %v3904 = vrot.slane %v3865, 4
        %v3905 = vsel %vm2118, %v3889, %v3904
        %v3906 = vrot.slane %v3893, 4
        %v3907 = vsel %vm2118, %v3906, %v3869
        %v3908 = vrot.slane %v3869, 4
        %v3909 = vsel %vm2118, %v3893, %v3908
        %3918 = vrot.lane.b32.xlu0 %v2217, 2
        %v3919 = vpop.permute.xlu0 %3918
        %3920 = vrot.lane.b32.xlu0 %v2329, 2
        %v3921 = vpop.permute.xlu0 %3920
        %3922 = vrot.lane.b32.xlu0 %v2665, 2
        %v3923 = vpop.permute.xlu0 %3922
        %3924 = vrot.lane.b32.xlu0 %v2777, 2
        %v3925 = vpop.permute.xlu0 %3924
        %3926 = vrot.lane.b32.xlu0 %v3113, 2
        %v3927 = vpop.permute.xlu0 %3926
        %3928 = vrot.lane.b32.xlu0 %v3225, 2
        %v3929 = vpop.permute.xlu0 %3928
        %3930 = vrot.lane.b32.xlu0 %v3561, 2
        %v3931 = vpop.permute.xlu0 %3930
        %3932 = vrot.lane.b32.xlu0 %v3673, 2
        %v3933 = vpop.permute.xlu0 %3932
        %3950 = vrot.lane.b32.xlu0 %v2219, 4
        %v3951 = vpop.permute.xlu0 %3950
        %3952 = vrot.lane.b32.xlu0 %v2331, 4
        %v3953 = vpop.permute.xlu0 %3952
        %3954 = vrot.lane.b32.xlu0 %v2667, 4
        %v3955 = vpop.permute.xlu0 %3954
        %3956 = vrot.lane.b32.xlu0 %v2779, 4
        %v3957 = vpop.permute.xlu0 %3956
        %3958 = vrot.lane.b32.xlu0 %v3115, 4
        %v3959 = vpop.permute.xlu0 %3958
        %3960 = vrot.lane.b32.xlu0 %v3227, 4
        %v3961 = vpop.permute.xlu0 %3960
        %3962 = vrot.lane.b32.xlu0 %v3563, 4
        %v3963 = vpop.permute.xlu0 %3962
        %3964 = vrot.lane.b32.xlu0 %v3675, 4
        %v3965 = vpop.permute.xlu0 %3964
        %3982 = vrot.lane.b32.xlu0 %v2221, 6
        %v3983 = vpop.permute.xlu0 %3982
        %3984 = vrot.lane.b32.xlu0 %v2333, 6
        %v3985 = vpop.permute.xlu0 %3984
        %3986 = vrot.lane.b32.xlu0 %v2669, 6
        %v3987 = vpop.permute.xlu0 %3986
        %3988 = vrot.lane.b32.xlu0 %v2781, 6
        %v3989 = vpop.permute.xlu0 %3988
        %3990 = vrot.lane.b32.xlu0 %v3117, 6
        %v3991 = vpop.permute.xlu0 %3990
        %3992 = vrot.lane.b32.xlu0 %v3229, 6
        %v3993 = vpop.permute.xlu0 %3992
        %3994 = vrot.lane.b32.xlu0 %v3565, 6
        %v3995 = vpop.permute.xlu0 %3994
        %3996 = vrot.lane.b32.xlu0 %v3677, 6
        %v3997 = vpop.permute.xlu0 %3996
        %4014 = vrot.lane.b32.xlu0 %v2223, 8
        %v4015 = vpop.permute.xlu0 %4014
        %4016 = vrot.lane.b32.xlu0 %v2335, 8
        %v4017 = vpop.permute.xlu0 %4016
        %4018 = vrot.lane.b32.xlu0 %v2671, 8
        %v4019 = vpop.permute.xlu0 %4018
        %4020 = vrot.lane.b32.xlu0 %v2783, 8
        %v4021 = vpop.permute.xlu0 %4020
        %4022 = vrot.lane.b32.xlu0 %v3119, 8
        %v4023 = vpop.permute.xlu0 %4022
        %4024 = vrot.lane.b32.xlu0 %v3231, 8
        %v4025 = vpop.permute.xlu0 %4024
        %4026 = vrot.lane.b32.xlu0 %v3567, 8
        %v4027 = vpop.permute.xlu0 %4026
        %4028 = vrot.lane.b32.xlu0 %v3679, 8
        %v4029 = vpop.permute.xlu0 %4028
        %4046 = vrot.lane.b32.xlu0 %v2225, 10
        %v4047 = vpop.permute.xlu0 %4046
        %4048 = vrot.lane.b32.xlu0 %v2337, 10
        %v4049 = vpop.permute.xlu0 %4048
        %4050 = vrot.lane.b32.xlu0 %v2673, 10
        %v4051 = vpop.permute.xlu0 %4050
        %4052 = vrot.lane.b32.xlu0 %v2785, 10
        %v4053 = vpop.permute.xlu0 %4052
        %4054 = vrot.lane.b32.xlu0 %v3121, 10
        %v4055 = vpop.permute.xlu0 %4054
        %4056 = vrot.lane.b32.xlu0 %v3233, 10
        %v4057 = vpop.permute.xlu0 %4056
        %4058 = vrot.lane.b32.xlu0 %v3569, 10
        %v4059 = vpop.permute.xlu0 %4058
        %4060 = vrot.lane.b32.xlu0 %v3681, 10
        %v4061 = vpop.permute.xlu0 %4060
        %4078 = vrot.lane.b32.xlu0 %v2227, 12
        %v4079 = vpop.permute.xlu0 %4078
        %4080 = vrot.lane.b32.xlu0 %v2339, 12
        %v4081 = vpop.permute.xlu0 %4080
        %4082 = vrot.lane.b32.xlu0 %v2675, 12
        %v4083 = vpop.permute.xlu0 %4082
        %4084 = vrot.lane.b32.xlu0 %v2787, 12
        %v4085 = vpop.permute.xlu0 %4084
        %4086 = vrot.lane.b32.xlu0 %v3123, 12
        %v4087 = vpop.permute.xlu0 %4086
        %4088 = vrot.lane.b32.xlu0 %v3235, 12
        %v4089 = vpop.permute.xlu0 %4088
        %4090 = vrot.lane.b32.xlu0 %v3571, 12
        %v4091 = vpop.permute.xlu0 %4090
        %4092 = vrot.lane.b32.xlu0 %v3683, 12
        %v4093 = vpop.permute.xlu0 %4092
        %4110 = vrot.lane.b32.xlu0 %v2229, 14
        %v4111 = vpop.permute.xlu0 %4110
        %4112 = vrot.lane.b32.xlu0 %v2341, 14
        %v4113 = vpop.permute.xlu0 %4112
        %4114 = vrot.lane.b32.xlu0 %v2677, 14
        %v4115 = vpop.permute.xlu0 %4114
        %4116 = vrot.lane.b32.xlu0 %v2789, 14
        %v4117 = vpop.permute.xlu0 %4116
        %4118 = vrot.lane.b32.xlu0 %v3125, 14
        %v4119 = vpop.permute.xlu0 %4118
        %4120 = vrot.lane.b32.xlu0 %v3237, 14
        %v4121 = vpop.permute.xlu0 %4120
        %4122 = vrot.lane.b32.xlu0 %v3573, 14
        %v4123 = vpop.permute.xlu0 %4122
        %4124 = vrot.lane.b32.xlu0 %v3685, 14
        %v4125 = vpop.permute.xlu0 %4124
        %4142 = vrot.lane.b32.xlu0 %v2439, 16
        %v4143 = vpop.permute.xlu0 %4142
        %4144 = vrot.lane.b32.xlu0 %v2551, 16
        %v4145 = vpop.permute.xlu0 %4144
        %4146 = vrot.lane.b32.xlu0 %v2887, 16
        %v4147 = vpop.permute.xlu0 %4146
        %4148 = vrot.lane.b32.xlu0 %v2999, 16
        %v4149 = vpop.permute.xlu0 %4148
        %4150 = vrot.lane.b32.xlu0 %v3335, 16
        %v4151 = vpop.permute.xlu0 %4150
        %4152 = vrot.lane.b32.xlu0 %v3447, 16
        %v4153 = vpop.permute.xlu0 %4152
        %4154 = vrot.lane.b32.xlu0 %v3783, 16
        %v4155 = vpop.permute.xlu0 %4154
        %4156 = vrot.lane.b32.xlu0 %v3895, 16
        %v4157 = vpop.permute.xlu0 %4156
        %4174 = vrot.lane.b32.xlu0 %v2441, 18
        %v4175 = vpop.permute.xlu0 %4174
        %4176 = vrot.lane.b32.xlu0 %v2553, 18
        %v4177 = vpop.permute.xlu0 %4176
        %4178 = vrot.lane.b32.xlu0 %v2889, 18
        %v4179 = vpop.permute.xlu0 %4178
        %4180 = vrot.lane.b32.xlu0 %v3001, 18
        %v4181 = vpop.permute.xlu0 %4180
        %4182 = vrot.lane.b32.xlu0 %v3337, 18
        %v4183 = vpop.permute.xlu0 %4182
        %4184 = vrot.lane.b32.xlu0 %v3449, 18
        %v4185 = vpop.permute.xlu0 %4184
        %4186 = vrot.lane.b32.xlu0 %v3785, 18
        %v4187 = vpop.permute.xlu0 %4186
        %4188 = vrot.lane.b32.xlu0 %v3897, 18
        %v4189 = vpop.permute.xlu0 %4188
        %4206 = vrot.lane.b32.xlu0 %v2443, 20
        %v4207 = vpop.permute.xlu0 %4206
        %4208 = vrot.lane.b32.xlu0 %v2555, 20
        %v4209 = vpop.permute.xlu0 %4208
        %4210 = vrot.lane.b32.xlu0 %v2891, 20
        %v4211 = vpop.permute.xlu0 %4210
        %4212 = vrot.lane.b32.xlu0 %v3003, 20
        %v4213 = vpop.permute.xlu0 %4212
        %4214 = vrot.lane.b32.xlu0 %v3339, 20
        %v4215 = vpop.permute.xlu0 %4214
        %4216 = vrot.lane.b32.xlu0 %v3451, 20
        %v4217 = vpop.permute.xlu0 %4216
        %4218 = vrot.lane.b32.xlu0 %v3787, 20
        %v4219 = vpop.permute.xlu0 %4218
        %4220 = vrot.lane.b32.xlu0 %v3899, 20
        %v4221 = vpop.permute.xlu0 %4220
        %4238 = vrot.lane.b32.xlu0 %v2445, 22
        %v4239 = vpop.permute.xlu0 %4238
        %4240 = vrot.lane.b32.xlu0 %v2557, 22
        %v4241 = vpop.permute.xlu0 %4240
        %4242 = vrot.lane.b32.xlu0 %v2893, 22
        %v4243 = vpop.permute.xlu0 %4242
        %4244 = vrot.lane.b32.xlu0 %v3005, 22
        %v4245 = vpop.permute.xlu0 %4244
        %4246 = vrot.lane.b32.xlu0 %v3341, 22
        %v4247 = vpop.permute.xlu0 %4246
        %4248 = vrot.lane.b32.xlu0 %v3453, 22
        %v4249 = vpop.permute.xlu0 %4248
        %4250 = vrot.lane.b32.xlu0 %v3789, 22
        %v4251 = vpop.permute.xlu0 %4250
        %4252 = vrot.lane.b32.xlu0 %v3901, 22
        %v4253 = vpop.permute.xlu0 %4252
        %4270 = vrot.lane.b32.xlu0 %v2447, 24
        %v4271 = vpop.permute.xlu0 %4270
        %4272 = vrot.lane.b32.xlu0 %v2559, 24
        %v4273 = vpop.permute.xlu0 %4272
        %4274 = vrot.lane.b32.xlu0 %v2895, 24
        %v4275 = vpop.permute.xlu0 %4274
        %4276 = vrot.lane.b32.xlu0 %v3007, 24
        %v4277 = vpop.permute.xlu0 %4276
        %4278 = vrot.lane.b32.xlu0 %v3343, 24
        %v4279 = vpop.permute.xlu0 %4278
        %4280 = vrot.lane.b32.xlu0 %v3455, 24
        %v4281 = vpop.permute.xlu0 %4280
        %4282 = vrot.lane.b32.xlu0 %v3791, 24
        %v4283 = vpop.permute.xlu0 %4282
        %4284 = vrot.lane.b32.xlu0 %v3903, 24
        %v4285 = vpop.permute.xlu0 %4284
        %4302 = vrot.lane.b32.xlu0 %v2449, 26
        %v4303 = vpop.permute.xlu0 %4302
        %4304 = vrot.lane.b32.xlu0 %v2561, 26
        %v4305 = vpop.permute.xlu0 %4304
        %4306 = vrot.lane.b32.xlu0 %v2897, 26
        %v4307 = vpop.permute.xlu0 %4306
        %4308 = vrot.lane.b32.xlu0 %v3009, 26
        %v4309 = vpop.permute.xlu0 %4308
        %4310 = vrot.lane.b32.xlu0 %v3345, 26
        %v4311 = vpop.permute.xlu0 %4310
        %4312 = vrot.lane.b32.xlu0 %v3457, 26
        %v4313 = vpop.permute.xlu0 %4312
        %4314 = vrot.lane.b32.xlu0 %v3793, 26
        %v4315 = vpop.permute.xlu0 %4314
        %4316 = vrot.lane.b32.xlu0 %v3905, 26
        %v4317 = vpop.permute.xlu0 %4316
        %4334 = vrot.lane.b32.xlu0 %v2451, 28
        %v4335 = vpop.permute.xlu0 %4334
        %4336 = vrot.lane.b32.xlu0 %v2563, 28
        %v4337 = vpop.permute.xlu0 %4336
        %4338 = vrot.lane.b32.xlu0 %v2899, 28
        %v4339 = vpop.permute.xlu0 %4338
        %4340 = vrot.lane.b32.xlu0 %v3011, 28
        %v4341 = vpop.permute.xlu0 %4340
        %4342 = vrot.lane.b32.xlu0 %v3347, 28
        %v4343 = vpop.permute.xlu0 %4342
        %4344 = vrot.lane.b32.xlu0 %v3459, 28
        %v4345 = vpop.permute.xlu0 %4344
        %4346 = vrot.lane.b32.xlu0 %v3795, 28
        %v4347 = vpop.permute.xlu0 %4346
        %4348 = vrot.lane.b32.xlu0 %v3907, 28
        %v4349 = vpop.permute.xlu0 %4348
        %4366 = vrot.lane.b32.xlu0 %v2453, 30
        %v4367 = vpop.permute.xlu0 %4366
        %4368 = vrot.lane.b32.xlu0 %v2565, 30
        %v4369 = vpop.permute.xlu0 %4368
        %4370 = vrot.lane.b32.xlu0 %v2901, 30
        %v4371 = vpop.permute.xlu0 %4370
        %4372 = vrot.lane.b32.xlu0 %v3013, 30
        %v4373 = vpop.permute.xlu0 %4372
        %4374 = vrot.lane.b32.xlu0 %v3349, 30
        %v4375 = vpop.permute.xlu0 %4374
        %4376 = vrot.lane.b32.xlu0 %v3461, 30
        %v4377 = vpop.permute.xlu0 %4376
        %4378 = vrot.lane.b32.xlu0 %v3797, 30
        %v4379 = vpop.permute.xlu0 %4378
        %4380 = vrot.lane.b32.xlu0 %v3909, 30
        %v4381 = vpop.permute.xlu0 %4380
        %vm4390 = vcmask 15360
        %v4391 = vsel %vm4390, %v2215, %v3919
        %v4392 = vsel %vm4390, %v2327, %v3921
        %v4393 = vsel %vm4390, %v2663, %v3923
        %v4394 = vsel %vm4390, %v2775, %v3925
        %v4395 = vsel %vm4390, %v3111, %v3927
        %v4396 = vsel %vm4390, %v3223, %v3929
        %v4397 = vsel %vm4390, %v3559, %v3931
        %v4398 = vsel %vm4390, %v3671, %v3933
        %vm4399 = vcmask 31744
        %v4400 = vsel %vm4399, %v4391, %v3951
        %v4401 = vsel %vm4399, %v4392, %v3953
        %v4402 = vsel %vm4399, %v4393, %v3955
        %v4403 = vsel %vm4399, %v4394, %v3957
        %v4404 = vsel %vm4399, %v4395, %v3959
        %v4405 = vsel %vm4399, %v4396, %v3961
        %v4406 = vsel %vm4399, %v4397, %v3963
        %v4407 = vsel %vm4399, %v4398, %v3965
        %vm4408 = vcmask 48128
        %v4409 = vsel %vm4408, %v4400, %v3983
        %v4410 = vsel %vm4408, %v4401, %v3985
        %v4411 = vsel %vm4408, %v4402, %v3987
        %v4412 = vsel %vm4408, %v4403, %v3989
        %v4413 = vsel %vm4408, %v4404, %v3991
        %v4414 = vsel %vm4408, %v4405, %v3993
        %v4415 = vsel %vm4408, %v4406, %v3995
        %v4416 = vsel %vm4408, %v4407, %v3997
        %vm4417 = vcmask 64512
        %v4418 = vsel %vm4417, %v4409, %v4015
        %v4419 = vsel %vm4417, %v4410, %v4017
        %v4420 = vsel %vm4417, %v4411, %v4019
        %v4421 = vsel %vm4417, %v4412, %v4021
        %v4422 = vsel %vm4417, %v4413, %v4023
        %v4423 = vsel %vm4417, %v4414, %v4025
        %v4424 = vsel %vm4417, %v4415, %v4027
        %v4425 = vsel %vm4417, %v4416, %v4029
        %vm4426 = vcmask 80896
        %v4427 = vsel %vm4426, %v4418, %v4047
        %v4428 = vsel %vm4426, %v4419, %v4049
        %v4429 = vsel %vm4426, %v4420, %v4051
        %v4430 = vsel %vm4426, %v4421, %v4053
        %v4431 = vsel %vm4426, %v4422, %v4055
        %v4432 = vsel %vm4426, %v4423, %v4057
        %v4433 = vsel %vm4426, %v4424, %v4059
        %v4434 = vsel %vm4426, %v4425, %v4061
        %vm4435 = vcmask 97280
        %v4436 = vsel %vm4435, %v4427, %v4079
        %v4437 = vsel %vm4435, %v4428, %v4081
        %v4438 = vsel %vm4435, %v4429, %v4083
        %v4439 = vsel %vm4435, %v4430, %v4085
        %v4440 = vsel %vm4435, %v4431, %v4087
        %v4441 = vsel %vm4435, %v4432, %v4089
        %v4442 = vsel %vm4435, %v4433, %v4091
        %v4443 = vsel %vm4435, %v4434, %v4093
        %vm4444 = vcmask 113664
        %v4445 = vsel %vm4444, %v4436, %v4111
        %v4446 = vsel %vm4444, %v4437, %v4113
        %v4447 = vsel %vm4444, %v4438, %v4115
        %v4448 = vsel %vm4444, %v4439, %v4117
        %v4449 = vsel %vm4444, %v4440, %v4119
        %v4450 = vsel %vm4444, %v4441, %v4121
        %v4451 = vsel %vm4444, %v4442, %v4123
        %v4452 = vsel %vm4444, %v4443, %v4125
        %vm4453 = vcmask 130048
        %v4454 = vsel %vm4453, %v4445, %v4143
        %v4455 = vsel %vm4453, %v4446, %v4145
        %v4456 = vsel %vm4453, %v4447, %v4147
        %v4457 = vsel %vm4453, %v4448, %v4149
        %v4458 = vsel %vm4453, %v4449, %v4151
        %v4459 = vsel %vm4453, %v4450, %v4153
        %v4460 = vsel %vm4453, %v4451, %v4155
        %v4461 = vsel %vm4453, %v4452, %v4157
        %vm4462 = vcmask 146432
        %v4463 = vsel %vm4462, %v4454, %v4175
        %v4464 = vsel %vm4462, %v4455, %v4177
        %v4465 = vsel %vm4462, %v4456, %v4179
        %v4466 = vsel %vm4462, %v4457, %v4181
        %v4467 = vsel %vm4462, %v4458, %v4183
        %v4468 = vsel %vm4462, %v4459, %v4185
        %v4469 = vsel %vm4462, %v4460, %v4187
        %v4470 = vsel %vm4462, %v4461, %v4189
        %vm4471 = vcmask 162816
        %v4472 = vsel %vm4471, %v4463, %v4207
        %v4473 = vsel %vm4471, %v4464, %v4209
        %v4474 = vsel %vm4471, %v4465, %v4211
        %v4475 = vsel %vm4471, %v4466, %v4213
        %v4476 = vsel %vm4471, %v4467, %v4215
        %v4477 = vsel %vm4471, %v4468, %v4217
        %v4478 = vsel %vm4471, %v4469, %v4219
        %v4479 = vsel %vm4471, %v4470, %v4221
        %vm4480 = vcmask 179200
        %v4481 = vsel %vm4480, %v4472, %v4239
        %v4482 = vsel %vm4480, %v4473, %v4241
        %v4483 = vsel %vm4480, %v4474, %v4243
        %v4484 = vsel %vm4480, %v4475, %v4245
        %v4485 = vsel %vm4480, %v4476, %v4247
        %v4486 = vsel %vm4480, %v4477, %v4249
        %v4487 = vsel %vm4480, %v4478, %v4251
        %v4488 = vsel %vm4480, %v4479, %v4253
        %vm4489 = vcmask 195584
        %v4490 = vsel %vm4489, %v4481, %v4271
        %v4491 = vsel %vm4489, %v4482, %v4273
        %v4492 = vsel %vm4489, %v4483, %v4275
        %v4493 = vsel %vm4489, %v4484, %v4277
        %v4494 = vsel %vm4489, %v4485, %v4279
        %v4495 = vsel %vm4489, %v4486, %v4281
        %v4496 = vsel %vm4489, %v4487, %v4283
        %v4497 = vsel %vm4489, %v4488, %v4285
        %vm4498 = vcmask 211968
        %v4499 = vsel %vm4498, %v4490, %v4303
        %v4500 = vsel %vm4498, %v4491, %v4305
        %v4501 = vsel %vm4498, %v4492, %v4307
        %v4502 = vsel %vm4498, %v4493, %v4309
        %v4503 = vsel %vm4498, %v4494, %v4311
        %v4504 = vsel %vm4498, %v4495, %v4313
        %v4505 = vsel %vm4498, %v4496, %v4315
        %v4506 = vsel %vm4498, %v4497, %v4317
        %vm4507 = vcmask 228352
        %v4508 = vsel %vm4507, %v4499, %v4335
        %v4509 = vsel %vm4507, %v4500, %v4337
        %v4510 = vsel %vm4507, %v4501, %v4339
        %v4511 = vsel %vm4507, %v4502, %v4341
        %v4512 = vsel %vm4507, %v4503, %v4343
        %v4513 = vsel %vm4507, %v4504, %v4345
        %v4514 = vsel %vm4507, %v4505, %v4347
        %v4515 = vsel %vm4507, %v4506, %v4349
        %vm4516 = vcmask 244736
        %v4517 = vsel %vm4516, %v4508, %v4367
        %v4518 = vsel %vm4516, %v4509, %v4369
        %v4519 = vsel %vm4516, %v4510, %v4371
        %v4520 = vsel %vm4516, %v4511, %v4373
        %v4521 = vsel %vm4516, %v4512, %v4375
        %v4522 = vsel %vm4516, %v4513, %v4377
        %v4523 = vsel %vm4516, %v4514, %v4379
        %v4524 = vsel %vm4516, %v4515, %v4381
        %v4525 = vperm.slane %v300, 0
        %v4526 = vlaneseq
        %v4527 = vshrl.u32 %v4526, 7
        %4529 = vset.pattern.permute.xlu0 %v4527
        %4530 = vperm.xlu0 %4529, %v4525
        %v4531 = vpop.permute.xlu0 %4530
        %v4532 = vlaneseq
        %v4533 = vshrl.u32 %v4532, 7
        %v4534 = vadd.s32 %v4533, 8
        %4535 = vset.pattern.permute.xlu0 %v4534
        %4536 = vperm.xlu0 %4535, %v4525
        %v4537 = vpop.permute.xlu0 %4536
        %v4538 = vperm.slane %v300, 1
        %v4539 = vlaneseq
        %v4540 = vshrl.u32 %v4539, 7
        %4542 = vset.pattern.permute.xlu0 %v4540
        %4543 = vperm.xlu0 %4542, %v4538
        %v4544 = vpop.permute.xlu0 %4543
        %v4545 = vlaneseq
        %v4546 = vshrl.u32 %v4545, 7
        %v4547 = vadd.s32 %v4546, 8
        %4548 = vset.pattern.permute.xlu0 %v4547
        %4549 = vperm.xlu0 %4548, %v4538
        %v4550 = vpop.permute.xlu0 %4549
        %v4551 = vperm.slane %v300, 2
        %v4552 = vlaneseq
        %v4553 = vshrl.u32 %v4552, 7
        %4555 = vset.pattern.permute.xlu0 %v4553
        %4556 = vperm.xlu0 %4555, %v4551
        %v4557 = vpop.permute.xlu0 %4556
        %v4558 = vlaneseq
        %v4559 = vshrl.u32 %v4558, 7
        %v4560 = vadd.s32 %v4559, 8
        %4561 = vset.pattern.permute.xlu0 %v4560
        %4562 = vperm.xlu0 %4561, %v4551
        %v4563 = vpop.permute.xlu0 %4562
        %v4564 = vperm.slane %v300, 3
        %v4565 = vlaneseq
        %v4566 = vshrl.u32 %v4565, 7
        %4568 = vset.pattern.permute.xlu0 %v4566
        %4569 = vperm.xlu0 %4568, %v4564
        %v4570 = vpop.permute.xlu0 %4569
        %v4571 = vlaneseq
        %v4572 = vshrl.u32 %v4571, 7
        %v4573 = vadd.s32 %v4572, 8
        %4574 = vset.pattern.permute.xlu0 %v4573
        %4575 = vperm.xlu0 %4574, %v4564
        %v4576 = vpop.permute.xlu0 %4575
        %v4577 = vperm.slane %v300, 4
        %v4578 = vlaneseq
        %v4579 = vshrl.u32 %v4578, 7
        %4581 = vset.pattern.permute.xlu0 %v4579
        %4582 = vperm.xlu0 %4581, %v4577
        %v4583 = vpop.permute.xlu0 %4582
        %v4584 = vlaneseq
        %v4585 = vshrl.u32 %v4584, 7
        %v4586 = vadd.s32 %v4585, 8
        %4587 = vset.pattern.permute.xlu0 %v4586
        %4588 = vperm.xlu0 %4587, %v4577
        %v4589 = vpop.permute.xlu0 %4588
        %v4590 = vperm.slane %v300, 5
        %v4591 = vlaneseq
        %v4592 = vshrl.u32 %v4591, 7
        %4594 = vset.pattern.permute.xlu0 %v4592
        %4595 = vperm.xlu0 %4594, %v4590
        %v4596 = vpop.permute.xlu0 %4595
        %v4597 = vlaneseq
        %v4598 = vshrl.u32 %v4597, 7
        %v4599 = vadd.s32 %v4598, 8
        %4600 = vset.pattern.permute.xlu0 %v4599
        %4601 = vperm.xlu0 %4600, %v4590
        %v4602 = vpop.permute.xlu0 %4601
        %v4603 = vperm.slane %v300, 6
        %v4604 = vlaneseq
        %v4605 = vshrl.u32 %v4604, 7
        %4607 = vset.pattern.permute.xlu0 %v4605
        %4608 = vperm.xlu0 %4607, %v4603
        %v4609 = vpop.permute.xlu0 %4608
        %v4610 = vlaneseq
        %v4611 = vshrl.u32 %v4610, 7
        %v4612 = vadd.s32 %v4611, 8
        %4613 = vset.pattern.permute.xlu0 %v4612
        %4614 = vperm.xlu0 %4613, %v4603
        %v4615 = vpop.permute.xlu0 %4614
        %v4616 = vperm.slane %v300, 7
        %v4617 = vlaneseq
        %v4618 = vshrl.u32 %v4617, 7
        %4620 = vset.pattern.permute.xlu0 %v4618
        %4621 = vperm.xlu0 %4620, %v4616
        %v4622 = vpop.permute.xlu0 %4621
        %v4623 = vlaneseq
        %v4624 = vshrl.u32 %v4623, 7
        %v4625 = vadd.s32 %v4624, 8
        %4626 = vset.pattern.permute.xlu0 %v4625
        %4627 = vperm.xlu0 %4626, %v4616
        %v4628 = vpop.permute.xlu0 %4627
        %v4629 = vperm.slane %v301, 0
        %v4630 = vlaneseq
        %v4631 = vshrl.u32 %v4630, 7
        %4633 = vset.pattern.permute.xlu0 %v4631
        %4634 = vperm.xlu0 %4633, %v4629
        %v4635 = vpop.permute.xlu0 %4634
        %v4636 = vlaneseq
        %v4637 = vshrl.u32 %v4636, 7
        %v4638 = vadd.s32 %v4637, 8
        %4639 = vset.pattern.permute.xlu0 %v4638
        %4640 = vperm.xlu0 %4639, %v4629
        %v4641 = vpop.permute.xlu0 %4640
        %v4642 = vperm.slane %v301, 1
        %v4643 = vlaneseq
        %v4644 = vshrl.u32 %v4643, 7
        %4646 = vset.pattern.permute.xlu0 %v4644
        %4647 = vperm.xlu0 %4646, %v4642
        %v4648 = vpop.permute.xlu0 %4647
        %v4649 = vlaneseq
        %v4650 = vshrl.u32 %v4649, 7
        %v4651 = vadd.s32 %v4650, 8
        %4652 = vset.pattern.permute.xlu0 %v4651
        %4653 = vperm.xlu0 %4652, %v4642
        %v4654 = vpop.permute.xlu0 %4653
        %v4655 = vperm.slane %v301, 2
        %v4656 = vlaneseq
        %v4657 = vshrl.u32 %v4656, 7
        %4659 = vset.pattern.permute.xlu0 %v4657
        %4660 = vperm.xlu0 %4659, %v4655
        %v4661 = vpop.permute.xlu0 %4660
        %v4662 = vlaneseq
        %v4663 = vshrl.u32 %v4662, 7
        %v4664 = vadd.s32 %v4663, 8
        %4665 = vset.pattern.permute.xlu0 %v4664
        %4666 = vperm.xlu0 %4665, %v4655
        %v4667 = vpop.permute.xlu0 %4666
        %v4668 = vperm.slane %v301, 3
        %v4669 = vlaneseq
        %v4670 = vshrl.u32 %v4669, 7
        %4672 = vset.pattern.permute.xlu0 %v4670
        %4673 = vperm.xlu0 %4672, %v4668
        %v4674 = vpop.permute.xlu0 %4673
        %v4675 = vlaneseq
        %v4676 = vshrl.u32 %v4675, 7
        %v4677 = vadd.s32 %v4676, 8
        %4678 = vset.pattern.permute.xlu0 %v4677
        %4679 = vperm.xlu0 %4678, %v4668
        %v4680 = vpop.permute.xlu0 %4679
        %v4681 = vperm.slane %v301, 4
        %v4682 = vlaneseq
        %v4683 = vshrl.u32 %v4682, 7
        %4685 = vset.pattern.permute.xlu0 %v4683
        %4686 = vperm.xlu0 %4685, %v4681
        %v4687 = vpop.permute.xlu0 %4686
        %v4688 = vlaneseq
        %v4689 = vshrl.u32 %v4688, 7
        %v4690 = vadd.s32 %v4689, 8
        %4691 = vset.pattern.permute.xlu0 %v4690
        %4692 = vperm.xlu0 %4691, %v4681
        %v4693 = vpop.permute.xlu0 %4692
        %v4694 = vperm.slane %v301, 5
        %v4695 = vlaneseq
        %v4696 = vshrl.u32 %v4695, 7
        %4698 = vset.pattern.permute.xlu0 %v4696
        %4699 = vperm.xlu0 %4698, %v4694
        %v4700 = vpop.permute.xlu0 %4699
        %v4701 = vlaneseq
        %v4702 = vshrl.u32 %v4701, 7
        %v4703 = vadd.s32 %v4702, 8
        %4704 = vset.pattern.permute.xlu0 %v4703
        %4705 = vperm.xlu0 %4704, %v4694
        %v4706 = vpop.permute.xlu0 %4705
        %v4707 = vperm.slane %v301, 6
        %v4708 = vlaneseq
        %v4709 = vshrl.u32 %v4708, 7
        %4711 = vset.pattern.permute.xlu0 %v4709
        %4712 = vperm.xlu0 %4711, %v4707
        %v4713 = vpop.permute.xlu0 %4712
        %v4714 = vlaneseq
        %v4715 = vshrl.u32 %v4714, 7
        %v4716 = vadd.s32 %v4715, 8
        %4717 = vset.pattern.permute.xlu0 %v4716
        %4718 = vperm.xlu0 %4717, %v4707
        %v4719 = vpop.permute.xlu0 %4718
        %v4720 = vperm.slane %v301, 7
        %v4721 = vlaneseq
        %v4722 = vshrl.u32 %v4721, 7
        %4724 = vset.pattern.permute.xlu0 %v4722
        %4725 = vperm.xlu0 %4724, %v4720
        %v4726 = vpop.permute.xlu0 %4725
        %v4727 = vlaneseq
        %v4728 = vshrl.u32 %v4727, 7
        %v4729 = vadd.s32 %v4728, 8
        %4730 = vset.pattern.permute.xlu0 %v4729
        %4731 = vperm.xlu0 %4730, %v4720
        %v4732 = vpop.permute.xlu0 %4731
        %v4733 = vperm.slane %v302, 0
        %v4734 = vlaneseq
        %v4735 = vshrl.u32 %v4734, 7
        %4737 = vset.pattern.permute.xlu0 %v4735
        %4738 = vperm.xlu0 %4737, %v4733
        %v4739 = vpop.permute.xlu0 %4738
        %v4740 = vlaneseq
        %v4741 = vshrl.u32 %v4740, 7
        %v4742 = vadd.s32 %v4741, 8
        %4743 = vset.pattern.permute.xlu0 %v4742
        %4744 = vperm.xlu0 %4743, %v4733
        %v4745 = vpop.permute.xlu0 %4744
        %v4746 = vperm.slane %v302, 1
        %v4747 = vlaneseq
        %v4748 = vshrl.u32 %v4747, 7
        %4750 = vset.pattern.permute.xlu0 %v4748
        %4751 = vperm.xlu0 %4750, %v4746
        %v4752 = vpop.permute.xlu0 %4751
        %v4753 = vlaneseq
        %v4754 = vshrl.u32 %v4753, 7
        %v4755 = vadd.s32 %v4754, 8
        %4756 = vset.pattern.permute.xlu0 %v4755
        %4757 = vperm.xlu0 %4756, %v4746
        %v4758 = vpop.permute.xlu0 %4757
        %v4759 = vperm.slane %v302, 2
        %v4760 = vlaneseq
        %v4761 = vshrl.u32 %v4760, 7
        %4763 = vset.pattern.permute.xlu0 %v4761
        %4764 = vperm.xlu0 %4763, %v4759
        %v4765 = vpop.permute.xlu0 %4764
        %v4766 = vlaneseq
        %v4767 = vshrl.u32 %v4766, 7
        %v4768 = vadd.s32 %v4767, 8
        %4769 = vset.pattern.permute.xlu0 %v4768
        %4770 = vperm.xlu0 %4769, %v4759
        %v4771 = vpop.permute.xlu0 %4770
        %v4772 = vperm.slane %v302, 3
        %v4773 = vlaneseq
        %v4774 = vshrl.u32 %v4773, 7
        %4776 = vset.pattern.permute.xlu0 %v4774
        %4777 = vperm.xlu0 %4776, %v4772
        %v4778 = vpop.permute.xlu0 %4777
        %v4779 = vlaneseq
        %v4780 = vshrl.u32 %v4779, 7
        %v4781 = vadd.s32 %v4780, 8
        %4782 = vset.pattern.permute.xlu0 %v4781
        %4783 = vperm.xlu0 %4782, %v4772
        %v4784 = vpop.permute.xlu0 %4783
        %v4785 = vperm.slane %v302, 4
        %v4786 = vlaneseq
        %v4787 = vshrl.u32 %v4786, 7
        %4789 = vset.pattern.permute.xlu0 %v4787
        %4790 = vperm.xlu0 %4789, %v4785
        %v4791 = vpop.permute.xlu0 %4790
        %v4792 = vlaneseq
        %v4793 = vshrl.u32 %v4792, 7
        %v4794 = vadd.s32 %v4793, 8
        %4795 = vset.pattern.permute.xlu0 %v4794
        %4796 = vperm.xlu0 %4795, %v4785
        %v4797 = vpop.permute.xlu0 %4796
        %v4798 = vperm.slane %v302, 5
        %v4799 = vlaneseq
        %v4800 = vshrl.u32 %v4799, 7
        %4802 = vset.pattern.permute.xlu0 %v4800
        %4803 = vperm.xlu0 %4802, %v4798
        %v4804 = vpop.permute.xlu0 %4803
        %v4805 = vlaneseq
        %v4806 = vshrl.u32 %v4805, 7
        %v4807 = vadd.s32 %v4806, 8
        %4808 = vset.pattern.permute.xlu0 %v4807
        %4809 = vperm.xlu0 %4808, %v4798
        %v4810 = vpop.permute.xlu0 %4809
        %v4811 = vperm.slane %v302, 6
        %v4812 = vlaneseq
        %v4813 = vshrl.u32 %v4812, 7
        %4815 = vset.pattern.permute.xlu0 %v4813
        %4816 = vperm.xlu0 %4815, %v4811
        %v4817 = vpop.permute.xlu0 %4816
        %v4818 = vlaneseq
        %v4819 = vshrl.u32 %v4818, 7
        %v4820 = vadd.s32 %v4819, 8
        %4821 = vset.pattern.permute.xlu0 %v4820
        %4822 = vperm.xlu0 %4821, %v4811
        %v4823 = vpop.permute.xlu0 %4822
        %v4824 = vperm.slane %v302, 7
        %v4825 = vlaneseq
        %v4826 = vshrl.u32 %v4825, 7
        %4828 = vset.pattern.permute.xlu0 %v4826
        %4829 = vperm.xlu0 %4828, %v4824
        %v4830 = vpop.permute.xlu0 %4829
        %v4831 = vlaneseq
        %v4832 = vshrl.u32 %v4831, 7
        %v4833 = vadd.s32 %v4832, 8
        %4834 = vset.pattern.permute.xlu0 %v4833
        %4835 = vperm.xlu0 %4834, %v4824
        %v4836 = vpop.permute.xlu0 %4835
        %v4837 = vperm.slane %v303, 0
        %v4838 = vlaneseq
        %v4839 = vshrl.u32 %v4838, 7
        %4841 = vset.pattern.permute.xlu0 %v4839
        %4842 = vperm.xlu0 %4841, %v4837
        %v4843 = vpop.permute.xlu0 %4842
        %v4844 = vlaneseq
        %v4845 = vshrl.u32 %v4844, 7
        %v4846 = vadd.s32 %v4845, 8
        %4847 = vset.pattern.permute.xlu0 %v4846
        %4848 = vperm.xlu0 %4847, %v4837
        %v4849 = vpop.permute.xlu0 %4848
        %v4850 = vperm.slane %v303, 1
        %v4851 = vlaneseq
        %v4852 = vshrl.u32 %v4851, 7
        %4854 = vset.pattern.permute.xlu0 %v4852
        %4855 = vperm.xlu0 %4854, %v4850
        %v4856 = vpop.permute.xlu0 %4855
        %v4857 = vlaneseq
        %v4858 = vshrl.u32 %v4857, 7
        %v4859 = vadd.s32 %v4858, 8
        %4860 = vset.pattern.permute.xlu0 %v4859
        %4861 = vperm.xlu0 %4860, %v4850
        %v4862 = vpop.permute.xlu0 %4861
        %v4863 = vperm.slane %v303, 2
        %v4864 = vlaneseq
        %v4865 = vshrl.u32 %v4864, 7
        %4867 = vset.pattern.permute.xlu0 %v4865
        %4868 = vperm.xlu0 %4867, %v4863
        %v4869 = vpop.permute.xlu0 %4868
        %v4870 = vlaneseq
        %v4871 = vshrl.u32 %v4870, 7
        %v4872 = vadd.s32 %v4871, 8
        %4873 = vset.pattern.permute.xlu0 %v4872
        %4874 = vperm.xlu0 %4873, %v4863
        %v4875 = vpop.permute.xlu0 %4874
        %v4876 = vperm.slane %v303, 3
        %v4877 = vlaneseq
        %v4878 = vshrl.u32 %v4877, 7
        %4880 = vset.pattern.permute.xlu0 %v4878
        %4881 = vperm.xlu0 %4880, %v4876
        %v4882 = vpop.permute.xlu0 %4881
        %v4883 = vlaneseq
        %v4884 = vshrl.u32 %v4883, 7
        %v4885 = vadd.s32 %v4884, 8
        %4886 = vset.pattern.permute.xlu0 %v4885
        %4887 = vperm.xlu0 %4886, %v4876
        %v4888 = vpop.permute.xlu0 %4887
        %v4889 = vperm.slane %v303, 4
        %v4890 = vlaneseq
        %v4891 = vshrl.u32 %v4890, 7
        %4893 = vset.pattern.permute.xlu0 %v4891
        %4894 = vperm.xlu0 %4893, %v4889
        %v4895 = vpop.permute.xlu0 %4894
        %v4896 = vlaneseq
        %v4897 = vshrl.u32 %v4896, 7
        %v4898 = vadd.s32 %v4897, 8
        %4899 = vset.pattern.permute.xlu0 %v4898
        %4900 = vperm.xlu0 %4899, %v4889
        %v4901 = vpop.permute.xlu0 %4900
        %v4902 = vperm.slane %v303, 5
        %v4903 = vlaneseq
        %v4904 = vshrl.u32 %v4903, 7
        %4906 = vset.pattern.permute.xlu0 %v4904
        %4907 = vperm.xlu0 %4906, %v4902
        %v4908 = vpop.permute.xlu0 %4907
        %v4909 = vlaneseq
        %v4910 = vshrl.u32 %v4909, 7
        %v4911 = vadd.s32 %v4910, 8
        %4912 = vset.pattern.permute.xlu0 %v4911
        %4913 = vperm.xlu0 %4912, %v4902
        %v4914 = vpop.permute.xlu0 %4913
        %v4915 = vperm.slane %v303, 6
        %v4916 = vlaneseq
        %v4917 = vshrl.u32 %v4916, 7
        %4919 = vset.pattern.permute.xlu0 %v4917
        %4920 = vperm.xlu0 %4919, %v4915
        %v4921 = vpop.permute.xlu0 %4920
        %v4922 = vlaneseq
        %v4923 = vshrl.u32 %v4922, 7
        %v4924 = vadd.s32 %v4923, 8
        %4925 = vset.pattern.permute.xlu0 %v4924
        %4926 = vperm.xlu0 %4925, %v4915
        %v4927 = vpop.permute.xlu0 %4926
        %v4928 = vperm.slane %v303, 7
        %v4929 = vlaneseq
        %v4930 = vshrl.u32 %v4929, 7
        %4932 = vset.pattern.permute.xlu0 %v4930
        %4933 = vperm.xlu0 %4932, %v4928
        %v4934 = vpop.permute.xlu0 %4933
        %v4935 = vlaneseq
        %v4936 = vshrl.u32 %v4935, 7
        %v4937 = vadd.s32 %v4936, 8
        %4938 = vset.pattern.permute.xlu0 %v4937
        %4939 = vperm.xlu0 %4938, %v4928
        %v4940 = vpop.permute.xlu0 %4939
        %v4941 = vperm.slane %v304, 0
        %v4942 = vlaneseq
        %v4943 = vshrl.u32 %v4942, 7
        %4945 = vset.pattern.permute.xlu0 %v4943
        %4946 = vperm.xlu0 %4945, %v4941
        %v4947 = vpop.permute.xlu0 %4946
        %v4948 = vlaneseq
        %v4949 = vshrl.u32 %v4948, 7
        %v4950 = vadd.s32 %v4949, 8
        %4951 = vset.pattern.permute.xlu0 %v4950
        %4952 = vperm.xlu0 %4951, %v4941
        %v4953 = vpop.permute.xlu0 %4952
        %v4954 = vperm.slane %v304, 1
        %v4955 = vlaneseq
        %v4956 = vshrl.u32 %v4955, 7
        %4958 = vset.pattern.permute.xlu0 %v4956
        %4959 = vperm.xlu0 %4958, %v4954
        %v4960 = vpop.permute.xlu0 %4959
        %v4961 = vlaneseq
        %v4962 = vshrl.u32 %v4961, 7
        %v4963 = vadd.s32 %v4962, 8
        %4964 = vset.pattern.permute.xlu0 %v4963
        %4965 = vperm.xlu0 %4964, %v4954
        %v4966 = vpop.permute.xlu0 %4965
        %v4967 = vperm.slane %v304, 2
        %v4968 = vlaneseq
        %v4969 = vshrl.u32 %v4968, 7
        %4971 = vset.pattern.permute.xlu0 %v4969
        %4972 = vperm.xlu0 %4971, %v4967
        %v4973 = vpop.permute.xlu0 %4972
        %v4974 = vlaneseq
        %v4975 = vshrl.u32 %v4974, 7
        %v4976 = vadd.s32 %v4975, 8
        %4977 = vset.pattern.permute.xlu0 %v4976
        %4978 = vperm.xlu0 %4977, %v4967
        %v4979 = vpop.permute.xlu0 %4978
        %v4980 = vperm.slane %v304, 3
        %v4981 = vlaneseq
        %v4982 = vshrl.u32 %v4981, 7
        %4984 = vset.pattern.permute.xlu0 %v4982
        %4985 = vperm.xlu0 %4984, %v4980
        %v4986 = vpop.permute.xlu0 %4985
        %v4987 = vlaneseq
        %v4988 = vshrl.u32 %v4987, 7
        %v4989 = vadd.s32 %v4988, 8
        %4990 = vset.pattern.permute.xlu0 %v4989
        %4991 = vperm.xlu0 %4990, %v4980
        %v4992 = vpop.permute.xlu0 %4991
        %v4993 = vperm.slane %v304, 4
        %v4994 = vlaneseq
        %v4995 = vshrl.u32 %v4994, 7
        %4997 = vset.pattern.permute.xlu0 %v4995
        %4998 = vperm.xlu0 %4997, %v4993
        %v4999 = vpop.permute.xlu0 %4998
        %v5000 = vlaneseq
        %v5001 = vshrl.u32 %v5000, 7
        %v5002 = vadd.s32 %v5001, 8
        %5003 = vset.pattern.permute.xlu0 %v5002
        %5004 = vperm.xlu0 %5003, %v4993
        %v5005 = vpop.permute.xlu0 %5004
        %v5006 = vperm.slane %v304, 5
        %v5007 = vlaneseq
        %v5008 = vshrl.u32 %v5007, 7
        %5010 = vset.pattern.permute.xlu0 %v5008
        %5011 = vperm.xlu0 %5010, %v5006
        %v5012 = vpop.permute.xlu0 %5011
        %v5013 = vlaneseq
        %v5014 = vshrl.u32 %v5013, 7
        %v5015 = vadd.s32 %v5014, 8
        %5016 = vset.pattern.permute.xlu0 %v5015
        %5017 = vperm.xlu0 %5016, %v5006
        %v5018 = vpop.permute.xlu0 %5017
        %v5019 = vperm.slane %v304, 6
        %v5020 = vlaneseq
        %v5021 = vshrl.u32 %v5020, 7
        %5023 = vset.pattern.permute.xlu0 %v5021
        %5024 = vperm.xlu0 %5023, %v5019
        %v5025 = vpop.permute.xlu0 %5024
        %v5026 = vlaneseq
        %v5027 = vshrl.u32 %v5026, 7
        %v5028 = vadd.s32 %v5027, 8
        %5029 = vset.pattern.permute.xlu0 %v5028
        %5030 = vperm.xlu0 %5029, %v5019
        %v5031 = vpop.permute.xlu0 %5030
        %v5032 = vperm.slane %v304, 7
        %v5033 = vlaneseq
        %v5034 = vshrl.u32 %v5033, 7
        %5036 = vset.pattern.permute.xlu0 %v5034
        %5037 = vperm.xlu0 %5036, %v5032
        %v5038 = vpop.permute.xlu0 %5037
        %v5039 = vlaneseq
        %v5040 = vshrl.u32 %v5039, 7
        %v5041 = vadd.s32 %v5040, 8
        %5042 = vset.pattern.permute.xlu0 %v5041
        %5043 = vperm.xlu0 %5042, %v5032
        %v5044 = vpop.permute.xlu0 %5043
        %v5045 = vperm.slane %v305, 0
        %v5046 = vlaneseq
        %v5047 = vshrl.u32 %v5046, 7
        %5049 = vset.pattern.permute.xlu0 %v5047
        %5050 = vperm.xlu0 %5049, %v5045
        %v5051 = vpop.permute.xlu0 %5050
        %v5052 = vlaneseq
        %v5053 = vshrl.u32 %v5052, 7
        %v5054 = vadd.s32 %v5053, 8
        %5055 = vset.pattern.permute.xlu0 %v5054
        %5056 = vperm.xlu0 %5055, %v5045
        %v5057 = vpop.permute.xlu0 %5056
        %v5058 = vperm.slane %v305, 1
        %v5059 = vlaneseq
        %v5060 = vshrl.u32 %v5059, 7
        %5062 = vset.pattern.permute.xlu0 %v5060
        %5063 = vperm.xlu0 %5062, %v5058
        %v5064 = vpop.permute.xlu0 %5063
        %v5065 = vlaneseq
        %v5066 = vshrl.u32 %v5065, 7
        %v5067 = vadd.s32 %v5066, 8
        %5068 = vset.pattern.permute.xlu0 %v5067
        %5069 = vperm.xlu0 %5068, %v5058
        %v5070 = vpop.permute.xlu0 %5069
        %v5071 = vperm.slane %v305, 2
        %v5072 = vlaneseq
        %v5073 = vshrl.u32 %v5072, 7
        %5075 = vset.pattern.permute.xlu0 %v5073
        %5076 = vperm.xlu0 %5075, %v5071
        %v5077 = vpop.permute.xlu0 %5076
        %v5078 = vlaneseq
        %v5079 = vshrl.u32 %v5078, 7
        %v5080 = vadd.s32 %v5079, 8
        %5081 = vset.pattern.permute.xlu0 %v5080
        %5082 = vperm.xlu0 %5081, %v5071
        %v5083 = vpop.permute.xlu0 %5082
        %v5084 = vperm.slane %v305, 3
        %v5085 = vlaneseq
        %v5086 = vshrl.u32 %v5085, 7
        %5088 = vset.pattern.permute.xlu0 %v5086
        %5089 = vperm.xlu0 %5088, %v5084
        %v5090 = vpop.permute.xlu0 %5089
        %v5091 = vlaneseq
        %v5092 = vshrl.u32 %v5091, 7
        %v5093 = vadd.s32 %v5092, 8
        %5094 = vset.pattern.permute.xlu0 %v5093
        %5095 = vperm.xlu0 %5094, %v5084
        %v5096 = vpop.permute.xlu0 %5095
        %v5097 = vperm.slane %v305, 4
        %v5098 = vlaneseq
        %v5099 = vshrl.u32 %v5098, 7
        %5101 = vset.pattern.permute.xlu0 %v5099
        %5102 = vperm.xlu0 %5101, %v5097
        %v5103 = vpop.permute.xlu0 %5102
        %v5104 = vlaneseq
        %v5105 = vshrl.u32 %v5104, 7
        %v5106 = vadd.s32 %v5105, 8
        %5107 = vset.pattern.permute.xlu0 %v5106
        %5108 = vperm.xlu0 %5107, %v5097
        %v5109 = vpop.permute.xlu0 %5108
        %v5110 = vperm.slane %v305, 5
        %v5111 = vlaneseq
        %v5112 = vshrl.u32 %v5111, 7
        %5114 = vset.pattern.permute.xlu0 %v5112
        %5115 = vperm.xlu0 %5114, %v5110
        %v5116 = vpop.permute.xlu0 %5115
        %v5117 = vlaneseq
        %v5118 = vshrl.u32 %v5117, 7
        %v5119 = vadd.s32 %v5118, 8
        %5120 = vset.pattern.permute.xlu0 %v5119
        %5121 = vperm.xlu0 %5120, %v5110
        %v5122 = vpop.permute.xlu0 %5121
        %v5123 = vperm.slane %v305, 6
        %v5124 = vlaneseq
        %v5125 = vshrl.u32 %v5124, 7
        %5127 = vset.pattern.permute.xlu0 %v5125
        %5128 = vperm.xlu0 %5127, %v5123
        %v5129 = vpop.permute.xlu0 %5128
        %v5130 = vlaneseq
        %v5131 = vshrl.u32 %v5130, 7
        %v5132 = vadd.s32 %v5131, 8
        %5133 = vset.pattern.permute.xlu0 %v5132
        %5134 = vperm.xlu0 %5133, %v5123
        %v5135 = vpop.permute.xlu0 %5134
        %v5136 = vperm.slane %v305, 7
        %v5137 = vlaneseq
        %v5138 = vshrl.u32 %v5137, 7
        %5140 = vset.pattern.permute.xlu0 %v5138
        %5141 = vperm.xlu0 %5140, %v5136
        %v5142 = vpop.permute.xlu0 %5141
        %v5143 = vlaneseq
        %v5144 = vshrl.u32 %v5143, 7
        %v5145 = vadd.s32 %v5144, 8
        %5146 = vset.pattern.permute.xlu0 %v5145
        %5147 = vperm.xlu0 %5146, %v5136
        %v5148 = vpop.permute.xlu0 %5147
        %v5149 = vperm.slane %v306, 0
        %v5150 = vlaneseq
        %v5151 = vshrl.u32 %v5150, 7
        %5153 = vset.pattern.permute.xlu0 %v5151
        %5154 = vperm.xlu0 %5153, %v5149
        %v5155 = vpop.permute.xlu0 %5154
        %v5156 = vlaneseq
        %v5157 = vshrl.u32 %v5156, 7
        %v5158 = vadd.s32 %v5157, 8
        %5159 = vset.pattern.permute.xlu0 %v5158
        %5160 = vperm.xlu0 %5159, %v5149
        %v5161 = vpop.permute.xlu0 %5160
        %v5162 = vperm.slane %v306, 1
        %v5163 = vlaneseq
        %v5164 = vshrl.u32 %v5163, 7
        %5166 = vset.pattern.permute.xlu0 %v5164
        %5167 = vperm.xlu0 %5166, %v5162
        %v5168 = vpop.permute.xlu0 %5167
        %v5169 = vlaneseq
        %v5170 = vshrl.u32 %v5169, 7
        %v5171 = vadd.s32 %v5170, 8
        %5172 = vset.pattern.permute.xlu0 %v5171
        %5173 = vperm.xlu0 %5172, %v5162
        %v5174 = vpop.permute.xlu0 %5173
        %v5175 = vperm.slane %v306, 2
        %v5176 = vlaneseq
        %v5177 = vshrl.u32 %v5176, 7
        %5179 = vset.pattern.permute.xlu0 %v5177
        %5180 = vperm.xlu0 %5179, %v5175
        %v5181 = vpop.permute.xlu0 %5180
        %v5182 = vlaneseq
        %v5183 = vshrl.u32 %v5182, 7
        %v5184 = vadd.s32 %v5183, 8
        %5185 = vset.pattern.permute.xlu0 %v5184
        %5186 = vperm.xlu0 %5185, %v5175
        %v5187 = vpop.permute.xlu0 %5186
        %v5188 = vperm.slane %v306, 3
        %v5189 = vlaneseq
        %v5190 = vshrl.u32 %v5189, 7
        %5192 = vset.pattern.permute.xlu0 %v5190
        %5193 = vperm.xlu0 %5192, %v5188
        %v5194 = vpop.permute.xlu0 %5193
        %v5195 = vlaneseq
        %v5196 = vshrl.u32 %v5195, 7
        %v5197 = vadd.s32 %v5196, 8
        %5198 = vset.pattern.permute.xlu0 %v5197
        %5199 = vperm.xlu0 %5198, %v5188
        %v5200 = vpop.permute.xlu0 %5199
        %v5201 = vperm.slane %v306, 4
        %v5202 = vlaneseq
        %v5203 = vshrl.u32 %v5202, 7
        %5205 = vset.pattern.permute.xlu0 %v5203
        %5206 = vperm.xlu0 %5205, %v5201
        %v5207 = vpop.permute.xlu0 %5206
        %v5208 = vlaneseq
        %v5209 = vshrl.u32 %v5208, 7
        %v5210 = vadd.s32 %v5209, 8
        %5211 = vset.pattern.permute.xlu0 %v5210
        %5212 = vperm.xlu0 %5211, %v5201
        %v5213 = vpop.permute.xlu0 %5212
        %v5214 = vperm.slane %v306, 5
        %v5215 = vlaneseq
        %v5216 = vshrl.u32 %v5215, 7
        %5218 = vset.pattern.permute.xlu0 %v5216
        %5219 = vperm.xlu0 %5218, %v5214
        %v5220 = vpop.permute.xlu0 %5219
        %v5221 = vlaneseq
        %v5222 = vshrl.u32 %v5221, 7
        %v5223 = vadd.s32 %v5222, 8
        %5224 = vset.pattern.permute.xlu0 %v5223
        %5225 = vperm.xlu0 %5224, %v5214
        %v5226 = vpop.permute.xlu0 %5225
        %v5227 = vperm.slane %v306, 6
        %v5228 = vlaneseq
        %v5229 = vshrl.u32 %v5228, 7
        %5231 = vset.pattern.permute.xlu0 %v5229
        %5232 = vperm.xlu0 %5231, %v5227
        %v5233 = vpop.permute.xlu0 %5232
        %v5234 = vlaneseq
        %v5235 = vshrl.u32 %v5234, 7
        %v5236 = vadd.s32 %v5235, 8
        %5237 = vset.pattern.permute.xlu0 %v5236
        %5238 = vperm.xlu0 %5237, %v5227
        %v5239 = vpop.permute.xlu0 %5238
        %v5240 = vperm.slane %v306, 7
        %v5241 = vlaneseq
        %v5242 = vshrl.u32 %v5241, 7
        %5244 = vset.pattern.permute.xlu0 %v5242
        %5245 = vperm.xlu0 %5244, %v5240
        %v5246 = vpop.permute.xlu0 %5245
        %v5247 = vlaneseq
        %v5248 = vshrl.u32 %v5247, 7
        %v5249 = vadd.s32 %v5248, 8
        %5250 = vset.pattern.permute.xlu0 %v5249
        %5251 = vperm.xlu0 %5250, %v5240
        %v5252 = vpop.permute.xlu0 %5251
        %v5253 = vperm.slane %v307, 0
        %v5254 = vlaneseq
        %v5255 = vshrl.u32 %v5254, 7
        %5257 = vset.pattern.permute.xlu0 %v5255
        %5258 = vperm.xlu0 %5257, %v5253
        %v5259 = vpop.permute.xlu0 %5258
        %v5260 = vlaneseq
        %v5261 = vshrl.u32 %v5260, 7
        %v5262 = vadd.s32 %v5261, 8
        %5263 = vset.pattern.permute.xlu0 %v5262
        %5264 = vperm.xlu0 %5263, %v5253
        %v5265 = vpop.permute.xlu0 %5264
        %v5266 = vperm.slane %v307, 1
        %v5267 = vlaneseq
        %v5268 = vshrl.u32 %v5267, 7
        %5270 = vset.pattern.permute.xlu0 %v5268
        %5271 = vperm.xlu0 %5270, %v5266
        %v5272 = vpop.permute.xlu0 %5271
        %v5273 = vlaneseq
        %v5274 = vshrl.u32 %v5273, 7
        %v5275 = vadd.s32 %v5274, 8
        %5276 = vset.pattern.permute.xlu0 %v5275
        %5277 = vperm.xlu0 %5276, %v5266
        %v5278 = vpop.permute.xlu0 %5277
        %v5279 = vperm.slane %v307, 2
        %v5280 = vlaneseq
        %v5281 = vshrl.u32 %v5280, 7
        %5283 = vset.pattern.permute.xlu0 %v5281
        %5284 = vperm.xlu0 %5283, %v5279
        %v5285 = vpop.permute.xlu0 %5284
        %v5286 = vlaneseq
        %v5287 = vshrl.u32 %v5286, 7
        %v5288 = vadd.s32 %v5287, 8
        %5289 = vset.pattern.permute.xlu0 %v5288
        %5290 = vperm.xlu0 %5289, %v5279
        %v5291 = vpop.permute.xlu0 %5290
        %v5292 = vperm.slane %v307, 3
        %v5293 = vlaneseq
        %v5294 = vshrl.u32 %v5293, 7
        %5296 = vset.pattern.permute.xlu0 %v5294
        %5297 = vperm.xlu0 %5296, %v5292
        %v5298 = vpop.permute.xlu0 %5297
        %v5299 = vlaneseq
        %v5300 = vshrl.u32 %v5299, 7
        %v5301 = vadd.s32 %v5300, 8
        %5302 = vset.pattern.permute.xlu0 %v5301
        %5303 = vperm.xlu0 %5302, %v5292
        %v5304 = vpop.permute.xlu0 %5303
        %v5305 = vperm.slane %v307, 4
        %v5306 = vlaneseq
        %v5307 = vshrl.u32 %v5306, 7
        %5309 = vset.pattern.permute.xlu0 %v5307
        %5310 = vperm.xlu0 %5309, %v5305
        %v5311 = vpop.permute.xlu0 %5310
        %v5312 = vlaneseq
        %v5313 = vshrl.u32 %v5312, 7
        %v5314 = vadd.s32 %v5313, 8
        %5315 = vset.pattern.permute.xlu0 %v5314
        %5316 = vperm.xlu0 %5315, %v5305
        %v5317 = vpop.permute.xlu0 %5316
        %v5318 = vperm.slane %v307, 5
        %v5319 = vlaneseq
        %v5320 = vshrl.u32 %v5319, 7
        %5322 = vset.pattern.permute.xlu0 %v5320
        %5323 = vperm.xlu0 %5322, %v5318
        %v5324 = vpop.permute.xlu0 %5323
        %v5325 = vlaneseq
        %v5326 = vshrl.u32 %v5325, 7
        %v5327 = vadd.s32 %v5326, 8
        %5328 = vset.pattern.permute.xlu0 %v5327
        %5329 = vperm.xlu0 %5328, %v5318
        %v5330 = vpop.permute.xlu0 %5329
        %v5331 = vperm.slane %v307, 6
        %v5332 = vlaneseq
        %v5333 = vshrl.u32 %v5332, 7
        %5335 = vset.pattern.permute.xlu0 %v5333
        %5336 = vperm.xlu0 %5335, %v5331
        %v5337 = vpop.permute.xlu0 %5336
        %v5338 = vlaneseq
        %v5339 = vshrl.u32 %v5338, 7
        %v5340 = vadd.s32 %v5339, 8
        %5341 = vset.pattern.permute.xlu0 %v5340
        %5342 = vperm.xlu0 %5341, %v5331
        %v5343 = vpop.permute.xlu0 %5342
        %v5344 = vperm.slane %v307, 7
        %v5345 = vlaneseq
        %v5346 = vshrl.u32 %v5345, 7
        %5348 = vset.pattern.permute.xlu0 %v5346
        %5349 = vperm.xlu0 %5348, %v5344
        %v5350 = vpop.permute.xlu0 %5349
        %v5351 = vlaneseq
        %v5352 = vshrl.u32 %v5351, 7
        %v5353 = vadd.s32 %v5352, 8
        %5354 = vset.pattern.permute.xlu0 %v5353
        %5355 = vperm.xlu0 %5354, %v5344
        %v5356 = vpop.permute.xlu0 %5355
        %v5357 = vperm.slane %v316, 0
        %v5358 = vlaneseq
        %v5359 = vshrl.u32 %v5358, 7
        %5361 = vset.pattern.permute.xlu0 %v5359
        %5362 = vperm.xlu0 %5361, %v5357
        %v5363 = vpop.permute.xlu0 %5362
        %v5364 = vlaneseq
        %v5365 = vshrl.u32 %v5364, 7
        %v5366 = vadd.s32 %v5365, 8
        %5367 = vset.pattern.permute.xlu0 %v5366
        %5368 = vperm.xlu0 %5367, %v5357
        %v5369 = vpop.permute.xlu0 %5368
        %v5370 = vperm.slane %v316, 1
        %v5371 = vlaneseq
        %v5372 = vshrl.u32 %v5371, 7
        %5374 = vset.pattern.permute.xlu0 %v5372
        %5375 = vperm.xlu0 %5374, %v5370
        %v5376 = vpop.permute.xlu0 %5375
        %v5377 = vlaneseq
        %v5378 = vshrl.u32 %v5377, 7
        %v5379 = vadd.s32 %v5378, 8
        %5380 = vset.pattern.permute.xlu0 %v5379
        %5381 = vperm.xlu0 %5380, %v5370
        %v5382 = vpop.permute.xlu0 %5381
        %v5383 = vperm.slane %v316, 2
        %v5384 = vlaneseq
        %v5385 = vshrl.u32 %v5384, 7
        %5387 = vset.pattern.permute.xlu0 %v5385
        %5388 = vperm.xlu0 %5387, %v5383
        %v5389 = vpop.permute.xlu0 %5388
        %v5390 = vlaneseq
        %v5391 = vshrl.u32 %v5390, 7
        %v5392 = vadd.s32 %v5391, 8
        %5393 = vset.pattern.permute.xlu0 %v5392
        %5394 = vperm.xlu0 %5393, %v5383
        %v5395 = vpop.permute.xlu0 %5394
        %v5396 = vperm.slane %v316, 3
        %v5397 = vlaneseq
        %v5398 = vshrl.u32 %v5397, 7
        %5400 = vset.pattern.permute.xlu0 %v5398
        %5401 = vperm.xlu0 %5400, %v5396
        %v5402 = vpop.permute.xlu0 %5401
        %v5403 = vlaneseq
        %v5404 = vshrl.u32 %v5403, 7
        %v5405 = vadd.s32 %v5404, 8
        %5406 = vset.pattern.permute.xlu0 %v5405
        %5407 = vperm.xlu0 %5406, %v5396
        %v5408 = vpop.permute.xlu0 %5407
        %v5409 = vperm.slane %v316, 4
        %v5410 = vlaneseq
        %v5411 = vshrl.u32 %v5410, 7
        %5413 = vset.pattern.permute.xlu0 %v5411
        %5414 = vperm.xlu0 %5413, %v5409
        %v5415 = vpop.permute.xlu0 %5414
        %v5416 = vlaneseq
        %v5417 = vshrl.u32 %v5416, 7
        %v5418 = vadd.s32 %v5417, 8
        %5419 = vset.pattern.permute.xlu0 %v5418
        %5420 = vperm.xlu0 %5419, %v5409
        %v5421 = vpop.permute.xlu0 %5420
        %v5422 = vperm.slane %v316, 5
        %v5423 = vlaneseq
        %v5424 = vshrl.u32 %v5423, 7
        %5426 = vset.pattern.permute.xlu0 %v5424
        %5427 = vperm.xlu0 %5426, %v5422
        %v5428 = vpop.permute.xlu0 %5427
        %v5429 = vlaneseq
        %v5430 = vshrl.u32 %v5429, 7
        %v5431 = vadd.s32 %v5430, 8
        %5432 = vset.pattern.permute.xlu0 %v5431
        %5433 = vperm.xlu0 %5432, %v5422
        %v5434 = vpop.permute.xlu0 %5433
        %v5435 = vperm.slane %v316, 6
        %v5436 = vlaneseq
        %v5437 = vshrl.u32 %v5436, 7
        %5439 = vset.pattern.permute.xlu0 %v5437
        %5440 = vperm.xlu0 %5439, %v5435
        %v5441 = vpop.permute.xlu0 %5440
        %v5442 = vlaneseq
        %v5443 = vshrl.u32 %v5442, 7
        %v5444 = vadd.s32 %v5443, 8
        %5445 = vset.pattern.permute.xlu0 %v5444
        %5446 = vperm.xlu0 %5445, %v5435
        %v5447 = vpop.permute.xlu0 %5446
        %v5448 = vperm.slane %v316, 7
        %v5449 = vlaneseq
        %v5450 = vshrl.u32 %v5449, 7
        %5452 = vset.pattern.permute.xlu0 %v5450
        %5453 = vperm.xlu0 %5452, %v5448
        %v5454 = vpop.permute.xlu0 %5453
        %v5455 = vlaneseq
        %v5456 = vshrl.u32 %v5455, 7
        %v5457 = vadd.s32 %v5456, 8
        %5458 = vset.pattern.permute.xlu0 %v5457
        %5459 = vperm.xlu0 %5458, %v5448
        %v5460 = vpop.permute.xlu0 %5459
        %v5461 = vperm.slane %v317, 0
        %v5462 = vlaneseq
        %v5463 = vshrl.u32 %v5462, 7
        %5465 = vset.pattern.permute.xlu0 %v5463
        %5466 = vperm.xlu0 %5465, %v5461
        %v5467 = vpop.permute.xlu0 %5466
        %v5468 = vlaneseq
        %v5469 = vshrl.u32 %v5468, 7
        %v5470 = vadd.s32 %v5469, 8
        %5471 = vset.pattern.permute.xlu0 %v5470
        %5472 = vperm.xlu0 %5471, %v5461
        %v5473 = vpop.permute.xlu0 %5472
        %v5474 = vperm.slane %v317, 1
        %v5475 = vlaneseq
        %v5476 = vshrl.u32 %v5475, 7
        %5478 = vset.pattern.permute.xlu0 %v5476
        %5479 = vperm.xlu0 %5478, %v5474
        %v5480 = vpop.permute.xlu0 %5479
        %v5481 = vlaneseq
        %v5482 = vshrl.u32 %v5481, 7
        %v5483 = vadd.s32 %v5482, 8
        %5484 = vset.pattern.permute.xlu0 %v5483
        %5485 = vperm.xlu0 %5484, %v5474
        %v5486 = vpop.permute.xlu0 %5485
        %v5487 = vperm.slane %v317, 2
        %v5488 = vlaneseq
        %v5489 = vshrl.u32 %v5488, 7
        %5491 = vset.pattern.permute.xlu0 %v5489
        %5492 = vperm.xlu0 %5491, %v5487
        %v5493 = vpop.permute.xlu0 %5492
        %v5494 = vlaneseq
        %v5495 = vshrl.u32 %v5494, 7
        %v5496 = vadd.s32 %v5495, 8
        %5497 = vset.pattern.permute.xlu0 %v5496
        %5498 = vperm.xlu0 %5497, %v5487
        %v5499 = vpop.permute.xlu0 %5498
        %v5500 = vperm.slane %v317, 3
        %v5501 = vlaneseq
        %v5502 = vshrl.u32 %v5501, 7
        %5504 = vset.pattern.permute.xlu0 %v5502
        %5505 = vperm.xlu0 %5504, %v5500
        %v5506 = vpop.permute.xlu0 %5505
        %v5507 = vlaneseq
        %v5508 = vshrl.u32 %v5507, 7
        %v5509 = vadd.s32 %v5508, 8
        %5510 = vset.pattern.permute.xlu0 %v5509
        %5511 = vperm.xlu0 %5510, %v5500
        %v5512 = vpop.permute.xlu0 %5511
        %v5513 = vperm.slane %v317, 4
        %v5514 = vlaneseq
        %v5515 = vshrl.u32 %v5514, 7
        %5517 = vset.pattern.permute.xlu0 %v5515
        %5518 = vperm.xlu0 %5517, %v5513
        %v5519 = vpop.permute.xlu0 %5518
        %v5520 = vlaneseq
        %v5521 = vshrl.u32 %v5520, 7
        %v5522 = vadd.s32 %v5521, 8
        %5523 = vset.pattern.permute.xlu0 %v5522
        %5524 = vperm.xlu0 %5523, %v5513
        %v5525 = vpop.permute.xlu0 %5524
        %v5526 = vperm.slane %v317, 5
        %v5527 = vlaneseq
        %v5528 = vshrl.u32 %v5527, 7
        %5530 = vset.pattern.permute.xlu0 %v5528
        %5531 = vperm.xlu0 %5530, %v5526
        %v5532 = vpop.permute.xlu0 %5531
        %v5533 = vlaneseq
        %v5534 = vshrl.u32 %v5533, 7
        %v5535 = vadd.s32 %v5534, 8
        %5536 = vset.pattern.permute.xlu0 %v5535
        %5537 = vperm.xlu0 %5536, %v5526
        %v5538 = vpop.permute.xlu0 %5537
        %v5539 = vperm.slane %v317, 6
        %v5540 = vlaneseq
        %v5541 = vshrl.u32 %v5540, 7
        %5543 = vset.pattern.permute.xlu0 %v5541
        %5544 = vperm.xlu0 %5543, %v5539
        %v5545 = vpop.permute.xlu0 %5544
        %v5546 = vlaneseq
        %v5547 = vshrl.u32 %v5546, 7
        %v5548 = vadd.s32 %v5547, 8
        %5549 = vset.pattern.permute.xlu0 %v5548
        %5550 = vperm.xlu0 %5549, %v5539
        %v5551 = vpop.permute.xlu0 %5550
        %v5552 = vperm.slane %v317, 7
        %v5553 = vlaneseq
        %v5554 = vshrl.u32 %v5553, 7
        %5556 = vset.pattern.permute.xlu0 %v5554
        %5557 = vperm.xlu0 %5556, %v5552
        %v5558 = vpop.permute.xlu0 %5557
        %v5559 = vlaneseq
        %v5560 = vshrl.u32 %v5559, 7
        %v5561 = vadd.s32 %v5560, 8
        %5562 = vset.pattern.permute.xlu0 %v5561
        %5563 = vperm.xlu0 %5562, %v5552
        %v5564 = vpop.permute.xlu0 %5563
        %v5565 = vperm.slane %v318, 0
        %v5566 = vlaneseq
        %v5567 = vshrl.u32 %v5566, 7
        %5569 = vset.pattern.permute.xlu0 %v5567
        %5570 = vperm.xlu0 %5569, %v5565
        %v5571 = vpop.permute.xlu0 %5570
        %v5572 = vlaneseq
        %v5573 = vshrl.u32 %v5572, 7
        %v5574 = vadd.s32 %v5573, 8
        %5575 = vset.pattern.permute.xlu0 %v5574
        %5576 = vperm.xlu0 %5575, %v5565
        %v5577 = vpop.permute.xlu0 %5576
        %v5578 = vperm.slane %v318, 1
        %v5579 = vlaneseq
        %v5580 = vshrl.u32 %v5579, 7
        %5582 = vset.pattern.permute.xlu0 %v5580
        %5583 = vperm.xlu0 %5582, %v5578
        %v5584 = vpop.permute.xlu0 %5583
        %v5585 = vlaneseq
        %v5586 = vshrl.u32 %v5585, 7
        %v5587 = vadd.s32 %v5586, 8
        %5588 = vset.pattern.permute.xlu0 %v5587
        %5589 = vperm.xlu0 %5588, %v5578
        %v5590 = vpop.permute.xlu0 %5589
        %v5591 = vperm.slane %v318, 2
        %v5592 = vlaneseq
        %v5593 = vshrl.u32 %v5592, 7
        %5595 = vset.pattern.permute.xlu0 %v5593
        %5596 = vperm.xlu0 %5595, %v5591
        %v5597 = vpop.permute.xlu0 %5596
        %v5598 = vlaneseq
        %v5599 = vshrl.u32 %v5598, 7
        %v5600 = vadd.s32 %v5599, 8
        %5601 = vset.pattern.permute.xlu0 %v5600
        %5602 = vperm.xlu0 %5601, %v5591
        %v5603 = vpop.permute.xlu0 %5602
        %v5604 = vperm.slane %v318, 3
        %v5605 = vlaneseq
        %v5606 = vshrl.u32 %v5605, 7
        %5608 = vset.pattern.permute.xlu0 %v5606
        %5609 = vperm.xlu0 %5608, %v5604
        %v5610 = vpop.permute.xlu0 %5609
        %v5611 = vlaneseq
        %v5612 = vshrl.u32 %v5611, 7
        %v5613 = vadd.s32 %v5612, 8
        %5614 = vset.pattern.permute.xlu0 %v5613
        %5615 = vperm.xlu0 %5614, %v5604
        %v5616 = vpop.permute.xlu0 %5615
        %v5617 = vperm.slane %v318, 4
        %v5618 = vlaneseq
        %v5619 = vshrl.u32 %v5618, 7
        %5621 = vset.pattern.permute.xlu0 %v5619
        %5622 = vperm.xlu0 %5621, %v5617
        %v5623 = vpop.permute.xlu0 %5622
        %v5624 = vlaneseq
        %v5625 = vshrl.u32 %v5624, 7
        %v5626 = vadd.s32 %v5625, 8
        %5627 = vset.pattern.permute.xlu0 %v5626
        %5628 = vperm.xlu0 %5627, %v5617
        %v5629 = vpop.permute.xlu0 %5628
        %v5630 = vperm.slane %v318, 5
        %v5631 = vlaneseq
        %v5632 = vshrl.u32 %v5631, 7
        %5634 = vset.pattern.permute.xlu0 %v5632
        %5635 = vperm.xlu0 %5634, %v5630
        %v5636 = vpop.permute.xlu0 %5635
        %v5637 = vlaneseq
        %v5638 = vshrl.u32 %v5637, 7
        %v5639 = vadd.s32 %v5638, 8
        %5640 = vset.pattern.permute.xlu0 %v5639
        %5641 = vperm.xlu0 %5640, %v5630
        %v5642 = vpop.permute.xlu0 %5641
        %v5643 = vperm.slane %v318, 6
        %v5644 = vlaneseq
        %v5645 = vshrl.u32 %v5644, 7
        %5647 = vset.pattern.permute.xlu0 %v5645
        %5648 = vperm.xlu0 %5647, %v5643
        %v5649 = vpop.permute.xlu0 %5648
        %v5650 = vlaneseq
        %v5651 = vshrl.u32 %v5650, 7
        %v5652 = vadd.s32 %v5651, 8
        %5653 = vset.pattern.permute.xlu0 %v5652
        %5654 = vperm.xlu0 %5653, %v5643
        %v5655 = vpop.permute.xlu0 %5654
        %v5656 = vperm.slane %v318, 7
        %v5657 = vlaneseq
        %v5658 = vshrl.u32 %v5657, 7
        %5660 = vset.pattern.permute.xlu0 %v5658
        %5661 = vperm.xlu0 %5660, %v5656
        %v5662 = vpop.permute.xlu0 %5661
        %v5663 = vlaneseq
        %v5664 = vshrl.u32 %v5663, 7
        %v5665 = vadd.s32 %v5664, 8
        %5666 = vset.pattern.permute.xlu0 %v5665
        %5667 = vperm.xlu0 %5666, %v5656
        %v5668 = vpop.permute.xlu0 %5667
        %v5669 = vperm.slane %v319, 0
        %v5670 = vlaneseq
        %v5671 = vshrl.u32 %v5670, 7
        %5673 = vset.pattern.permute.xlu0 %v5671
        %5674 = vperm.xlu0 %5673, %v5669
        %v5675 = vpop.permute.xlu0 %5674
        %v5676 = vlaneseq
        %v5677 = vshrl.u32 %v5676, 7
        %v5678 = vadd.s32 %v5677, 8
        %5679 = vset.pattern.permute.xlu0 %v5678
        %5680 = vperm.xlu0 %5679, %v5669
        %v5681 = vpop.permute.xlu0 %5680
        %v5682 = vperm.slane %v319, 1
        %v5683 = vlaneseq
        %v5684 = vshrl.u32 %v5683, 7
        %5686 = vset.pattern.permute.xlu0 %v5684
        %5687 = vperm.xlu0 %5686, %v5682
        %v5688 = vpop.permute.xlu0 %5687
        %v5689 = vlaneseq
        %v5690 = vshrl.u32 %v5689, 7
        %v5691 = vadd.s32 %v5690, 8
        %5692 = vset.pattern.permute.xlu0 %v5691
        %5693 = vperm.xlu0 %5692, %v5682
        %v5694 = vpop.permute.xlu0 %5693
        %v5695 = vperm.slane %v319, 2
        %v5696 = vlaneseq
        %v5697 = vshrl.u32 %v5696, 7
        %5699 = vset.pattern.permute.xlu0 %v5697
        %5700 = vperm.xlu0 %5699, %v5695
        %v5701 = vpop.permute.xlu0 %5700
        %v5702 = vlaneseq
        %v5703 = vshrl.u32 %v5702, 7
        %v5704 = vadd.s32 %v5703, 8
        %5705 = vset.pattern.permute.xlu0 %v5704
        %5706 = vperm.xlu0 %5705, %v5695
        %v5707 = vpop.permute.xlu0 %5706
        %v5708 = vperm.slane %v319, 3
        %v5709 = vlaneseq
        %v5710 = vshrl.u32 %v5709, 7
        %5712 = vset.pattern.permute.xlu0 %v5710
        %5713 = vperm.xlu0 %5712, %v5708
        %v5714 = vpop.permute.xlu0 %5713
        %v5715 = vlaneseq
        %v5716 = vshrl.u32 %v5715, 7
        %v5717 = vadd.s32 %v5716, 8
        %5718 = vset.pattern.permute.xlu0 %v5717
        %5719 = vperm.xlu0 %5718, %v5708
        %v5720 = vpop.permute.xlu0 %5719
        %v5721 = vperm.slane %v319, 4
        %v5722 = vlaneseq
        %v5723 = vshrl.u32 %v5722, 7
        %5725 = vset.pattern.permute.xlu0 %v5723
        %5726 = vperm.xlu0 %5725, %v5721
        %v5727 = vpop.permute.xlu0 %5726
        %v5728 = vlaneseq
        %v5729 = vshrl.u32 %v5728, 7
        %v5730 = vadd.s32 %v5729, 8
        %5731 = vset.pattern.permute.xlu0 %v5730
        %5732 = vperm.xlu0 %5731, %v5721
        %v5733 = vpop.permute.xlu0 %5732
        %v5734 = vperm.slane %v319, 5
        %v5735 = vlaneseq
        %v5736 = vshrl.u32 %v5735, 7
        %5738 = vset.pattern.permute.xlu0 %v5736
        %5739 = vperm.xlu0 %5738, %v5734
        %v5740 = vpop.permute.xlu0 %5739
        %v5741 = vlaneseq
        %v5742 = vshrl.u32 %v5741, 7
        %v5743 = vadd.s32 %v5742, 8
        %5744 = vset.pattern.permute.xlu0 %v5743
        %5745 = vperm.xlu0 %5744, %v5734
        %v5746 = vpop.permute.xlu0 %5745
        %v5747 = vperm.slane %v319, 6
        %v5748 = vlaneseq
        %v5749 = vshrl.u32 %v5748, 7
        %5751 = vset.pattern.permute.xlu0 %v5749
        %5752 = vperm.xlu0 %5751, %v5747
        %v5753 = vpop.permute.xlu0 %5752
        %v5754 = vlaneseq
        %v5755 = vshrl.u32 %v5754, 7
        %v5756 = vadd.s32 %v5755, 8
        %5757 = vset.pattern.permute.xlu0 %v5756
        %5758 = vperm.xlu0 %5757, %v5747
        %v5759 = vpop.permute.xlu0 %5758
        %v5760 = vperm.slane %v319, 7
        %v5761 = vlaneseq
        %v5762 = vshrl.u32 %v5761, 7
        %5764 = vset.pattern.permute.xlu0 %v5762
        %5765 = vperm.xlu0 %5764, %v5760
        %v5766 = vpop.permute.xlu0 %5765
        %v5767 = vlaneseq
        %v5768 = vshrl.u32 %v5767, 7
        %v5769 = vadd.s32 %v5768, 8
        %5770 = vset.pattern.permute.xlu0 %v5769
        %5771 = vperm.xlu0 %5770, %v5760
        %v5772 = vpop.permute.xlu0 %5771
        %v5773 = vperm.slane %v320, 0
        %v5774 = vlaneseq
        %v5775 = vshrl.u32 %v5774, 7
        %5777 = vset.pattern.permute.xlu0 %v5775
        %5778 = vperm.xlu0 %5777, %v5773
        %v5779 = vpop.permute.xlu0 %5778
        %v5780 = vlaneseq
        %v5781 = vshrl.u32 %v5780, 7
        %v5782 = vadd.s32 %v5781, 8
        %5783 = vset.pattern.permute.xlu0 %v5782
        %5784 = vperm.xlu0 %5783, %v5773
        %v5785 = vpop.permute.xlu0 %5784
        %v5786 = vperm.slane %v320, 1
        %v5787 = vlaneseq
        %v5788 = vshrl.u32 %v5787, 7
        %5790 = vset.pattern.permute.xlu0 %v5788
        %5791 = vperm.xlu0 %5790, %v5786
        %v5792 = vpop.permute.xlu0 %5791
        %v5793 = vlaneseq
        %v5794 = vshrl.u32 %v5793, 7
        %v5795 = vadd.s32 %v5794, 8
        %5796 = vset.pattern.permute.xlu0 %v5795
        %5797 = vperm.xlu0 %5796, %v5786
        %v5798 = vpop.permute.xlu0 %5797
        %v5799 = vperm.slane %v320, 2
        %v5800 = vlaneseq
        %v5801 = vshrl.u32 %v5800, 7
        %5803 = vset.pattern.permute.xlu0 %v5801
        %5804 = vperm.xlu0 %5803, %v5799
        %v5805 = vpop.permute.xlu0 %5804
        %v5806 = vlaneseq
        %v5807 = vshrl.u32 %v5806, 7
        %v5808 = vadd.s32 %v5807, 8
        %5809 = vset.pattern.permute.xlu0 %v5808
        %5810 = vperm.xlu0 %5809, %v5799
        %v5811 = vpop.permute.xlu0 %5810
        %v5812 = vperm.slane %v320, 3
        %v5813 = vlaneseq
        %v5814 = vshrl.u32 %v5813, 7
        %5816 = vset.pattern.permute.xlu0 %v5814
        %5817 = vperm.xlu0 %5816, %v5812
        %v5818 = vpop.permute.xlu0 %5817
        %v5819 = vlaneseq
        %v5820 = vshrl.u32 %v5819, 7
        %v5821 = vadd.s32 %v5820, 8
        %5822 = vset.pattern.permute.xlu0 %v5821
        %5823 = vperm.xlu0 %5822, %v5812
        %v5824 = vpop.permute.xlu0 %5823
        %v5825 = vperm.slane %v320, 4
        %v5826 = vlaneseq
        %v5827 = vshrl.u32 %v5826, 7
        %5829 = vset.pattern.permute.xlu0 %v5827
        %5830 = vperm.xlu0 %5829, %v5825
        %v5831 = vpop.permute.xlu0 %5830
        %v5832 = vlaneseq
        %v5833 = vshrl.u32 %v5832, 7
        %v5834 = vadd.s32 %v5833, 8
        %5835 = vset.pattern.permute.xlu0 %v5834
        %5836 = vperm.xlu0 %5835, %v5825
        %v5837 = vpop.permute.xlu0 %5836
        %v5838 = vperm.slane %v320, 5
        %v5839 = vlaneseq
        %v5840 = vshrl.u32 %v5839, 7
        %5842 = vset.pattern.permute.xlu0 %v5840
        %5843 = vperm.xlu0 %5842, %v5838
        %v5844 = vpop.permute.xlu0 %5843
        %v5845 = vlaneseq
        %v5846 = vshrl.u32 %v5845, 7
        %v5847 = vadd.s32 %v5846, 8
        %5848 = vset.pattern.permute.xlu0 %v5847
        %5849 = vperm.xlu0 %5848, %v5838
        %v5850 = vpop.permute.xlu0 %5849
        %v5851 = vperm.slane %v320, 6
        %v5852 = vlaneseq
        %v5853 = vshrl.u32 %v5852, 7
        %5855 = vset.pattern.permute.xlu0 %v5853
        %5856 = vperm.xlu0 %5855, %v5851
        %v5857 = vpop.permute.xlu0 %5856
        %v5858 = vlaneseq
        %v5859 = vshrl.u32 %v5858, 7
        %v5860 = vadd.s32 %v5859, 8
        %5861 = vset.pattern.permute.xlu0 %v5860
        %5862 = vperm.xlu0 %5861, %v5851
        %v5863 = vpop.permute.xlu0 %5862
        %v5864 = vperm.slane %v320, 7
        %v5865 = vlaneseq
        %v5866 = vshrl.u32 %v5865, 7
        %5868 = vset.pattern.permute.xlu0 %v5866
        %5869 = vperm.xlu0 %5868, %v5864
        %v5870 = vpop.permute.xlu0 %5869
        %v5871 = vlaneseq
        %v5872 = vshrl.u32 %v5871, 7
        %v5873 = vadd.s32 %v5872, 8
        %5874 = vset.pattern.permute.xlu0 %v5873
        %5875 = vperm.xlu0 %5874, %v5864
        %v5876 = vpop.permute.xlu0 %5875
        %v5877 = vperm.slane %v321, 0
        %v5878 = vlaneseq
        %v5879 = vshrl.u32 %v5878, 7
        %5881 = vset.pattern.permute.xlu0 %v5879
        %5882 = vperm.xlu0 %5881, %v5877
        %v5883 = vpop.permute.xlu0 %5882
        %v5884 = vlaneseq
        %v5885 = vshrl.u32 %v5884, 7
        %v5886 = vadd.s32 %v5885, 8
        %5887 = vset.pattern.permute.xlu0 %v5886
        %5888 = vperm.xlu0 %5887, %v5877
        %v5889 = vpop.permute.xlu0 %5888
        %v5890 = vperm.slane %v321, 1
        %v5891 = vlaneseq
        %v5892 = vshrl.u32 %v5891, 7
        %5894 = vset.pattern.permute.xlu0 %v5892
        %5895 = vperm.xlu0 %5894, %v5890
        %v5896 = vpop.permute.xlu0 %5895
        %v5897 = vlaneseq
        %v5898 = vshrl.u32 %v5897, 7
        %v5899 = vadd.s32 %v5898, 8
        %5900 = vset.pattern.permute.xlu0 %v5899
        %5901 = vperm.xlu0 %5900, %v5890
        %v5902 = vpop.permute.xlu0 %5901
        %v5903 = vperm.slane %v321, 2
        %v5904 = vlaneseq
        %v5905 = vshrl.u32 %v5904, 7
        %5907 = vset.pattern.permute.xlu0 %v5905
        %5908 = vperm.xlu0 %5907, %v5903
        %v5909 = vpop.permute.xlu0 %5908
        %v5910 = vlaneseq
        %v5911 = vshrl.u32 %v5910, 7
        %v5912 = vadd.s32 %v5911, 8
        %5913 = vset.pattern.permute.xlu0 %v5912
        %5914 = vperm.xlu0 %5913, %v5903
        %v5915 = vpop.permute.xlu0 %5914
        %v5916 = vperm.slane %v321, 3
        %v5917 = vlaneseq
        %v5918 = vshrl.u32 %v5917, 7
        %5920 = vset.pattern.permute.xlu0 %v5918
        %5921 = vperm.xlu0 %5920, %v5916
        %v5922 = vpop.permute.xlu0 %5921
        %v5923 = vlaneseq
        %v5924 = vshrl.u32 %v5923, 7
        %v5925 = vadd.s32 %v5924, 8
        %5926 = vset.pattern.permute.xlu0 %v5925
        %5927 = vperm.xlu0 %5926, %v5916
        %v5928 = vpop.permute.xlu0 %5927
        %v5929 = vperm.slane %v321, 4
        %v5930 = vlaneseq
        %v5931 = vshrl.u32 %v5930, 7
        %5933 = vset.pattern.permute.xlu0 %v5931
        %5934 = vperm.xlu0 %5933, %v5929
        %v5935 = vpop.permute.xlu0 %5934
        %v5936 = vlaneseq
        %v5937 = vshrl.u32 %v5936, 7
        %v5938 = vadd.s32 %v5937, 8
        %5939 = vset.pattern.permute.xlu0 %v5938
        %5940 = vperm.xlu0 %5939, %v5929
        %v5941 = vpop.permute.xlu0 %5940
        %v5942 = vperm.slane %v321, 5
        %v5943 = vlaneseq
        %v5944 = vshrl.u32 %v5943, 7
        %5946 = vset.pattern.permute.xlu0 %v5944
        %5947 = vperm.xlu0 %5946, %v5942
        %v5948 = vpop.permute.xlu0 %5947
        %v5949 = vlaneseq
        %v5950 = vshrl.u32 %v5949, 7
        %v5951 = vadd.s32 %v5950, 8
        %5952 = vset.pattern.permute.xlu0 %v5951
        %5953 = vperm.xlu0 %5952, %v5942
        %v5954 = vpop.permute.xlu0 %5953
        %v5955 = vperm.slane %v321, 6
        %v5956 = vlaneseq
        %v5957 = vshrl.u32 %v5956, 7
        %5959 = vset.pattern.permute.xlu0 %v5957
        %5960 = vperm.xlu0 %5959, %v5955
        %v5961 = vpop.permute.xlu0 %5960
        %v5962 = vlaneseq
        %v5963 = vshrl.u32 %v5962, 7
        %v5964 = vadd.s32 %v5963, 8
        %5965 = vset.pattern.permute.xlu0 %v5964
        %5966 = vperm.xlu0 %5965, %v5955
        %v5967 = vpop.permute.xlu0 %5966
        %v5968 = vperm.slane %v321, 7
        %v5969 = vlaneseq
        %v5970 = vshrl.u32 %v5969, 7
        %5972 = vset.pattern.permute.xlu0 %v5970
        %5973 = vperm.xlu0 %5972, %v5968
        %v5974 = vpop.permute.xlu0 %5973
        %v5975 = vlaneseq
        %v5976 = vshrl.u32 %v5975, 7
        %v5977 = vadd.s32 %v5976, 8
        %5978 = vset.pattern.permute.xlu0 %v5977
        %5979 = vperm.xlu0 %5978, %v5968
        %v5980 = vpop.permute.xlu0 %5979
        %v5981 = vperm.slane %v322, 0
        %v5982 = vlaneseq
        %v5983 = vshrl.u32 %v5982, 7
        %5985 = vset.pattern.permute.xlu0 %v5983
        %5986 = vperm.xlu0 %5985, %v5981
        %v5987 = vpop.permute.xlu0 %5986
        %v5988 = vlaneseq
        %v5989 = vshrl.u32 %v5988, 7
        %v5990 = vadd.s32 %v5989, 8
        %5991 = vset.pattern.permute.xlu0 %v5990
        %5992 = vperm.xlu0 %5991, %v5981
        %v5993 = vpop.permute.xlu0 %5992
        %v5994 = vperm.slane %v322, 1
        %v5995 = vlaneseq
        %v5996 = vshrl.u32 %v5995, 7
        %5998 = vset.pattern.permute.xlu0 %v5996
        %5999 = vperm.xlu0 %5998, %v5994
        %v6000 = vpop.permute.xlu0 %5999
        %v6001 = vlaneseq
        %v6002 = vshrl.u32 %v6001, 7
        %v6003 = vadd.s32 %v6002, 8
        %6004 = vset.pattern.permute.xlu0 %v6003
        %6005 = vperm.xlu0 %6004, %v5994
        %v6006 = vpop.permute.xlu0 %6005
        %v6007 = vperm.slane %v322, 2
        %v6008 = vlaneseq
        %v6009 = vshrl.u32 %v6008, 7
        %6011 = vset.pattern.permute.xlu0 %v6009
        %6012 = vperm.xlu0 %6011, %v6007
        %v6013 = vpop.permute.xlu0 %6012
        %v6014 = vlaneseq
        %v6015 = vshrl.u32 %v6014, 7
        %v6016 = vadd.s32 %v6015, 8
        %6017 = vset.pattern.permute.xlu0 %v6016
        %6018 = vperm.xlu0 %6017, %v6007
        %v6019 = vpop.permute.xlu0 %6018
        %v6020 = vperm.slane %v322, 3
        %v6021 = vlaneseq
        %v6022 = vshrl.u32 %v6021, 7
        %6024 = vset.pattern.permute.xlu0 %v6022
        %6025 = vperm.xlu0 %6024, %v6020
        %v6026 = vpop.permute.xlu0 %6025
        %v6027 = vlaneseq
        %v6028 = vshrl.u32 %v6027, 7
        %v6029 = vadd.s32 %v6028, 8
        %6030 = vset.pattern.permute.xlu0 %v6029
        %6031 = vperm.xlu0 %6030, %v6020
        %v6032 = vpop.permute.xlu0 %6031
        %v6033 = vperm.slane %v322, 4
        %v6034 = vlaneseq
        %v6035 = vshrl.u32 %v6034, 7
        %6037 = vset.pattern.permute.xlu0 %v6035
        %6038 = vperm.xlu0 %6037, %v6033
        %v6039 = vpop.permute.xlu0 %6038
        %v6040 = vlaneseq
        %v6041 = vshrl.u32 %v6040, 7
        %v6042 = vadd.s32 %v6041, 8
        %6043 = vset.pattern.permute.xlu0 %v6042
        %6044 = vperm.xlu0 %6043, %v6033
        %v6045 = vpop.permute.xlu0 %6044
        %v6046 = vperm.slane %v322, 5
        %v6047 = vlaneseq
        %v6048 = vshrl.u32 %v6047, 7
        %6050 = vset.pattern.permute.xlu0 %v6048
        %6051 = vperm.xlu0 %6050, %v6046
        %v6052 = vpop.permute.xlu0 %6051
        %v6053 = vlaneseq
        %v6054 = vshrl.u32 %v6053, 7
        %v6055 = vadd.s32 %v6054, 8
        %6056 = vset.pattern.permute.xlu0 %v6055
        %6057 = vperm.xlu0 %6056, %v6046
        %v6058 = vpop.permute.xlu0 %6057
        %v6059 = vperm.slane %v322, 6
        %v6060 = vlaneseq
        %v6061 = vshrl.u32 %v6060, 7
        %6063 = vset.pattern.permute.xlu0 %v6061
        %6064 = vperm.xlu0 %6063, %v6059
        %v6065 = vpop.permute.xlu0 %6064
        %v6066 = vlaneseq
        %v6067 = vshrl.u32 %v6066, 7
        %v6068 = vadd.s32 %v6067, 8
        %6069 = vset.pattern.permute.xlu0 %v6068
        %6070 = vperm.xlu0 %6069, %v6059
        %v6071 = vpop.permute.xlu0 %6070
        %v6072 = vperm.slane %v322, 7
        %v6073 = vlaneseq
        %v6074 = vshrl.u32 %v6073, 7
        %6076 = vset.pattern.permute.xlu0 %v6074
        %6077 = vperm.xlu0 %6076, %v6072
        %v6078 = vpop.permute.xlu0 %6077
        %v6079 = vlaneseq
        %v6080 = vshrl.u32 %v6079, 7
        %v6081 = vadd.s32 %v6080, 8
        %6082 = vset.pattern.permute.xlu0 %v6081
        %6083 = vperm.xlu0 %6082, %v6072
        %v6084 = vpop.permute.xlu0 %6083
        %v6085 = vperm.slane %v323, 0
        %v6086 = vlaneseq
        %v6087 = vshrl.u32 %v6086, 7
        %6089 = vset.pattern.permute.xlu0 %v6087
        %6090 = vperm.xlu0 %6089, %v6085
        %v6091 = vpop.permute.xlu0 %6090
        %v6092 = vlaneseq
        %v6093 = vshrl.u32 %v6092, 7
        %v6094 = vadd.s32 %v6093, 8
        %6095 = vset.pattern.permute.xlu0 %v6094
        %6096 = vperm.xlu0 %6095, %v6085
        %v6097 = vpop.permute.xlu0 %6096
        %v6098 = vperm.slane %v323, 1
        %v6099 = vlaneseq
        %v6100 = vshrl.u32 %v6099, 7
        %6102 = vset.pattern.permute.xlu0 %v6100
        %6103 = vperm.xlu0 %6102, %v6098
        %v6104 = vpop.permute.xlu0 %6103
        %v6105 = vlaneseq
        %v6106 = vshrl.u32 %v6105, 7
        %v6107 = vadd.s32 %v6106, 8
        %6108 = vset.pattern.permute.xlu0 %v6107
        %6109 = vperm.xlu0 %6108, %v6098
        %v6110 = vpop.permute.xlu0 %6109
        %v6111 = vperm.slane %v323, 2
        %v6112 = vlaneseq
        %v6113 = vshrl.u32 %v6112, 7
        %6115 = vset.pattern.permute.xlu0 %v6113
        %6116 = vperm.xlu0 %6115, %v6111
        %v6117 = vpop.permute.xlu0 %6116
        %v6118 = vlaneseq
        %v6119 = vshrl.u32 %v6118, 7
        %v6120 = vadd.s32 %v6119, 8
        %6121 = vset.pattern.permute.xlu0 %v6120
        %6122 = vperm.xlu0 %6121, %v6111
        %v6123 = vpop.permute.xlu0 %6122
        %v6124 = vperm.slane %v323, 3
        %v6125 = vlaneseq
        %v6126 = vshrl.u32 %v6125, 7
        %6128 = vset.pattern.permute.xlu0 %v6126
        %6129 = vperm.xlu0 %6128, %v6124
        %v6130 = vpop.permute.xlu0 %6129
        %v6131 = vlaneseq
        %v6132 = vshrl.u32 %v6131, 7
        %v6133 = vadd.s32 %v6132, 8
        %6134 = vset.pattern.permute.xlu0 %v6133
        %6135 = vperm.xlu0 %6134, %v6124
        %v6136 = vpop.permute.xlu0 %6135
        %v6137 = vperm.slane %v323, 4
        %v6138 = vlaneseq
        %v6139 = vshrl.u32 %v6138, 7
        %6141 = vset.pattern.permute.xlu0 %v6139
        %6142 = vperm.xlu0 %6141, %v6137
        %v6143 = vpop.permute.xlu0 %6142
        %v6144 = vlaneseq
        %v6145 = vshrl.u32 %v6144, 7
        %v6146 = vadd.s32 %v6145, 8
        %6147 = vset.pattern.permute.xlu0 %v6146
        %6148 = vperm.xlu0 %6147, %v6137
        %v6149 = vpop.permute.xlu0 %6148
        %v6150 = vperm.slane %v323, 5
        %v6151 = vlaneseq
        %v6152 = vshrl.u32 %v6151, 7
        %6154 = vset.pattern.permute.xlu0 %v6152
        %6155 = vperm.xlu0 %6154, %v6150
        %v6156 = vpop.permute.xlu0 %6155
        %v6157 = vlaneseq
        %v6158 = vshrl.u32 %v6157, 7
        %v6159 = vadd.s32 %v6158, 8
        %6160 = vset.pattern.permute.xlu0 %v6159
        %6161 = vperm.xlu0 %6160, %v6150
        %v6162 = vpop.permute.xlu0 %6161
        %v6163 = vperm.slane %v323, 6
        %v6164 = vlaneseq
        %v6165 = vshrl.u32 %v6164, 7
        %6167 = vset.pattern.permute.xlu0 %v6165
        %6168 = vperm.xlu0 %6167, %v6163
        %v6169 = vpop.permute.xlu0 %6168
        %v6170 = vlaneseq
        %v6171 = vshrl.u32 %v6170, 7
        %v6172 = vadd.s32 %v6171, 8
        %6173 = vset.pattern.permute.xlu0 %v6172
        %6174 = vperm.xlu0 %6173, %v6163
        %v6175 = vpop.permute.xlu0 %6174
        %v6176 = vperm.slane %v323, 7
        %v6177 = vlaneseq
        %v6178 = vshrl.u32 %v6177, 7
        %6180 = vset.pattern.permute.xlu0 %v6178
        %6181 = vperm.xlu0 %6180, %v6176
        %v6182 = vpop.permute.xlu0 %6181
        %v6183 = vlaneseq
        %v6184 = vshrl.u32 %v6183, 7
        %v6185 = vadd.s32 %v6184, 8
        %6186 = vset.pattern.permute.xlu0 %v6185
        %6187 = vperm.xlu0 %6186, %v6176
        %v6188 = vpop.permute.xlu0 %6187
        %v6189 = vsel %vm1988, %v4531, %v5363
        %v6190 = vsel %vm1988, %v4537, %v5369
        %v6191 = vsel %vm1988, %v4544, %v5376
        %v6192 = vsel %vm1988, %v4550, %v5382
        %v6193 = vsel %vm1988, %v4557, %v5389
        %v6194 = vsel %vm1988, %v4563, %v5395
        %v6195 = vsel %vm1988, %v4570, %v5402
        %v6196 = vsel %vm1988, %v4576, %v5408
        %v6197 = vsel %vm1988, %v4583, %v5415
        %v6198 = vsel %vm1988, %v4589, %v5421
        %v6199 = vsel %vm1988, %v4596, %v5428
        %v6200 = vsel %vm1988, %v4602, %v5434
        %v6201 = vsel %vm1988, %v4609, %v5441
        %v6202 = vsel %vm1988, %v4615, %v5447
        %v6203 = vsel %vm1988, %v4622, %v5454
        %v6204 = vsel %vm1988, %v4628, %v5460
        %v6205 = vsel %vm1988, %v4635, %v5467
        %v6206 = vsel %vm1988, %v4641, %v5473
        %v6207 = vsel %vm1988, %v4648, %v5480
        %v6208 = vsel %vm1988, %v4654, %v5486
        %v6209 = vsel %vm1988, %v4661, %v5493
        %v6210 = vsel %vm1988, %v4667, %v5499
        %v6211 = vsel %vm1988, %v4674, %v5506
        %v6212 = vsel %vm1988, %v4680, %v5512
        %v6213 = vsel %vm1988, %v4687, %v5519
        %v6214 = vsel %vm1988, %v4693, %v5525
        %v6215 = vsel %vm1988, %v4700, %v5532
        %v6216 = vsel %vm1988, %v4706, %v5538
        %v6217 = vsel %vm1988, %v4713, %v5545
        %v6218 = vsel %vm1988, %v4719, %v5551
        %v6219 = vsel %vm1988, %v4726, %v5558
        %v6220 = vsel %vm1988, %v4732, %v5564
        %v6221 = vsel %vm1988, %v4739, %v5571
        %v6222 = vsel %vm1988, %v4745, %v5577
        %v6223 = vsel %vm1988, %v4752, %v5584
        %v6224 = vsel %vm1988, %v4758, %v5590
        %v6225 = vsel %vm1988, %v4765, %v5597
        %v6226 = vsel %vm1988, %v4771, %v5603
        %v6227 = vsel %vm1988, %v4778, %v5610
        %v6228 = vsel %vm1988, %v4784, %v5616
        %v6229 = vsel %vm1988, %v4791, %v5623
        %v6230 = vsel %vm1988, %v4797, %v5629
        %v6231 = vsel %vm1988, %v4804, %v5636
        %v6232 = vsel %vm1988, %v4810, %v5642
        %v6233 = vsel %vm1988, %v4817, %v5649
        %v6234 = vsel %vm1988, %v4823, %v5655
        %v6235 = vsel %vm1988, %v4830, %v5662
        %v6236 = vsel %vm1988, %v4836, %v5668
        %v6237 = vsel %vm1988, %v4843, %v5675
        %v6238 = vsel %vm1988, %v4849, %v5681
        %v6239 = vsel %vm1988, %v4856, %v5688
        %v6240 = vsel %vm1988, %v4862, %v5694
        %v6241 = vsel %vm1988, %v4869, %v5701
        %v6242 = vsel %vm1988, %v4875, %v5707
        %v6243 = vsel %vm1988, %v4882, %v5714
        %v6244 = vsel %vm1988, %v4888, %v5720
        %v6245 = vsel %vm1988, %v4895, %v5727
        %v6246 = vsel %vm1988, %v4901, %v5733
        %v6247 = vsel %vm1988, %v4908, %v5740
        %v6248 = vsel %vm1988, %v4914, %v5746
        %v6249 = vsel %vm1988, %v4921, %v5753
        %v6250 = vsel %vm1988, %v4927, %v5759
        %v6251 = vsel %vm1988, %v4934, %v5766
        %v6252 = vsel %vm1988, %v4940, %v5772
        %v6253 = vsel %vm1988, %v4947, %v5779
        %v6254 = vsel %vm1988, %v4953, %v5785
        %v6255 = vsel %vm1988, %v4960, %v5792
        %v6256 = vsel %vm1988, %v4966, %v5798
        %v6257 = vsel %vm1988, %v4973, %v5805
        %v6258 = vsel %vm1988, %v4979, %v5811
        %v6259 = vsel %vm1988, %v4986, %v5818
        %v6260 = vsel %vm1988, %v4992, %v5824
        %v6261 = vsel %vm1988, %v4999, %v5831
        %v6262 = vsel %vm1988, %v5005, %v5837
        %v6263 = vsel %vm1988, %v5012, %v5844
        %v6264 = vsel %vm1988, %v5018, %v5850
        %v6265 = vsel %vm1988, %v5025, %v5857
        %v6266 = vsel %vm1988, %v5031, %v5863
        %v6267 = vsel %vm1988, %v5038, %v5870
        %v6268 = vsel %vm1988, %v5044, %v5876
        %v6269 = vsel %vm1988, %v5051, %v5883
        %v6270 = vsel %vm1988, %v5057, %v5889
        %v6271 = vsel %vm1988, %v5064, %v5896
        %v6272 = vsel %vm1988, %v5070, %v5902
        %v6273 = vsel %vm1988, %v5077, %v5909
        %v6274 = vsel %vm1988, %v5083, %v5915
        %v6275 = vsel %vm1988, %v5090, %v5922
        %v6276 = vsel %vm1988, %v5096, %v5928
        %v6277 = vsel %vm1988, %v5103, %v5935
        %v6278 = vsel %vm1988, %v5109, %v5941
        %v6279 = vsel %vm1988, %v5116, %v5948
        %v6280 = vsel %vm1988, %v5122, %v5954
        %v6281 = vsel %vm1988, %v5129, %v5961
        %v6282 = vsel %vm1988, %v5135, %v5967
        %v6283 = vsel %vm1988, %v5142, %v5974
        %v6284 = vsel %vm1988, %v5148, %v5980
        %v6285 = vsel %vm1988, %v5155, %v5987
        %v6286 = vsel %vm1988, %v5161, %v5993
        %v6287 = vsel %vm1988, %v5168, %v6000
        %v6288 = vsel %vm1988, %v5174, %v6006
        %v6289 = vsel %vm1988, %v5181, %v6013
        %v6290 = vsel %vm1988, %v5187, %v6019
        %v6291 = vsel %vm1988, %v5194, %v6026
        %v6292 = vsel %vm1988, %v5200, %v6032
        %v6293 = vsel %vm1988, %v5207, %v6039
        %v6294 = vsel %vm1988, %v5213, %v6045
        %v6295 = vsel %vm1988, %v5220, %v6052
        %v6296 = vsel %vm1988, %v5226, %v6058
        %v6297 = vsel %vm1988, %v5233, %v6065
        %v6298 = vsel %vm1988, %v5239, %v6071
        %v6299 = vsel %vm1988, %v5246, %v6078
        %v6300 = vsel %vm1988, %v5252, %v6084
        %v6301 = vsel %vm1988, %v5259, %v6091
        %v6302 = vsel %vm1988, %v5265, %v6097
        %v6303 = vsel %vm1988, %v5272, %v6104
        %v6304 = vsel %vm1988, %v5278, %v6110
        %v6305 = vsel %vm1988, %v5285, %v6117
        %v6306 = vsel %vm1988, %v5291, %v6123
        %v6307 = vsel %vm1988, %v5298, %v6130
        %v6308 = vsel %vm1988, %v5304, %v6136
        %v6309 = vsel %vm1988, %v5311, %v6143
        %v6310 = vsel %vm1988, %v5317, %v6149
        %v6311 = vsel %vm1988, %v5324, %v6156
        %v6312 = vsel %vm1988, %v5330, %v6162
        %v6313 = vsel %vm1988, %v5337, %v6169
        %v6314 = vsel %vm1988, %v5343, %v6175
        %v6315 = vsel %vm1988, %v5350, %v6182
        %v6316 = vsel %vm1988, %v5356, %v6188
        %v6317 = vrot.slane %v6193, 4
        %v6318 = vsel %vm2118, %v6317, %v6189
        %v6319 = vrot.slane %v6189, 4
        %v6320 = vsel %vm2118, %v6193, %v6319
        %v6322 = vunpack.c.l.s4 1983009808
        %v6323 = vunpack.c.0.s8 %v6322
        %v6324 = vperm.slane %v6318, %v6323
        %v6326 = vunpack.c.l.s4 1983009808
        %v6327 = vunpack.c.0.s8 %v6326
        %v6328 = vperm.slane %v6320, %v6327
        %v6329 = vrot.slane %v6195, 4
        %v6330 = vsel %vm2118, %v6329, %v6191
        %v6331 = vrot.slane %v6191, 4
        %v6332 = vsel %vm2118, %v6195, %v6331
        %v6334 = vunpack.c.l.s4 1983009808
        %v6335 = vunpack.c.0.s8 %v6334
        %v6336 = vperm.slane %v6330, %v6335
        %v6338 = vunpack.c.l.s4 1983009808
        %v6339 = vunpack.c.0.s8 %v6338
        %v6340 = vperm.slane %v6332, %v6339
        %v6341 = vrot.slane %v6201, 4
        %v6342 = vsel %vm2118, %v6341, %v6197
        %v6343 = vrot.slane %v6197, 4
        %v6344 = vsel %vm2118, %v6201, %v6343
        %v6346 = vunpack.c.l.s4 1983009808
        %v6347 = vunpack.c.0.s8 %v6346
        %v6348 = vperm.slane %v6342, %v6347
        %v6350 = vunpack.c.l.s4 1983009808
        %v6351 = vunpack.c.0.s8 %v6350
        %v6352 = vperm.slane %v6344, %v6351
        %v6353 = vrot.slane %v6203, 4
        %v6354 = vsel %vm2118, %v6353, %v6199
        %v6355 = vrot.slane %v6199, 4
        %v6356 = vsel %vm2118, %v6203, %v6355
        %v6358 = vunpack.c.l.s4 1983009808
        %v6359 = vunpack.c.0.s8 %v6358
        %v6360 = vperm.slane %v6354, %v6359
        %v6362 = vunpack.c.l.s4 1983009808
        %v6363 = vunpack.c.0.s8 %v6362
        %v6364 = vperm.slane %v6356, %v6363
        %v6365 = vrot.slane %v6336, 4
        %v6366 = vsel %vm2118, %v6365, %v6324
        %v6367 = vrot.slane %v6324, 4
        %v6368 = vsel %vm2118, %v6336, %v6367
        %v6370 = vunpack.c.l.s4 1934713408
        %v6371 = vunpack.c.0.s8 %v6370
        %v6372 = vperm.slane %v6366, %v6371
        %v6374 = vunpack.c.l.s4 1934713408
        %v6375 = vunpack.c.0.s8 %v6374
        %v6376 = vperm.slane %v6368, %v6375
        %v6377 = vrot.slane %v6340, 4
        %v6378 = vsel %vm2118, %v6377, %v6328
        %v6379 = vrot.slane %v6328, 4
        %v6380 = vsel %vm2118, %v6340, %v6379
        %v6382 = vunpack.c.l.s4 1934713408
        %v6383 = vunpack.c.0.s8 %v6382
        %v6384 = vperm.slane %v6378, %v6383
        %v6386 = vunpack.c.l.s4 1934713408
        %v6387 = vunpack.c.0.s8 %v6386
        %v6388 = vperm.slane %v6380, %v6387
        %v6389 = vrot.slane %v6360, 4
        %v6390 = vsel %vm2118, %v6389, %v6348
        %v6391 = vrot.slane %v6348, 4
        %v6392 = vsel %vm2118, %v6360, %v6391
        %v6394 = vunpack.c.l.s4 1934713408
        %v6395 = vunpack.c.0.s8 %v6394
        %v6396 = vperm.slane %v6390, %v6395
        %v6398 = vunpack.c.l.s4 1934713408
        %v6399 = vunpack.c.0.s8 %v6398
        %v6400 = vperm.slane %v6392, %v6399
        %v6401 = vrot.slane %v6364, 4
        %v6402 = vsel %vm2118, %v6401, %v6352
        %v6403 = vrot.slane %v6352, 4
        %v6404 = vsel %vm2118, %v6364, %v6403
        %v6406 = vunpack.c.l.s4 1934713408
        %v6407 = vunpack.c.0.s8 %v6406
        %v6408 = vperm.slane %v6402, %v6407
        %v6410 = vunpack.c.l.s4 1934713408
        %v6411 = vunpack.c.0.s8 %v6410
        %v6412 = vperm.slane %v6404, %v6411
        %v6413 = vrot.slane %v6396, 4
        %v6414 = vsel %vm2118, %v6413, %v6372
        %v6415 = vrot.slane %v6372, 4
        %v6416 = vsel %vm2118, %v6396, %v6415
        %v6417 = vrot.slane %v6400, 4
        %v6418 = vsel %vm2118, %v6417, %v6376
        %v6419 = vrot.slane %v6376, 4
        %v6420 = vsel %vm2118, %v6400, %v6419
        %v6421 = vrot.slane %v6408, 4
        %v6422 = vsel %vm2118, %v6421, %v6384
        %v6423 = vrot.slane %v6384, 4
        %v6424 = vsel %vm2118, %v6408, %v6423
        %v6425 = vrot.slane %v6412, 4
        %v6426 = vsel %vm2118, %v6425, %v6388
        %v6427 = vrot.slane %v6388, 4
        %v6428 = vsel %vm2118, %v6412, %v6427
        %v6429 = vrot.slane %v6209, 4
        %v6430 = vsel %vm2118, %v6429, %v6205
        %v6431 = vrot.slane %v6205, 4
        %v6432 = vsel %vm2118, %v6209, %v6431
        %v6434 = vunpack.c.l.s4 1983009808
        %v6435 = vunpack.c.0.s8 %v6434
        %v6436 = vperm.slane %v6430, %v6435
        %v6438 = vunpack.c.l.s4 1983009808
        %v6439 = vunpack.c.0.s8 %v6438
        %v6440 = vperm.slane %v6432, %v6439
        %v6441 = vrot.slane %v6211, 4
        %v6442 = vsel %vm2118, %v6441, %v6207
        %v6443 = vrot.slane %v6207, 4
        %v6444 = vsel %vm2118, %v6211, %v6443
        %v6446 = vunpack.c.l.s4 1983009808
        %v6447 = vunpack.c.0.s8 %v6446
        %v6448 = vperm.slane %v6442, %v6447
        %v6450 = vunpack.c.l.s4 1983009808
        %v6451 = vunpack.c.0.s8 %v6450
        %v6452 = vperm.slane %v6444, %v6451
        %v6453 = vrot.slane %v6217, 4
        %v6454 = vsel %vm2118, %v6453, %v6213
        %v6455 = vrot.slane %v6213, 4
        %v6456 = vsel %vm2118, %v6217, %v6455
        %v6458 = vunpack.c.l.s4 1983009808
        %v6459 = vunpack.c.0.s8 %v6458
        %v6460 = vperm.slane %v6454, %v6459
        %v6462 = vunpack.c.l.s4 1983009808
        %v6463 = vunpack.c.0.s8 %v6462
        %v6464 = vperm.slane %v6456, %v6463
        %v6465 = vrot.slane %v6219, 4
        %v6466 = vsel %vm2118, %v6465, %v6215
        %v6467 = vrot.slane %v6215, 4
        %v6468 = vsel %vm2118, %v6219, %v6467
        %v6470 = vunpack.c.l.s4 1983009808
        %v6471 = vunpack.c.0.s8 %v6470
        %v6472 = vperm.slane %v6466, %v6471
        %v6474 = vunpack.c.l.s4 1983009808
        %v6475 = vunpack.c.0.s8 %v6474
        %v6476 = vperm.slane %v6468, %v6475
        %v6477 = vrot.slane %v6448, 4
        %v6478 = vsel %vm2118, %v6477, %v6436
        %v6479 = vrot.slane %v6436, 4
        %v6480 = vsel %vm2118, %v6448, %v6479
        %v6482 = vunpack.c.l.s4 1934713408
        %v6483 = vunpack.c.0.s8 %v6482
        %v6484 = vperm.slane %v6478, %v6483
        %v6486 = vunpack.c.l.s4 1934713408
        %v6487 = vunpack.c.0.s8 %v6486
        %v6488 = vperm.slane %v6480, %v6487
        %v6489 = vrot.slane %v6452, 4
        %v6490 = vsel %vm2118, %v6489, %v6440
        %v6491 = vrot.slane %v6440, 4
        %v6492 = vsel %vm2118, %v6452, %v6491
        %v6494 = vunpack.c.l.s4 1934713408
        %v6495 = vunpack.c.0.s8 %v6494
        %v6496 = vperm.slane %v6490, %v6495
        %v6498 = vunpack.c.l.s4 1934713408
        %v6499 = vunpack.c.0.s8 %v6498
        %v6500 = vperm.slane %v6492, %v6499
        %v6501 = vrot.slane %v6472, 4
        %v6502 = vsel %vm2118, %v6501, %v6460
        %v6503 = vrot.slane %v6460, 4
        %v6504 = vsel %vm2118, %v6472, %v6503
        %v6506 = vunpack.c.l.s4 1934713408
        %v6507 = vunpack.c.0.s8 %v6506
        %v6508 = vperm.slane %v6502, %v6507
        %v6510 = vunpack.c.l.s4 1934713408
        %v6511 = vunpack.c.0.s8 %v6510
        %v6512 = vperm.slane %v6504, %v6511
        %v6513 = vrot.slane %v6476, 4
        %v6514 = vsel %vm2118, %v6513, %v6464
        %v6515 = vrot.slane %v6464, 4
        %v6516 = vsel %vm2118, %v6476, %v6515
        %v6518 = vunpack.c.l.s4 1934713408
        %v6519 = vunpack.c.0.s8 %v6518
        %v6520 = vperm.slane %v6514, %v6519
        %v6522 = vunpack.c.l.s4 1934713408
        %v6523 = vunpack.c.0.s8 %v6522
        %v6524 = vperm.slane %v6516, %v6523
        %v6525 = vrot.slane %v6508, 4
        %v6526 = vsel %vm2118, %v6525, %v6484
        %v6527 = vrot.slane %v6484, 4
        %v6528 = vsel %vm2118, %v6508, %v6527
        %v6529 = vrot.slane %v6512, 4
        %v6530 = vsel %vm2118, %v6529, %v6488
        %v6531 = vrot.slane %v6488, 4
        %v6532 = vsel %vm2118, %v6512, %v6531
        %v6533 = vrot.slane %v6520, 4
        %v6534 = vsel %vm2118, %v6533, %v6496
        %v6535 = vrot.slane %v6496, 4
        %v6536 = vsel %vm2118, %v6520, %v6535
        %v6537 = vrot.slane %v6524, 4
        %v6538 = vsel %vm2118, %v6537, %v6500
        %v6539 = vrot.slane %v6500, 4
        %v6540 = vsel %vm2118, %v6524, %v6539
        %v6541 = vrot.slane %v6194, 4
        %v6542 = vsel %vm2118, %v6541, %v6190
        %v6543 = vrot.slane %v6190, 4
        %v6544 = vsel %vm2118, %v6194, %v6543
        %v6546 = vunpack.c.l.s4 1983009808
        %v6547 = vunpack.c.0.s8 %v6546
        %v6548 = vperm.slane %v6542, %v6547
        %v6550 = vunpack.c.l.s4 1983009808
        %v6551 = vunpack.c.0.s8 %v6550
        %v6552 = vperm.slane %v6544, %v6551
        %v6553 = vrot.slane %v6196, 4
        %v6554 = vsel %vm2118, %v6553, %v6192
        %v6555 = vrot.slane %v6192, 4
        %v6556 = vsel %vm2118, %v6196, %v6555
        %v6558 = vunpack.c.l.s4 1983009808
        %v6559 = vunpack.c.0.s8 %v6558
        %v6560 = vperm.slane %v6554, %v6559
        %v6562 = vunpack.c.l.s4 1983009808
        %v6563 = vunpack.c.0.s8 %v6562
        %v6564 = vperm.slane %v6556, %v6563
        %v6565 = vrot.slane %v6202, 4
        %v6566 = vsel %vm2118, %v6565, %v6198
        %v6567 = vrot.slane %v6198, 4
        %v6568 = vsel %vm2118, %v6202, %v6567
        %v6570 = vunpack.c.l.s4 1983009808
        %v6571 = vunpack.c.0.s8 %v6570
        %v6572 = vperm.slane %v6566, %v6571
        %v6574 = vunpack.c.l.s4 1983009808
        %v6575 = vunpack.c.0.s8 %v6574
        %v6576 = vperm.slane %v6568, %v6575
        %v6577 = vrot.slane %v6204, 4
        %v6578 = vsel %vm2118, %v6577, %v6200
        %v6579 = vrot.slane %v6200, 4
        %v6580 = vsel %vm2118, %v6204, %v6579
        %v6582 = vunpack.c.l.s4 1983009808
        %v6583 = vunpack.c.0.s8 %v6582
        %v6584 = vperm.slane %v6578, %v6583
        %v6586 = vunpack.c.l.s4 1983009808
        %v6587 = vunpack.c.0.s8 %v6586
        %v6588 = vperm.slane %v6580, %v6587
        %v6589 = vrot.slane %v6560, 4
        %v6590 = vsel %vm2118, %v6589, %v6548
        %v6591 = vrot.slane %v6548, 4
        %v6592 = vsel %vm2118, %v6560, %v6591
        %v6594 = vunpack.c.l.s4 1934713408
        %v6595 = vunpack.c.0.s8 %v6594
        %v6596 = vperm.slane %v6590, %v6595
        %v6598 = vunpack.c.l.s4 1934713408
        %v6599 = vunpack.c.0.s8 %v6598
        %v6600 = vperm.slane %v6592, %v6599
        %v6601 = vrot.slane %v6564, 4
        %v6602 = vsel %vm2118, %v6601, %v6552
        %v6603 = vrot.slane %v6552, 4
        %v6604 = vsel %vm2118, %v6564, %v6603
        %v6606 = vunpack.c.l.s4 1934713408
        %v6607 = vunpack.c.0.s8 %v6606
        %v6608 = vperm.slane %v6602, %v6607
        %v6610 = vunpack.c.l.s4 1934713408
        %v6611 = vunpack.c.0.s8 %v6610
        %v6612 = vperm.slane %v6604, %v6611
        %v6613 = vrot.slane %v6584, 4
        %v6614 = vsel %vm2118, %v6613, %v6572
        %v6615 = vrot.slane %v6572, 4
        %v6616 = vsel %vm2118, %v6584, %v6615
        %v6618 = vunpack.c.l.s4 1934713408
        %v6619 = vunpack.c.0.s8 %v6618
        %v6620 = vperm.slane %v6614, %v6619
        %v6622 = vunpack.c.l.s4 1934713408
        %v6623 = vunpack.c.0.s8 %v6622
        %v6624 = vperm.slane %v6616, %v6623
        %v6625 = vrot.slane %v6588, 4
        %v6626 = vsel %vm2118, %v6625, %v6576
        %v6627 = vrot.slane %v6576, 4
        %v6628 = vsel %vm2118, %v6588, %v6627
        %v6630 = vunpack.c.l.s4 1934713408
        %v6631 = vunpack.c.0.s8 %v6630
        %v6632 = vperm.slane %v6626, %v6631
        %v6634 = vunpack.c.l.s4 1934713408
        %v6635 = vunpack.c.0.s8 %v6634
        %v6636 = vperm.slane %v6628, %v6635
        %v6637 = vrot.slane %v6620, 4
        %v6638 = vsel %vm2118, %v6637, %v6596
        %v6639 = vrot.slane %v6596, 4
        %v6640 = vsel %vm2118, %v6620, %v6639
        %v6641 = vrot.slane %v6624, 4
        %v6642 = vsel %vm2118, %v6641, %v6600
        %v6643 = vrot.slane %v6600, 4
        %v6644 = vsel %vm2118, %v6624, %v6643
        %v6645 = vrot.slane %v6632, 4
        %v6646 = vsel %vm2118, %v6645, %v6608
        %v6647 = vrot.slane %v6608, 4
        %v6648 = vsel %vm2118, %v6632, %v6647
        %v6649 = vrot.slane %v6636, 4
        %v6650 = vsel %vm2118, %v6649, %v6612
        %v6651 = vrot.slane %v6612, 4
        %v6652 = vsel %vm2118, %v6636, %v6651
        %v6653 = vrot.slane %v6210, 4
        %v6654 = vsel %vm2118, %v6653, %v6206
        %v6655 = vrot.slane %v6206, 4
        %v6656 = vsel %vm2118, %v6210, %v6655
        %v6658 = vunpack.c.l.s4 1983009808
        %v6659 = vunpack.c.0.s8 %v6658
        %v6660 = vperm.slane %v6654, %v6659
        %v6662 = vunpack.c.l.s4 1983009808
        %v6663 = vunpack.c.0.s8 %v6662
        %v6664 = vperm.slane %v6656, %v6663
        %v6665 = vrot.slane %v6212, 4
        %v6666 = vsel %vm2118, %v6665, %v6208
        %v6667 = vrot.slane %v6208, 4
        %v6668 = vsel %vm2118, %v6212, %v6667
        %v6670 = vunpack.c.l.s4 1983009808
        %v6671 = vunpack.c.0.s8 %v6670
        %v6672 = vperm.slane %v6666, %v6671
        %v6674 = vunpack.c.l.s4 1983009808
        %v6675 = vunpack.c.0.s8 %v6674
        %v6676 = vperm.slane %v6668, %v6675
        %v6677 = vrot.slane %v6218, 4
        %v6678 = vsel %vm2118, %v6677, %v6214
        %v6679 = vrot.slane %v6214, 4
        %v6680 = vsel %vm2118, %v6218, %v6679
        %v6682 = vunpack.c.l.s4 1983009808
        %v6683 = vunpack.c.0.s8 %v6682
        %v6684 = vperm.slane %v6678, %v6683
        %v6686 = vunpack.c.l.s4 1983009808
        %v6687 = vunpack.c.0.s8 %v6686
        %v6688 = vperm.slane %v6680, %v6687
        %v6689 = vrot.slane %v6220, 4
        %v6690 = vsel %vm2118, %v6689, %v6216
        %v6691 = vrot.slane %v6216, 4
        %v6692 = vsel %vm2118, %v6220, %v6691
        %v6694 = vunpack.c.l.s4 1983009808
        %v6695 = vunpack.c.0.s8 %v6694
        %v6696 = vperm.slane %v6690, %v6695
        %v6698 = vunpack.c.l.s4 1983009808
        %v6699 = vunpack.c.0.s8 %v6698
        %v6700 = vperm.slane %v6692, %v6699
        %v6701 = vrot.slane %v6672, 4
        %v6702 = vsel %vm2118, %v6701, %v6660
        %v6703 = vrot.slane %v6660, 4
        %v6704 = vsel %vm2118, %v6672, %v6703
        %v6706 = vunpack.c.l.s4 1934713408
        %v6707 = vunpack.c.0.s8 %v6706
        %v6708 = vperm.slane %v6702, %v6707
        %v6710 = vunpack.c.l.s4 1934713408
        %v6711 = vunpack.c.0.s8 %v6710
        %v6712 = vperm.slane %v6704, %v6711
        %v6713 = vrot.slane %v6676, 4
        %v6714 = vsel %vm2118, %v6713, %v6664
        %v6715 = vrot.slane %v6664, 4
        %v6716 = vsel %vm2118, %v6676, %v6715
        %v6718 = vunpack.c.l.s4 1934713408
        %v6719 = vunpack.c.0.s8 %v6718
        %v6720 = vperm.slane %v6714, %v6719
        %v6722 = vunpack.c.l.s4 1934713408
        %v6723 = vunpack.c.0.s8 %v6722
        %v6724 = vperm.slane %v6716, %v6723
        %v6725 = vrot.slane %v6696, 4
        %v6726 = vsel %vm2118, %v6725, %v6684
        %v6727 = vrot.slane %v6684, 4
        %v6728 = vsel %vm2118, %v6696, %v6727
        %v6730 = vunpack.c.l.s4 1934713408
        %v6731 = vunpack.c.0.s8 %v6730
        %v6732 = vperm.slane %v6726, %v6731
        %v6734 = vunpack.c.l.s4 1934713408
        %v6735 = vunpack.c.0.s8 %v6734
        %v6736 = vperm.slane %v6728, %v6735
        %v6737 = vrot.slane %v6700, 4
        %v6738 = vsel %vm2118, %v6737, %v6688
        %v6739 = vrot.slane %v6688, 4
        %v6740 = vsel %vm2118, %v6700, %v6739
        %v6742 = vunpack.c.l.s4 1934713408
        %v6743 = vunpack.c.0.s8 %v6742
        %v6744 = vperm.slane %v6738, %v6743
        %v6746 = vunpack.c.l.s4 1934713408
        %v6747 = vunpack.c.0.s8 %v6746
        %v6748 = vperm.slane %v6740, %v6747
        %v6749 = vrot.slane %v6732, 4
        %v6750 = vsel %vm2118, %v6749, %v6708
        %v6751 = vrot.slane %v6708, 4
        %v6752 = vsel %vm2118, %v6732, %v6751
        %v6753 = vrot.slane %v6736, 4
        %v6754 = vsel %vm2118, %v6753, %v6712
        %v6755 = vrot.slane %v6712, 4
        %v6756 = vsel %vm2118, %v6736, %v6755
        %v6757 = vrot.slane %v6744, 4
        %v6758 = vsel %vm2118, %v6757, %v6720
        %v6759 = vrot.slane %v6720, 4
        %v6760 = vsel %vm2118, %v6744, %v6759
        %v6761 = vrot.slane %v6748, 4
        %v6762 = vsel %vm2118, %v6761, %v6724
        %v6763 = vrot.slane %v6724, 4
        %v6764 = vsel %vm2118, %v6748, %v6763
        %v6765 = vrot.slane %v6225, 4
        %v6766 = vsel %vm2118, %v6765, %v6221
        %v6767 = vrot.slane %v6221, 4
        %v6768 = vsel %vm2118, %v6225, %v6767
        %v6770 = vunpack.c.l.s4 1983009808
        %v6771 = vunpack.c.0.s8 %v6770
        %v6772 = vperm.slane %v6766, %v6771
        %v6774 = vunpack.c.l.s4 1983009808
        %v6775 = vunpack.c.0.s8 %v6774
        %v6776 = vperm.slane %v6768, %v6775
        %v6777 = vrot.slane %v6227, 4
        %v6778 = vsel %vm2118, %v6777, %v6223
        %v6779 = vrot.slane %v6223, 4
        %v6780 = vsel %vm2118, %v6227, %v6779
        %v6782 = vunpack.c.l.s4 1983009808
        %v6783 = vunpack.c.0.s8 %v6782
        %v6784 = vperm.slane %v6778, %v6783
        %v6786 = vunpack.c.l.s4 1983009808
        %v6787 = vunpack.c.0.s8 %v6786
        %v6788 = vperm.slane %v6780, %v6787
        %v6789 = vrot.slane %v6233, 4
        %v6790 = vsel %vm2118, %v6789, %v6229
        %v6791 = vrot.slane %v6229, 4
        %v6792 = vsel %vm2118, %v6233, %v6791
        %v6794 = vunpack.c.l.s4 1983009808
        %v6795 = vunpack.c.0.s8 %v6794
        %v6796 = vperm.slane %v6790, %v6795
        %v6798 = vunpack.c.l.s4 1983009808
        %v6799 = vunpack.c.0.s8 %v6798
        %v6800 = vperm.slane %v6792, %v6799
        %v6801 = vrot.slane %v6235, 4
        %v6802 = vsel %vm2118, %v6801, %v6231
        %v6803 = vrot.slane %v6231, 4
        %v6804 = vsel %vm2118, %v6235, %v6803
        %v6806 = vunpack.c.l.s4 1983009808
        %v6807 = vunpack.c.0.s8 %v6806
        %v6808 = vperm.slane %v6802, %v6807
        %v6810 = vunpack.c.l.s4 1983009808
        %v6811 = vunpack.c.0.s8 %v6810
        %v6812 = vperm.slane %v6804, %v6811
        %v6813 = vrot.slane %v6784, 4
        %v6814 = vsel %vm2118, %v6813, %v6772
        %v6815 = vrot.slane %v6772, 4
        %v6816 = vsel %vm2118, %v6784, %v6815
        %v6818 = vunpack.c.l.s4 1934713408
        %v6819 = vunpack.c.0.s8 %v6818
        %v6820 = vperm.slane %v6814, %v6819
        %v6822 = vunpack.c.l.s4 1934713408
        %v6823 = vunpack.c.0.s8 %v6822
        %v6824 = vperm.slane %v6816, %v6823
        %v6825 = vrot.slane %v6788, 4
        %v6826 = vsel %vm2118, %v6825, %v6776
        %v6827 = vrot.slane %v6776, 4
        %v6828 = vsel %vm2118, %v6788, %v6827
        %v6830 = vunpack.c.l.s4 1934713408
        %v6831 = vunpack.c.0.s8 %v6830
        %v6832 = vperm.slane %v6826, %v6831
        %v6834 = vunpack.c.l.s4 1934713408
        %v6835 = vunpack.c.0.s8 %v6834
        %v6836 = vperm.slane %v6828, %v6835
        %v6837 = vrot.slane %v6808, 4
        %v6838 = vsel %vm2118, %v6837, %v6796
        %v6839 = vrot.slane %v6796, 4
        %v6840 = vsel %vm2118, %v6808, %v6839
        %v6842 = vunpack.c.l.s4 1934713408
        %v6843 = vunpack.c.0.s8 %v6842
        %v6844 = vperm.slane %v6838, %v6843
        %v6846 = vunpack.c.l.s4 1934713408
        %v6847 = vunpack.c.0.s8 %v6846
        %v6848 = vperm.slane %v6840, %v6847
        %v6849 = vrot.slane %v6812, 4
        %v6850 = vsel %vm2118, %v6849, %v6800
        %v6851 = vrot.slane %v6800, 4
        %v6852 = vsel %vm2118, %v6812, %v6851
        %v6854 = vunpack.c.l.s4 1934713408
        %v6855 = vunpack.c.0.s8 %v6854
        %v6856 = vperm.slane %v6850, %v6855
        %v6858 = vunpack.c.l.s4 1934713408
        %v6859 = vunpack.c.0.s8 %v6858
        %v6860 = vperm.slane %v6852, %v6859
        %v6861 = vrot.slane %v6844, 4
        %v6862 = vsel %vm2118, %v6861, %v6820
        %v6863 = vrot.slane %v6820, 4
        %v6864 = vsel %vm2118, %v6844, %v6863
        %v6865 = vrot.slane %v6848, 4
        %v6866 = vsel %vm2118, %v6865, %v6824
        %v6867 = vrot.slane %v6824, 4
        %v6868 = vsel %vm2118, %v6848, %v6867
        %v6869 = vrot.slane %v6856, 4
        %v6870 = vsel %vm2118, %v6869, %v6832
        %v6871 = vrot.slane %v6832, 4
        %v6872 = vsel %vm2118, %v6856, %v6871
        %v6873 = vrot.slane %v6860, 4
        %v6874 = vsel %vm2118, %v6873, %v6836
        %v6875 = vrot.slane %v6836, 4
        %v6876 = vsel %vm2118, %v6860, %v6875
        %v6877 = vrot.slane %v6241, 4
        %v6878 = vsel %vm2118, %v6877, %v6237
        %v6879 = vrot.slane %v6237, 4
        %v6880 = vsel %vm2118, %v6241, %v6879
        %v6882 = vunpack.c.l.s4 1983009808
        %v6883 = vunpack.c.0.s8 %v6882
        %v6884 = vperm.slane %v6878, %v6883
        %v6886 = vunpack.c.l.s4 1983009808
        %v6887 = vunpack.c.0.s8 %v6886
        %v6888 = vperm.slane %v6880, %v6887
        %v6889 = vrot.slane %v6243, 4
        %v6890 = vsel %vm2118, %v6889, %v6239
        %v6891 = vrot.slane %v6239, 4
        %v6892 = vsel %vm2118, %v6243, %v6891
        %v6894 = vunpack.c.l.s4 1983009808
        %v6895 = vunpack.c.0.s8 %v6894
        %v6896 = vperm.slane %v6890, %v6895
        %v6898 = vunpack.c.l.s4 1983009808
        %v6899 = vunpack.c.0.s8 %v6898
        %v6900 = vperm.slane %v6892, %v6899
        %v6901 = vrot.slane %v6249, 4
        %v6902 = vsel %vm2118, %v6901, %v6245
        %v6903 = vrot.slane %v6245, 4
        %v6904 = vsel %vm2118, %v6249, %v6903
        %v6906 = vunpack.c.l.s4 1983009808
        %v6907 = vunpack.c.0.s8 %v6906
        %v6908 = vperm.slane %v6902, %v6907
        %v6910 = vunpack.c.l.s4 1983009808
        %v6911 = vunpack.c.0.s8 %v6910
        %v6912 = vperm.slane %v6904, %v6911
        %v6913 = vrot.slane %v6251, 4
        %v6914 = vsel %vm2118, %v6913, %v6247
        %v6915 = vrot.slane %v6247, 4
        %v6916 = vsel %vm2118, %v6251, %v6915
        %v6918 = vunpack.c.l.s4 1983009808
        %v6919 = vunpack.c.0.s8 %v6918
        %v6920 = vperm.slane %v6914, %v6919
        %v6922 = vunpack.c.l.s4 1983009808
        %v6923 = vunpack.c.0.s8 %v6922
        %v6924 = vperm.slane %v6916, %v6923
        %v6925 = vrot.slane %v6896, 4
        %v6926 = vsel %vm2118, %v6925, %v6884
        %v6927 = vrot.slane %v6884, 4
        %v6928 = vsel %vm2118, %v6896, %v6927
        %v6930 = vunpack.c.l.s4 1934713408
        %v6931 = vunpack.c.0.s8 %v6930
        %v6932 = vperm.slane %v6926, %v6931
        %v6934 = vunpack.c.l.s4 1934713408
        %v6935 = vunpack.c.0.s8 %v6934
        %v6936 = vperm.slane %v6928, %v6935
        %v6937 = vrot.slane %v6900, 4
        %v6938 = vsel %vm2118, %v6937, %v6888
        %v6939 = vrot.slane %v6888, 4
        %v6940 = vsel %vm2118, %v6900, %v6939
        %v6942 = vunpack.c.l.s4 1934713408
        %v6943 = vunpack.c.0.s8 %v6942
        %v6944 = vperm.slane %v6938, %v6943
        %v6946 = vunpack.c.l.s4 1934713408
        %v6947 = vunpack.c.0.s8 %v6946
        %v6948 = vperm.slane %v6940, %v6947
        %v6949 = vrot.slane %v6920, 4
        %v6950 = vsel %vm2118, %v6949, %v6908
        %v6951 = vrot.slane %v6908, 4
        %v6952 = vsel %vm2118, %v6920, %v6951
        %v6954 = vunpack.c.l.s4 1934713408
        %v6955 = vunpack.c.0.s8 %v6954
        %v6956 = vperm.slane %v6950, %v6955
        %v6958 = vunpack.c.l.s4 1934713408
        %v6959 = vunpack.c.0.s8 %v6958
        %v6960 = vperm.slane %v6952, %v6959
        %v6961 = vrot.slane %v6924, 4
        %v6962 = vsel %vm2118, %v6961, %v6912
        %v6963 = vrot.slane %v6912, 4
        %v6964 = vsel %vm2118, %v6924, %v6963
        %v6966 = vunpack.c.l.s4 1934713408
        %v6967 = vunpack.c.0.s8 %v6966
        %v6968 = vperm.slane %v6962, %v6967
        %v6970 = vunpack.c.l.s4 1934713408
        %v6971 = vunpack.c.0.s8 %v6970
        %v6972 = vperm.slane %v6964, %v6971
        %v6973 = vrot.slane %v6956, 4
        %v6974 = vsel %vm2118, %v6973, %v6932
        %v6975 = vrot.slane %v6932, 4
        %v6976 = vsel %vm2118, %v6956, %v6975
        %v6977 = vrot.slane %v6960, 4
        %v6978 = vsel %vm2118, %v6977, %v6936
        %v6979 = vrot.slane %v6936, 4
        %v6980 = vsel %vm2118, %v6960, %v6979
        %v6981 = vrot.slane %v6968, 4
        %v6982 = vsel %vm2118, %v6981, %v6944
        %v6983 = vrot.slane %v6944, 4
        %v6984 = vsel %vm2118, %v6968, %v6983
        %v6985 = vrot.slane %v6972, 4
        %v6986 = vsel %vm2118, %v6985, %v6948
        %v6987 = vrot.slane %v6948, 4
        %v6988 = vsel %vm2118, %v6972, %v6987
        %v6989 = vrot.slane %v6226, 4
        %v6990 = vsel %vm2118, %v6989, %v6222
        %v6991 = vrot.slane %v6222, 4
        %v6992 = vsel %vm2118, %v6226, %v6991
        %v6994 = vunpack.c.l.s4 1983009808
        %v6995 = vunpack.c.0.s8 %v6994
        %v6996 = vperm.slane %v6990, %v6995
        %v6998 = vunpack.c.l.s4 1983009808
        %v6999 = vunpack.c.0.s8 %v6998
        %v7000 = vperm.slane %v6992, %v6999
        %v7001 = vrot.slane %v6228, 4
        %v7002 = vsel %vm2118, %v7001, %v6224
        %v7003 = vrot.slane %v6224, 4
        %v7004 = vsel %vm2118, %v6228, %v7003
        %v7006 = vunpack.c.l.s4 1983009808
        %v7007 = vunpack.c.0.s8 %v7006
        %v7008 = vperm.slane %v7002, %v7007
        %v7010 = vunpack.c.l.s4 1983009808
        %v7011 = vunpack.c.0.s8 %v7010
        %v7012 = vperm.slane %v7004, %v7011
        %v7013 = vrot.slane %v6234, 4
        %v7014 = vsel %vm2118, %v7013, %v6230
        %v7015 = vrot.slane %v6230, 4
        %v7016 = vsel %vm2118, %v6234, %v7015
        %v7018 = vunpack.c.l.s4 1983009808
        %v7019 = vunpack.c.0.s8 %v7018
        %v7020 = vperm.slane %v7014, %v7019
        %v7022 = vunpack.c.l.s4 1983009808
        %v7023 = vunpack.c.0.s8 %v7022
        %v7024 = vperm.slane %v7016, %v7023
        %v7025 = vrot.slane %v6236, 4
        %v7026 = vsel %vm2118, %v7025, %v6232
        %v7027 = vrot.slane %v6232, 4
        %v7028 = vsel %vm2118, %v6236, %v7027
        %v7030 = vunpack.c.l.s4 1983009808
        %v7031 = vunpack.c.0.s8 %v7030
        %v7032 = vperm.slane %v7026, %v7031
        %v7034 = vunpack.c.l.s4 1983009808
        %v7035 = vunpack.c.0.s8 %v7034
        %v7036 = vperm.slane %v7028, %v7035
        %v7037 = vrot.slane %v7008, 4
        %v7038 = vsel %vm2118, %v7037, %v6996
        %v7039 = vrot.slane %v6996, 4
        %v7040 = vsel %vm2118, %v7008, %v7039
        %v7042 = vunpack.c.l.s4 1934713408
        %v7043 = vunpack.c.0.s8 %v7042
        %v7044 = vperm.slane %v7038, %v7043
        %v7046 = vunpack.c.l.s4 1934713408
        %v7047 = vunpack.c.0.s8 %v7046
        %v7048 = vperm.slane %v7040, %v7047
        %v7049 = vrot.slane %v7012, 4
        %v7050 = vsel %vm2118, %v7049, %v7000
        %v7051 = vrot.slane %v7000, 4
        %v7052 = vsel %vm2118, %v7012, %v7051
        %v7054 = vunpack.c.l.s4 1934713408
        %v7055 = vunpack.c.0.s8 %v7054
        %v7056 = vperm.slane %v7050, %v7055
        %v7058 = vunpack.c.l.s4 1934713408
        %v7059 = vunpack.c.0.s8 %v7058
        %v7060 = vperm.slane %v7052, %v7059
        %v7061 = vrot.slane %v7032, 4
        %v7062 = vsel %vm2118, %v7061, %v7020
        %v7063 = vrot.slane %v7020, 4
        %v7064 = vsel %vm2118, %v7032, %v7063
        %v7066 = vunpack.c.l.s4 1934713408
        %v7067 = vunpack.c.0.s8 %v7066
        %v7068 = vperm.slane %v7062, %v7067
        %v7070 = vunpack.c.l.s4 1934713408
        %v7071 = vunpack.c.0.s8 %v7070
        %v7072 = vperm.slane %v7064, %v7071
        %v7073 = vrot.slane %v7036, 4
        %v7074 = vsel %vm2118, %v7073, %v7024
        %v7075 = vrot.slane %v7024, 4
        %v7076 = vsel %vm2118, %v7036, %v7075
        %v7078 = vunpack.c.l.s4 1934713408
        %v7079 = vunpack.c.0.s8 %v7078
        %v7080 = vperm.slane %v7074, %v7079
        %v7082 = vunpack.c.l.s4 1934713408
        %v7083 = vunpack.c.0.s8 %v7082
        %v7084 = vperm.slane %v7076, %v7083
        %v7085 = vrot.slane %v7068, 4
        %v7086 = vsel %vm2118, %v7085, %v7044
        %v7087 = vrot.slane %v7044, 4
        %v7088 = vsel %vm2118, %v7068, %v7087
        %v7089 = vrot.slane %v7072, 4
        %v7090 = vsel %vm2118, %v7089, %v7048
        %v7091 = vrot.slane %v7048, 4
        %v7092 = vsel %vm2118, %v7072, %v7091
        %v7093 = vrot.slane %v7080, 4
        %v7094 = vsel %vm2118, %v7093, %v7056
        %v7095 = vrot.slane %v7056, 4
        %v7096 = vsel %vm2118, %v7080, %v7095
        %v7097 = vrot.slane %v7084, 4
        %v7098 = vsel %vm2118, %v7097, %v7060
        %v7099 = vrot.slane %v7060, 4
        %v7100 = vsel %vm2118, %v7084, %v7099
        %v7101 = vrot.slane %v6242, 4
        %v7102 = vsel %vm2118, %v7101, %v6238
        %v7103 = vrot.slane %v6238, 4
        %v7104 = vsel %vm2118, %v6242, %v7103
        %v7106 = vunpack.c.l.s4 1983009808
        %v7107 = vunpack.c.0.s8 %v7106
        %v7108 = vperm.slane %v7102, %v7107
        %v7110 = vunpack.c.l.s4 1983009808
        %v7111 = vunpack.c.0.s8 %v7110
        %v7112 = vperm.slane %v7104, %v7111
        %v7113 = vrot.slane %v6244, 4
        %v7114 = vsel %vm2118, %v7113, %v6240
        %v7115 = vrot.slane %v6240, 4
        %v7116 = vsel %vm2118, %v6244, %v7115
        %v7118 = vunpack.c.l.s4 1983009808
        %v7119 = vunpack.c.0.s8 %v7118
        %v7120 = vperm.slane %v7114, %v7119
        %v7122 = vunpack.c.l.s4 1983009808
        %v7123 = vunpack.c.0.s8 %v7122
        %v7124 = vperm.slane %v7116, %v7123
        %v7125 = vrot.slane %v6250, 4
        %v7126 = vsel %vm2118, %v7125, %v6246
        %v7127 = vrot.slane %v6246, 4
        %v7128 = vsel %vm2118, %v6250, %v7127
        %v7130 = vunpack.c.l.s4 1983009808
        %v7131 = vunpack.c.0.s8 %v7130
        %v7132 = vperm.slane %v7126, %v7131
        %v7134 = vunpack.c.l.s4 1983009808
        %v7135 = vunpack.c.0.s8 %v7134
        %v7136 = vperm.slane %v7128, %v7135
        %v7137 = vrot.slane %v6252, 4
        %v7138 = vsel %vm2118, %v7137, %v6248
        %v7139 = vrot.slane %v6248, 4
        %v7140 = vsel %vm2118, %v6252, %v7139
        %v7142 = vunpack.c.l.s4 1983009808
        %v7143 = vunpack.c.0.s8 %v7142
        %v7144 = vperm.slane %v7138, %v7143
        %v7146 = vunpack.c.l.s4 1983009808
        %v7147 = vunpack.c.0.s8 %v7146
        %v7148 = vperm.slane %v7140, %v7147
        %v7149 = vrot.slane %v7120, 4
        %v7150 = vsel %vm2118, %v7149, %v7108
        %v7151 = vrot.slane %v7108, 4
        %v7152 = vsel %vm2118, %v7120, %v7151
        %v7154 = vunpack.c.l.s4 1934713408
        %v7155 = vunpack.c.0.s8 %v7154
        %v7156 = vperm.slane %v7150, %v7155
        %v7158 = vunpack.c.l.s4 1934713408
        %v7159 = vunpack.c.0.s8 %v7158
        %v7160 = vperm.slane %v7152, %v7159
        %v7161 = vrot.slane %v7124, 4
        %v7162 = vsel %vm2118, %v7161, %v7112
        %v7163 = vrot.slane %v7112, 4
        %v7164 = vsel %vm2118, %v7124, %v7163
        %v7166 = vunpack.c.l.s4 1934713408
        %v7167 = vunpack.c.0.s8 %v7166
        %v7168 = vperm.slane %v7162, %v7167
        %v7170 = vunpack.c.l.s4 1934713408
        %v7171 = vunpack.c.0.s8 %v7170
        %v7172 = vperm.slane %v7164, %v7171
        %v7173 = vrot.slane %v7144, 4
        %v7174 = vsel %vm2118, %v7173, %v7132
        %v7175 = vrot.slane %v7132, 4
        %v7176 = vsel %vm2118, %v7144, %v7175
        %v7178 = vunpack.c.l.s4 1934713408
        %v7179 = vunpack.c.0.s8 %v7178
        %v7180 = vperm.slane %v7174, %v7179
        %v7182 = vunpack.c.l.s4 1934713408
        %v7183 = vunpack.c.0.s8 %v7182
        %v7184 = vperm.slane %v7176, %v7183
        %v7185 = vrot.slane %v7148, 4
        %v7186 = vsel %vm2118, %v7185, %v7136
        %v7187 = vrot.slane %v7136, 4
        %v7188 = vsel %vm2118, %v7148, %v7187
        %v7190 = vunpack.c.l.s4 1934713408
        %v7191 = vunpack.c.0.s8 %v7190
        %v7192 = vperm.slane %v7186, %v7191
        %v7194 = vunpack.c.l.s4 1934713408
        %v7195 = vunpack.c.0.s8 %v7194
        %v7196 = vperm.slane %v7188, %v7195
        %v7197 = vrot.slane %v7180, 4
        %v7198 = vsel %vm2118, %v7197, %v7156
        %v7199 = vrot.slane %v7156, 4
        %v7200 = vsel %vm2118, %v7180, %v7199
        %v7201 = vrot.slane %v7184, 4
        %v7202 = vsel %vm2118, %v7201, %v7160
        %v7203 = vrot.slane %v7160, 4
        %v7204 = vsel %vm2118, %v7184, %v7203
        %v7205 = vrot.slane %v7192, 4
        %v7206 = vsel %vm2118, %v7205, %v7168
        %v7207 = vrot.slane %v7168, 4
        %v7208 = vsel %vm2118, %v7192, %v7207
        %v7209 = vrot.slane %v7196, 4
        %v7210 = vsel %vm2118, %v7209, %v7172
        %v7211 = vrot.slane %v7172, 4
        %v7212 = vsel %vm2118, %v7196, %v7211
        %v7213 = vrot.slane %v6257, 4
        %v7214 = vsel %vm2118, %v7213, %v6253
        %v7215 = vrot.slane %v6253, 4
        %v7216 = vsel %vm2118, %v6257, %v7215
        %v7218 = vunpack.c.l.s4 1983009808
        %v7219 = vunpack.c.0.s8 %v7218
        %v7220 = vperm.slane %v7214, %v7219
        %v7222 = vunpack.c.l.s4 1983009808
        %v7223 = vunpack.c.0.s8 %v7222
        %v7224 = vperm.slane %v7216, %v7223
        %v7225 = vrot.slane %v6259, 4
        %v7226 = vsel %vm2118, %v7225, %v6255
        %v7227 = vrot.slane %v6255, 4
        %v7228 = vsel %vm2118, %v6259, %v7227
        %v7230 = vunpack.c.l.s4 1983009808
        %v7231 = vunpack.c.0.s8 %v7230
        %v7232 = vperm.slane %v7226, %v7231
        %v7234 = vunpack.c.l.s4 1983009808
        %v7235 = vunpack.c.0.s8 %v7234
        %v7236 = vperm.slane %v7228, %v7235
        %v7237 = vrot.slane %v6265, 4
        %v7238 = vsel %vm2118, %v7237, %v6261
        %v7239 = vrot.slane %v6261, 4
        %v7240 = vsel %vm2118, %v6265, %v7239
        %v7242 = vunpack.c.l.s4 1983009808
        %v7243 = vunpack.c.0.s8 %v7242
        %v7244 = vperm.slane %v7238, %v7243
        %v7246 = vunpack.c.l.s4 1983009808
        %v7247 = vunpack.c.0.s8 %v7246
        %v7248 = vperm.slane %v7240, %v7247
        %v7249 = vrot.slane %v6267, 4
        %v7250 = vsel %vm2118, %v7249, %v6263
        %v7251 = vrot.slane %v6263, 4
        %v7252 = vsel %vm2118, %v6267, %v7251
        %v7254 = vunpack.c.l.s4 1983009808
        %v7255 = vunpack.c.0.s8 %v7254
        %v7256 = vperm.slane %v7250, %v7255
        %v7258 = vunpack.c.l.s4 1983009808
        %v7259 = vunpack.c.0.s8 %v7258
        %v7260 = vperm.slane %v7252, %v7259
        %v7261 = vrot.slane %v7232, 4
        %v7262 = vsel %vm2118, %v7261, %v7220
        %v7263 = vrot.slane %v7220, 4
        %v7264 = vsel %vm2118, %v7232, %v7263
        %v7266 = vunpack.c.l.s4 1934713408
        %v7267 = vunpack.c.0.s8 %v7266
        %v7268 = vperm.slane %v7262, %v7267
        %v7270 = vunpack.c.l.s4 1934713408
        %v7271 = vunpack.c.0.s8 %v7270
        %v7272 = vperm.slane %v7264, %v7271
        %v7273 = vrot.slane %v7236, 4
        %v7274 = vsel %vm2118, %v7273, %v7224
        %v7275 = vrot.slane %v7224, 4
        %v7276 = vsel %vm2118, %v7236, %v7275
        %v7278 = vunpack.c.l.s4 1934713408
        %v7279 = vunpack.c.0.s8 %v7278
        %v7280 = vperm.slane %v7274, %v7279
        %v7282 = vunpack.c.l.s4 1934713408
        %v7283 = vunpack.c.0.s8 %v7282
        %v7284 = vperm.slane %v7276, %v7283
        %v7285 = vrot.slane %v7256, 4
        %v7286 = vsel %vm2118, %v7285, %v7244
        %v7287 = vrot.slane %v7244, 4
        %v7288 = vsel %vm2118, %v7256, %v7287
        %v7290 = vunpack.c.l.s4 1934713408
        %v7291 = vunpack.c.0.s8 %v7290
        %v7292 = vperm.slane %v7286, %v7291
        %v7294 = vunpack.c.l.s4 1934713408
        %v7295 = vunpack.c.0.s8 %v7294
        %v7296 = vperm.slane %v7288, %v7295
        %v7297 = vrot.slane %v7260, 4
        %v7298 = vsel %vm2118, %v7297, %v7248
        %v7299 = vrot.slane %v7248, 4
        %v7300 = vsel %vm2118, %v7260, %v7299
        %v7302 = vunpack.c.l.s4 1934713408
        %v7303 = vunpack.c.0.s8 %v7302
        %v7304 = vperm.slane %v7298, %v7303
        %v7306 = vunpack.c.l.s4 1934713408
        %v7307 = vunpack.c.0.s8 %v7306
        %v7308 = vperm.slane %v7300, %v7307
        %v7309 = vrot.slane %v7292, 4
        %v7310 = vsel %vm2118, %v7309, %v7268
        %v7311 = vrot.slane %v7268, 4
        %v7312 = vsel %vm2118, %v7292, %v7311
        %v7313 = vrot.slane %v7296, 4
        %v7314 = vsel %vm2118, %v7313, %v7272
        %v7315 = vrot.slane %v7272, 4
        %v7316 = vsel %vm2118, %v7296, %v7315
        %v7317 = vrot.slane %v7304, 4
        %v7318 = vsel %vm2118, %v7317, %v7280
        %v7319 = vrot.slane %v7280, 4
        %v7320 = vsel %vm2118, %v7304, %v7319
        %v7321 = vrot.slane %v7308, 4
        %v7322 = vsel %vm2118, %v7321, %v7284
        %v7323 = vrot.slane %v7284, 4
        %v7324 = vsel %vm2118, %v7308, %v7323
        %v7325 = vrot.slane %v6273, 4
        %v7326 = vsel %vm2118, %v7325, %v6269
        %v7327 = vrot.slane %v6269, 4
        %v7328 = vsel %vm2118, %v6273, %v7327
        %v7330 = vunpack.c.l.s4 1983009808
        %v7331 = vunpack.c.0.s8 %v7330
        %v7332 = vperm.slane %v7326, %v7331
        %v7334 = vunpack.c.l.s4 1983009808
        %v7335 = vunpack.c.0.s8 %v7334
        %v7336 = vperm.slane %v7328, %v7335
        %v7337 = vrot.slane %v6275, 4
        %v7338 = vsel %vm2118, %v7337, %v6271
        %v7339 = vrot.slane %v6271, 4
        %v7340 = vsel %vm2118, %v6275, %v7339
        %v7342 = vunpack.c.l.s4 1983009808
        %v7343 = vunpack.c.0.s8 %v7342
        %v7344 = vperm.slane %v7338, %v7343
        %v7346 = vunpack.c.l.s4 1983009808
        %v7347 = vunpack.c.0.s8 %v7346
        %v7348 = vperm.slane %v7340, %v7347
        %v7349 = vrot.slane %v6281, 4
        %v7350 = vsel %vm2118, %v7349, %v6277
        %v7351 = vrot.slane %v6277, 4
        %v7352 = vsel %vm2118, %v6281, %v7351
        %v7354 = vunpack.c.l.s4 1983009808
        %v7355 = vunpack.c.0.s8 %v7354
        %v7356 = vperm.slane %v7350, %v7355
        %v7358 = vunpack.c.l.s4 1983009808
        %v7359 = vunpack.c.0.s8 %v7358
        %v7360 = vperm.slane %v7352, %v7359
        %v7361 = vrot.slane %v6283, 4
        %v7362 = vsel %vm2118, %v7361, %v6279
        %v7363 = vrot.slane %v6279, 4
        %v7364 = vsel %vm2118, %v6283, %v7363
        %v7366 = vunpack.c.l.s4 1983009808
        %v7367 = vunpack.c.0.s8 %v7366
        %v7368 = vperm.slane %v7362, %v7367
        %v7370 = vunpack.c.l.s4 1983009808
        %v7371 = vunpack.c.0.s8 %v7370
        %v7372 = vperm.slane %v7364, %v7371
        %v7373 = vrot.slane %v7344, 4
        %v7374 = vsel %vm2118, %v7373, %v7332
        %v7375 = vrot.slane %v7332, 4
        %v7376 = vsel %vm2118, %v7344, %v7375
        %v7378 = vunpack.c.l.s4 1934713408
        %v7379 = vunpack.c.0.s8 %v7378
        %v7380 = vperm.slane %v7374, %v7379
        %v7382 = vunpack.c.l.s4 1934713408
        %v7383 = vunpack.c.0.s8 %v7382
        %v7384 = vperm.slane %v7376, %v7383
        %v7385 = vrot.slane %v7348, 4
        %v7386 = vsel %vm2118, %v7385, %v7336
        %v7387 = vrot.slane %v7336, 4
        %v7388 = vsel %vm2118, %v7348, %v7387
        %v7390 = vunpack.c.l.s4 1934713408
        %v7391 = vunpack.c.0.s8 %v7390
        %v7392 = vperm.slane %v7386, %v7391
        %v7394 = vunpack.c.l.s4 1934713408
        %v7395 = vunpack.c.0.s8 %v7394
        %v7396 = vperm.slane %v7388, %v7395
        %v7397 = vrot.slane %v7368, 4
        %v7398 = vsel %vm2118, %v7397, %v7356
        %v7399 = vrot.slane %v7356, 4
        %v7400 = vsel %vm2118, %v7368, %v7399
        %v7402 = vunpack.c.l.s4 1934713408
        %v7403 = vunpack.c.0.s8 %v7402
        %v7404 = vperm.slane %v7398, %v7403
        %v7406 = vunpack.c.l.s4 1934713408
        %v7407 = vunpack.c.0.s8 %v7406
        %v7408 = vperm.slane %v7400, %v7407
        %v7409 = vrot.slane %v7372, 4
        %v7410 = vsel %vm2118, %v7409, %v7360
        %v7411 = vrot.slane %v7360, 4
        %v7412 = vsel %vm2118, %v7372, %v7411
        %v7414 = vunpack.c.l.s4 1934713408
        %v7415 = vunpack.c.0.s8 %v7414
        %v7416 = vperm.slane %v7410, %v7415
        %v7418 = vunpack.c.l.s4 1934713408
        %v7419 = vunpack.c.0.s8 %v7418
        %v7420 = vperm.slane %v7412, %v7419
        %v7421 = vrot.slane %v7404, 4
        %v7422 = vsel %vm2118, %v7421, %v7380
        %v7423 = vrot.slane %v7380, 4
        %v7424 = vsel %vm2118, %v7404, %v7423
        %v7425 = vrot.slane %v7408, 4
        %v7426 = vsel %vm2118, %v7425, %v7384
        %v7427 = vrot.slane %v7384, 4
        %v7428 = vsel %vm2118, %v7408, %v7427
        %v7429 = vrot.slane %v7416, 4
        %v7430 = vsel %vm2118, %v7429, %v7392
        %v7431 = vrot.slane %v7392, 4
        %v7432 = vsel %vm2118, %v7416, %v7431
        %v7433 = vrot.slane %v7420, 4
        %v7434 = vsel %vm2118, %v7433, %v7396
        %v7435 = vrot.slane %v7396, 4
        %v7436 = vsel %vm2118, %v7420, %v7435
        %v7437 = vrot.slane %v6258, 4
        %v7438 = vsel %vm2118, %v7437, %v6254
        %v7439 = vrot.slane %v6254, 4
        %v7440 = vsel %vm2118, %v6258, %v7439
        %v7442 = vunpack.c.l.s4 1983009808
        %v7443 = vunpack.c.0.s8 %v7442
        %v7444 = vperm.slane %v7438, %v7443
        %v7446 = vunpack.c.l.s4 1983009808
        %v7447 = vunpack.c.0.s8 %v7446
        %v7448 = vperm.slane %v7440, %v7447
        %v7449 = vrot.slane %v6260, 4
        %v7450 = vsel %vm2118, %v7449, %v6256
        %v7451 = vrot.slane %v6256, 4
        %v7452 = vsel %vm2118, %v6260, %v7451
        %v7454 = vunpack.c.l.s4 1983009808
        %v7455 = vunpack.c.0.s8 %v7454
        %v7456 = vperm.slane %v7450, %v7455
        %v7458 = vunpack.c.l.s4 1983009808
        %v7459 = vunpack.c.0.s8 %v7458
        %v7460 = vperm.slane %v7452, %v7459
        %v7461 = vrot.slane %v6266, 4
        %v7462 = vsel %vm2118, %v7461, %v6262
        %v7463 = vrot.slane %v6262, 4
        %v7464 = vsel %vm2118, %v6266, %v7463
        %v7466 = vunpack.c.l.s4 1983009808
        %v7467 = vunpack.c.0.s8 %v7466
        %v7468 = vperm.slane %v7462, %v7467
        %v7470 = vunpack.c.l.s4 1983009808
        %v7471 = vunpack.c.0.s8 %v7470
        %v7472 = vperm.slane %v7464, %v7471
        %v7473 = vrot.slane %v6268, 4
        %v7474 = vsel %vm2118, %v7473, %v6264
        %v7475 = vrot.slane %v6264, 4
        %v7476 = vsel %vm2118, %v6268, %v7475
        %v7478 = vunpack.c.l.s4 1983009808
        %v7479 = vunpack.c.0.s8 %v7478
        %v7480 = vperm.slane %v7474, %v7479
        %v7482 = vunpack.c.l.s4 1983009808
        %v7483 = vunpack.c.0.s8 %v7482
        %v7484 = vperm.slane %v7476, %v7483
        %v7485 = vrot.slane %v7456, 4
        %v7486 = vsel %vm2118, %v7485, %v7444
        %v7487 = vrot.slane %v7444, 4
        %v7488 = vsel %vm2118, %v7456, %v7487
        %v7490 = vunpack.c.l.s4 1934713408
        %v7491 = vunpack.c.0.s8 %v7490
        %v7492 = vperm.slane %v7486, %v7491
        %v7494 = vunpack.c.l.s4 1934713408
        %v7495 = vunpack.c.0.s8 %v7494
        %v7496 = vperm.slane %v7488, %v7495
        %v7497 = vrot.slane %v7460, 4
        %v7498 = vsel %vm2118, %v7497, %v7448
        %v7499 = vrot.slane %v7448, 4
        %v7500 = vsel %vm2118, %v7460, %v7499
        %v7502 = vunpack.c.l.s4 1934713408
        %v7503 = vunpack.c.0.s8 %v7502
        %v7504 = vperm.slane %v7498, %v7503
        %v7506 = vunpack.c.l.s4 1934713408
        %v7507 = vunpack.c.0.s8 %v7506
        %v7508 = vperm.slane %v7500, %v7507
        %v7509 = vrot.slane %v7480, 4
        %v7510 = vsel %vm2118, %v7509, %v7468
        %v7511 = vrot.slane %v7468, 4
        %v7512 = vsel %vm2118, %v7480, %v7511
        %v7514 = vunpack.c.l.s4 1934713408
        %v7515 = vunpack.c.0.s8 %v7514
        %v7516 = vperm.slane %v7510, %v7515
        %v7518 = vunpack.c.l.s4 1934713408
        %v7519 = vunpack.c.0.s8 %v7518
        %v7520 = vperm.slane %v7512, %v7519
        %v7521 = vrot.slane %v7484, 4
        %v7522 = vsel %vm2118, %v7521, %v7472
        %v7523 = vrot.slane %v7472, 4
        %v7524 = vsel %vm2118, %v7484, %v7523
        %v7526 = vunpack.c.l.s4 1934713408
        %v7527 = vunpack.c.0.s8 %v7526
        %v7528 = vperm.slane %v7522, %v7527
        %v7530 = vunpack.c.l.s4 1934713408
        %v7531 = vunpack.c.0.s8 %v7530
        %v7532 = vperm.slane %v7524, %v7531
        %v7533 = vrot.slane %v7516, 4
        %v7534 = vsel %vm2118, %v7533, %v7492
        %v7535 = vrot.slane %v7492, 4
        %v7536 = vsel %vm2118, %v7516, %v7535
        %v7537 = vrot.slane %v7520, 4
        %v7538 = vsel %vm2118, %v7537, %v7496
        %v7539 = vrot.slane %v7496, 4
        %v7540 = vsel %vm2118, %v7520, %v7539
        %v7541 = vrot.slane %v7528, 4
        %v7542 = vsel %vm2118, %v7541, %v7504
        %v7543 = vrot.slane %v7504, 4
        %v7544 = vsel %vm2118, %v7528, %v7543
        %v7545 = vrot.slane %v7532, 4
        %v7546 = vsel %vm2118, %v7545, %v7508
        %v7547 = vrot.slane %v7508, 4
        %v7548 = vsel %vm2118, %v7532, %v7547
        %v7549 = vrot.slane %v6274, 4
        %v7550 = vsel %vm2118, %v7549, %v6270
        %v7551 = vrot.slane %v6270, 4
        %v7552 = vsel %vm2118, %v6274, %v7551
        %v7554 = vunpack.c.l.s4 1983009808
        %v7555 = vunpack.c.0.s8 %v7554
        %v7556 = vperm.slane %v7550, %v7555
        %v7558 = vunpack.c.l.s4 1983009808
        %v7559 = vunpack.c.0.s8 %v7558
        %v7560 = vperm.slane %v7552, %v7559
        %v7561 = vrot.slane %v6276, 4
        %v7562 = vsel %vm2118, %v7561, %v6272
        %v7563 = vrot.slane %v6272, 4
        %v7564 = vsel %vm2118, %v6276, %v7563
        %v7566 = vunpack.c.l.s4 1983009808
        %v7567 = vunpack.c.0.s8 %v7566
        %v7568 = vperm.slane %v7562, %v7567
        %v7570 = vunpack.c.l.s4 1983009808
        %v7571 = vunpack.c.0.s8 %v7570
        %v7572 = vperm.slane %v7564, %v7571
        %v7573 = vrot.slane %v6282, 4
        %v7574 = vsel %vm2118, %v7573, %v6278
        %v7575 = vrot.slane %v6278, 4
        %v7576 = vsel %vm2118, %v6282, %v7575
        %v7578 = vunpack.c.l.s4 1983009808
        %v7579 = vunpack.c.0.s8 %v7578
        %v7580 = vperm.slane %v7574, %v7579
        %v7582 = vunpack.c.l.s4 1983009808
        %v7583 = vunpack.c.0.s8 %v7582
        %v7584 = vperm.slane %v7576, %v7583
        %v7585 = vrot.slane %v6284, 4
        %v7586 = vsel %vm2118, %v7585, %v6280
        %v7587 = vrot.slane %v6280, 4
        %v7588 = vsel %vm2118, %v6284, %v7587
        %v7590 = vunpack.c.l.s4 1983009808
        %v7591 = vunpack.c.0.s8 %v7590
        %v7592 = vperm.slane %v7586, %v7591
        %v7594 = vunpack.c.l.s4 1983009808
        %v7595 = vunpack.c.0.s8 %v7594
        %v7596 = vperm.slane %v7588, %v7595
        %v7597 = vrot.slane %v7568, 4
        %v7598 = vsel %vm2118, %v7597, %v7556
        %v7599 = vrot.slane %v7556, 4
        %v7600 = vsel %vm2118, %v7568, %v7599
        %v7602 = vunpack.c.l.s4 1934713408
        %v7603 = vunpack.c.0.s8 %v7602
        %v7604 = vperm.slane %v7598, %v7603
        %v7606 = vunpack.c.l.s4 1934713408
        %v7607 = vunpack.c.0.s8 %v7606
        %v7608 = vperm.slane %v7600, %v7607
        %v7609 = vrot.slane %v7572, 4
        %v7610 = vsel %vm2118, %v7609, %v7560
        %v7611 = vrot.slane %v7560, 4
        %v7612 = vsel %vm2118, %v7572, %v7611
        %v7614 = vunpack.c.l.s4 1934713408
        %v7615 = vunpack.c.0.s8 %v7614
        %v7616 = vperm.slane %v7610, %v7615
        %v7618 = vunpack.c.l.s4 1934713408
        %v7619 = vunpack.c.0.s8 %v7618
        %v7620 = vperm.slane %v7612, %v7619
        %v7621 = vrot.slane %v7592, 4
        %v7622 = vsel %vm2118, %v7621, %v7580
        %v7623 = vrot.slane %v7580, 4
        %v7624 = vsel %vm2118, %v7592, %v7623
        %v7626 = vunpack.c.l.s4 1934713408
        %v7627 = vunpack.c.0.s8 %v7626
        %v7628 = vperm.slane %v7622, %v7627
        %v7630 = vunpack.c.l.s4 1934713408
        %v7631 = vunpack.c.0.s8 %v7630
        %v7632 = vperm.slane %v7624, %v7631
        %v7633 = vrot.slane %v7596, 4
        %v7634 = vsel %vm2118, %v7633, %v7584
        %v7635 = vrot.slane %v7584, 4
        %v7636 = vsel %vm2118, %v7596, %v7635
        %v7638 = vunpack.c.l.s4 1934713408
        %v7639 = vunpack.c.0.s8 %v7638
        %v7640 = vperm.slane %v7634, %v7639
        %v7642 = vunpack.c.l.s4 1934713408
        %v7643 = vunpack.c.0.s8 %v7642
        %v7644 = vperm.slane %v7636, %v7643
        %v7645 = vrot.slane %v7628, 4
        %v7646 = vsel %vm2118, %v7645, %v7604
        %v7647 = vrot.slane %v7604, 4
        %v7648 = vsel %vm2118, %v7628, %v7647
        %v7649 = vrot.slane %v7632, 4
        %v7650 = vsel %vm2118, %v7649, %v7608
        %v7651 = vrot.slane %v7608, 4
        %v7652 = vsel %vm2118, %v7632, %v7651
        %v7653 = vrot.slane %v7640, 4
        %v7654 = vsel %vm2118, %v7653, %v7616
        %v7655 = vrot.slane %v7616, 4
        %v7656 = vsel %vm2118, %v7640, %v7655
        %v7657 = vrot.slane %v7644, 4
        %v7658 = vsel %vm2118, %v7657, %v7620
        %v7659 = vrot.slane %v7620, 4
        %v7660 = vsel %vm2118, %v7644, %v7659
        %v7661 = vrot.slane %v6289, 4
        %v7662 = vsel %vm2118, %v7661, %v6285
        %v7663 = vrot.slane %v6285, 4
        %v7664 = vsel %vm2118, %v6289, %v7663
        %v7666 = vunpack.c.l.s4 1983009808
        %v7667 = vunpack.c.0.s8 %v7666
        %v7668 = vperm.slane %v7662, %v7667
        %v7670 = vunpack.c.l.s4 1983009808
        %v7671 = vunpack.c.0.s8 %v7670
        %v7672 = vperm.slane %v7664, %v7671
        %v7673 = vrot.slane %v6291, 4
        %v7674 = vsel %vm2118, %v7673, %v6287
        %v7675 = vrot.slane %v6287, 4
        %v7676 = vsel %vm2118, %v6291, %v7675
        %v7678 = vunpack.c.l.s4 1983009808
        %v7679 = vunpack.c.0.s8 %v7678
        %v7680 = vperm.slane %v7674, %v7679
        %v7682 = vunpack.c.l.s4 1983009808
        %v7683 = vunpack.c.0.s8 %v7682
        %v7684 = vperm.slane %v7676, %v7683
        %v7685 = vrot.slane %v6297, 4
        %v7686 = vsel %vm2118, %v7685, %v6293
        %v7687 = vrot.slane %v6293, 4
        %v7688 = vsel %vm2118, %v6297, %v7687
        %v7690 = vunpack.c.l.s4 1983009808
        %v7691 = vunpack.c.0.s8 %v7690
        %v7692 = vperm.slane %v7686, %v7691
        %v7694 = vunpack.c.l.s4 1983009808
        %v7695 = vunpack.c.0.s8 %v7694
        %v7696 = vperm.slane %v7688, %v7695
        %v7697 = vrot.slane %v6299, 4
        %v7698 = vsel %vm2118, %v7697, %v6295
        %v7699 = vrot.slane %v6295, 4
        %v7700 = vsel %vm2118, %v6299, %v7699
        %v7702 = vunpack.c.l.s4 1983009808
        %v7703 = vunpack.c.0.s8 %v7702
        %v7704 = vperm.slane %v7698, %v7703
        %v7706 = vunpack.c.l.s4 1983009808
        %v7707 = vunpack.c.0.s8 %v7706
        %v7708 = vperm.slane %v7700, %v7707
        %v7709 = vrot.slane %v7680, 4
        %v7710 = vsel %vm2118, %v7709, %v7668
        %v7711 = vrot.slane %v7668, 4
        %v7712 = vsel %vm2118, %v7680, %v7711
        %v7714 = vunpack.c.l.s4 1934713408
        %v7715 = vunpack.c.0.s8 %v7714
        %v7716 = vperm.slane %v7710, %v7715
        %v7718 = vunpack.c.l.s4 1934713408
        %v7719 = vunpack.c.0.s8 %v7718
        %v7720 = vperm.slane %v7712, %v7719
        %v7721 = vrot.slane %v7684, 4
        %v7722 = vsel %vm2118, %v7721, %v7672
        %v7723 = vrot.slane %v7672, 4
        %v7724 = vsel %vm2118, %v7684, %v7723
        %v7726 = vunpack.c.l.s4 1934713408
        %v7727 = vunpack.c.0.s8 %v7726
        %v7728 = vperm.slane %v7722, %v7727
        %v7730 = vunpack.c.l.s4 1934713408
        %v7731 = vunpack.c.0.s8 %v7730
        %v7732 = vperm.slane %v7724, %v7731
        %v7733 = vrot.slane %v7704, 4
        %v7734 = vsel %vm2118, %v7733, %v7692
        %v7735 = vrot.slane %v7692, 4
        %v7736 = vsel %vm2118, %v7704, %v7735
        %v7738 = vunpack.c.l.s4 1934713408
        %v7739 = vunpack.c.0.s8 %v7738
        %v7740 = vperm.slane %v7734, %v7739
        %v7742 = vunpack.c.l.s4 1934713408
        %v7743 = vunpack.c.0.s8 %v7742
        %v7744 = vperm.slane %v7736, %v7743
        %v7745 = vrot.slane %v7708, 4
        %v7746 = vsel %vm2118, %v7745, %v7696
        %v7747 = vrot.slane %v7696, 4
        %v7748 = vsel %vm2118, %v7708, %v7747
        %v7750 = vunpack.c.l.s4 1934713408
        %v7751 = vunpack.c.0.s8 %v7750
        %v7752 = vperm.slane %v7746, %v7751
        %v7754 = vunpack.c.l.s4 1934713408
        %v7755 = vunpack.c.0.s8 %v7754
        %v7756 = vperm.slane %v7748, %v7755
        %v7757 = vrot.slane %v7740, 4
        %v7758 = vsel %vm2118, %v7757, %v7716
        %v7759 = vrot.slane %v7716, 4
        %v7760 = vsel %vm2118, %v7740, %v7759
        %v7761 = vrot.slane %v7744, 4
        %v7762 = vsel %vm2118, %v7761, %v7720
        %v7763 = vrot.slane %v7720, 4
        %v7764 = vsel %vm2118, %v7744, %v7763
        %v7765 = vrot.slane %v7752, 4
        %v7766 = vsel %vm2118, %v7765, %v7728
        %v7767 = vrot.slane %v7728, 4
        %v7768 = vsel %vm2118, %v7752, %v7767
        %v7769 = vrot.slane %v7756, 4
        %v7770 = vsel %vm2118, %v7769, %v7732
        %v7771 = vrot.slane %v7732, 4
        %v7772 = vsel %vm2118, %v7756, %v7771
        %v7773 = vrot.slane %v6305, 4
        %v7774 = vsel %vm2118, %v7773, %v6301
        %v7775 = vrot.slane %v6301, 4
        %v7776 = vsel %vm2118, %v6305, %v7775
        %v7778 = vunpack.c.l.s4 1983009808
        %v7779 = vunpack.c.0.s8 %v7778
        %v7780 = vperm.slane %v7774, %v7779
        %v7782 = vunpack.c.l.s4 1983009808
        %v7783 = vunpack.c.0.s8 %v7782
        %v7784 = vperm.slane %v7776, %v7783
        %v7785 = vrot.slane %v6307, 4
        %v7786 = vsel %vm2118, %v7785, %v6303
        %v7787 = vrot.slane %v6303, 4
        %v7788 = vsel %vm2118, %v6307, %v7787
        %v7790 = vunpack.c.l.s4 1983009808
        %v7791 = vunpack.c.0.s8 %v7790
        %v7792 = vperm.slane %v7786, %v7791
        %v7794 = vunpack.c.l.s4 1983009808
        %v7795 = vunpack.c.0.s8 %v7794
        %v7796 = vperm.slane %v7788, %v7795
        %v7797 = vrot.slane %v6313, 4
        %v7798 = vsel %vm2118, %v7797, %v6309
        %v7799 = vrot.slane %v6309, 4
        %v7800 = vsel %vm2118, %v6313, %v7799
        %v7802 = vunpack.c.l.s4 1983009808
        %v7803 = vunpack.c.0.s8 %v7802
        %v7804 = vperm.slane %v7798, %v7803
        %v7806 = vunpack.c.l.s4 1983009808
        %v7807 = vunpack.c.0.s8 %v7806
        %v7808 = vperm.slane %v7800, %v7807
        %v7809 = vrot.slane %v6315, 4
        %v7810 = vsel %vm2118, %v7809, %v6311
        %v7811 = vrot.slane %v6311, 4
        %v7812 = vsel %vm2118, %v6315, %v7811
        %v7814 = vunpack.c.l.s4 1983009808
        %v7815 = vunpack.c.0.s8 %v7814
        %v7816 = vperm.slane %v7810, %v7815
        %v7818 = vunpack.c.l.s4 1983009808
        %v7819 = vunpack.c.0.s8 %v7818
        %v7820 = vperm.slane %v7812, %v7819
        %v7821 = vrot.slane %v7792, 4
        %v7822 = vsel %vm2118, %v7821, %v7780
        %v7823 = vrot.slane %v7780, 4
        %v7824 = vsel %vm2118, %v7792, %v7823
        %v7826 = vunpack.c.l.s4 1934713408
        %v7827 = vunpack.c.0.s8 %v7826
        %v7828 = vperm.slane %v7822, %v7827
        %v7830 = vunpack.c.l.s4 1934713408
        %v7831 = vunpack.c.0.s8 %v7830
        %v7832 = vperm.slane %v7824, %v7831
        %v7833 = vrot.slane %v7796, 4
        %v7834 = vsel %vm2118, %v7833, %v7784
        %v7835 = vrot.slane %v7784, 4
        %v7836 = vsel %vm2118, %v7796, %v7835
        %v7838 = vunpack.c.l.s4 1934713408
        %v7839 = vunpack.c.0.s8 %v7838
        %v7840 = vperm.slane %v7834, %v7839
        %v7842 = vunpack.c.l.s4 1934713408
        %v7843 = vunpack.c.0.s8 %v7842
        %v7844 = vperm.slane %v7836, %v7843
        %v7845 = vrot.slane %v7816, 4
        %v7846 = vsel %vm2118, %v7845, %v7804
        %v7847 = vrot.slane %v7804, 4
        %v7848 = vsel %vm2118, %v7816, %v7847
        %v7850 = vunpack.c.l.s4 1934713408
        %v7851 = vunpack.c.0.s8 %v7850
        %v7852 = vperm.slane %v7846, %v7851
        %v7854 = vunpack.c.l.s4 1934713408
        %v7855 = vunpack.c.0.s8 %v7854
        %v7856 = vperm.slane %v7848, %v7855
        %v7857 = vrot.slane %v7820, 4
        %v7858 = vsel %vm2118, %v7857, %v7808
        %v7859 = vrot.slane %v7808, 4
        %v7860 = vsel %vm2118, %v7820, %v7859
        %v7862 = vunpack.c.l.s4 1934713408
        %v7863 = vunpack.c.0.s8 %v7862
        %v7864 = vperm.slane %v7858, %v7863
        %v7866 = vunpack.c.l.s4 1934713408
        %v7867 = vunpack.c.0.s8 %v7866
        %v7868 = vperm.slane %v7860, %v7867
        %v7869 = vrot.slane %v7852, 4
        %v7870 = vsel %vm2118, %v7869, %v7828
        %v7871 = vrot.slane %v7828, 4
        %v7872 = vsel %vm2118, %v7852, %v7871
        %v7873 = vrot.slane %v7856, 4
        %v7874 = vsel %vm2118, %v7873, %v7832
        %v7875 = vrot.slane %v7832, 4
        %v7876 = vsel %vm2118, %v7856, %v7875
        %v7877 = vrot.slane %v7864, 4
        %v7878 = vsel %vm2118, %v7877, %v7840
        %v7879 = vrot.slane %v7840, 4
        %v7880 = vsel %vm2118, %v7864, %v7879
        %v7881 = vrot.slane %v7868, 4
        %v7882 = vsel %vm2118, %v7881, %v7844
        %v7883 = vrot.slane %v7844, 4
        %v7884 = vsel %vm2118, %v7868, %v7883
        %v7885 = vrot.slane %v6290, 4
        %v7886 = vsel %vm2118, %v7885, %v6286
        %v7887 = vrot.slane %v6286, 4
        %v7888 = vsel %vm2118, %v6290, %v7887
        %v7890 = vunpack.c.l.s4 1983009808
        %v7891 = vunpack.c.0.s8 %v7890
        %v7892 = vperm.slane %v7886, %v7891
        %v7894 = vunpack.c.l.s4 1983009808
        %v7895 = vunpack.c.0.s8 %v7894
        %v7896 = vperm.slane %v7888, %v7895
        %v7897 = vrot.slane %v6292, 4
        %v7898 = vsel %vm2118, %v7897, %v6288
        %v7899 = vrot.slane %v6288, 4
        %v7900 = vsel %vm2118, %v6292, %v7899
        %v7902 = vunpack.c.l.s4 1983009808
        %v7903 = vunpack.c.0.s8 %v7902
        %v7904 = vperm.slane %v7898, %v7903
        %v7906 = vunpack.c.l.s4 1983009808
        %v7907 = vunpack.c.0.s8 %v7906
        %v7908 = vperm.slane %v7900, %v7907
        %v7909 = vrot.slane %v6298, 4
        %v7910 = vsel %vm2118, %v7909, %v6294
        %v7911 = vrot.slane %v6294, 4
        %v7912 = vsel %vm2118, %v6298, %v7911
        %v7914 = vunpack.c.l.s4 1983009808
        %v7915 = vunpack.c.0.s8 %v7914
        %v7916 = vperm.slane %v7910, %v7915
        %v7918 = vunpack.c.l.s4 1983009808
        %v7919 = vunpack.c.0.s8 %v7918
        %v7920 = vperm.slane %v7912, %v7919
        %v7921 = vrot.slane %v6300, 4
        %v7922 = vsel %vm2118, %v7921, %v6296
        %v7923 = vrot.slane %v6296, 4
        %v7924 = vsel %vm2118, %v6300, %v7923
        %v7926 = vunpack.c.l.s4 1983009808
        %v7927 = vunpack.c.0.s8 %v7926
        %v7928 = vperm.slane %v7922, %v7927
        %v7930 = vunpack.c.l.s4 1983009808
        %v7931 = vunpack.c.0.s8 %v7930
        %v7932 = vperm.slane %v7924, %v7931
        %v7933 = vrot.slane %v7904, 4
        %v7934 = vsel %vm2118, %v7933, %v7892
        %v7935 = vrot.slane %v7892, 4
        %v7936 = vsel %vm2118, %v7904, %v7935
        %v7938 = vunpack.c.l.s4 1934713408
        %v7939 = vunpack.c.0.s8 %v7938
        %v7940 = vperm.slane %v7934, %v7939
        %v7942 = vunpack.c.l.s4 1934713408
        %v7943 = vunpack.c.0.s8 %v7942
        %v7944 = vperm.slane %v7936, %v7943
        %v7945 = vrot.slane %v7908, 4
        %v7946 = vsel %vm2118, %v7945, %v7896
        %v7947 = vrot.slane %v7896, 4
        %v7948 = vsel %vm2118, %v7908, %v7947
        %v7950 = vunpack.c.l.s4 1934713408
        %v7951 = vunpack.c.0.s8 %v7950
        %v7952 = vperm.slane %v7946, %v7951
        %v7954 = vunpack.c.l.s4 1934713408
        %v7955 = vunpack.c.0.s8 %v7954
        %v7956 = vperm.slane %v7948, %v7955
        %v7957 = vrot.slane %v7928, 4
        %v7958 = vsel %vm2118, %v7957, %v7916
        %v7959 = vrot.slane %v7916, 4
        %v7960 = vsel %vm2118, %v7928, %v7959
        %v7962 = vunpack.c.l.s4 1934713408
        %v7963 = vunpack.c.0.s8 %v7962
        %v7964 = vperm.slane %v7958, %v7963
        %v7966 = vunpack.c.l.s4 1934713408
        %v7967 = vunpack.c.0.s8 %v7966
        %v7968 = vperm.slane %v7960, %v7967
        %v7969 = vrot.slane %v7932, 4
        %v7970 = vsel %vm2118, %v7969, %v7920
        %v7971 = vrot.slane %v7920, 4
        %v7972 = vsel %vm2118, %v7932, %v7971
        %v7974 = vunpack.c.l.s4 1934713408
        %v7975 = vunpack.c.0.s8 %v7974
        %v7976 = vperm.slane %v7970, %v7975
        %v7978 = vunpack.c.l.s4 1934713408
        %v7979 = vunpack.c.0.s8 %v7978
        %v7980 = vperm.slane %v7972, %v7979
        %v7981 = vrot.slane %v7964, 4
        %v7982 = vsel %vm2118, %v7981, %v7940
        %v7983 = vrot.slane %v7940, 4
        %v7984 = vsel %vm2118, %v7964, %v7983
        %v7985 = vrot.slane %v7968, 4
        %v7986 = vsel %vm2118, %v7985, %v7944
        %v7987 = vrot.slane %v7944, 4
        %v7988 = vsel %vm2118, %v7968, %v7987
        %v7989 = vrot.slane %v7976, 4
        %v7990 = vsel %vm2118, %v7989, %v7952
        %v7991 = vrot.slane %v7952, 4
        %v7992 = vsel %vm2118, %v7976, %v7991
        %v7993 = vrot.slane %v7980, 4
        %v7994 = vsel %vm2118, %v7993, %v7956
        %v7995 = vrot.slane %v7956, 4
        %v7996 = vsel %vm2118, %v7980, %v7995
        %v7997 = vrot.slane %v6306, 4
        %v7998 = vsel %vm2118, %v7997, %v6302
        %v7999 = vrot.slane %v6302, 4
        %v8000 = vsel %vm2118, %v6306, %v7999
        %v8002 = vunpack.c.l.s4 1983009808
        %v8003 = vunpack.c.0.s8 %v8002
        %v8004 = vperm.slane %v7998, %v8003
        %v8006 = vunpack.c.l.s4 1983009808
        %v8007 = vunpack.c.0.s8 %v8006
        %v8008 = vperm.slane %v8000, %v8007
        %v8009 = vrot.slane %v6308, 4
        %v8010 = vsel %vm2118, %v8009, %v6304
        %v8011 = vrot.slane %v6304, 4
        %v8012 = vsel %vm2118, %v6308, %v8011
        %v8014 = vunpack.c.l.s4 1983009808
        %v8015 = vunpack.c.0.s8 %v8014
        %v8016 = vperm.slane %v8010, %v8015
        %v8018 = vunpack.c.l.s4 1983009808
        %v8019 = vunpack.c.0.s8 %v8018
        %v8020 = vperm.slane %v8012, %v8019
        %v8021 = vrot.slane %v6314, 4
        %v8022 = vsel %vm2118, %v8021, %v6310
        %v8023 = vrot.slane %v6310, 4
        %v8024 = vsel %vm2118, %v6314, %v8023
        %v8026 = vunpack.c.l.s4 1983009808
        %v8027 = vunpack.c.0.s8 %v8026
        %v8028 = vperm.slane %v8022, %v8027
        %v8030 = vunpack.c.l.s4 1983009808
        %v8031 = vunpack.c.0.s8 %v8030
        %v8032 = vperm.slane %v8024, %v8031
        %v8033 = vrot.slane %v6316, 4
        %v8034 = vsel %vm2118, %v8033, %v6312
        %v8035 = vrot.slane %v6312, 4
        %v8036 = vsel %vm2118, %v6316, %v8035
        %v8038 = vunpack.c.l.s4 1983009808
        %v8039 = vunpack.c.0.s8 %v8038
        %v8040 = vperm.slane %v8034, %v8039
        %v8042 = vunpack.c.l.s4 1983009808
        %v8043 = vunpack.c.0.s8 %v8042
        %v8044 = vperm.slane %v8036, %v8043
        %v8045 = vrot.slane %v8016, 4
        %v8046 = vsel %vm2118, %v8045, %v8004
        %v8047 = vrot.slane %v8004, 4
        %v8048 = vsel %vm2118, %v8016, %v8047
        %v8050 = vunpack.c.l.s4 1934713408
        %v8051 = vunpack.c.0.s8 %v8050
        %v8052 = vperm.slane %v8046, %v8051
        %v8054 = vunpack.c.l.s4 1934713408
        %v8055 = vunpack.c.0.s8 %v8054
        %v8056 = vperm.slane %v8048, %v8055
        %v8057 = vrot.slane %v8020, 4
        %v8058 = vsel %vm2118, %v8057, %v8008
        %v8059 = vrot.slane %v8008, 4
        %v8060 = vsel %vm2118, %v8020, %v8059
        %v8062 = vunpack.c.l.s4 1934713408
        %v8063 = vunpack.c.0.s8 %v8062
        %v8064 = vperm.slane %v8058, %v8063
        %v8066 = vunpack.c.l.s4 1934713408
        %v8067 = vunpack.c.0.s8 %v8066
        %v8068 = vperm.slane %v8060, %v8067
        %v8069 = vrot.slane %v8040, 4
        %v8070 = vsel %vm2118, %v8069, %v8028
        %v8071 = vrot.slane %v8028, 4
        %v8072 = vsel %vm2118, %v8040, %v8071
        %v8074 = vunpack.c.l.s4 1934713408
        %v8075 = vunpack.c.0.s8 %v8074
        %v8076 = vperm.slane %v8070, %v8075
        %v8078 = vunpack.c.l.s4 1934713408
        %v8079 = vunpack.c.0.s8 %v8078
        %v8080 = vperm.slane %v8072, %v8079
        %v8081 = vrot.slane %v8044, 4
        %v8082 = vsel %vm2118, %v8081, %v8032
        %v8083 = vrot.slane %v8032, 4
        %v8084 = vsel %vm2118, %v8044, %v8083
        %v8086 = vunpack.c.l.s4 1934713408
        %v8087 = vunpack.c.0.s8 %v8086
        %v8088 = vperm.slane %v8082, %v8087
        %v8090 = vunpack.c.l.s4 1934713408
        %v8091 = vunpack.c.0.s8 %v8090
        %v8092 = vperm.slane %v8084, %v8091
        %v8093 = vrot.slane %v8076, 4
        %v8094 = vsel %vm2118, %v8093, %v8052
        %v8095 = vrot.slane %v8052, 4
        %v8096 = vsel %vm2118, %v8076, %v8095
        %v8097 = vrot.slane %v8080, 4
        %v8098 = vsel %vm2118, %v8097, %v8056
        %v8099 = vrot.slane %v8056, 4
        %v8100 = vsel %vm2118, %v8080, %v8099
        %v8101 = vrot.slane %v8088, 4
        %v8102 = vsel %vm2118, %v8101, %v8064
        %v8103 = vrot.slane %v8064, 4
        %v8104 = vsel %vm2118, %v8088, %v8103
        %v8105 = vrot.slane %v8092, 4
        %v8106 = vsel %vm2118, %v8105, %v8068
        %v8107 = vrot.slane %v8068, 4
        %v8108 = vsel %vm2118, %v8092, %v8107
        %8117 = vrot.lane.b32.xlu0 %v6416, 2
        %v8118 = vpop.permute.xlu0 %8117
        %8119 = vrot.lane.b32.xlu0 %v6528, 2
        %v8120 = vpop.permute.xlu0 %8119
        %8121 = vrot.lane.b32.xlu0 %v6864, 2
        %v8122 = vpop.permute.xlu0 %8121
        %8123 = vrot.lane.b32.xlu0 %v6976, 2
        %v8124 = vpop.permute.xlu0 %8123
        %8125 = vrot.lane.b32.xlu0 %v7312, 2
        %v8126 = vpop.permute.xlu0 %8125
        %8127 = vrot.lane.b32.xlu0 %v7424, 2
        %v8128 = vpop.permute.xlu0 %8127
        %8129 = vrot.lane.b32.xlu0 %v7760, 2
        %v8130 = vpop.permute.xlu0 %8129
        %8131 = vrot.lane.b32.xlu0 %v7872, 2
        %v8132 = vpop.permute.xlu0 %8131
        %8149 = vrot.lane.b32.xlu0 %v6418, 4
        %v8150 = vpop.permute.xlu0 %8149
        %8151 = vrot.lane.b32.xlu0 %v6530, 4
        %v8152 = vpop.permute.xlu0 %8151
        %8153 = vrot.lane.b32.xlu0 %v6866, 4
        %v8154 = vpop.permute.xlu0 %8153
        %8155 = vrot.lane.b32.xlu0 %v6978, 4
        %v8156 = vpop.permute.xlu0 %8155
        %8157 = vrot.lane.b32.xlu0 %v7314, 4
        %v8158 = vpop.permute.xlu0 %8157
        %8159 = vrot.lane.b32.xlu0 %v7426, 4
        %v8160 = vpop.permute.xlu0 %8159
        %8161 = vrot.lane.b32.xlu0 %v7762, 4
        %v8162 = vpop.permute.xlu0 %8161
        %8163 = vrot.lane.b32.xlu0 %v7874, 4
        %v8164 = vpop.permute.xlu0 %8163
        %8181 = vrot.lane.b32.xlu0 %v6420, 6
        %v8182 = vpop.permute.xlu0 %8181
        %8183 = vrot.lane.b32.xlu0 %v6532, 6
        %v8184 = vpop.permute.xlu0 %8183
        %8185 = vrot.lane.b32.xlu0 %v6868, 6
        %v8186 = vpop.permute.xlu0 %8185
        %8187 = vrot.lane.b32.xlu0 %v6980, 6
        %v8188 = vpop.permute.xlu0 %8187
        %8189 = vrot.lane.b32.xlu0 %v7316, 6
        %v8190 = vpop.permute.xlu0 %8189
        %8191 = vrot.lane.b32.xlu0 %v7428, 6
        %v8192 = vpop.permute.xlu0 %8191
        %8193 = vrot.lane.b32.xlu0 %v7764, 6
        %v8194 = vpop.permute.xlu0 %8193
        %8195 = vrot.lane.b32.xlu0 %v7876, 6
        %v8196 = vpop.permute.xlu0 %8195
        %8213 = vrot.lane.b32.xlu0 %v6422, 8
        %v8214 = vpop.permute.xlu0 %8213
        %8215 = vrot.lane.b32.xlu0 %v6534, 8
        %v8216 = vpop.permute.xlu0 %8215
        %8217 = vrot.lane.b32.xlu0 %v6870, 8
        %v8218 = vpop.permute.xlu0 %8217
        %8219 = vrot.lane.b32.xlu0 %v6982, 8
        %v8220 = vpop.permute.xlu0 %8219
        %8221 = vrot.lane.b32.xlu0 %v7318, 8
        %v8222 = vpop.permute.xlu0 %8221
        %8223 = vrot.lane.b32.xlu0 %v7430, 8
        %v8224 = vpop.permute.xlu0 %8223
        %8225 = vrot.lane.b32.xlu0 %v7766, 8
        %v8226 = vpop.permute.xlu0 %8225
        %8227 = vrot.lane.b32.xlu0 %v7878, 8
        %v8228 = vpop.permute.xlu0 %8227
        %8245 = vrot.lane.b32.xlu0 %v6424, 10
        %v8246 = vpop.permute.xlu0 %8245
        %8247 = vrot.lane.b32.xlu0 %v6536, 10
        %v8248 = vpop.permute.xlu0 %8247
        %8249 = vrot.lane.b32.xlu0 %v6872, 10
        %v8250 = vpop.permute.xlu0 %8249
        %8251 = vrot.lane.b32.xlu0 %v6984, 10
        %v8252 = vpop.permute.xlu0 %8251
        %8253 = vrot.lane.b32.xlu0 %v7320, 10
        %v8254 = vpop.permute.xlu0 %8253
        %8255 = vrot.lane.b32.xlu0 %v7432, 10
        %v8256 = vpop.permute.xlu0 %8255
        %8257 = vrot.lane.b32.xlu0 %v7768, 10
        %v8258 = vpop.permute.xlu0 %8257
        %8259 = vrot.lane.b32.xlu0 %v7880, 10
        %v8260 = vpop.permute.xlu0 %8259
        %8277 = vrot.lane.b32.xlu0 %v6426, 12
        %v8278 = vpop.permute.xlu0 %8277
        %8279 = vrot.lane.b32.xlu0 %v6538, 12
        %v8280 = vpop.permute.xlu0 %8279
        %8281 = vrot.lane.b32.xlu0 %v6874, 12
        %v8282 = vpop.permute.xlu0 %8281
        %8283 = vrot.lane.b32.xlu0 %v6986, 12
        %v8284 = vpop.permute.xlu0 %8283
        %8285 = vrot.lane.b32.xlu0 %v7322, 12
        %v8286 = vpop.permute.xlu0 %8285
        %8287 = vrot.lane.b32.xlu0 %v7434, 12
        %v8288 = vpop.permute.xlu0 %8287
        %8289 = vrot.lane.b32.xlu0 %v7770, 12
        %v8290 = vpop.permute.xlu0 %8289
        %8291 = vrot.lane.b32.xlu0 %v7882, 12
        %v8292 = vpop.permute.xlu0 %8291
        %8309 = vrot.lane.b32.xlu0 %v6428, 14
        %v8310 = vpop.permute.xlu0 %8309
        %8311 = vrot.lane.b32.xlu0 %v6540, 14
        %v8312 = vpop.permute.xlu0 %8311
        %8313 = vrot.lane.b32.xlu0 %v6876, 14
        %v8314 = vpop.permute.xlu0 %8313
        %8315 = vrot.lane.b32.xlu0 %v6988, 14
        %v8316 = vpop.permute.xlu0 %8315
        %8317 = vrot.lane.b32.xlu0 %v7324, 14
        %v8318 = vpop.permute.xlu0 %8317
        %8319 = vrot.lane.b32.xlu0 %v7436, 14
        %v8320 = vpop.permute.xlu0 %8319
        %8321 = vrot.lane.b32.xlu0 %v7772, 14
        %v8322 = vpop.permute.xlu0 %8321
        %8323 = vrot.lane.b32.xlu0 %v7884, 14
        %v8324 = vpop.permute.xlu0 %8323
        %8341 = vrot.lane.b32.xlu0 %v6638, 16
        %v8342 = vpop.permute.xlu0 %8341
        %8343 = vrot.lane.b32.xlu0 %v6750, 16
        %v8344 = vpop.permute.xlu0 %8343
        %8345 = vrot.lane.b32.xlu0 %v7086, 16
        %v8346 = vpop.permute.xlu0 %8345
        %8347 = vrot.lane.b32.xlu0 %v7198, 16
        %v8348 = vpop.permute.xlu0 %8347
        %8349 = vrot.lane.b32.xlu0 %v7534, 16
        %v8350 = vpop.permute.xlu0 %8349
        %8351 = vrot.lane.b32.xlu0 %v7646, 16
        %v8352 = vpop.permute.xlu0 %8351
        %8353 = vrot.lane.b32.xlu0 %v7982, 16
        %v8354 = vpop.permute.xlu0 %8353
        %8355 = vrot.lane.b32.xlu0 %v8094, 16
        %v8356 = vpop.permute.xlu0 %8355
        %8373 = vrot.lane.b32.xlu0 %v6640, 18
        %v8374 = vpop.permute.xlu0 %8373
        %8375 = vrot.lane.b32.xlu0 %v6752, 18
        %v8376 = vpop.permute.xlu0 %8375
        %8377 = vrot.lane.b32.xlu0 %v7088, 18
        %v8378 = vpop.permute.xlu0 %8377
        %8379 = vrot.lane.b32.xlu0 %v7200, 18
        %v8380 = vpop.permute.xlu0 %8379
        %8381 = vrot.lane.b32.xlu0 %v7536, 18
        %v8382 = vpop.permute.xlu0 %8381
        %8383 = vrot.lane.b32.xlu0 %v7648, 18
        %v8384 = vpop.permute.xlu0 %8383
        %8385 = vrot.lane.b32.xlu0 %v7984, 18
        %v8386 = vpop.permute.xlu0 %8385
        %8387 = vrot.lane.b32.xlu0 %v8096, 18
        %v8388 = vpop.permute.xlu0 %8387
        %8405 = vrot.lane.b32.xlu0 %v6642, 20
        %v8406 = vpop.permute.xlu0 %8405
        %8407 = vrot.lane.b32.xlu0 %v6754, 20
        %v8408 = vpop.permute.xlu0 %8407
        %8409 = vrot.lane.b32.xlu0 %v7090, 20
        %v8410 = vpop.permute.xlu0 %8409
        %8411 = vrot.lane.b32.xlu0 %v7202, 20
        %v8412 = vpop.permute.xlu0 %8411
        %8413 = vrot.lane.b32.xlu0 %v7538, 20
        %v8414 = vpop.permute.xlu0 %8413
        %8415 = vrot.lane.b32.xlu0 %v7650, 20
        %v8416 = vpop.permute.xlu0 %8415
        %8417 = vrot.lane.b32.xlu0 %v7986, 20
        %v8418 = vpop.permute.xlu0 %8417
        %8419 = vrot.lane.b32.xlu0 %v8098, 20
        %v8420 = vpop.permute.xlu0 %8419
        %8437 = vrot.lane.b32.xlu0 %v6644, 22
        %v8438 = vpop.permute.xlu0 %8437
        %8439 = vrot.lane.b32.xlu0 %v6756, 22
        %v8440 = vpop.permute.xlu0 %8439
        %8441 = vrot.lane.b32.xlu0 %v7092, 22
        %v8442 = vpop.permute.xlu0 %8441
        %8443 = vrot.lane.b32.xlu0 %v7204, 22
        %v8444 = vpop.permute.xlu0 %8443
        %8445 = vrot.lane.b32.xlu0 %v7540, 22
        %v8446 = vpop.permute.xlu0 %8445
        %8447 = vrot.lane.b32.xlu0 %v7652, 22
        %v8448 = vpop.permute.xlu0 %8447
        %8449 = vrot.lane.b32.xlu0 %v7988, 22
        %v8450 = vpop.permute.xlu0 %8449
        %8451 = vrot.lane.b32.xlu0 %v8100, 22
        %v8452 = vpop.permute.xlu0 %8451
        %8469 = vrot.lane.b32.xlu0 %v6646, 24
        %v8470 = vpop.permute.xlu0 %8469
        %8471 = vrot.lane.b32.xlu0 %v6758, 24
        %v8472 = vpop.permute.xlu0 %8471
        %8473 = vrot.lane.b32.xlu0 %v7094, 24
        %v8474 = vpop.permute.xlu0 %8473
        %8475 = vrot.lane.b32.xlu0 %v7206, 24
        %v8476 = vpop.permute.xlu0 %8475
        %8477 = vrot.lane.b32.xlu0 %v7542, 24
        %v8478 = vpop.permute.xlu0 %8477
        %8479 = vrot.lane.b32.xlu0 %v7654, 24
        %v8480 = vpop.permute.xlu0 %8479
        %8481 = vrot.lane.b32.xlu0 %v7990, 24
        %v8482 = vpop.permute.xlu0 %8481
        %8483 = vrot.lane.b32.xlu0 %v8102, 24
        %v8484 = vpop.permute.xlu0 %8483
        %8501 = vrot.lane.b32.xlu0 %v6648, 26
        %v8502 = vpop.permute.xlu0 %8501
        %8503 = vrot.lane.b32.xlu0 %v6760, 26
        %v8504 = vpop.permute.xlu0 %8503
        %8505 = vrot.lane.b32.xlu0 %v7096, 26
        %v8506 = vpop.permute.xlu0 %8505
        %8507 = vrot.lane.b32.xlu0 %v7208, 26
        %v8508 = vpop.permute.xlu0 %8507
        %8509 = vrot.lane.b32.xlu0 %v7544, 26
        %v8510 = vpop.permute.xlu0 %8509
        %8511 = vrot.lane.b32.xlu0 %v7656, 26
        %v8512 = vpop.permute.xlu0 %8511
        %8513 = vrot.lane.b32.xlu0 %v7992, 26
        %v8514 = vpop.permute.xlu0 %8513
        %8515 = vrot.lane.b32.xlu0 %v8104, 26
        %v8516 = vpop.permute.xlu0 %8515
        %8533 = vrot.lane.b32.xlu0 %v6650, 28
        %v8534 = vpop.permute.xlu0 %8533
        %8535 = vrot.lane.b32.xlu0 %v6762, 28
        %v8536 = vpop.permute.xlu0 %8535
        %8537 = vrot.lane.b32.xlu0 %v7098, 28
        %v8538 = vpop.permute.xlu0 %8537
        %8539 = vrot.lane.b32.xlu0 %v7210, 28
        %v8540 = vpop.permute.xlu0 %8539
        %8541 = vrot.lane.b32.xlu0 %v7546, 28
        %v8542 = vpop.permute.xlu0 %8541
        %8543 = vrot.lane.b32.xlu0 %v7658, 28
        %v8544 = vpop.permute.xlu0 %8543
        %8545 = vrot.lane.b32.xlu0 %v7994, 28
        %v8546 = vpop.permute.xlu0 %8545
        %8547 = vrot.lane.b32.xlu0 %v8106, 28
        %v8548 = vpop.permute.xlu0 %8547
        %8565 = vrot.lane.b32.xlu0 %v6652, 30
        %v8566 = vpop.permute.xlu0 %8565
        %8567 = vrot.lane.b32.xlu0 %v6764, 30
        %v8568 = vpop.permute.xlu0 %8567
        %8569 = vrot.lane.b32.xlu0 %v7100, 30
        %v8570 = vpop.permute.xlu0 %8569
        %8571 = vrot.lane.b32.xlu0 %v7212, 30
        %v8572 = vpop.permute.xlu0 %8571
        %8573 = vrot.lane.b32.xlu0 %v7548, 30
        %v8574 = vpop.permute.xlu0 %8573
        %8575 = vrot.lane.b32.xlu0 %v7660, 30
        %v8576 = vpop.permute.xlu0 %8575
        %8577 = vrot.lane.b32.xlu0 %v7996, 30
        %v8578 = vpop.permute.xlu0 %8577
        %8579 = vrot.lane.b32.xlu0 %v8108, 30
        %v8580 = vpop.permute.xlu0 %8579
        %v8589 = vsel %vm4390, %v6414, %v8118
        %v8590 = vsel %vm4390, %v6526, %v8120
        %v8591 = vsel %vm4390, %v6862, %v8122
        %v8592 = vsel %vm4390, %v6974, %v8124
        %v8593 = vsel %vm4390, %v7310, %v8126
        %v8594 = vsel %vm4390, %v7422, %v8128
        %v8595 = vsel %vm4390, %v7758, %v8130
        %v8596 = vsel %vm4390, %v7870, %v8132
        %v8597 = vsel %vm4399, %v8589, %v8150
        %v8598 = vsel %vm4399, %v8590, %v8152
        %v8599 = vsel %vm4399, %v8591, %v8154
        %v8600 = vsel %vm4399, %v8592, %v8156
        %v8601 = vsel %vm4399, %v8593, %v8158
        %v8602 = vsel %vm4399, %v8594, %v8160
        %v8603 = vsel %vm4399, %v8595, %v8162
        %v8604 = vsel %vm4399, %v8596, %v8164
        %v8605 = vsel %vm4408, %v8597, %v8182
        %v8606 = vsel %vm4408, %v8598, %v8184
        %v8607 = vsel %vm4408, %v8599, %v8186
        %v8608 = vsel %vm4408, %v8600, %v8188
        %v8609 = vsel %vm4408, %v8601, %v8190
        %v8610 = vsel %vm4408, %v8602, %v8192
        %v8611 = vsel %vm4408, %v8603, %v8194
        %v8612 = vsel %vm4408, %v8604, %v8196
        %v8613 = vsel %vm4417, %v8605, %v8214
        %v8614 = vsel %vm4417, %v8606, %v8216
        %v8615 = vsel %vm4417, %v8607, %v8218
        %v8616 = vsel %vm4417, %v8608, %v8220
        %v8617 = vsel %vm4417, %v8609, %v8222
        %v8618 = vsel %vm4417, %v8610, %v8224
        %v8619 = vsel %vm4417, %v8611, %v8226
        %v8620 = vsel %vm4417, %v8612, %v8228
        %v8621 = vsel %vm4426, %v8613, %v8246
        %v8622 = vsel %vm4426, %v8614, %v8248
        %v8623 = vsel %vm4426, %v8615, %v8250
        %v8624 = vsel %vm4426, %v8616, %v8252
        %v8625 = vsel %vm4426, %v8617, %v8254
        %v8626 = vsel %vm4426, %v8618, %v8256
        %v8627 = vsel %vm4426, %v8619, %v8258
        %v8628 = vsel %vm4426, %v8620, %v8260
        %v8629 = vsel %vm4435, %v8621, %v8278
        %v8630 = vsel %vm4435, %v8622, %v8280
        %v8631 = vsel %vm4435, %v8623, %v8282
        %v8632 = vsel %vm4435, %v8624, %v8284
        %v8633 = vsel %vm4435, %v8625, %v8286
        %v8634 = vsel %vm4435, %v8626, %v8288
        %v8635 = vsel %vm4435, %v8627, %v8290
        %v8636 = vsel %vm4435, %v8628, %v8292
        %v8637 = vsel %vm4444, %v8629, %v8310
        %v8638 = vsel %vm4444, %v8630, %v8312
        %v8639 = vsel %vm4444, %v8631, %v8314
        %v8640 = vsel %vm4444, %v8632, %v8316
        %v8641 = vsel %vm4444, %v8633, %v8318
        %v8642 = vsel %vm4444, %v8634, %v8320
        %v8643 = vsel %vm4444, %v8635, %v8322
        %v8644 = vsel %vm4444, %v8636, %v8324
        %v8645 = vsel %vm4453, %v8637, %v8342
        %v8646 = vsel %vm4453, %v8638, %v8344
        %v8647 = vsel %vm4453, %v8639, %v8346
        %v8648 = vsel %vm4453, %v8640, %v8348
        %v8649 = vsel %vm4453, %v8641, %v8350
        %v8650 = vsel %vm4453, %v8642, %v8352
        %v8651 = vsel %vm4453, %v8643, %v8354
        %v8652 = vsel %vm4453, %v8644, %v8356
        %v8653 = vsel %vm4462, %v8645, %v8374
        %v8654 = vsel %vm4462, %v8646, %v8376
        %v8655 = vsel %vm4462, %v8647, %v8378
        %v8656 = vsel %vm4462, %v8648, %v8380
        %v8657 = vsel %vm4462, %v8649, %v8382
        %v8658 = vsel %vm4462, %v8650, %v8384
        %v8659 = vsel %vm4462, %v8651, %v8386
        %v8660 = vsel %vm4462, %v8652, %v8388
        %v8661 = vsel %vm4471, %v8653, %v8406
        %v8662 = vsel %vm4471, %v8654, %v8408
        %v8663 = vsel %vm4471, %v8655, %v8410
        %v8664 = vsel %vm4471, %v8656, %v8412
        %v8665 = vsel %vm4471, %v8657, %v8414
        %v8666 = vsel %vm4471, %v8658, %v8416
        %v8667 = vsel %vm4471, %v8659, %v8418
        %v8668 = vsel %vm4471, %v8660, %v8420
        %v8669 = vsel %vm4480, %v8661, %v8438
        %v8670 = vsel %vm4480, %v8662, %v8440
        %v8671 = vsel %vm4480, %v8663, %v8442
        %v8672 = vsel %vm4480, %v8664, %v8444
        %v8673 = vsel %vm4480, %v8665, %v8446
        %v8674 = vsel %vm4480, %v8666, %v8448
        %v8675 = vsel %vm4480, %v8667, %v8450
        %v8676 = vsel %vm4480, %v8668, %v8452
        %v8677 = vsel %vm4489, %v8669, %v8470
        %v8678 = vsel %vm4489, %v8670, %v8472
        %v8679 = vsel %vm4489, %v8671, %v8474
        %v8680 = vsel %vm4489, %v8672, %v8476
        %v8681 = vsel %vm4489, %v8673, %v8478
        %v8682 = vsel %vm4489, %v8674, %v8480
        %v8683 = vsel %vm4489, %v8675, %v8482
        %v8684 = vsel %vm4489, %v8676, %v8484
        %v8685 = vsel %vm4498, %v8677, %v8502
        %v8686 = vsel %vm4498, %v8678, %v8504
        %v8687 = vsel %vm4498, %v8679, %v8506
        %v8688 = vsel %vm4498, %v8680, %v8508
        %v8689 = vsel %vm4498, %v8681, %v8510
        %v8690 = vsel %vm4498, %v8682, %v8512
        %v8691 = vsel %vm4498, %v8683, %v8514
        %v8692 = vsel %vm4498, %v8684, %v8516
        %v8693 = vsel %vm4507, %v8685, %v8534
        %v8694 = vsel %vm4507, %v8686, %v8536
        %v8695 = vsel %vm4507, %v8687, %v8538
        %v8696 = vsel %vm4507, %v8688, %v8540
        %v8697 = vsel %vm4507, %v8689, %v8542
        %v8698 = vsel %vm4507, %v8690, %v8544
        %v8699 = vsel %vm4507, %v8691, %v8546
        %v8700 = vsel %vm4507, %v8692, %v8548
        %v8701 = vsel %vm4516, %v8693, %v8566
        %v8702 = vsel %vm4516, %v8694, %v8568
        %v8703 = vsel %vm4516, %v8695, %v8570
        %v8704 = vsel %vm4516, %v8696, %v8572
        %v8705 = vsel %vm4516, %v8697, %v8574
        %v8706 = vsel %vm4516, %v8698, %v8576
        %v8707 = vsel %vm4516, %v8699, %v8578
        %v8708 = vsel %vm4516, %v8700, %v8580
        %8717 = vrot.lane.b32.xlu0 %v8701, 32
        %v8718 = vpop.permute.xlu0 %8717
        %8719 = vrot.lane.b32.xlu0 %v8702, 32
        %v8720 = vpop.permute.xlu0 %8719
        %8721 = vrot.lane.b32.xlu0 %v8703, 32
        %v8722 = vpop.permute.xlu0 %8721
        %8723 = vrot.lane.b32.xlu0 %v8704, 32
        %v8724 = vpop.permute.xlu0 %8723
        %8725 = vrot.lane.b32.xlu0 %v8705, 32
        %v8726 = vpop.permute.xlu0 %8725
        %8727 = vrot.lane.b32.xlu0 %v8706, 32
        %v8728 = vpop.permute.xlu0 %8727
        %8729 = vrot.lane.b32.xlu0 %v8707, 32
        %v8730 = vpop.permute.xlu0 %8729
        %8731 = vrot.lane.b32.xlu0 %v8708, 32
        %v8732 = vpop.permute.xlu0 %8731
        %vm8741 = vcmask 261120
        %v8742 = vsel %vm8741, %v4517, %v8718
        %v8743 = vsel %vm8741, %v4518, %v8720
        %v8744 = vsel %vm8741, %v4519, %v8722
        %v8745 = vsel %vm8741, %v4520, %v8724
        %v8746 = vsel %vm8741, %v4521, %v8726
        %v8747 = vsel %vm8741, %v4522, %v8728
        %v8748 = vsel %vm8741, %v4523, %v8730
        %v8749 = vsel %vm8741, %v4524, %v8732
        %vm8750 = vcmask 523264
        %8751 = vst.msk [vmem:[%s190] sm:$0xff] %vm8750, %v8742
        %8752 = vst.msk [vmem:[%s190 + $0x8] sm:$0xff] %vm8750, %v8743
        %8753 = vst.msk [vmem:[%s190 + $0x10] sm:$0xff] %vm8750, %v8744
        %8754 = vst.msk [vmem:[%s190 + $0x18] sm:$0xff] %vm8750, %v8745
        %8755 = vst.msk [vmem:[%s190 + $0x20] sm:$0xff] %vm8750, %v8746
        %8756 = vst.msk [vmem:[%s190 + $0x28] sm:$0xff] %vm8750, %v8747
        %8757 = vst.msk [vmem:[%s190 + $0x30] sm:$0xff] %vm8750, %v8748
        %8758 = vst.msk [vmem:[%s190 + $0x38] sm:$0xff] %vm8750, %v8749
        %s8759 = smul.u32 4, %s21
        %s8760 = smul.u32 2, %s22
        %p8761 = scmp.lt.s32.totalorder %s20, 1
        %s8762 = scalar_select %p8761, %s20, 1
        %p8763 = scmp.lt.s32.totalorder %s8759, 3
        %s8764 = scalar_select %p8763, %s8759, 3
        %p8765 = scmp.lt.s32.totalorder %s8760, 1
        %s8766 = scalar_select %p8765, %s8760, 1
        %s8767 = smul.addr %s8764, 2
        %s8768 = sadd.s32 %s8766, %s8767
        %s8769 = smul.addr %s8762, 8
        %s8770 = sadd.s32 %s8768, %s8769
        %s8771 = smul.addr %s8770, 8
        %s8772 = scalar_lea.vmem %s1, %s8771
        // Predicated region
        $region29: #{_iwt_fused.1} parent=23 // pred_check
          %p8773 = pneg %p86
        $region30: #{_iwt_fused.1} parent=23 // pred_check_branch
          %8775 = sbr.rel (%p8773) target = $region32
        $region31: #{_iwt_fused.1} parent=23 // pred_region
          %s8776 = smul.u32 4, %s21
          %s8777 = smul.u32 2, %s22
        $region32: #{_iwt_fused.1} parent=23 // pred_fallthru
          _
      $region24: #{_iwt_fused.1} parent=5 // pred_fallthru
        _
      %p8778 = scmp.le.s32.totalorder 2, %s10
      // Predicated region
      $region33: #{_iwt_fused.1} parent=5 // pred_check
        %p8779 = pneg %p8778
      $region34: #{_iwt_fused.1} parent=5 // pred_check_branch
        %8781 = sbr.rel (%p8779) target = $region36
      $region35: #{_iwt_fused.1} parent=5 // pred_region
        %s8782 = ssub.s32 %s10, 2
        // Predicated region
        $region37: #{_iwt_fused.1} parent=35 // pred_check
          %p8783 = pneg %p92
        $region38: #{_iwt_fused.1} parent=35 // pred_check_branch
          %8785 = sbr.rel (%p8783) target = $region40
        $region39: #{_iwt_fused.1} parent=35 // pred_region
          %s8786 = smul.u32 4, %s24
          %s8787 = smul.u32 2, %s25
          %p8788 = scmp.lt.s32.totalorder %s23, 1
          %s8789 = scalar_select %p8788, %s23, 1
          %p8790 = scmp.lt.s32.totalorder %s8786, 3
          %s8791 = scalar_select %p8790, %s8786, 3
          %p8792 = scmp.lt.s32.totalorder %s8787, 1
          %s8793 = scalar_select %p8792, %s8787, 1
          %s8794 = smul.addr %s8791, 2
          %s8795 = sadd.s32 %s8793, %s8794
          %s8796 = smul.addr %s8789, 8
          %s8797 = sadd.s32 %s8795, %s8796
          %s8798 = smul.addr %s8797, 8
          %s8799 = scalar_lea.vmem %s1, %s8798
        $region40: #{_iwt_fused.1} parent=35 // pred_fallthru
          _
      $region36: #{_iwt_fused.1} parent=5 // pred_fallthru
        _
    $region6: #{_iwt_fused.1} parent=1 // loop_footer
      %s14 = sadd.s32 1, %s10
    $region7: #{_iwt_fused.1} parent=1 // loop_footer_branch
      %9 = sbr.rel target = $region3
    $region8: #{_iwt_fused.1} parent=1 // loop_exit
      _
    %8800 = vsyncpa [#allocation3], 1
    %s8801 = scalar_lea.sflag [#allocation3], 1
    %8802 = vsyncpa %s8801, 1

// kernel: _iwt_planes.1
$region0: #{_iwt_planes.1}
  #allocation0 [shape = 'u32[]', space=smem, size = 0x4, offset = 0x4, fixed_abs, tag = 'smem constant byte address 0x4 - core index']
  #allocation1 [shape = 'u32[72,128]{1,0:T(1,128)}', space=vmem, size = 0x9000, scoped, tag = 'internal scratch']
  %s0 = inlined_call_operand.hbm [shape: f32[2,4,4,16,16], index: 0, kind: input, shape index: {}]
  %s1 = inlined_call_operand.vmem [shape: f32[2,4,16,16], index: 1, kind: output, shape index: {0}]
  %s2 = inlined_call_operand.vmem [shape: f32[2,4,16,16], index: 2, kind: output, shape index: {1}]
  %s3 = inlined_call_operand.vmem [shape: f32[2,4,16,16], index: 3, kind: output, shape index: {2}]
  %s4 = inlined_call_operand.vmem [shape: f32[2,4,16,16], index: 4, kind: output, shape index: {3}]
  %5 = xla_tuple %s1, %s2, %s3, %s4
  %s6 = sld [smem:[#allocation0]]
  $region65: #{_iwt_planes.1} parent=0
    _
  %s8 = ssub.s32 1, %s6
  %s9 = scalar_select 0, %s8, %s6
  $region1: #{_iwt_planes.1} parent=0
    #allocation2 [shape = 'u8[262144]{0}', space=vmem, size = 0x40000, scoped, tag = 'input window, operand 0']
    #allocation3 [shape = 's32[2]{0}', space=sflag, size = 0x8, scoped, tag = 'scoped memory for _iwt_planes.1']
    %10 = vsyncpa [#allocation3], 0
    %s11 = scalar_lea.sflag [#allocation3], 1
    %12 = vsyncpa %s11, 0
    loop: start=0, step=1, limit=4
    $region2: #{_iwt_planes.1} parent=1 // loop_pre_header
      _
    $region3: #{_iwt_planes.1} parent=1 // loop_header
      %s14 = sphi 0, %s18
      %p15 = scmp.ge.s32.totalorder %s14, 4
      %s21 = sphi 0, %s40
      %s22 = sphi 0, %s36
      %s23 = sphi 0, %s32
      %s24 = sphi 0, %s21
      %s25 = sphi 0, %s22
      %s26 = sphi 0, %s23
      %s27 = sphi 0, %s24
      %s28 = sphi 0, %s25
      %s29 = sphi 0, %s26
      %s47 = sphi 0, %s49
      %s50 = sphi 0, %s47
      %s51 = sphi 0, %s50
      %s67 = sphi 0, %s51
      %s77 = sphi 0, %s79
      %s80 = sphi 0, %s77
      %s81 = sphi 0, %s80
      %s97 = sphi 0, %s81
      %s107 = sphi 0, %s109
      %s110 = sphi 0, %s107
      %s111 = sphi 0, %s110
      %s127 = sphi 0, %s111
      %s137 = sphi 0, %s139
      %s140 = sphi 0, %s137
      %s141 = sphi 0, %s140
      %s157 = sphi 0, %s141
      %s167 = sphi 0, %s169
      %s170 = sphi 0, %s167
      %s171 = sphi 0, %s170
      %s187 = sphi 0, %s171
    $region4: #{_iwt_planes.1} parent=1 // loop_header_branch
      %17 = sbr.rel (%p15) target = $region8
    $region5: #{_iwt_planes.1} parent=1 // loop_body
      %s19 = ssub.s32 %s14, 1
      %s20 = ssub.s32 %s14, 2
      %s30 = sadd.s32 1, %s23
      %p31 = scmp.ge.s32.totalorder %s30, 1
      %s32 = scalar_select %p31, 0, %s30
      %s33 = sadd.s32 1, %s22
      %s34 = scalar_select %p31, %s33, %s22
      %p35 = scmp.ge.s32.totalorder %s34, 1
      %s36 = scalar_select %p35, 0, %s34
      %s37 = sadd.s32 1, %s21
      %s38 = scalar_select %p35, %s37, %s21
      %p39 = scmp.ge.s32.totalorder %s38, 2
      %s40 = scalar_select %p39, 0, %s38
      %s41 = ssub.s32 %s21, %s40
      %s42 = ssub.s32 %s22, %s36
      %s43 = sor.u32 %s41, %s42
      %s44 = ssub.s32 %s23, %s32
      %s45 = sor.u32 %s43, %s44
      %p46 = scmp.eq.s32.totalorder %s45, 0
      %s48 = sadd.s32 %s47, 1
      %s49 = scalar_select %p46, %s47, %s48
      %p52 = pneg %p46
      %p53 = scmp.eq.s32.totalorder %s14, 1
      %p54 = por %p52, %p53
      %p55 = scmp.ne.s32.totalorder %s47, %s50
      %p56 = scmp.eq.s32.totalorder %s14, 0
      %p57 = por %p55, %p56
      %p58 = scmp.ne.s32.totalorder %s47, %s50
      %p59 = scmp.eq.s32.totalorder %s19, 1
      %p60 = por %p58, %p59
      %p61 = scmp.ne.s32.totalorder %s50, %s51
      %p62 = scmp.eq.s32.totalorder %s19, 0
      %p63 = por %p61, %p62
      %p64 = scmp.ne.s32.totalorder %s50, %s51
      %p65 = scmp.eq.s32.totalorder %s20, 1
      %p66 = por %p64, %p65
      %p68 = scmp.ne.s32.totalorder %s51, %s67
      %p69 = scmp.eq.s32.totalorder %s20, 0
      %p70 = por %p68, %p69
      %s71 = ssub.s32 %s21, %s40
      %s72 = ssub.s32 %s22, %s36
      %s73 = sor.u32 %s71, %s72
      %s74 = ssub.s32 %s23, %s32
      %s75 = sor.u32 %s73, %s74
      %p76 = scmp.eq.s32.totalorder %s75, 0
      %s78 = sadd.s32 %s77, 1
      %s79 = scalar_select %p76, %s77, %s78
      %p82 = pneg %p76
      %p83 = scmp.eq.s32.totalorder %s14, 1
      %p84 = por %p82, %p83
      %p85 = scmp.ne.s32.totalorder %s77, %s80
      %p86 = scmp.eq.s32.totalorder %s14, 0
      %p87 = por %p85, %p86
      %p88 = scmp.ne.s32.totalorder %s77, %s80
      %p89 = scmp.eq.s32.totalorder %s19, 1
      %p90 = por %p88, %p89
      %p91 = scmp.ne.s32.totalorder %s80, %s81
      %p92 = scmp.eq.s32.totalorder %s19, 0
      %p93 = por %p91, %p92
      %p94 = scmp.ne.s32.totalorder %s80, %s81
      %p95 = scmp.eq.s32.totalorder %s20, 1
      %p96 = por %p94, %p95
      %p98 = scmp.ne.s32.totalorder %s81, %s97
      %p99 = scmp.eq.s32.totalorder %s20, 0
      %p100 = por %p98, %p99
      %s101 = ssub.s32 %s21, %s40
      %s102 = ssub.s32 %s22, %s36
      %s103 = sor.u32 %s101, %s102
      %s104 = ssub.s32 %s23, %s32
      %s105 = sor.u32 %s103, %s104
      %p106 = scmp.eq.s32.totalorder %s105, 0
      %s108 = sadd.s32 %s107, 1
      %s109 = scalar_select %p106, %s107, %s108
      %p112 = pneg %p106
      %p113 = scmp.eq.s32.totalorder %s14, 1
      %p114 = por %p112, %p113
      %p115 = scmp.ne.s32.totalorder %s107, %s110
      %p116 = scmp.eq.s32.totalorder %s14, 0
      %p117 = por %p115, %p116
      %p118 = scmp.ne.s32.totalorder %s107, %s110
      %p119 = scmp.eq.s32.totalorder %s19, 1
      %p120 = por %p118, %p119
      %p121 = scmp.ne.s32.totalorder %s110, %s111
      %p122 = scmp.eq.s32.totalorder %s19, 0
      %p123 = por %p121, %p122
      %p124 = scmp.ne.s32.totalorder %s110, %s111
      %p125 = scmp.eq.s32.totalorder %s20, 1
      %p126 = por %p124, %p125
      %p128 = scmp.ne.s32.totalorder %s111, %s127
      %p129 = scmp.eq.s32.totalorder %s20, 0
      %p130 = por %p128, %p129
      %s131 = ssub.s32 %s21, %s40
      %s132 = ssub.s32 %s22, %s36
      %s133 = sor.u32 %s131, %s132
      %s134 = ssub.s32 %s23, %s32
      %s135 = sor.u32 %s133, %s134
      %p136 = scmp.eq.s32.totalorder %s135, 0
      %s138 = sadd.s32 %s137, 1
      %s139 = scalar_select %p136, %s137, %s138
      %p142 = pneg %p136
      %p143 = scmp.eq.s32.totalorder %s14, 1
      %p144 = por %p142, %p143
      %p145 = scmp.ne.s32.totalorder %s137, %s140
      %p146 = scmp.eq.s32.totalorder %s14, 0
      %p147 = por %p145, %p146
      %p148 = scmp.ne.s32.totalorder %s137, %s140
      %p149 = scmp.eq.s32.totalorder %s19, 1
      %p150 = por %p148, %p149
      %p151 = scmp.ne.s32.totalorder %s140, %s141
      %p152 = scmp.eq.s32.totalorder %s19, 0
      %p153 = por %p151, %p152
      %p154 = scmp.ne.s32.totalorder %s140, %s141
      %p155 = scmp.eq.s32.totalorder %s20, 1
      %p156 = por %p154, %p155
      %p158 = scmp.ne.s32.totalorder %s141, %s157
      %p159 = scmp.eq.s32.totalorder %s20, 0
      %p160 = por %p158, %p159
      %s161 = ssub.s32 %s21, %s40
      %s162 = ssub.s32 %s22, %s36
      %s163 = sor.u32 %s161, %s162
      %s164 = ssub.s32 %s23, %s32
      %s165 = sor.u32 %s163, %s164
      %p166 = scmp.eq.s32.totalorder %s165, 0
      %s168 = sadd.s32 %s167, 1
      %s169 = scalar_select %p166, %s167, %s168
      %p172 = pneg %p166
      %p173 = scmp.eq.s32.totalorder %s14, 1
      %p174 = por %p172, %p173
      %p175 = scmp.ne.s32.totalorder %s167, %s170
      %p176 = scmp.eq.s32.totalorder %s14, 0
      %p177 = por %p175, %p176
      %p178 = scmp.ne.s32.totalorder %s167, %s170
      %p179 = scmp.eq.s32.totalorder %s19, 1
      %p180 = por %p178, %p179
      %p181 = scmp.ne.s32.totalorder %s170, %s171
      %p182 = scmp.eq.s32.totalorder %s19, 0
      %p183 = por %p181, %p182
      %p184 = scmp.ne.s32.totalorder %s170, %s171
      %p185 = scmp.eq.s32.totalorder %s20, 1
      %p186 = por %p184, %p185
      %p188 = scmp.ne.s32.totalorder %s171, %s187
      %p189 = scmp.eq.s32.totalorder %s20, 0
      %p190 = por %p188, %p189
      %p191 = scmp.le.s32.totalorder 1, %s14
      %p192 = scmp.lt.s32.totalorder %s14, 3
      %p193 = pnand %p191, %p192
      %p194 = pneg %p193
      // Predicated region
      $region9: #{_iwt_planes.1} parent=5 // pred_check
        _
      $region10: #{_iwt_planes.1} parent=5 // pred_check_branch
        %196 = sbr.rel (%p193) target = $region12
      $region11: #{_iwt_planes.1} parent=5 // pred_region
        %s197 = ssub.s32 %s14, 1
      $region12: #{_iwt_planes.1} parent=5 // pred_fallthru
        _
      %p198 = scmp.lt.s32.totalorder %s14, 2
      // Predicated region
      $region13: #{_iwt_planes.1} parent=5 // pred_check
        %p199 = pneg %p198
      $region14: #{_iwt_planes.1} parent=5 // pred_check_branch
        %201 = sbr.rel (%p199) target = $region16
      $region15: #{_iwt_planes.1} parent=5 // pred_region
        // Predicated region
        $region17: #{_iwt_planes.1} parent=15 // pred_check
          %p202 = pneg %p57
        $region18: #{_iwt_planes.1} parent=15 // pred_check_branch
          %204 = sbr.rel (%p202) target = $region20
        $region19: #{_iwt_planes.1} parent=15 // pred_region
          %s205 = sand.u32 %s47, 1
          %s206 = scalar_lea.sflag [#allocation3], %s205
          %s207 = sand.u32 %s47, 1
          %s208 = smul.addr %s207, 256
          %s209 = scalar_lea.vmem [#allocation2], %s208
          %s210 = smul.u32 4, %s22
          %s211 = smul.u32 2, %s23
          %213 = vsyncadd %s206, 0
          %s214 = smul.addr %s210, 2
          %s215 = sadd.s32 %s211, %s214
          %s216 = smul.addr %s21, 32
          %s217 = sadd.s32 %s215, %s216
          %s218 = smul.addr %s217, 8
          %s219 = scalar_lea.hbm %s0, %s218
          %s220 = sshll.u32 %s219, 4
          %s221 = int_to_ptr.hbm [resolvable:$true] %s220
          %s222 = sshll.u32 %s209, 4
          %s223 = int_to_ptr.vmem [resolvable:$true] %s222
          %228 = dma.hbm_to_vmem [thread:$0]  %s221, 4096, %s223, %s206, 128, 128, 8
        $region20: #{_iwt_planes.1} parent=15 // pred_fallthru
          _
      $region16: #{_iwt_planes.1} parent=5 // pred_fallthru
        _
      %p229 = scmp.le.s32.totalorder 1, %s14
      %p230 = scmp.lt.s32.totalorder %s14, 3
      %p231 = pnand %p229, %p230
      %p232 = pneg %p231
      // Predicated region
      $region21: #{_iwt_planes.1} parent=5 // pred_check
        _
      $region22: #{_iwt_planes.1} parent=5 // pred_check_branch
        %234 = sbr.rel (%p231) target = $region24
      $region23: #{_iwt_planes.1} parent=5 // pred_region
        %s235 = ssub.s32 %s14, 1
        %s236 = sand.u32 %s50, 1
        %s237 = scalar_lea.sflag [#allocation3], %s236
        %s238 = sand.u32 %s50, 1
        %s239 = smul.addr %s238, 256
        %s240 = scalar_lea.vmem [#allocation2], %s239
        // Predicated region
        $region25: #{_iwt_planes.1} parent=23 // pred_check
          %p241 = pneg %p63
        $region26: #{_iwt_planes.1} parent=23 // pred_check_branch
          %243 = sbr.rel (%p241) target = $region28
        $region27: #{_iwt_planes.1} parent=23 // pred_region
          %245 = dma.done %s237, 4096
        $region28: #{_iwt_planes.1} parent=23 // pred_fallthru
          _
        %s246 = sand.u32 %s50, 1
        %s247 = scalar_lea.sflag [#allocation3], %s246
        %s248 = sand.u32 %s50, 1
        %s249 = smul.addr %s248, 256
        %s250 = scalar_lea.vmem [#allocation2], %s249
        %p251 = pneg %p63
        %p252 = pneg %p60
        %p253 = pneg %p93
        %p254 = pneg %p90
        %s255 = smul.u32 4, %s25
        %s256 = smul.u32 2, %s26
        %p257 = scmp.lt.s32.totalorder %s24, 1
        %s258 = scalar_select %p257, %s24, 1
        %p259 = scmp.lt.s32.totalorder %s255, 3
        %s260 = scalar_select %p259, %s255, 3
        %p261 = scmp.lt.s32.totalorder %s256, 1
        %s262 = scalar_select %p261, %s256, 1
        %s263 = smul.addr %s260, 2
        %s264 = sadd.s32 %s262, %s263
        %s265 = smul.addr %s258, 8
        %s266 = sadd.s32 %s264, %s265
        %s267 = smul.addr %s266, 8
        %s268 = scalar_lea.vmem %s1, %s267
        %p269 = pneg %p123
        %p270 = pneg %p120
        %s271 = smul.u32 4, %s25
        %s272 = smul.u32 2, %s26
        %p273 = scmp.lt.s32.totalorder %s24, 1
        %s274 = scalar_select %p273, %s24, 1
        %p275 = scmp.lt.s32.totalorder %s271, 3
        %s276 = scalar_select %p275, %s271, 3
        %p277 = scmp.lt.s32.totalorder %s272, 1
        %s278 = scalar_select %p277, %s272, 1
        %s279 = smul.addr %s276, 2
        %s280 = sadd.s32 %s278, %s279
        %s281 = smul.addr %s274, 8
        %s282 = sadd.s32 %s280, %s281
        %s283 = smul.addr %s282, 8
        %s284 = scalar_lea.vmem %s2, %s283
        %p285 = pneg %p153
        %p286 = pneg %p150
        %s287 = smul.u32 4, %s25
        %s288 = smul.u32 2, %s26
        %p289 = scmp.lt.s32.totalorder %s24, 1
        %s290 = scalar_select %p289, %s24, 1
        %p291 = scmp.lt.s32.totalorder %s287, 3
        %s292 = scalar_select %p291, %s287, 3
        %p293 = scmp.lt.s32.totalorder %s288, 1
        %s294 = scalar_select %p293, %s288, 1
        %s295 = smul.addr %s292, 2
        %s296 = sadd.s32 %s294, %s295
        %s297 = smul.addr %s290, 8
        %s298 = sadd.s32 %s296, %s297
        %s299 = smul.addr %s298, 8
        %s300 = scalar_lea.vmem %s3, %s299
        %p301 = pneg %p183
        %p302 = pneg %p180
        %s303 = smul.u32 4, %s25
        %s304 = smul.u32 2, %s26
        %p305 = scmp.lt.s32.totalorder %s24, 1
        %s306 = scalar_select %p305, %s24, 1
        %p307 = scmp.lt.s32.totalorder %s303, 3
        %s308 = scalar_select %p307, %s303, 3
        %p309 = scmp.lt.s32.totalorder %s304, 1
        %s310 = scalar_select %p309, %s304, 1
        %s311 = smul.addr %s308, 2
        %s312 = sadd.s32 %s310, %s311
        %s313 = smul.addr %s306, 8
        %s314 = sadd.s32 %s312, %s313
        %s315 = smul.addr %s314, 8
        %s316 = scalar_lea.vmem %s4, %s315
        %s317 = smul.u32 4, %s25
        %s318 = smul.u32 2, %s26
        %s319 = smul.u32 4, %s25
        %s320 = smul.u32 2, %s26
        %p321 = scmp.lt.s32.totalorder %s24, 1
        %s322 = scalar_select %p321, %s24, 1
        %p323 = scmp.lt.s32.totalorder %s319, 3
        %s324 = scalar_select %p323, %s319, 3
        %p325 = scmp.lt.s32.totalorder %s320, 1
        %s326 = scalar_select %p325, %s320, 1
        %s327 = smul.addr %s324, 2
        %s328 = sadd.s32 %s326, %s327
        %s329 = smul.addr %s322, 8
        %s330 = sadd.s32 %s328, %s329
        %s331 = smul.addr %s330, 8
        %s332 = scalar_lea.vmem %s1, %s331
        %s333 = smul.u32 4, %s25
        %s334 = smul.u32 2, %s26
        %s335 = smul.u32 4, %s25
        %s336 = smul.u32 2, %s26
        %p337 = scmp.lt.s32.totalorder %s24, 1
        %s338 = scalar_select %p337, %s24, 1
        %p339 = scmp.lt.s32.totalorder %s335, 3
        %s340 = scalar_select %p339, %s335, 3
        %p341 = scmp.lt.s32.totalorder %s336, 1
        %s342 = scalar_select %p341, %s336, 1
        %s343 = smul.addr %s340, 2
        %s344 = sadd.s32 %s342, %s343
        %s345 = smul.addr %s338, 8
        %s346 = sadd.s32 %s344, %s345
        %s347 = smul.addr %s346, 8
        %s348 = scalar_lea.vmem %s2, %s347
        %s349 = smul.u32 4, %s25
        %s350 = smul.u32 2, %s26
        %s351 = smul.u32 4, %s25
        %s352 = smul.u32 2, %s26
        %p353 = scmp.lt.s32.totalorder %s24, 1
        %s354 = scalar_select %p353, %s24, 1
        %p355 = scmp.lt.s32.totalorder %s351, 3
        %s356 = scalar_select %p355, %s351, 3
        %p357 = scmp.lt.s32.totalorder %s352, 1
        %s358 = scalar_select %p357, %s352, 1
        %s359 = smul.addr %s356, 2
        %s360 = sadd.s32 %s358, %s359
        %s361 = smul.addr %s354, 8
        %s362 = sadd.s32 %s360, %s361
        %s363 = smul.addr %s362, 8
        %s364 = scalar_lea.vmem %s3, %s363
        %s365 = smul.u32 4, %s25
        %s366 = smul.u32 2, %s26
        %s367 = smul.u32 4, %s25
        %s368 = smul.u32 2, %s26
        %p369 = scmp.lt.s32.totalorder %s24, 1
        %s370 = scalar_select %p369, %s24, 1
        %p371 = scmp.lt.s32.totalorder %s367, 3
        %s372 = scalar_select %p371, %s367, 3
        %p373 = scmp.lt.s32.totalorder %s368, 1
        %s374 = scalar_select %p373, %s368, 1
        %s375 = smul.addr %s372, 2
        %s376 = sadd.s32 %s374, %s375
        %s377 = smul.addr %s370, 8
        %s378 = sadd.s32 %s376, %s377
        %s379 = smul.addr %s378, 8
        %s380 = scalar_lea.vmem %s4, %s379
        %s381 = smul.u32 4, %s25
        %s382 = smul.u32 2, %s26
        %v383 = vld [vmem:[%s240] sm:$0xff]
        %v384 = vld [vmem:[%s240 + $0x8] sm:$0xff]
        %v385 = vld [vmem:[%s240 + $0x10] sm:$0xff]
        %v386 = vld [vmem:[%s240 + $0x18] sm:$0xff]
        %v387 = vld [vmem:[%s240 + $0x20] sm:$0xff]
        %v388 = vld [vmem:[%s240 + $0x28] sm:$0xff]
        %v389 = vld [vmem:[%s240 + $0x30] sm:$0xff]
        %v390 = vld [vmem:[%s240 + $0x38] sm:$0xff]
        %v391 = vmul.f32 %v383, 0.5
        %v392 = vmul.f32 %v384, 0.5
        %v393 = vmul.f32 %v385, 0.5
        %v394 = vmul.f32 %v386, 0.5
        %v395 = vmul.f32 %v387, 0.5
        %v396 = vmul.f32 %v388, 0.5
        %v397 = vmul.f32 %v389, 0.5
        %v398 = vmul.f32 %v390, 0.5
        %s399 = scalar_lea.vmem %s240, 64 [#allocation2]
        %v400 = vld [vmem:[%s399] sm:$0xff]
        %v401 = vld [vmem:[%s399 + $0x8] sm:$0xff]
        %v402 = vld [vmem:[%s399 + $0x10] sm:$0xff]
        %v403 = vld [vmem:[%s399 + $0x18] sm:$0xff]
        %v404 = vld [vmem:[%s399 + $0x20] sm:$0xff]
        %v405 = vld [vmem:[%s399 + $0x28] sm:$0xff]
        %v406 = vld [vmem:[%s399 + $0x30] sm:$0xff]
        %v407 = vld [vmem:[%s399 + $0x38] sm:$0xff]
        %v408 = vmul.f32 %v400, 0.5
        %v409 = vmul.f32 %v401, 0.5
        %v410 = vmul.f32 %v402, 0.5
        %v411 = vmul.f32 %v403, 0.5
        %v412 = vmul.f32 %v404, 0.5
        %v413 = vmul.f32 %v405, 0.5
        %v414 = vmul.f32 %v406, 0.5
        %v415 = vmul.f32 %v407, 0.5
        %s416 = scalar_lea.vmem %s240, 128 [#allocation2]
        %v417 = vld [vmem:[%s416] sm:$0xff]
        %v418 = vld [vmem:[%s416 + $0x8] sm:$0xff]
        %v419 = vld [vmem:[%s416 + $0x10] sm:$0xff]
        %v420 = vld [vmem:[%s416 + $0x18] sm:$0xff]
        %v421 = vld [vmem:[%s416 + $0x20] sm:$0xff]
        %v422 = vld [vmem:[%s416 + $0x28] sm:$0xff]
        %v423 = vld [vmem:[%s416 + $0x30] sm:$0xff]
        %v424 = vld [vmem:[%s416 + $0x38] sm:$0xff]
        %v425 = vmul.f32 %v417, 0.5
        %v426 = vmul.f32 %v418, 0.5
        %v427 = vmul.f32 %v419, 0.5
        %v428 = vmul.f32 %v420, 0.5
        %v429 = vmul.f32 %v421, 0.5
        %v430 = vmul.f32 %v422, 0.5
        %v431 = vmul.f32 %v423, 0.5
        %v432 = vmul.f32 %v424, 0.5
        %s433 = scalar_lea.vmem %s240, 192 [#allocation2]
        %v434 = vld [vmem:[%s433] sm:$0xff]
        %v435 = vld [vmem:[%s433 + $0x8] sm:$0xff]
        %v436 = vld [vmem:[%s433 + $0x10] sm:$0xff]
        %v437 = vld [vmem:[%s433 + $0x18] sm:$0xff]
        %v438 = vld [vmem:[%s433 + $0x20] sm:$0xff]
        %v439 = vld [vmem:[%s433 + $0x28] sm:$0xff]
        %v440 = vld [vmem:[%s433 + $0x30] sm:$0xff]
        %v441 = vld [vmem:[%s433 + $0x38] sm:$0xff]
        %v442 = vmul.f32 %v434, 0.5
        %v443 = vmul.f32 %v435, 0.5
        %v444 = vmul.f32 %v436, 0.5
        %v445 = vmul.f32 %v437, 0.5
        %v446 = vmul.f32 %v438, 0.5
        %v447 = vmul.f32 %v439, 0.5
        %v448 = vmul.f32 %v440, 0.5
        %v449 = vmul.f32 %v441, 0.5
        %v450 = vsub.f32 %v391, %v408
        %v451 = vsub.f32 %v392, %v409
        %v452 = vsub.f32 %v393, %v410
        %v453 = vsub.f32 %v394, %v411
        %v454 = vsub.f32 %v395, %v412
        %v455 = vsub.f32 %v396, %v413
        %v456 = vsub.f32 %v397, %v414
        %v457 = vsub.f32 %v398, %v415
        %v458 = vadd.f32 %v391, %v408
        %v459 = vadd.f32 %v392, %v409
        %v460 = vadd.f32 %v393, %v410
        %v461 = vadd.f32 %v394, %v411
        %v462 = vadd.f32 %v395, %v412
        %v463 = vadd.f32 %v396, %v413
        %v464 = vadd.f32 %v397, %v414
        %v465 = vadd.f32 %v398, %v415
        %v466 = vsub.f32 %v425, %v442
        %v467 = vsub.f32 %v426, %v443
        %v468 = vsub.f32 %v427, %v444
        %v469 = vsub.f32 %v428, %v445
        %v470 = vsub.f32 %v429, %v446
        %v471 = vsub.f32 %v430, %v447
        %v472 = vsub.f32 %v431, %v448
        %v473 = vsub.f32 %v432, %v449
        %v474 = vadd.f32 %v425, %v442
        %v475 = vadd.f32 %v426, %v443
        %v476 = vadd.f32 %v427, %v444
        %v477 = vadd.f32 %v428, %v445
        %v478 = vadd.f32 %v429, %v446
        %v479 = vadd.f32 %v430, %v447
        %v480 = vadd.f32 %v431, %v448
        %v481 = vadd.f32 %v432, %v449
        %v482 = vsub.f32 %v450, %v466
        %v483 = vsub.f32 %v451, %v467
        %v484 = vsub.f32 %v452, %v468
        %v485 = vsub.f32 %v453, %v469
        %v486 = vsub.f32 %v454, %v470
        %v487 = vsub.f32 %v455, %v471
        %v488 = vsub.f32 %v456, %v472
        %v489 = vsub.f32 %v457, %v473
        %vm490 = vcmask 130048
        %491 = vst.msk [vmem:[%s332] sm:$0xff] %vm490, %v482
        %492 = vst.msk [vmem:[%s332 + $0x8] sm:$0xff] %vm490, %v483
        %493 = vst.msk [vmem:[%s332 + $0x10] sm:$0xff] %vm490, %v484
        %494 = vst.msk [vmem:[%s332 + $0x18] sm:$0xff] %vm490, %v485
        %495 = vst.msk [vmem:[%s332 + $0x20] sm:$0xff] %vm490, %v486
        %496 = vst.msk [vmem:[%s332 + $0x28] sm:$0xff] %vm490, %v487
        %497 = vst.msk [vmem:[%s332 + $0x30] sm:$0xff] %vm490, %v488
        %498 = vst.msk [vmem:[%s332 + $0x38] sm:$0xff] %vm490, %v489
        %v499 = vadd.f32 %v450, %v466
        %v500 = vadd.f32 %v451, %v467
        %v501 = vadd.f32 %v452, %v468
        %v502 = vadd.f32 %v453, %v469
        %v503 = vadd.f32 %v454, %v470
        %v504 = vadd.f32 %v455, %v471
        %v505 = vadd.f32 %v456, %v472
        %v506 = vadd.f32 %v457, %v473
        %507 = vst.msk [vmem:[%s348] sm:$0xff] %vm490, %v499
        %508 = vst.msk [vmem:[%s348 + $0x8] sm:$0xff] %vm490, %v500
        %509 = vst.msk [vmem:[%s348 + $0x10] sm:$0xff] %vm490, %v501
        %510 = vst.msk [vmem:[%s348 + $0x18] sm:$0xff] %vm490, %v502
        %511 = vst.msk [vmem:[%s348 + $0x20] sm:$0xff] %vm490, %v503
        %512 = vst.msk [vmem:[%s348 + $0x28] sm:$0xff] %vm490, %v504
        %513 = vst.msk [vmem:[%s348 + $0x30] sm:$0xff] %vm490, %v505
        %514 = vst.msk [vmem:[%s348 + $0x38] sm:$0xff] %vm490, %v506
        %v515 = vsub.f32 %v458, %v474
        %v516 = vsub.f32 %v459, %v475
        %v517 = vsub.f32 %v460, %v476
        %v518 = vsub.f32 %v461, %v477
        %v519 = vsub.f32 %v462, %v478
        %v520 = vsub.f32 %v463, %v479
        %v521 = vsub.f32 %v464, %v480
        %v522 = vsub.f32 %v465, %v481
        %523 = vst.msk [vmem:[%s364] sm:$0xff] %vm490, %v515
        %524 = vst.msk [vmem:[%s364 + $0x8] sm:$0xff] %vm490, %v516
        %525 = vst.msk [vmem:[%s364 + $0x10] sm:$0xff] %vm490, %v517
        %526 = vst.msk [vmem:[%s364 + $0x18] sm:$0xff] %vm490, %v518
        %527 = vst.msk [vmem:[%s364 + $0x20] sm:$0xff] %vm490, %v519
        %528 = vst.msk [vmem:[%s364 + $0x28] sm:$0xff] %vm490, %v520
        %529 = vst.msk [vmem:[%s364 + $0x30] sm:$0xff] %vm490, %v521
        %530 = vst.msk [vmem:[%s364 + $0x38] sm:$0xff] %vm490, %v522
        %v531 = vadd.f32 %v458, %v474
        %v532 = vadd.f32 %v459, %v475
        %v533 = vadd.f32 %v460, %v476
        %v534 = vadd.f32 %v461, %v477
        %v535 = vadd.f32 %v462, %v478
        %v536 = vadd.f32 %v463, %v479
        %v537 = vadd.f32 %v464, %v480
        %v538 = vadd.f32 %v465, %v481
        %539 = vst.msk [vmem:[%s380] sm:$0xff] %vm490, %v531
        %540 = vst.msk [vmem:[%s380 + $0x8] sm:$0xff] %vm490, %v532
        %541 = vst.msk [vmem:[%s380 + $0x10] sm:$0xff] %vm490, %v533
        %542 = vst.msk [vmem:[%s380 + $0x18] sm:$0xff] %vm490, %v534
        %543 = vst.msk [vmem:[%s380 + $0x20] sm:$0xff] %vm490, %v535
        %544 = vst.msk [vmem:[%s380 + $0x28] sm:$0xff] %vm490, %v536
        %545 = vst.msk [vmem:[%s380 + $0x30] sm:$0xff] %vm490, %v537
        %546 = vst.msk [vmem:[%s380 + $0x38] sm:$0xff] %vm490, %v538
        %s547 = smul.u32 4, %s25
        %s548 = smul.u32 2, %s26
        %p549 = scmp.lt.s32.totalorder %s24, 1
        %s550 = scalar_select %p549, %s24, 1
        %p551 = scmp.lt.s32.totalorder %s547, 3
        %s552 = scalar_select %p551, %s547, 3
        %p553 = scmp.lt.s32.totalorder %s548, 1
        %s554 = scalar_select %p553, %s548, 1
        %s555 = smul.addr %s552, 2
        %s556 = sadd.s32 %s554, %s555
        %s557 = smul.addr %s550, 8
        %s558 = sadd.s32 %s556, %s557
        %s559 = smul.addr %s558, 8
        %s560 = scalar_lea.vmem %s1, %s559
        %s561 = smul.u32 4, %s25
        %s562 = smul.u32 2, %s26
        %p563 = scmp.lt.s32.totalorder %s24, 1
        %s564 = scalar_select %p563, %s24, 1
        %p565 = scmp.lt.s32.totalorder %s561, 3
        %s566 = scalar_select %p565, %s561, 3
        %p567 = scmp.lt.s32.totalorder %s562, 1
        %s568 = scalar_select %p567, %s562, 1
        %s569 = smul.addr %s566, 2
        %s570 = sadd.s32 %s568, %s569
        %s571 = smul.addr %s564, 8
        %s572 = sadd.s32 %s570, %s571
        %s573 = smul.addr %s572, 8
        %s574 = scalar_lea.vmem %s2, %s573
        %s575 = smul.u32 4, %s25
        %s576 = smul.u32 2, %s26
        %p577 = scmp.lt.s32.totalorder %s24, 1
        %s578 = scalar_select %p577, %s24, 1
        %p579 = scmp.lt.s32.totalorder %s575, 3
        %s580 = scalar_select %p579, %s575, 3
        %p581 = scmp.lt.s32.totalorder %s576, 1
        %s582 = scalar_select %p581, %s576, 1
        %s583 = smul.addr %s580, 2
        %s584 = sadd.s32 %s582, %s583
        %s585 = smul.addr %s578, 8
        %s586 = sadd.s32 %s584, %s585
        %s587 = smul.addr %s586, 8
        %s588 = scalar_lea.vmem %s3, %s587
        %s589 = smul.u32 4, %s25
        %s590 = smul.u32 2, %s26
        %p591 = scmp.lt.s32.totalorder %s24, 1
        %s592 = scalar_select %p591, %s24, 1
        %p593 = scmp.lt.s32.totalorder %s589, 3
        %s594 = scalar_select %p593, %s589, 3
        %p595 = scmp.lt.s32.totalorder %s590, 1
        %s596 = scalar_select %p595, %s590, 1
        %s597 = smul.addr %s594, 2
        %s598 = sadd.s32 %s596, %s597
        %s599 = smul.addr %s592, 8
        %s600 = sadd.s32 %s598, %s599
        %s601 = smul.addr %s600, 8
        %s602 = scalar_lea.vmem %s4, %s601
        // Predicated region
        $region29: #{_iwt_planes.1} parent=23 // pred_check
          %p603 = pneg %p90
        $region30: #{_iwt_planes.1} parent=23 // pred_check_branch
          %605 = sbr.rel (%p603) target = $region32
        $region31: #{_iwt_planes.1} parent=23 // pred_region
          %s606 = smul.u32 4, %s25
          %s607 = smul.u32 2, %s26
        $region32: #{_iwt_planes.1} parent=23 // pred_fallthru
          _
        // Predicated region
        $region33: #{_iwt_planes.1} parent=23 // pred_check
          %p608 = pneg %p120
        $region34: #{_iwt_planes.1} parent=23 // pred_check_branch
          %610 = sbr.rel (%p608) target = $region36
        $region35: #{_iwt_planes.1} parent=23 // pred_region
          %s611 = smul.u32 4, %s25
          %s612 = smul.u32 2, %s26
        $region36: #{_iwt_planes.1} parent=23 // pred_fallthru
          _
        // Predicated region
        $region37: #{_iwt_planes.1} parent=23 // pred_check
          %p613 = pneg %p150
        $region38: #{_iwt_planes.1} parent=23 // pred_check_branch
          %615 = sbr.rel (%p613) target = $region40
        $region39: #{_iwt_planes.1} parent=23 // pred_region
          %s616 = smul.u32 4, %s25
          %s617 = smul.u32 2, %s26
        $region40: #{_iwt_planes.1} parent=23 // pred_fallthru
          _
        // Predicated region
        $region41: #{_iwt_planes.1} parent=23 // pred_check
          %p618 = pneg %p180
        $region42: #{_iwt_planes.1} parent=23 // pred_check_branch
          %620 = sbr.rel (%p618) target = $region44
        $region43: #{_iwt_planes.1} parent=23 // pred_region
          %s621 = smul.u32 4, %s25
          %s622 = smul.u32 2, %s26
        $region44: #{_iwt_planes.1} parent=23 // pred_fallthru
          _
      $region24: #{_iwt_planes.1} parent=5 // pred_fallthru
        _
      %p623 = scmp.le.s32.totalorder 2, %s14
      // Predicated region
      $region45: #{_iwt_planes.1} parent=5 // pred_check
        %p624 = pneg %p623
      $region46: #{_iwt_planes.1} parent=5 // pred_check_branch
        %626 = sbr.rel (%p624) target = $region48
      $region47: #{_iwt_planes.1} parent=5 // pred_region
        %s627 = ssub.s32 %s14, 2
        // Predicated region
        $region49: #{_iwt_planes.1} parent=47 // pred_check
          %p628 = pneg %p96
        $region50: #{_iwt_planes.1} parent=47 // pred_check_branch
          %630 = sbr.rel (%p628) target = $region52
        $region51: #{_iwt_planes.1} parent=47 // pred_region
          %s631 = smul.u32 4, %s28
          %s632 = smul.u32 2, %s29
          %p633 = scmp.lt.s32.totalorder %s27, 1
          %s634 = scalar_select %p633, %s27, 1
          %p635 = scmp.lt.s32.totalorder %s631, 3
          %s636 = scalar_select %p635, %s631, 3
          %p637 = scmp.lt.s32.totalorder %s632, 1
          %s638 = scalar_select %p637, %s632, 1
          %s639 = smul.addr %s636, 2
          %s640 = sadd.s32 %s638, %s639
          %s641 = smul.addr %s634, 8
          %s642 = sadd.s32 %s640, %s641
          %s643 = smul.addr %s642, 8
          %s644 = scalar_lea.vmem %s1, %s643
        $region52: #{_iwt_planes.1} parent=47 // pred_fallthru
          _
        // Predicated region
        $region53: #{_iwt_planes.1} parent=47 // pred_check
          %p645 = pneg %p126
        $region54: #{_iwt_planes.1} parent=47 // pred_check_branch
          %647 = sbr.rel (%p645) target = $region56
        $region55: #{_iwt_planes.1} parent=47 // pred_region
          %s648 = smul.u32 4, %s28
          %s649 = smul.u32 2, %s29
          %p650 = scmp.lt.s32.totalorder %s27, 1
          %s651 = scalar_select %p650, %s27, 1
          %p652 = scmp.lt.s32.totalorder %s648, 3
          %s653 = scalar_select %p652, %s648, 3
          %p654 = scmp.lt.s32.totalorder %s649, 1
          %s655 = scalar_select %p654, %s649, 1
          %s656 = smul.addr %s653, 2
          %s657 = sadd.s32 %s655, %s656
          %s658 = smul.addr %s651, 8
          %s659 = sadd.s32 %s657, %s658
          %s660 = smul.addr %s659, 8
          %s661 = scalar_lea.vmem %s2, %s660
        $region56: #{_iwt_planes.1} parent=47 // pred_fallthru
          _
        // Predicated region
        $region57: #{_iwt_planes.1} parent=47 // pred_check
          %p662 = pneg %p156
        $region58: #{_iwt_planes.1} parent=47 // pred_check_branch
          %664 = sbr.rel (%p662) target = $region60
        $region59: #{_iwt_planes.1} parent=47 // pred_region
          %s665 = smul.u32 4, %s28
          %s666 = smul.u32 2, %s29
          %p667 = scmp.lt.s32.totalorder %s27, 1
          %s668 = scalar_select %p667, %s27, 1
          %p669 = scmp.lt.s32.totalorder %s665, 3
          %s670 = scalar_select %p669, %s665, 3
          %p671 = scmp.lt.s32.totalorder %s666, 1
          %s672 = scalar_select %p671, %s666, 1
          %s673 = smul.addr %s670, 2
          %s674 = sadd.s32 %s672, %s673
          %s675 = smul.addr %s668, 8
          %s676 = sadd.s32 %s674, %s675
          %s677 = smul.addr %s676, 8
          %s678 = scalar_lea.vmem %s3, %s677
        $region60: #{_iwt_planes.1} parent=47 // pred_fallthru
          _
        // Predicated region
        $region61: #{_iwt_planes.1} parent=47 // pred_check
          %p679 = pneg %p186
        $region62: #{_iwt_planes.1} parent=47 // pred_check_branch
          %681 = sbr.rel (%p679) target = $region64
        $region63: #{_iwt_planes.1} parent=47 // pred_region
          %s682 = smul.u32 4, %s28
          %s683 = smul.u32 2, %s29
          %p684 = scmp.lt.s32.totalorder %s27, 1
          %s685 = scalar_select %p684, %s27, 1
          %p686 = scmp.lt.s32.totalorder %s682, 3
          %s687 = scalar_select %p686, %s682, 3
          %p688 = scmp.lt.s32.totalorder %s683, 1
          %s689 = scalar_select %p688, %s683, 1
          %s690 = smul.addr %s687, 2
          %s691 = sadd.s32 %s689, %s690
          %s692 = smul.addr %s685, 8
          %s693 = sadd.s32 %s691, %s692
          %s694 = smul.addr %s693, 8
          %s695 = scalar_lea.vmem %s4, %s694
        $region64: #{_iwt_planes.1} parent=47 // pred_fallthru
          _
      $region48: #{_iwt_planes.1} parent=5 // pred_fallthru
        _
    $region6: #{_iwt_planes.1} parent=1 // loop_footer
      %s18 = sadd.s32 1, %s14
    $region7: #{_iwt_planes.1} parent=1 // loop_footer_branch
      %13 = sbr.rel target = $region3
    $region8: #{_iwt_planes.1} parent=1 // loop_exit
      _
    %696 = vsyncpa [#allocation3], 1
    %s697 = scalar_lea.sflag [#allocation3], 1
    %698 = vsyncpa %s697, 1

</llo_original>
